<compile_context>
chip_gen: v7x
topology: tpu7x:2x2x1
jax: 0.10.0
libtpu: 0.0.40
codegen_flags: <defaults>
</compile_context>

<pallas_src>
import functools

import numpy as np
import jax
import jax.numpy as jnp
from jax import lax
from jax.experimental import pallas as pl
from jax.experimental.pallas import tpu as pltpu


EPS = 1e-5
KSIZE = 4


# ------------------------------ fused network kernel -------------------------

def disc_kernel(a_ref, rh1, rh2, rh3, rh4, rh5, ww1, ww2, ww3, ww4, ww5,
                pool_ref, gexp_ref, bexp_ref, out_ref, *, divisors):
    """Whole DCGAN discriminator forward.

    a_ref   : (N*64, 64*4)        bf16  layer-1 input, rows=(n,h), cols=(w,c)
    rhK     : (4, N*Ho, N*Hi)     bf16  per-tap 0/1 row-selection (H stride/pad)
    wwK     : (4, Wi*Cin, Wo*Co)  bf16  per-tap block-Toeplitz folded weights
    pool_ref: (3, Q, Q)           f32   channel sum/broadcast matrices (BN layers)
    gexp_ref: (3, 1, Q)           f32   gamma tiled over w
    bexp_ref: (3, 1, Q)           f32   beta tiled over w
    out_ref : (N, 128)            f32   column 0 = sigmoid(logit)
    """
    rhs = (rh1, rh2, rh3, rh4, rh5)
    wws = (ww1, ww2, ww3, ww4, ww5)

    x = a_ref[...]                                           # (N*64, 256) bf16
    for li in range(5):
        rh_r = rhs[li]
        ww_r = wws[li]

        # conv = sum over the 4 vertical taps of two 2-D MXU matmuls.
        pre = None
        for kh in range(KSIZE):
            # 0/1 selection of bf16 rows -> exact; cast back to bf16 for MXU.
            rows = jnp.dot(rh_r[kh], x,
                           preferred_element_type=jnp.float32).astype(jnp.bfloat16)
            t = jnp.dot(rows, ww_r[kh], preferred_element_type=jnp.float32)
            pre = t if pre is None else pre + t              # f32 accumulation

        if li in (1, 2, 3):
            # Training-mode BatchNorm: batch stats, biased variance, eps=1e-5.
            b = li - 1
            inv_cnt = 1.0 / divisors[b]
            colsum = jnp.sum(pre, axis=0, keepdims=True)                 # (1, Q)
            mean = jnp.dot(colsum, pool_ref[b],
                           preferred_element_type=jnp.float32) * inv_cnt  # per-ch, bcast over w
            d = pre - mean
            sqcol = jnp.sum(d * d, axis=0, keepdims=True)                # two-pass var
            var = jnp.dot(sqcol, pool_ref[b],
                          preferred_element_type=jnp.float32) * inv_cnt
            inv_std = lax.rsqrt(var + EPS)                               # EUP
            pre = d * (gexp_ref[b] * inv_std) + bexp_ref[b]

        if li < 4:
            pre = jnp.where(pre >= 0, pre, 0.2 * pre)        # LeakyReLU(0.2)
            x = pre.astype(jnp.bfloat16)                     # next layer's A
        else:
            # Exact sigmoid on the final logits (no approx reciprocal).
            out_ref[...] = 1.0 / (1.0 + jnp.exp(-pre))


# --------------------------- one-time constant folding ------------------------

def _build_rh(n, hi, ho, stride, pad):
    """(4, N*Ho, N*Hi) 0/1 row-selection: vertical stride-2 gather + padding."""
    rh = np.zeros((KSIZE, n * ho, n * hi), np.float32)
    for kh in range(KSIZE):
        for b in range(n):
            for o in range(ho):
                i = stride * o + kh - pad
                if 0 <= i < hi:
                    rh[kh, b * ho + o, b * hi + i] = 1.0
    return jnp.asarray(rh, jnp.bfloat16)


def _build_ww(w_oihw, wi, wo, stride, pad, cout_pad):
    """(4, Wi*Cin, Wo*cout_pad) block-Toeplitz folded weights (horizontal
    stride-2 gather + padding + channel contraction), one slab per kh tap."""
    cout, cin = w_oihw.shape[:2]
    ww = np.zeros((KSIZE, wi * cin, wo * cout_pad), np.float32)
    for kh in range(KSIZE):
        for o in range(wo):
            for kw in range(KSIZE):
                i = stride * o + kw - pad
                if 0 <= i < wi:
                    ww[kh, i * cin:(i + 1) * cin,
                       o * cout_pad:o * cout_pad + cout] = w_oihw[:, :, kh, kw].T
    return jnp.asarray(ww, jnp.bfloat16)


def build_discriminator(params, batch, image_size=64):
    """Fold all weights/constants once and return a jitted forward(x_nchw)."""
    strides = [2, 2, 2, 2, 1]
    pads = [1, 1, 1, 1, 0]
    bn_keys = [None, ("g2", "b2"), ("g3", "b3"), ("g4", "b4"), None]

    rhs, wws, pools, gexps, bexps, divisors = [], [], [], [], [], []
    h = image_size
    for li in range(5):
        w = np.asarray(params["w%d" % (li + 1)], np.float32)
        cout, cin = w.shape[:2]
        s, p = strides[li], pads[li]
        hi = h
        ho = (hi + 2 * p - KSIZE) // s + 1
        if li == 0:
            # pad input channels 3 -> 4 (zero weights => no effect, nicer lanes)
            w = np.pad(w, ((0, 0), (0, 4 - cin), (0, 0), (0, 0)))
            cin = 4
        cout_pad = 128 if li == 4 else cout   # final logit column padded to 128 lanes

        rhs.append(_build_rh(batch, hi, ho, s, p))
        wws.append(_build_ww(w, hi, ho, s, p, cout_pad))

        if bn_keys[li] is not None:
            g = np.asarray(params[bn_keys[li][0]], np.float32)
            b = np.asarray(params[bn_keys[li][1]], np.float32)
            # channel pooling/broadcast over interleaved (w, c) columns
            pools.append(np.kron(np.ones((ho, ho), np.float32),
                                 np.eye(cout, dtype=np.float32)))
            gexps.append(np.tile(g, ho).reshape(1, ho * cout))
            bexps.append(np.tile(b, ho).reshape(1, ho * cout))
            divisors.append(float(batch * ho * ho))
        h = ho

    pool = jnp.asarray(np.stack(pools), jnp.float32)    # (3, Q, Q)
    gexp = jnp.asarray(np.stack(gexps), jnp.float32)    # (3, 1, Q)
    bexp = jnp.asarray(np.stack(bexps), jnp.float32)    # (3, 1, Q)

    kern = functools.partial(disc_kernel, divisors=tuple(divisors))
    fused = pl.pallas_call(
        kern,
        out_shape=jax.ShapeDtypeStruct((batch, 128), jnp.float32),
    )  # no grid: whole arrays staged into VMEM, single kernel invocation

    rh_arrs = list(rhs)
    ww_arrs = list(wws)

    @jax.jit
    def forward(x_nchw):
        n, c, hh, ww_ = x_nchw.shape
        xh = jnp.transpose(x_nchw, (0, 2, 3, 1))               # NCHW -> NHWC
        xh = jnp.pad(xh, ((0, 0), (0, 0), (0, 0), (0, 4 - c)))  # C 3 -> 4
        a1 = xh.reshape(n * hh, ww_ * 4).astype(jnp.bfloat16)   # (N*H, W*C)
        out = fused(a1, *rh_arrs, *ww_arrs, pool, gexp, bexp)
        return out[:, 0]                 # == output.view(-1, 1).squeeze(1)

    return forward


# --------------------------- pure-JAX reference check --------------------------

def reference_forward(x, params):
    def conv(x, w, stride, pad):
        return lax.conv_general_dilated(
            x, w, (stride, stride), [(pad, pad), (pad, pad)],
            dimension_numbers=("NCHW", "OIHW", "NCHW"))

    def bn(x, g, b):
        mean = jnp.mean(x, axis=(0, 2, 3), keepdims=True)
        var = jnp.mean((x - mean) ** 2, axis=(0, 2, 3), keepdims=True)
        return ((x - mean) / jnp.sqrt(var + EPS)
                * g.reshape(1, -1, 1, 1) + b.reshape(1, -1, 1, 1))

    def lrelu(x):
        return jnp.where(x >= 0, x, 0.2 * x)

    h = lrelu(conv(x, params["w1"], 2, 1))
    h = lrelu(bn(conv(h, params["w2"], 2, 1), params["g2"], params["b2"]))
    h = lrelu(bn(conv(h, params["w3"], 2, 1), params["g3"], params["b3"]))
    h = lrelu(bn(conv(h, params["w4"], 2, 1), params["g4"], params["b4"]))
    h = jax.nn.sigmoid(conv(h, params["w5"], 1, 0))
    return h.reshape(-1)


# ------------------------------------ main ------------------------------------

if __name__ == "__main__":
    key = jax.random.PRNGKey(0)
    ks = jax.random.split(key, 6)

    batch, nc, ndf = 2, 3, 8          # DCGAN discriminator requires 64x64 input
    x = jax.random.normal(ks[0], (batch, nc, 64, 64), jnp.float32)

    params = {
        "w1": 0.02 * jax.random.normal(ks[1], (ndf, nc, 4, 4), jnp.float32),
        "w2": 0.02 * jax.random.normal(ks[2], (ndf * 2, ndf, 4, 4), jnp.float32),
        "g2": jnp.ones((ndf * 2,), jnp.float32),
        "b2": jnp.zeros((ndf * 2,), jnp.float32),
        "w3": 0.02 * jax.random.normal(ks[3], (ndf * 4, ndf * 2, 4, 4), jnp.float32),
        "g3": jnp.ones((ndf * 4,), jnp.float32),
        "b3": jnp.zeros((ndf * 4,), jnp.float32),
        "w4": 0.02 * jax.random.normal(ks[4], (ndf * 8, ndf * 4, 4, 4), jnp.float32),
        "g4": jnp.ones((ndf * 8,), jnp.float32),
        "b4": jnp.zeros((ndf * 8,), jnp.float32),
        "w5": 0.02 * jax.random.normal(ks[5], (1, ndf * 8, 4, 4), jnp.float32),
    }

    fwd = build_discriminator(params, batch)     # one-time constant folding
    out = jax.block_until_ready(fwd(x))

    ref = reference_forward(x, params)
    assert out.shape == (batch,), out.shape
    # Tolerance relaxed vs pure-f32: matmul operands and intermediate
    # activations are bf16 (f32 accumulation, f32 two-pass BN statistics).
    assert jnp.allclose(out, ref, atol=2e-2, rtol=2e-2), (out, ref)

    print("KERNEL_OK")
</pallas_src>

<mosaic_0001>
module attributes {stable_mosaic.version = 11 : i64} {
  func.func @disc_kernel(%arg0: memref<128x256xbf16, #tpu.memory_space<vmem>>, %arg1: memref<4x64x128xbf16, #tpu.memory_space<vmem>>, %arg2: memref<4x32x64xbf16, #tpu.memory_space<vmem>>, %arg3: memref<4x16x32xbf16, #tpu.memory_space<vmem>>, %arg4: memref<4x8x16xbf16, #tpu.memory_space<vmem>>, %arg5: memref<4x2x8xbf16, #tpu.memory_space<vmem>>, %arg6: memref<4x256x256xbf16, #tpu.memory_space<vmem>>, %arg7: memref<4x256x256xbf16, #tpu.memory_space<vmem>>, %arg8: memref<4x256x256xbf16, #tpu.memory_space<vmem>>, %arg9: memref<4x256x256xbf16, #tpu.memory_space<vmem>>, %arg10: memref<4x256x128xbf16, #tpu.memory_space<vmem>>, %arg11: memref<3x256x256xf32, #tpu.memory_space<vmem>>, %arg12: memref<3x1x256xf32, #tpu.memory_space<vmem>>, %arg13: memref<3x1x256xf32, #tpu.memory_space<vmem>>, %arg14: memref<2x128xf32, #tpu.memory_space<vmem>>) attributes {dimension_semantics = [], scalar_prefetch = 0 : i64, scratch_operands = 0 : i64, tpu.core_type = #tpu.core_type<tc>} {
    %c0 = arith.constant 0 : index
    %c0_0 = arith.constant 0 : index
    %0 = vector.load %arg0[%c0, %c0_0] : memref<128x256xbf16, #tpu.memory_space<vmem>>, vector<128x256xbf16>
    %c0_1 = arith.constant 0 : index
    %c0_2 = arith.constant 0 : index
    %c0_3 = arith.constant 0 : index
    %1 = vector.load %arg1[%c0_1, %c0_2, %c0_3] : memref<4x64x128xbf16, #tpu.memory_space<vmem>>, vector<1x64x128xbf16>
    %2 = vector.shape_cast %1 : vector<1x64x128xbf16> to vector<64x128xbf16>
    %cst = arith.constant dense<0.000000e+00> : vector<64x256xf32>
    %3 = tpu.matmul %2, %0, %cst {dimension_numbers = #tpu.dot_dimension_numbers<[1], [0], [0], [1], [0, 0, 1, 1], [], []>} : vector<64x128xbf16>, vector<128x256xbf16>, vector<64x256xf32> -> vector<64x256xf32>
    %4 = arith.truncf %3 : vector<64x256xf32> to vector<64x256xbf16>
    %c0_4 = arith.constant 0 : index
    %c0_5 = arith.constant 0 : index
    %c0_6 = arith.constant 0 : index
    %5 = vector.load %arg6[%c0_4, %c0_5, %c0_6] : memref<4x256x256xbf16, #tpu.memory_space<vmem>>, vector<1x256x256xbf16>
    %6 = vector.shape_cast %5 : vector<1x256x256xbf16> to vector<256x256xbf16>
    %cst_7 = arith.constant dense<0.000000e+00> : vector<64x256xf32>
    %7 = tpu.matmul %4, %6, %cst_7 {dimension_numbers = #tpu.dot_dimension_numbers<[1], [0], [0], [1], [0, 0, 1, 1], [], []>} : vector<64x256xbf16>, vector<256x256xbf16>, vector<64x256xf32> -> vector<64x256xf32>
    %c1 = arith.constant 1 : index
    %c0_8 = arith.constant 0 : index
    %c0_9 = arith.constant 0 : index
    %8 = vector.load %arg1[%c1, %c0_8, %c0_9] : memref<4x64x128xbf16, #tpu.memory_space<vmem>>, vector<1x64x128xbf16>
    %9 = vector.shape_cast %8 : vector<1x64x128xbf16> to vector<64x128xbf16>
    %cst_10 = arith.constant dense<0.000000e+00> : vector<64x256xf32>
    %10 = tpu.matmul %9, %0, %cst_10 {dimension_numbers = #tpu.dot_dimension_numbers<[1], [0], [0], [1], [0, 0, 1, 1], [], []>} : vector<64x128xbf16>, vector<128x256xbf16>, vector<64x256xf32> -> vector<64x256xf32>
    %11 = arith.truncf %10 : vector<64x256xf32> to vector<64x256xbf16>
    %c1_11 = arith.constant 1 : index
    %c0_12 = arith.constant 0 : index
    %c0_13 = arith.constant 0 : index
    %12 = vector.load %arg6[%c1_11, %c0_12, %c0_13] : memref<4x256x256xbf16, #tpu.memory_space<vmem>>, vector<1x256x256xbf16>
    %13 = vector.shape_cast %12 : vector<1x256x256xbf16> to vector<256x256xbf16>
    %cst_14 = arith.constant dense<0.000000e+00> : vector<64x256xf32>
    %14 = tpu.matmul %11, %13, %cst_14 {dimension_numbers = #tpu.dot_dimension_numbers<[1], [0], [0], [1], [0, 0, 1, 1], [], []>} : vector<64x256xbf16>, vector<256x256xbf16>, vector<64x256xf32> -> vector<64x256xf32>
    %15 = arith.addf %7, %14 : vector<64x256xf32>
    %c2 = arith.constant 2 : index
    %c0_15 = arith.constant 0 : index
    %c0_16 = arith.constant 0 : index
    %16 = vector.load %arg1[%c2, %c0_15, %c0_16] : memref<4x64x128xbf16, #tpu.memory_space<vmem>>, vector<1x64x128xbf16>
    %17 = vector.shape_cast %16 : vector<1x64x128xbf16> to vector<64x128xbf16>
    %cst_17 = arith.constant dense<0.000000e+00> : vector<64x256xf32>
    %18 = tpu.matmul %17, %0, %cst_17 {dimension_numbers = #tpu.dot_dimension_numbers<[1], [0], [0], [1], [0, 0, 1, 1], [], []>} : vector<64x128xbf16>, vector<128x256xbf16>, vector<64x256xf32> -> vector<64x256xf32>
    %19 = arith.truncf %18 : vector<64x256xf32> to vector<64x256xbf16>
    %c2_18 = arith.constant 2 : index
    %c0_19 = arith.constant 0 : index
    %c0_20 = arith.constant 0 : index
    %20 = vector.load %arg6[%c2_18, %c0_19, %c0_20] : memref<4x256x256xbf16, #tpu.memory_space<vmem>>, vector<1x256x256xbf16>
    %21 = vector.shape_cast %20 : vector<1x256x256xbf16> to vector<256x256xbf16>
    %cst_21 = arith.constant dense<0.000000e+00> : vector<64x256xf32>
    %22 = tpu.matmul %19, %21, %cst_21 {dimension_numbers = #tpu.dot_dimension_numbers<[1], [0], [0], [1], [0, 0, 1, 1], [], []>} : vector<64x256xbf16>, vector<256x256xbf16>, vector<64x256xf32> -> vector<64x256xf32>
    %23 = arith.addf %15, %22 : vector<64x256xf32>
    %c3 = arith.constant 3 : index
    %c0_22 = arith.constant 0 : index
    %c0_23 = arith.constant 0 : index
    %24 = vector.load %arg1[%c3, %c0_22, %c0_23] : memref<4x64x128xbf16, #tpu.memory_space<vmem>>, vector<1x64x128xbf16>
    %25 = vector.shape_cast %24 : vector<1x64x128xbf16> to vector<64x128xbf16>
    %cst_24 = arith.constant dense<0.000000e+00> : vector<64x256xf32>
    %26 = tpu.matmul %25, %0, %cst_24 {dimension_numbers = #tpu.dot_dimension_numbers<[1], [0], [0], [1], [0, 0, 1, 1], [], []>} : vector<64x128xbf16>, vector<128x256xbf16>, vector<64x256xf32> -> vector<64x256xf32>
    %27 = arith.truncf %26 : vector<64x256xf32> to vector<64x256xbf16>
    %c3_25 = arith.constant 3 : index
    %c0_26 = arith.constant 0 : index
    %c0_27 = arith.constant 0 : index
    %28 = vector.load %arg6[%c3_25, %c0_26, %c0_27] : memref<4x256x256xbf16, #tpu.memory_space<vmem>>, vector<1x256x256xbf16>
    %29 = vector.shape_cast %28 : vector<1x256x256xbf16> to vector<256x256xbf16>
    %cst_28 = arith.constant dense<0.000000e+00> : vector<64x256xf32>
    %30 = tpu.matmul %27, %29, %cst_28 {dimension_numbers = #tpu.dot_dimension_numbers<[1], [0], [0], [1], [0, 0, 1, 1], [], []>} : vector<64x256xbf16>, vector<256x256xbf16>, vector<64x256xf32> -> vector<64x256xf32>
    %31 = arith.addf %23, %30 : vector<64x256xf32>
    %cst_29 = arith.constant 0.000000e+00 : f32
    %32 = vector.broadcast %cst_29 : f32 to vector<64x256xf32>
    %33 = arith.cmpf oge, %31, %32 : vector<64x256xf32>
    %cst_30 = arith.constant 2.000000e-01 : f32
    %34 = vector.broadcast %cst_30 : f32 to vector<64x256xf32>
    %35 = arith.mulf %34, %31 : vector<64x256xf32>
    %36 = arith.select %33, %31, %35 : vector<64x256xi1>, vector<64x256xf32>
    %37 = arith.truncf %36 : vector<64x256xf32> to vector<64x256xbf16>
    %c0_31 = arith.constant 0 : index
    %c0_32 = arith.constant 0 : index
    %c0_33 = arith.constant 0 : index
    %38 = vector.load %arg2[%c0_31, %c0_32, %c0_33] : memref<4x32x64xbf16, #tpu.memory_space<vmem>>, vector<1x32x64xbf16>
    %39 = vector.shape_cast %38 : vector<1x32x64xbf16> to vector<32x64xbf16>
    %cst_34 = arith.constant dense<0.000000e+00> : vector<32x256xf32>
    %40 = tpu.matmul %39, %37, %cst_34 {dimension_numbers = #tpu.dot_dimension_numbers<[1], [0], [0], [1], [0, 0, 1, 1], [], []>} : vector<32x64xbf16>, vector<64x256xbf16>, vector<32x256xf32> -> vector<32x256xf32>
    %41 = arith.truncf %40 : vector<32x256xf32> to vector<32x256xbf16>
    %c0_35 = arith.constant 0 : index
    %c0_36 = arith.constant 0 : index
    %c0_37 = arith.constant 0 : index
    %42 = vector.load %arg7[%c0_35, %c0_36, %c0_37] : memref<4x256x256xbf16, #tpu.memory_space<vmem>>, vector<1x256x256xbf16>
    %43 = vector.shape_cast %42 : vector<1x256x256xbf16> to vector<256x256xbf16>
    %cst_38 = arith.constant dense<0.000000e+00> : vector<32x256xf32>
    %44 = tpu.matmul %41, %43, %cst_38 {dimension_numbers = #tpu.dot_dimension_numbers<[1], [0], [0], [1], [0, 0, 1, 1], [], []>} : vector<32x256xbf16>, vector<256x256xbf16>, vector<32x256xf32> -> vector<32x256xf32>
    %c1_39 = arith.constant 1 : index
    %c0_40 = arith.constant 0 : index
    %c0_41 = arith.constant 0 : index
    %45 = vector.load %arg2[%c1_39, %c0_40, %c0_41] : memref<4x32x64xbf16, #tpu.memory_space<vmem>>, vector<1x32x64xbf16>
    %46 = vector.shape_cast %45 : vector<1x32x64xbf16> to vector<32x64xbf16>
    %cst_42 = arith.constant dense<0.000000e+00> : vector<32x256xf32>
    %47 = tpu.matmul %46, %37, %cst_42 {dimension_numbers = #tpu.dot_dimension_numbers<[1], [0], [0], [1], [0, 0, 1, 1], [], []>} : vector<32x64xbf16>, vector<64x256xbf16>, vector<32x256xf32> -> vector<32x256xf32>
    %48 = arith.truncf %47 : vector<32x256xf32> to vector<32x256xbf16>
    %c1_43 = arith.constant 1 : index
    %c0_44 = arith.constant 0 : index
    %c0_45 = arith.constant 0 : index
    %49 = vector.load %arg7[%c1_43, %c0_44, %c0_45] : memref<4x256x256xbf16, #tpu.memory_space<vmem>>, vector<1x256x256xbf16>
    %50 = vector.shape_cast %49 : vector<1x256x256xbf16> to vector<256x256xbf16>
    %cst_46 = arith.constant dense<0.000000e+00> : vector<32x256xf32>
    %51 = tpu.matmul %48, %50, %cst_46 {dimension_numbers = #tpu.dot_dimension_numbers<[1], [0], [0], [1], [0, 0, 1, 1], [], []>} : vector<32x256xbf16>, vector<256x256xbf16>, vector<32x256xf32> -> vector<32x256xf32>
    %52 = arith.addf %44, %51 : vector<32x256xf32>
    %c2_47 = arith.constant 2 : index
    %c0_48 = arith.constant 0 : index
    %c0_49 = arith.constant 0 : index
    %53 = vector.load %arg2[%c2_47, %c0_48, %c0_49] : memref<4x32x64xbf16, #tpu.memory_space<vmem>>, vector<1x32x64xbf16>
    %54 = vector.shape_cast %53 : vector<1x32x64xbf16> to vector<32x64xbf16>
    %cst_50 = arith.constant dense<0.000000e+00> : vector<32x256xf32>
    %55 = tpu.matmul %54, %37, %cst_50 {dimension_numbers = #tpu.dot_dimension_numbers<[1], [0], [0], [1], [0, 0, 1, 1], [], []>} : vector<32x64xbf16>, vector<64x256xbf16>, vector<32x256xf32> -> vector<32x256xf32>
    %56 = arith.truncf %55 : vector<32x256xf32> to vector<32x256xbf16>
    %c2_51 = arith.constant 2 : index
    %c0_52 = arith.constant 0 : index
    %c0_53 = arith.constant 0 : index
    %57 = vector.load %arg7[%c2_51, %c0_52, %c0_53] : memref<4x256x256xbf16, #tpu.memory_space<vmem>>, vector<1x256x256xbf16>
    %58 = vector.shape_cast %57 : vector<1x256x256xbf16> to vector<256x256xbf16>
    %cst_54 = arith.constant dense<0.000000e+00> : vector<32x256xf32>
    %59 = tpu.matmul %56, %58, %cst_54 {dimension_numbers = #tpu.dot_dimension_numbers<[1], [0], [0], [1], [0, 0, 1, 1], [], []>} : vector<32x256xbf16>, vector<256x256xbf16>, vector<32x256xf32> -> vector<32x256xf32>
    %60 = arith.addf %52, %59 : vector<32x256xf32>
    %c3_55 = arith.constant 3 : index
    %c0_56 = arith.constant 0 : index
    %c0_57 = arith.constant 0 : index
    %61 = vector.load %arg2[%c3_55, %c0_56, %c0_57] : memref<4x32x64xbf16, #tpu.memory_space<vmem>>, vector<1x32x64xbf16>
    %62 = vector.shape_cast %61 : vector<1x32x64xbf16> to vector<32x64xbf16>
    %cst_58 = arith.constant dense<0.000000e+00> : vector<32x256xf32>
    %63 = tpu.matmul %62, %37, %cst_58 {dimension_numbers = #tpu.dot_dimension_numbers<[1], [0], [0], [1], [0, 0, 1, 1], [], []>} : vector<32x64xbf16>, vector<64x256xbf16>, vector<32x256xf32> -> vector<32x256xf32>
    %64 = arith.truncf %63 : vector<32x256xf32> to vector<32x256xbf16>
    %c3_59 = arith.constant 3 : index
    %c0_60 = arith.constant 0 : index
    %c0_61 = arith.constant 0 : index
    %65 = vector.load %arg7[%c3_59, %c0_60, %c0_61] : memref<4x256x256xbf16, #tpu.memory_space<vmem>>, vector<1x256x256xbf16>
    %66 = vector.shape_cast %65 : vector<1x256x256xbf16> to vector<256x256xbf16>
    %cst_62 = arith.constant dense<0.000000e+00> : vector<32x256xf32>
    %67 = tpu.matmul %64, %66, %cst_62 {dimension_numbers = #tpu.dot_dimension_numbers<[1], [0], [0], [1], [0, 0, 1, 1], [], []>} : vector<32x256xbf16>, vector<256x256xbf16>, vector<32x256xf32> -> vector<32x256xf32>
    %68 = arith.addf %60, %67 : vector<32x256xf32>
    %cst_63 = arith.constant dense<0.000000e+00> : vector<256xf32>
    %69 = vector.multi_reduction <add>, %68, %cst_63 [0] : vector<32x256xf32> to vector<256xf32>
    %70 = vector.shape_cast %69 : vector<256xf32> to vector<1x256xf32>
    %c0_64 = arith.constant 0 : index
    %c0_65 = arith.constant 0 : index
    %c0_66 = arith.constant 0 : index
    %71 = vector.load %arg11[%c0_64, %c0_65, %c0_66] : memref<3x256x256xf32, #tpu.memory_space<vmem>>, vector<1x256x256xf32>
    %72 = vector.shape_cast %71 : vector<1x256x256xf32> to vector<256x256xf32>
    %cst_67 = arith.constant dense<0.000000e+00> : vector<1x256xf32>
    %73 = tpu.matmul %70, %72, %cst_67 {dimension_numbers = #tpu.dot_dimension_numbers<[1], [0], [0], [1], [0, 0, 1, 1], [], []>} : vector<1x256xf32>, vector<256x256xf32>, vector<1x256xf32> -> vector<1x256xf32>
    %cst_68 = arith.constant 0.001953125 : f32
    %74 = vector.broadcast %cst_68 : f32 to vector<1x256xf32>
    %75 = arith.mulf %73, %74 : vector<1x256xf32>
    %76 = vector.broadcast %75 : vector<1x256xf32> to vector<32x256xf32>
    %77 = arith.subf %68, %76 : vector<32x256xf32>
    %78 = arith.mulf %77, %77 : vector<32x256xf32>
    %cst_69 = arith.constant dense<0.000000e+00> : vector<256xf32>
    %79 = vector.multi_reduction <add>, %78, %cst_69 [0] : vector<32x256xf32> to vector<256xf32>
    %80 = vector.shape_cast %79 : vector<256xf32> to vector<1x256xf32>
    %c0_70 = arith.constant 0 : index
    %c0_71 = arith.constant 0 : index
    %c0_72 = arith.constant 0 : index
    %81 = vector.load %arg11[%c0_70, %c0_71, %c0_72] : memref<3x256x256xf32, #tpu.memory_space<vmem>>, vector<1x256x256xf32>
    %82 = vector.shape_cast %81 : vector<1x256x256xf32> to vector<256x256xf32>
    %cst_73 = arith.constant dense<0.000000e+00> : vector<1x256xf32>
    %83 = tpu.matmul %80, %82, %cst_73 {dimension_numbers = #tpu.dot_dimension_numbers<[1], [0], [0], [1], [0, 0, 1, 1], [], []>} : vector<1x256xf32>, vector<256x256xf32>, vector<1x256xf32> -> vector<1x256xf32>
    %cst_74 = arith.constant 0.001953125 : f32
    %84 = vector.broadcast %cst_74 : f32 to vector<1x256xf32>
    %85 = arith.mulf %83, %84 : vector<1x256xf32>
    %cst_75 = arith.constant 9.99999974E-6 : f32
    %86 = vector.broadcast %cst_75 : f32 to vector<1x256xf32>
    %87 = arith.addf %85, %86 : vector<1x256xf32>
    %88 = math.rsqrt %87 : vector<1x256xf32>
    %c0_76 = arith.constant 0 : index
    %c0_77 = arith.constant 0 : index
    %c0_78 = arith.constant 0 : index
    %89 = vector.load %arg12[%c0_76, %c0_77, %c0_78] : memref<3x1x256xf32, #tpu.memory_space<vmem>>, vector<1x1x256xf32>
    %90 = vector.shape_cast %89 : vector<1x1x256xf32> to vector<1x256xf32>
    %91 = arith.mulf %90, %88 : vector<1x256xf32>
    %92 = vector.broadcast %91 : vector<1x256xf32> to vector<32x256xf32>
    %93 = arith.mulf %77, %92 : vector<32x256xf32>
    %c0_79 = arith.constant 0 : index
    %c0_80 = arith.constant 0 : index
    %c0_81 = arith.constant 0 : index
    %94 = vector.load %arg13[%c0_79, %c0_80, %c0_81] : memref<3x1x256xf32, #tpu.memory_space<vmem>>, vector<1x1x256xf32>
    %95 = vector.shape_cast %94 : vector<1x1x256xf32> to vector<1x256xf32>
    %96 = vector.broadcast %95 : vector<1x256xf32> to vector<32x256xf32>
    %97 = arith.addf %93, %96 : vector<32x256xf32>
    %cst_82 = arith.constant 0.000000e+00 : f32
    %98 = vector.broadcast %cst_82 : f32 to vector<32x256xf32>
    %99 = arith.cmpf oge, %97, %98 : vector<32x256xf32>
    %cst_83 = arith.constant 2.000000e-01 : f32
    %100 = vector.broadcast %cst_83 : f32 to vector<32x256xf32>
    %101 = arith.mulf %100, %97 : vector<32x256xf32>
    %102 = arith.select %99, %97, %101 : vector<32x256xi1>, vector<32x256xf32>
    %103 = arith.truncf %102 : vector<32x256xf32> to vector<32x256xbf16>
    %c0_84 = arith.constant 0 : index
    %c0_85 = arith.constant 0 : index
    %c0_86 = arith.constant 0 : index
    %104 = vector.load %arg3[%c0_84, %c0_85, %c0_86] : memref<4x16x32xbf16, #tpu.memory_space<vmem>>, vector<1x16x32xbf16>
    %105 = vector.shape_cast %104 : vector<1x16x32xbf16> to vector<16x32xbf16>
    %cst_87 = arith.constant dense<0.000000e+00> : vector<16x256xf32>
    %106 = tpu.matmul %105, %103, %cst_87 {dimension_numbers = #tpu.dot_dimension_numbers<[1], [0], [0], [1], [0, 0, 1, 1], [], []>} : vector<16x32xbf16>, vector<32x256xbf16>, vector<16x256xf32> -> vector<16x256xf32>
    %107 = arith.truncf %106 : vector<16x256xf32> to vector<16x256xbf16>
    %c0_88 = arith.constant 0 : index
    %c0_89 = arith.constant 0 : index
    %c0_90 = arith.constant 0 : index
    %108 = vector.load %arg8[%c0_88, %c0_89, %c0_90] : memref<4x256x256xbf16, #tpu.memory_space<vmem>>, vector<1x256x256xbf16>
    %109 = vector.shape_cast %108 : vector<1x256x256xbf16> to vector<256x256xbf16>
    %cst_91 = arith.constant dense<0.000000e+00> : vector<16x256xf32>
    %110 = tpu.matmul %107, %109, %cst_91 {dimension_numbers = #tpu.dot_dimension_numbers<[1], [0], [0], [1], [0, 0, 1, 1], [], []>} : vector<16x256xbf16>, vector<256x256xbf16>, vector<16x256xf32> -> vector<16x256xf32>
    %c1_92 = arith.constant 1 : index
    %c0_93 = arith.constant 0 : index
    %c0_94 = arith.constant 0 : index
    %111 = vector.load %arg3[%c1_92, %c0_93, %c0_94] : memref<4x16x32xbf16, #tpu.memory_space<vmem>>, vector<1x16x32xbf16>
    %112 = vector.shape_cast %111 : vector<1x16x32xbf16> to vector<16x32xbf16>
    %cst_95 = arith.constant dense<0.000000e+00> : vector<16x256xf32>
    %113 = tpu.matmul %112, %103, %cst_95 {dimension_numbers = #tpu.dot_dimension_numbers<[1], [0], [0], [1], [0, 0, 1, 1], [], []>} : vector<16x32xbf16>, vector<32x256xbf16>, vector<16x256xf32> -> vector<16x256xf32>
    %114 = arith.truncf %113 : vector<16x256xf32> to vector<16x256xbf16>
    %c1_96 = arith.constant 1 : index
    %c0_97 = arith.constant 0 : index
    %c0_98 = arith.constant 0 : index
    %115 = vector.load %arg8[%c1_96, %c0_97, %c0_98] : memref<4x256x256xbf16, #tpu.memory_space<vmem>>, vector<1x256x256xbf16>
    %116 = vector.shape_cast %115 : vector<1x256x256xbf16> to vector<256x256xbf16>
    %cst_99 = arith.constant dense<0.000000e+00> : vector<16x256xf32>
    %117 = tpu.matmul %114, %116, %cst_99 {dimension_numbers = #tpu.dot_dimension_numbers<[1], [0], [0], [1], [0, 0, 1, 1], [], []>} : vector<16x256xbf16>, vector<256x256xbf16>, vector<16x256xf32> -> vector<16x256xf32>
    %118 = arith.addf %110, %117 : vector<16x256xf32>
    %c2_100 = arith.constant 2 : index
    %c0_101 = arith.constant 0 : index
    %c0_102 = arith.constant 0 : index
    %119 = vector.load %arg3[%c2_100, %c0_101, %c0_102] : memref<4x16x32xbf16, #tpu.memory_space<vmem>>, vector<1x16x32xbf16>
    %120 = vector.shape_cast %119 : vector<1x16x32xbf16> to vector<16x32xbf16>
    %cst_103 = arith.constant dense<0.000000e+00> : vector<16x256xf32>
    %121 = tpu.matmul %120, %103, %cst_103 {dimension_numbers = #tpu.dot_dimension_numbers<[1], [0], [0], [1], [0, 0, 1, 1], [], []>} : vector<16x32xbf16>, vector<32x256xbf16>, vector<16x256xf32> -> vector<16x256xf32>
    %122 = arith.truncf %121 : vector<16x256xf32> to vector<16x256xbf16>
    %c2_104 = arith.constant 2 : index
    %c0_105 = arith.constant 0 : index
    %c0_106 = arith.constant 0 : index
    %123 = vector.load %arg8[%c2_104, %c0_105, %c0_106] : memref<4x256x256xbf16, #tpu.memory_space<vmem>>, vector<1x256x256xbf16>
    %124 = vector.shape_cast %123 : vector<1x256x256xbf16> to vector<256x256xbf16>
    %cst_107 = arith.constant dense<0.000000e+00> : vector<16x256xf32>
    %125 = tpu.matmul %122, %124, %cst_107 {dimension_numbers = #tpu.dot_dimension_numbers<[1], [0], [0], [1], [0, 0, 1, 1], [], []>} : vector<16x256xbf16>, vector<256x256xbf16>, vector<16x256xf32> -> vector<16x256xf32>
    %126 = arith.addf %118, %125 : vector<16x256xf32>
    %c3_108 = arith.constant 3 : index
    %c0_109 = arith.constant 0 : index
    %c0_110 = arith.constant 0 : index
    %127 = vector.load %arg3[%c3_108, %c0_109, %c0_110] : memref<4x16x32xbf16, #tpu.memory_space<vmem>>, vector<1x16x32xbf16>
    %128 = vector.shape_cast %127 : vector<1x16x32xbf16> to vector<16x32xbf16>
    %cst_111 = arith.constant dense<0.000000e+00> : vector<16x256xf32>
    %129 = tpu.matmul %128, %103, %cst_111 {dimension_numbers = #tpu.dot_dimension_numbers<[1], [0], [0], [1], [0, 0, 1, 1], [], []>} : vector<16x32xbf16>, vector<32x256xbf16>, vector<16x256xf32> -> vector<16x256xf32>
    %130 = arith.truncf %129 : vector<16x256xf32> to vector<16x256xbf16>
    %c3_112 = arith.constant 3 : index
    %c0_113 = arith.constant 0 : index
    %c0_114 = arith.constant 0 : index
    %131 = vector.load %arg8[%c3_112, %c0_113, %c0_114] : memref<4x256x256xbf16, #tpu.memory_space<vmem>>, vector<1x256x256xbf16>
    %132 = vector.shape_cast %131 : vector<1x256x256xbf16> to vector<256x256xbf16>
    %cst_115 = arith.constant dense<0.000000e+00> : vector<16x256xf32>
    %133 = tpu.matmul %130, %132, %cst_115 {dimension_numbers = #tpu.dot_dimension_numbers<[1], [0], [0], [1], [0, 0, 1, 1], [], []>} : vector<16x256xbf16>, vector<256x256xbf16>, vector<16x256xf32> -> vector<16x256xf32>
    %134 = arith.addf %126, %133 : vector<16x256xf32>
    %cst_116 = arith.constant dense<0.000000e+00> : vector<256xf32>
    %135 = vector.multi_reduction <add>, %134, %cst_116 [0] : vector<16x256xf32> to vector<256xf32>
    %136 = vector.shape_cast %135 : vector<256xf32> to vector<1x256xf32>
    %c1_117 = arith.constant 1 : index
    %c0_118 = arith.constant 0 : index
    %c0_119 = arith.constant 0 : index
    %137 = vector.load %arg11[%c1_117, %c0_118, %c0_119] : memref<3x256x256xf32, #tpu.memory_space<vmem>>, vector<1x256x256xf32>
    %138 = vector.shape_cast %137 : vector<1x256x256xf32> to vector<256x256xf32>
    %cst_120 = arith.constant dense<0.000000e+00> : vector<1x256xf32>
    %139 = tpu.matmul %136, %138, %cst_120 {dimension_numbers = #tpu.dot_dimension_numbers<[1], [0], [0], [1], [0, 0, 1, 1], [], []>} : vector<1x256xf32>, vector<256x256xf32>, vector<1x256xf32> -> vector<1x256xf32>
    %cst_121 = arith.constant 7.812500e-03 : f32
    %140 = vector.broadcast %cst_121 : f32 to vector<1x256xf32>
    %141 = arith.mulf %139, %140 : vector<1x256xf32>
    %142 = vector.broadcast %141 : vector<1x256xf32> to vector<16x256xf32>
    %143 = arith.subf %134, %142 : vector<16x256xf32>
    %144 = arith.mulf %143, %143 : vector<16x256xf32>
    %cst_122 = arith.constant dense<0.000000e+00> : vector<256xf32>
    %145 = vector.multi_reduction <add>, %144, %cst_122 [0] : vector<16x256xf32> to vector<256xf32>
    %146 = vector.shape_cast %145 : vector<256xf32> to vector<1x256xf32>
    %c1_123 = arith.constant 1 : index
    %c0_124 = arith.constant 0 : index
    %c0_125 = arith.constant 0 : index
    %147 = vector.load %arg11[%c1_123, %c0_124, %c0_125] : memref<3x256x256xf32, #tpu.memory_space<vmem>>, vector<1x256x256xf32>
    %148 = vector.shape_cast %147 : vector<1x256x256xf32> to vector<256x256xf32>
    %cst_126 = arith.constant dense<0.000000e+00> : vector<1x256xf32>
    %149 = tpu.matmul %146, %148, %cst_126 {dimension_numbers = #tpu.dot_dimension_numbers<[1], [0], [0], [1], [0, 0, 1, 1], [], []>} : vector<1x256xf32>, vector<256x256xf32>, vector<1x256xf32> -> vector<1x256xf32>
    %cst_127 = arith.constant 7.812500e-03 : f32
    %150 = vector.broadcast %cst_127 : f32 to vector<1x256xf32>
    %151 = arith.mulf %149, %150 : vector<1x256xf32>
    %cst_128 = arith.constant 9.99999974E-6 : f32
    %152 = vector.broadcast %cst_128 : f32 to vector<1x256xf32>
    %153 = arith.addf %151, %152 : vector<1x256xf32>
    %154 = math.rsqrt %153 : vector<1x256xf32>
    %c1_129 = arith.constant 1 : index
    %c0_130 = arith.constant 0 : index
    %c0_131 = arith.constant 0 : index
    %155 = vector.load %arg12[%c1_129, %c0_130, %c0_131] : memref<3x1x256xf32, #tpu.memory_space<vmem>>, vector<1x1x256xf32>
    %156 = vector.shape_cast %155 : vector<1x1x256xf32> to vector<1x256xf32>
    %157 = arith.mulf %156, %154 : vector<1x256xf32>
    %158 = vector.broadcast %157 : vector<1x256xf32> to vector<16x256xf32>
    %159 = arith.mulf %143, %158 : vector<16x256xf32>
    %c1_132 = arith.constant 1 : index
    %c0_133 = arith.constant 0 : index
    %c0_134 = arith.constant 0 : index
    %160 = vector.load %arg13[%c1_132, %c0_133, %c0_134] : memref<3x1x256xf32, #tpu.memory_space<vmem>>, vector<1x1x256xf32>
    %161 = vector.shape_cast %160 : vector<1x1x256xf32> to vector<1x256xf32>
    %162 = vector.broadcast %161 : vector<1x256xf32> to vector<16x256xf32>
    %163 = arith.addf %159, %162 : vector<16x256xf32>
    %cst_135 = arith.constant 0.000000e+00 : f32
    %164 = vector.broadcast %cst_135 : f32 to vector<16x256xf32>
    %165 = arith.cmpf oge, %163, %164 : vector<16x256xf32>
    %cst_136 = arith.constant 2.000000e-01 : f32
    %166 = vector.broadcast %cst_136 : f32 to vector<16x256xf32>
    %167 = arith.mulf %166, %163 : vector<16x256xf32>
    %168 = arith.select %165, %163, %167 : vector<16x256xi1>, vector<16x256xf32>
    %169 = arith.truncf %168 : vector<16x256xf32> to vector<16x256xbf16>
    %c0_137 = arith.constant 0 : index
    %c0_138 = arith.constant 0 : index
    %c0_139 = arith.constant 0 : index
    %170 = vector.load %arg4[%c0_137, %c0_138, %c0_139] : memref<4x8x16xbf16, #tpu.memory_space<vmem>>, vector<1x8x16xbf16>
    %171 = vector.shape_cast %170 : vector<1x8x16xbf16> to vector<8x16xbf16>
    %cst_140 = arith.constant dense<0.000000e+00> : vector<8x256xf32>
    %172 = tpu.matmul %171, %169, %cst_140 {dimension_numbers = #tpu.dot_dimension_numbers<[1], [0], [0], [1], [0, 0, 1, 1], [], []>} : vector<8x16xbf16>, vector<16x256xbf16>, vector<8x256xf32> -> vector<8x256xf32>
    %173 = arith.truncf %172 : vector<8x256xf32> to vector<8x256xbf16>
    %c0_141 = arith.constant 0 : index
    %c0_142 = arith.constant 0 : index
    %c0_143 = arith.constant 0 : index
    %174 = vector.load %arg9[%c0_141, %c0_142, %c0_143] : memref<4x256x256xbf16, #tpu.memory_space<vmem>>, vector<1x256x256xbf16>
    %175 = vector.shape_cast %174 : vector<1x256x256xbf16> to vector<256x256xbf16>
    %cst_144 = arith.constant dense<0.000000e+00> : vector<8x256xf32>
    %176 = tpu.matmul %173, %175, %cst_144 {dimension_numbers = #tpu.dot_dimension_numbers<[1], [0], [0], [1], [0, 0, 1, 1], [], []>} : vector<8x256xbf16>, vector<256x256xbf16>, vector<8x256xf32> -> vector<8x256xf32>
    %c1_145 = arith.constant 1 : index
    %c0_146 = arith.constant 0 : index
    %c0_147 = arith.constant 0 : index
    %177 = vector.load %arg4[%c1_145, %c0_146, %c0_147] : memref<4x8x16xbf16, #tpu.memory_space<vmem>>, vector<1x8x16xbf16>
    %178 = vector.shape_cast %177 : vector<1x8x16xbf16> to vector<8x16xbf16>
    %cst_148 = arith.constant dense<0.000000e+00> : vector<8x256xf32>
    %179 = tpu.matmul %178, %169, %cst_148 {dimension_numbers = #tpu.dot_dimension_numbers<[1], [0], [0], [1], [0, 0, 1, 1], [], []>} : vector<8x16xbf16>, vector<16x256xbf16>, vector<8x256xf32> -> vector<8x256xf32>
    %180 = arith.truncf %179 : vector<8x256xf32> to vector<8x256xbf16>
    %c1_149 = arith.constant 1 : index
    %c0_150 = arith.constant 0 : index
    %c0_151 = arith.constant 0 : index
    %181 = vector.load %arg9[%c1_149, %c0_150, %c0_151] : memref<4x256x256xbf16, #tpu.memory_space<vmem>>, vector<1x256x256xbf16>
    %182 = vector.shape_cast %181 : vector<1x256x256xbf16> to vector<256x256xbf16>
    %cst_152 = arith.constant dense<0.000000e+00> : vector<8x256xf32>
    %183 = tpu.matmul %180, %182, %cst_152 {dimension_numbers = #tpu.dot_dimension_numbers<[1], [0], [0], [1], [0, 0, 1, 1], [], []>} : vector<8x256xbf16>, vector<256x256xbf16>, vector<8x256xf32> -> vector<8x256xf32>
    %184 = arith.addf %176, %183 : vector<8x256xf32>
    %c2_153 = arith.constant 2 : index
    %c0_154 = arith.constant 0 : index
    %c0_155 = arith.constant 0 : index
    %185 = vector.load %arg4[%c2_153, %c0_154, %c0_155] : memref<4x8x16xbf16, #tpu.memory_space<vmem>>, vector<1x8x16xbf16>
    %186 = vector.shape_cast %185 : vector<1x8x16xbf16> to vector<8x16xbf16>
    %cst_156 = arith.constant dense<0.000000e+00> : vector<8x256xf32>
    %187 = tpu.matmul %186, %169, %cst_156 {dimension_numbers = #tpu.dot_dimension_numbers<[1], [0], [0], [1], [0, 0, 1, 1], [], []>} : vector<8x16xbf16>, vector<16x256xbf16>, vector<8x256xf32> -> vector<8x256xf32>
    %188 = arith.truncf %187 : vector<8x256xf32> to vector<8x256xbf16>
    %c2_157 = arith.constant 2 : index
    %c0_158 = arith.constant 0 : index
    %c0_159 = arith.constant 0 : index
    %189 = vector.load %arg9[%c2_157, %c0_158, %c0_159] : memref<4x256x256xbf16, #tpu.memory_space<vmem>>, vector<1x256x256xbf16>
    %190 = vector.shape_cast %189 : vector<1x256x256xbf16> to vector<256x256xbf16>
    %cst_160 = arith.constant dense<0.000000e+00> : vector<8x256xf32>
    %191 = tpu.matmul %188, %190, %cst_160 {dimension_numbers = #tpu.dot_dimension_numbers<[1], [0], [0], [1], [0, 0, 1, 1], [], []>} : vector<8x256xbf16>, vector<256x256xbf16>, vector<8x256xf32> -> vector<8x256xf32>
    %192 = arith.addf %184, %191 : vector<8x256xf32>
    %c3_161 = arith.constant 3 : index
    %c0_162 = arith.constant 0 : index
    %c0_163 = arith.constant 0 : index
    %193 = vector.load %arg4[%c3_161, %c0_162, %c0_163] : memref<4x8x16xbf16, #tpu.memory_space<vmem>>, vector<1x8x16xbf16>
    %194 = vector.shape_cast %193 : vector<1x8x16xbf16> to vector<8x16xbf16>
    %cst_164 = arith.constant dense<0.000000e+00> : vector<8x256xf32>
    %195 = tpu.matmul %194, %169, %cst_164 {dimension_numbers = #tpu.dot_dimension_numbers<[1], [0], [0], [1], [0, 0, 1, 1], [], []>} : vector<8x16xbf16>, vector<16x256xbf16>, vector<8x256xf32> -> vector<8x256xf32>
    %196 = arith.truncf %195 : vector<8x256xf32> to vector<8x256xbf16>
    %c3_165 = arith.constant 3 : index
    %c0_166 = arith.constant 0 : index
    %c0_167 = arith.constant 0 : index
    %197 = vector.load %arg9[%c3_165, %c0_166, %c0_167] : memref<4x256x256xbf16, #tpu.memory_space<vmem>>, vector<1x256x256xbf16>
    %198 = vector.shape_cast %197 : vector<1x256x256xbf16> to vector<256x256xbf16>
    %cst_168 = arith.constant dense<0.000000e+00> : vector<8x256xf32>
    %199 = tpu.matmul %196, %198, %cst_168 {dimension_numbers = #tpu.dot_dimension_numbers<[1], [0], [0], [1], [0, 0, 1, 1], [], []>} : vector<8x256xbf16>, vector<256x256xbf16>, vector<8x256xf32> -> vector<8x256xf32>
    %200 = arith.addf %192, %199 : vector<8x256xf32>
    %cst_169 = arith.constant dense<0.000000e+00> : vector<256xf32>
    %201 = vector.multi_reduction <add>, %200, %cst_169 [0] : vector<8x256xf32> to vector<256xf32>
    %202 = vector.shape_cast %201 : vector<256xf32> to vector<1x256xf32>
    %c2_170 = arith.constant 2 : index
    %c0_171 = arith.constant 0 : index
    %c0_172 = arith.constant 0 : index
    %203 = vector.load %arg11[%c2_170, %c0_171, %c0_172] : memref<3x256x256xf32, #tpu.memory_space<vmem>>, vector<1x256x256xf32>
    %204 = vector.shape_cast %203 : vector<1x256x256xf32> to vector<256x256xf32>
    %cst_173 = arith.constant dense<0.000000e+00> : vector<1x256xf32>
    %205 = tpu.matmul %202, %204, %cst_173 {dimension_numbers = #tpu.dot_dimension_numbers<[1], [0], [0], [1], [0, 0, 1, 1], [], []>} : vector<1x256xf32>, vector<256x256xf32>, vector<1x256xf32> -> vector<1x256xf32>
    %cst_174 = arith.constant 3.125000e-02 : f32
    %206 = vector.broadcast %cst_174 : f32 to vector<1x256xf32>
    %207 = arith.mulf %205, %206 : vector<1x256xf32>
    %208 = vector.broadcast %207 : vector<1x256xf32> to vector<8x256xf32>
    %209 = arith.subf %200, %208 : vector<8x256xf32>
    %210 = arith.mulf %209, %209 : vector<8x256xf32>
    %cst_175 = arith.constant dense<0.000000e+00> : vector<256xf32>
    %211 = vector.multi_reduction <add>, %210, %cst_175 [0] : vector<8x256xf32> to vector<256xf32>
    %212 = vector.shape_cast %211 : vector<256xf32> to vector<1x256xf32>
    %c2_176 = arith.constant 2 : index
    %c0_177 = arith.constant 0 : index
    %c0_178 = arith.constant 0 : index
    %213 = vector.load %arg11[%c2_176, %c0_177, %c0_178] : memref<3x256x256xf32, #tpu.memory_space<vmem>>, vector<1x256x256xf32>
    %214 = vector.shape_cast %213 : vector<1x256x256xf32> to vector<256x256xf32>
    %cst_179 = arith.constant dense<0.000000e+00> : vector<1x256xf32>
    %215 = tpu.matmul %212, %214, %cst_179 {dimension_numbers = #tpu.dot_dimension_numbers<[1], [0], [0], [1], [0, 0, 1, 1], [], []>} : vector<1x256xf32>, vector<256x256xf32>, vector<1x256xf32> -> vector<1x256xf32>
    %cst_180 = arith.constant 3.125000e-02 : f32
    %216 = vector.broadcast %cst_180 : f32 to vector<1x256xf32>
    %217 = arith.mulf %215, %216 : vector<1x256xf32>
    %cst_181 = arith.constant 9.99999974E-6 : f32
    %218 = vector.broadcast %cst_181 : f32 to vector<1x256xf32>
    %219 = arith.addf %217, %218 : vector<1x256xf32>
    %220 = math.rsqrt %219 : vector<1x256xf32>
    %c2_182 = arith.constant 2 : index
    %c0_183 = arith.constant 0 : index
    %c0_184 = arith.constant 0 : index
    %221 = vector.load %arg12[%c2_182, %c0_183, %c0_184] : memref<3x1x256xf32, #tpu.memory_space<vmem>>, vector<1x1x256xf32>
    %222 = vector.shape_cast %221 : vector<1x1x256xf32> to vector<1x256xf32>
    %223 = arith.mulf %222, %220 : vector<1x256xf32>
    %224 = vector.broadcast %223 : vector<1x256xf32> to vector<8x256xf32>
    %225 = arith.mulf %209, %224 : vector<8x256xf32>
    %c2_185 = arith.constant 2 : index
    %c0_186 = arith.constant 0 : index
    %c0_187 = arith.constant 0 : index
    %226 = vector.load %arg13[%c2_185, %c0_186, %c0_187] : memref<3x1x256xf32, #tpu.memory_space<vmem>>, vector<1x1x256xf32>
    %227 = vector.shape_cast %226 : vector<1x1x256xf32> to vector<1x256xf32>
    %228 = vector.broadcast %227 : vector<1x256xf32> to vector<8x256xf32>
    %229 = arith.addf %225, %228 : vector<8x256xf32>
    %cst_188 = arith.constant 0.000000e+00 : f32
    %230 = vector.broadcast %cst_188 : f32 to vector<8x256xf32>
    %231 = arith.cmpf oge, %229, %230 : vector<8x256xf32>
    %cst_189 = arith.constant 2.000000e-01 : f32
    %232 = vector.broadcast %cst_189 : f32 to vector<8x256xf32>
    %233 = arith.mulf %232, %229 : vector<8x256xf32>
    %234 = arith.select %231, %229, %233 : vector<8x256xi1>, vector<8x256xf32>
    %235 = arith.truncf %234 : vector<8x256xf32> to vector<8x256xbf16>
    %c0_190 = arith.constant 0 : index
    %c0_191 = arith.constant 0 : index
    %c0_192 = arith.constant 0 : index
    %236 = vector.load %arg5[%c0_190, %c0_191, %c0_192] : memref<4x2x8xbf16, #tpu.memory_space<vmem>>, vector<1x2x8xbf16>
    %237 = vector.shape_cast %236 : vector<1x2x8xbf16> to vector<2x8xbf16>
    %cst_193 = arith.constant dense<0.000000e+00> : vector<2x256xf32>
    %238 = tpu.matmul %237, %235, %cst_193 {dimension_numbers = #tpu.dot_dimension_numbers<[1], [0], [0], [1], [0, 0, 1, 1], [], []>} : vector<2x8xbf16>, vector<8x256xbf16>, vector<2x256xf32> -> vector<2x256xf32>
    %239 = arith.truncf %238 : vector<2x256xf32> to vector<2x256xbf16>
    %c0_194 = arith.constant 0 : index
    %c0_195 = arith.constant 0 : index
    %c0_196 = arith.constant 0 : index
    %240 = vector.load %arg10[%c0_194, %c0_195, %c0_196] : memref<4x256x128xbf16, #tpu.memory_space<vmem>>, vector<1x256x128xbf16>
    %241 = vector.shape_cast %240 : vector<1x256x128xbf16> to vector<256x128xbf16>
    %cst_197 = arith.constant dense<0.000000e+00> : vector<2x128xf32>
    %242 = tpu.matmul %239, %241, %cst_197 {dimension_numbers = #tpu.dot_dimension_numbers<[1], [0], [0], [1], [0, 0, 1, 1], [], []>} : vector<2x256xbf16>, vector<256x128xbf16>, vector<2x128xf32> -> vector<2x128xf32>
    %c1_198 = arith.constant 1 : index
    %c0_199 = arith.constant 0 : index
    %c0_200 = arith.constant 0 : index
    %243 = vector.load %arg5[%c1_198, %c0_199, %c0_200] : memref<4x2x8xbf16, #tpu.memory_space<vmem>>, vector<1x2x8xbf16>
    %244 = vector.shape_cast %243 : vector<1x2x8xbf16> to vector<2x8xbf16>
    %cst_201 = arith.constant dense<0.000000e+00> : vector<2x256xf32>
    %245 = tpu.matmul %244, %235, %cst_201 {dimension_numbers = #tpu.dot_dimension_numbers<[1], [0], [0], [1], [0, 0, 1, 1], [], []>} : vector<2x8xbf16>, vector<8x256xbf16>, vector<2x256xf32> -> vector<2x256xf32>
    %246 = arith.truncf %245 : vector<2x256xf32> to vector<2x256xbf16>
    %c1_202 = arith.constant 1 : index
    %c0_203 = arith.constant 0 : index
    %c0_204 = arith.constant 0 : index
    %247 = vector.load %arg10[%c1_202, %c0_203, %c0_204] : memref<4x256x128xbf16, #tpu.memory_space<vmem>>, vector<1x256x128xbf16>
    %248 = vector.shape_cast %247 : vector<1x256x128xbf16> to vector<256x128xbf16>
    %cst_205 = arith.constant dense<0.000000e+00> : vector<2x128xf32>
    %249 = tpu.matmul %246, %248, %cst_205 {dimension_numbers = #tpu.dot_dimension_numbers<[1], [0], [0], [1], [0, 0, 1, 1], [], []>} : vector<2x256xbf16>, vector<256x128xbf16>, vector<2x128xf32> -> vector<2x128xf32>
    %250 = arith.addf %242, %249 : vector<2x128xf32>
    %c2_206 = arith.constant 2 : index
    %c0_207 = arith.constant 0 : index
    %c0_208 = arith.constant 0 : index
    %251 = vector.load %arg5[%c2_206, %c0_207, %c0_208] : memref<4x2x8xbf16, #tpu.memory_space<vmem>>, vector<1x2x8xbf16>
    %252 = vector.shape_cast %251 : vector<1x2x8xbf16> to vector<2x8xbf16>
    %cst_209 = arith.constant dense<0.000000e+00> : vector<2x256xf32>
    %253 = tpu.matmul %252, %235, %cst_209 {dimension_numbers = #tpu.dot_dimension_numbers<[1], [0], [0], [1], [0, 0, 1, 1], [], []>} : vector<2x8xbf16>, vector<8x256xbf16>, vector<2x256xf32> -> vector<2x256xf32>
    %254 = arith.truncf %253 : vector<2x256xf32> to vector<2x256xbf16>
    %c2_210 = arith.constant 2 : index
    %c0_211 = arith.constant 0 : index
    %c0_212 = arith.constant 0 : index
    %255 = vector.load %arg10[%c2_210, %c0_211, %c0_212] : memref<4x256x128xbf16, #tpu.memory_space<vmem>>, vector<1x256x128xbf16>
    %256 = vector.shape_cast %255 : vector<1x256x128xbf16> to vector<256x128xbf16>
    %cst_213 = arith.constant dense<0.000000e+00> : vector<2x128xf32>
    %257 = tpu.matmul %254, %256, %cst_213 {dimension_numbers = #tpu.dot_dimension_numbers<[1], [0], [0], [1], [0, 0, 1, 1], [], []>} : vector<2x256xbf16>, vector<256x128xbf16>, vector<2x128xf32> -> vector<2x128xf32>
    %258 = arith.addf %250, %257 : vector<2x128xf32>
    %c3_214 = arith.constant 3 : index
    %c0_215 = arith.constant 0 : index
    %c0_216 = arith.constant 0 : index
    %259 = vector.load %arg5[%c3_214, %c0_215, %c0_216] : memref<4x2x8xbf16, #tpu.memory_space<vmem>>, vector<1x2x8xbf16>
    %260 = vector.shape_cast %259 : vector<1x2x8xbf16> to vector<2x8xbf16>
    %cst_217 = arith.constant dense<0.000000e+00> : vector<2x256xf32>
    %261 = tpu.matmul %260, %235, %cst_217 {dimension_numbers = #tpu.dot_dimension_numbers<[1], [0], [0], [1], [0, 0, 1, 1], [], []>} : vector<2x8xbf16>, vector<8x256xbf16>, vector<2x256xf32> -> vector<2x256xf32>
    %262 = arith.truncf %261 : vector<2x256xf32> to vector<2x256xbf16>
    %c3_218 = arith.constant 3 : index
    %c0_219 = arith.constant 0 : index
    %c0_220 = arith.constant 0 : index
    %263 = vector.load %arg10[%c3_218, %c0_219, %c0_220] : memref<4x256x128xbf16, #tpu.memory_space<vmem>>, vector<1x256x128xbf16>
    %264 = vector.shape_cast %263 : vector<1x256x128xbf16> to vector<256x128xbf16>
    %cst_221 = arith.constant dense<0.000000e+00> : vector<2x128xf32>
    %265 = tpu.matmul %262, %264, %cst_221 {dimension_numbers = #tpu.dot_dimension_numbers<[1], [0], [0], [1], [0, 0, 1, 1], [], []>} : vector<2x256xbf16>, vector<256x128xbf16>, vector<2x128xf32> -> vector<2x128xf32>
    %266 = arith.addf %258, %265 : vector<2x128xf32>
    %cst_222 = arith.constant 0.000000e+00 : f32
    %267 = vector.broadcast %cst_222 : f32 to vector<2x128xf32>
    %268 = arith.subf %267, %266 : vector<2x128xf32>
    %269 = math.exp %268 : vector<2x128xf32>
    %cst_223 = arith.constant 1.000000e+00 : f32
    %270 = vector.broadcast %cst_223 : f32 to vector<2x128xf32>
    %271 = arith.addf %270, %269 : vector<2x128xf32>
    %cst_224 = arith.constant 1.000000e+00 : f32
    %272 = vector.broadcast %cst_224 : f32 to vector<2x128xf32>
    %273 = arith.divf %272, %271 : vector<2x128xf32>
    %c0_225 = arith.constant 0 : index
    %c0_226 = arith.constant 0 : index
    %274 = vector.load %arg14[%c0_225, %c0_226] : memref<2x128xf32, #tpu.memory_space<vmem>>, vector<2x128xf32>
    tpu.vector_store %arg14[%c0_225, %c0_226], %273 {strides = array<i32>} : memref<2x128xf32, #tpu.memory_space<vmem>>, vector<2x128xf32>,
    return
  }
}

</mosaic_0001>

<llo_original>
// kernel: forward.1
$region0: #{forward.1}
  #allocation0 [shape = 'u32[]', space=smem, size = 0x4, offset = 0x4, fixed_abs, tag = 'smem constant byte address 0x4 - core index']
  #allocation1 [shape = 'u32[144,128]{1,0:T(1,128)}', space=vmem, size = 0x12000, scoped, tag = 'internal scratch']
  %s0 = inlined_call_operand.vmem [shape: bf16[128,256], index: 0, kind: input, shape index: {}]
  %s1 = inlined_call_operand.vmem [shape: bf16[4,64,128], index: 1, kind: input, shape index: {}]
  %s2 = inlined_call_operand.vmem [shape: bf16[4,32,64], index: 2, kind: input, shape index: {}]
  %s3 = inlined_call_operand.vmem [shape: bf16[4,16,32], index: 3, kind: input, shape index: {}]
  %s4 = inlined_call_operand.vmem [shape: bf16[4,8,16], index: 4, kind: input, shape index: {}]
  %s5 = inlined_call_operand.vmem [shape: bf16[4,2,8], index: 5, kind: input, shape index: {}]
  %s6 = inlined_call_operand.vmem [shape: bf16[4,256,256], index: 6, kind: input, shape index: {}]
  %s7 = inlined_call_operand.vmem [shape: bf16[4,256,256], index: 7, kind: input, shape index: {}]
  %s8 = inlined_call_operand.vmem [shape: bf16[4,256,256], index: 8, kind: input, shape index: {}]
  %s9 = inlined_call_operand.vmem [shape: bf16[4,256,256], index: 9, kind: input, shape index: {}]
  %s10 = inlined_call_operand.vmem [shape: bf16[4,256,128], index: 10, kind: input, shape index: {}]
  %s11 = inlined_call_operand.vmem [shape: f32[3,256,256], index: 11, kind: input, shape index: {}]
  %s12 = inlined_call_operand.vmem [shape: f32[3,1,256], index: 12, kind: input, shape index: {}]
  %s13 = inlined_call_operand.vmem [shape: f32[3,1,256], index: 13, kind: input, shape index: {}]
  %s14 = inlined_call_operand.vmem [shape: f32[2,128], index: 14, kind: output, shape index: {}]
  %s15 = sld [smem:[#allocation0]]
  $region66: #{forward.1} parent=0
    _
  %s17 = ssub.s32 1, %s15
  %s18 = scalar_select 0, %s17, %s15
  // Predicated region
  $region2: #{forward.1} parent=0 // pred_check
    _
  $region3: #{forward.1} parent=0 // pred_check_branch
    %20 = sbr.rel (0) target = $region5
  $region4: #{forward.1} parent=0 // pred_region
    _
  $region5: #{forward.1} parent=0 // pred_fallthru
    _
  // Predicated region
  $region6: #{forward.1} parent=0 // pred_check
    _
  $region7: #{forward.1} parent=0 // pred_check_branch
    %22 = sbr.rel (0) target = $region9
  $region8: #{forward.1} parent=0 // pred_region
    _
  $region9: #{forward.1} parent=0 // pred_fallthru
    _
  // Predicated region
  $region10: #{forward.1} parent=0 // pred_check
    _
  $region11: #{forward.1} parent=0 // pred_check_branch
    %24 = sbr.rel (0) target = $region13
  $region12: #{forward.1} parent=0 // pred_region
    _
  $region13: #{forward.1} parent=0 // pred_fallthru
    _
  // Predicated region
  $region14: #{forward.1} parent=0 // pred_check
    _
  $region15: #{forward.1} parent=0 // pred_check_branch
    %26 = sbr.rel (0) target = $region17
  $region16: #{forward.1} parent=0 // pred_region
    _
  $region17: #{forward.1} parent=0 // pred_fallthru
    _
  // Predicated region
  $region18: #{forward.1} parent=0 // pred_check
    _
  $region19: #{forward.1} parent=0 // pred_check_branch
    %28 = sbr.rel (0) target = $region21
  $region20: #{forward.1} parent=0 // pred_region
    _
  $region21: #{forward.1} parent=0 // pred_fallthru
    _
  // Predicated region
  $region22: #{forward.1} parent=0 // pred_check
    _
  $region23: #{forward.1} parent=0 // pred_check_branch
    %30 = sbr.rel (0) target = $region25
  $region24: #{forward.1} parent=0 // pred_region
    _
  $region25: #{forward.1} parent=0 // pred_fallthru
    _
  // Predicated region
  $region26: #{forward.1} parent=0 // pred_check
    _
  $region27: #{forward.1} parent=0 // pred_check_branch
    %32 = sbr.rel (0) target = $region29
  $region28: #{forward.1} parent=0 // pred_region
    _
  $region29: #{forward.1} parent=0 // pred_fallthru
    _
  // Predicated region
  $region30: #{forward.1} parent=0 // pred_check
    _
  $region31: #{forward.1} parent=0 // pred_check_branch
    %34 = sbr.rel (0) target = $region33
  $region32: #{forward.1} parent=0 // pred_region
    _
  $region33: #{forward.1} parent=0 // pred_fallthru
    _
  // Predicated region
  $region34: #{forward.1} parent=0 // pred_check
    _
  $region35: #{forward.1} parent=0 // pred_check_branch
    %36 = sbr.rel (0) target = $region37
  $region36: #{forward.1} parent=0 // pred_region
    _
  $region37: #{forward.1} parent=0 // pred_fallthru
    _
  // Predicated region
  $region38: #{forward.1} parent=0 // pred_check
    _
  $region39: #{forward.1} parent=0 // pred_check_branch
    %38 = sbr.rel (0) target = $region41
  $region40: #{forward.1} parent=0 // pred_region
    _
  $region41: #{forward.1} parent=0 // pred_fallthru
    _
  // Predicated region
  $region42: #{forward.1} parent=0 // pred_check
    _
  $region43: #{forward.1} parent=0 // pred_check_branch
    %40 = sbr.rel (0) target = $region45
  $region44: #{forward.1} parent=0 // pred_region
    _
  $region45: #{forward.1} parent=0 // pred_fallthru
    _
  // Predicated region
  $region46: #{forward.1} parent=0 // pred_check
    _
  $region47: #{forward.1} parent=0 // pred_check_branch
    %42 = sbr.rel (0) target = $region49
  $region48: #{forward.1} parent=0 // pred_region
    _
  $region49: #{forward.1} parent=0 // pred_fallthru
    _
  // Predicated region
  $region50: #{forward.1} parent=0 // pred_check
    _
  $region51: #{forward.1} parent=0 // pred_check_branch
    %44 = sbr.rel (0) target = $region53
  $region52: #{forward.1} parent=0 // pred_region
    _
  $region53: #{forward.1} parent=0 // pred_fallthru
    _
  // Predicated region
  $region54: #{forward.1} parent=0 // pred_check
    _
  $region55: #{forward.1} parent=0 // pred_check_branch
    %46 = sbr.rel (0) target = $region57
  $region56: #{forward.1} parent=0 // pred_region
    _
  $region57: #{forward.1} parent=0 // pred_fallthru
    _
  %v48 = vld [vmem:[%s0] sm:$0xff]
  %v49 = vld [vmem:[%s0 + $0x8] sm:$0xff]
  %v50 = vld [vmem:[%s0 + $0x10] sm:$0xff]
  %v51 = vld [vmem:[%s0 + $0x18] sm:$0xff]
  %v52 = vld [vmem:[%s0 + $0x20] sm:$0xff]
  %v53 = vld [vmem:[%s0 + $0x28] sm:$0xff]
  %v54 = vld [vmem:[%s0 + $0x30] sm:$0xff]
  %v55 = vld [vmem:[%s0 + $0x38] sm:$0xff]
  %v56 = vld [vmem:[%s0 + $0x40] sm:$0xff]
  %v57 = vld [vmem:[%s0 + $0x48] sm:$0xff]
  %v58 = vld [vmem:[%s0 + $0x50] sm:$0xff]
  %v59 = vld [vmem:[%s0 + $0x58] sm:$0xff]
  %v60 = vld [vmem:[%s0 + $0x60] sm:$0xff]
  %v61 = vld [vmem:[%s0 + $0x68] sm:$0xff]
  %v62 = vld [vmem:[%s0 + $0x70] sm:$0xff]
  %v63 = vld [vmem:[%s0 + $0x78] sm:$0xff]
  %v64 = vld [vmem:[%s1] sm:$0xf]
  %v65 = vld [vmem:[%s1 + $0x4] sm:$0xf]
  %v66 = vld [vmem:[%s1 + $0x8] sm:$0xf]
  %v67 = vld [vmem:[%s1 + $0xc] sm:$0xf]
  %v68 = vld [vmem:[%s1 + $0x10] sm:$0xf]
  %v69 = vld [vmem:[%s1 + $0x14] sm:$0xf]
  %v70 = vld [vmem:[%s1 + $0x18] sm:$0xf]
  %v71 = vld [vmem:[%s1 + $0x1c] sm:$0xf]
  %v80 = vunpack.c.l.b16 %v64
  %v81 = vunpack.c.l.b16 %v65
  %v82 = vunpack.c.l.b16 %v66
  %v83 = vunpack.c.l.b16 %v67
  %v84 = vunpack.c.l.b16 %v68
  %v85 = vunpack.c.l.b16 %v69
  %v86 = vunpack.c.l.b16 %v70
  %v87 = vunpack.c.l.b16 %v71
  %v88 = vpack.c.b16 %v81, %v80
  %v89 = vpack.c.b16 %v83, %v82
  %v90 = vpack.c.b16 %v85, %v84
  %v91 = vpack.c.b16 %v87, %v86
  %v112 = vunpack.c.l.b16 %v48
  %v113 = vunpack.c.h.b16 %v48
  %v114 = vunpack.c.l.b16 %v49
  %v115 = vunpack.c.h.b16 %v49
  %v116 = vunpack.c.l.b16 %v50
  %v117 = vunpack.c.h.b16 %v50
  %v118 = vunpack.c.l.b16 %v51
  %v119 = vunpack.c.h.b16 %v51
  %v120 = vunpack.c.l.b16 %v52
  %v121 = vunpack.c.h.b16 %v52
  %v122 = vunpack.c.l.b16 %v53
  %v123 = vunpack.c.h.b16 %v53
  %v124 = vunpack.c.l.b16 %v54
  %v125 = vunpack.c.h.b16 %v54
  %v126 = vunpack.c.l.b16 %v55
  %v127 = vunpack.c.h.b16 %v55
  %v128 = vunpack.c.l.b16 %v56
  %v129 = vunpack.c.h.b16 %v56
  %v130 = vunpack.c.l.b16 %v57
  %v131 = vunpack.c.h.b16 %v57
  %v132 = vunpack.c.l.b16 %v58
  %v133 = vunpack.c.h.b16 %v58
  %v134 = vunpack.c.l.b16 %v59
  %v135 = vunpack.c.h.b16 %v59
  %v136 = vunpack.c.l.b16 %v60
  %v137 = vunpack.c.h.b16 %v60
  %v138 = vunpack.c.l.b16 %v61
  %v139 = vunpack.c.h.b16 %v61
  %v140 = vunpack.c.l.b16 %v62
  %v141 = vunpack.c.h.b16 %v62
  %v142 = vunpack.c.l.b16 %v63
  %v143 = vunpack.c.h.b16 %v63
  %v144 = vpack.c.b16 %v114, %v112
  %v145 = vpack.c.b16 %v115, %v113
  %v146 = vpack.c.b16 %v118, %v116
  %v147 = vpack.c.b16 %v119, %v117
  %v148 = vpack.c.b16 %v122, %v120
  %v149 = vpack.c.b16 %v123, %v121
  %v150 = vpack.c.b16 %v126, %v124
  %v151 = vpack.c.b16 %v127, %v125
  %v152 = vpack.c.b16 %v130, %v128
  %v153 = vpack.c.b16 %v131, %v129
  %v154 = vpack.c.b16 %v134, %v132
  %v155 = vpack.c.b16 %v135, %v133
  %v156 = vpack.c.b16 %v138, %v136
  %v157 = vpack.c.b16 %v139, %v137
  %v158 = vpack.c.b16 %v142, %v140
  %v159 = vpack.c.b16 %v143, %v141
  %176 = vmatprep.subr.bf16.mxu0 %v145
  %177 = vmatpush1.bf16.msra.mxu0 %v144
  %178 = vmatprep.subr.bf16.mxu0 %v147
  %179 = vmatpush1.bf16.msra.mxu0 %v146
  %180 = vmatprep.subr.bf16.mxu0 %v149
  %181 = vmatpush1.bf16.msra.mxu0 %v148
  %182 = vmatprep.subr.bf16.mxu0 %v151
  %183 = vmatpush1.bf16.msra.mxu0 %v150
  %184 = vmatprep.subr.bf16.mxu0 %v153
  %185 = vmatpush1.bf16.msra.mxu0 %v152
  %186 = vmatprep.subr.bf16.mxu0 %v155
  %187 = vmatpush1.bf16.msra.mxu0 %v154
  %188 = vmatprep.subr.bf16.mxu0 %v157
  %189 = vmatpush1.bf16.msra.mxu0 %v156
  %190 = vmatprep.subr.bf16.mxu0 %v159
  %191 = vmatpush1.bf16.msra.mxu0 %v158
  %192 = vmatprep.subr.bf16.mxu0 0
  %193 = vmatpush1.bf16.msra.mxu0 0
  %194 = vmatprep.subr.bf16.mxu0 0
  %195 = vmatpush1.bf16.msra.mxu0 0
  %196 = vmatprep.subr.bf16.mxu0 0
  %197 = vmatpush1.bf16.msra.mxu0 0
  %198 = vmatprep.subr.bf16.mxu0 0
  %199 = vmatpush1.bf16.msra.mxu0 0
  %200 = vmatprep.subr.bf16.mxu0 0
  %201 = vmatpush1.bf16.msra.mxu0 0
  %202 = vmatprep.subr.bf16.mxu0 0
  %203 = vmatpush1.bf16.msra.mxu0 0
  %204 = vmatprep.subr.bf16.mxu0 0
  %205 = vmatpush1.bf16.msra.mxu0 0
  %206 = vmatprep.subr.bf16.mxu0 0
  %207 = vmatpush1.bf16.msra.mxu0 0
  %208 = vmatprep.mubr.bf16.mxu0 0
  %209 = vmatmul.mubr.bf16.gmra.mrb[0].mxu0 %v88
  %v210 = vpop.f32.mrb[0].mxu0
  %v211 = vadd.f32 0.0, %v210
  %v212 = vpop.f32.mrb[0].mxu0
  %v213 = vadd.f32 0.0, %v212
  %v214 = vpop.f32.mrb[0].mxu0
  %v215 = vadd.f32 0.0, %v214
  %v216 = vpop.f32.mrb[0].mxu0
  %v217 = vadd.f32 0.0, %v216
  %218 = vmatprep.mubr.bf16.mxu0 0
  %219 = vmatmul.mubr.bf16.gmra.mrb[0].mxu0 %v89
  %v220 = vpop.f32.mrb[0].mxu0
  %v221 = vadd.f32 0.0, %v220
  %v222 = vpop.f32.mrb[0].mxu0
  %v223 = vadd.f32 0.0, %v222
  %v224 = vpop.f32.mrb[0].mxu0
  %v225 = vadd.f32 0.0, %v224
  %v226 = vpop.f32.mrb[0].mxu0
  %v227 = vadd.f32 0.0, %v226
  %228 = vmatprep.mubr.bf16.mxu0 0
  %229 = vmatmul.mubr.bf16.gmra.mrb[0].mxu0 %v90
  %v230 = vpop.f32.mrb[0].mxu0
  %v231 = vadd.f32 0.0, %v230
  %v232 = vpop.f32.mrb[0].mxu0
  %v233 = vadd.f32 0.0, %v232
  %v234 = vpop.f32.mrb[0].mxu0
  %v235 = vadd.f32 0.0, %v234
  %v236 = vpop.f32.mrb[0].mxu0
  %v237 = vadd.f32 0.0, %v236
  %238 = vmatprep.mubr.bf16.mxu0 0
  %239 = vmatmul.mubr.bf16.gmra.mrb[0].mxu0 %v91
  %v240 = vpop.f32.mrb[0].mxu0
  %v241 = vadd.f32 0.0, %v240
  %v242 = vpop.f32.mrb[0].mxu0
  %v243 = vadd.f32 0.0, %v242
  %v244 = vpop.f32.mrb[0].mxu0
  %v245 = vadd.f32 0.0, %v244
  %v246 = vpop.f32.mrb[0].mxu0
  %v247 = vadd.f32 0.0, %v246
  %248 = vdwg.mxu0
  %v249 = vpack.c.bf16 %v215, %v211
  %v250 = vpack.c.bf16 %v217, %v213
  %v251 = vpack.c.bf16 %v225, %v221
  %v252 = vpack.c.bf16 %v227, %v223
  %v253 = vpack.c.bf16 %v235, %v231
  %v254 = vpack.c.bf16 %v237, %v233
  %v255 = vpack.c.bf16 %v245, %v241
  %v256 = vpack.c.bf16 %v247, %v243
  %v257 = vld [vmem:[%s6] sm:$0xff]
  %v258 = vld [vmem:[%s6 + $0x8] sm:$0xff]
  %v259 = vld [vmem:[%s6 + $0x10] sm:$0xff]
  %v260 = vld [vmem:[%s6 + $0x18] sm:$0xff]
  %v261 = vld [vmem:[%s6 + $0x20] sm:$0xff]
  %v262 = vld [vmem:[%s6 + $0x28] sm:$0xff]
  %v263 = vld [vmem:[%s6 + $0x30] sm:$0xff]
  %v264 = vld [vmem:[%s6 + $0x38] sm:$0xff]
  %v265 = vld [vmem:[%s6 + $0x40] sm:$0xff]
  %v266 = vld [vmem:[%s6 + $0x48] sm:$0xff]
  %v267 = vld [vmem:[%s6 + $0x50] sm:$0xff]
  %v268 = vld [vmem:[%s6 + $0x58] sm:$0xff]
  %v269 = vld [vmem:[%s6 + $0x60] sm:$0xff]
  %v270 = vld [vmem:[%s6 + $0x68] sm:$0xff]
  %v271 = vld [vmem:[%s6 + $0x70] sm:$0xff]
  %v272 = vld [vmem:[%s6 + $0x78] sm:$0xff]
  %v273 = vld [vmem:[%s6 + $0x80] sm:$0xff]
  %v274 = vld [vmem:[%s6 + $0x88] sm:$0xff]
  %v275 = vld [vmem:[%s6 + $0x90] sm:$0xff]
  %v276 = vld [vmem:[%s6 + $0x98] sm:$0xff]
  %v277 = vld [vmem:[%s6 + $0xa0] sm:$0xff]
  %v278 = vld [vmem:[%s6 + $0xa8] sm:$0xff]
  %v279 = vld [vmem:[%s6 + $0xb0] sm:$0xff]
  %v280 = vld [vmem:[%s6 + $0xb8] sm:$0xff]
  %v281 = vld [vmem:[%s6 + $0xc0] sm:$0xff]
  %v282 = vld [vmem:[%s6 + $0xc8] sm:$0xff]
  %v283 = vld [vmem:[%s6 + $0xd0] sm:$0xff]
  %v284 = vld [vmem:[%s6 + $0xd8] sm:$0xff]
  %v285 = vld [vmem:[%s6 + $0xe0] sm:$0xff]
  %v286 = vld [vmem:[%s6 + $0xe8] sm:$0xff]
  %v287 = vld [vmem:[%s6 + $0xf0] sm:$0xff]
  %v288 = vld [vmem:[%s6 + $0xf8] sm:$0xff]
  %s289 = scalar_lea.vmem %s1, 32
  %v290 = vld [vmem:[%s289] sm:$0xf]
  %v291 = vld [vmem:[%s289 + $0x4] sm:$0xf]
  %v292 = vld [vmem:[%s289 + $0x8] sm:$0xf]
  %v293 = vld [vmem:[%s289 + $0xc] sm:$0xf]
  %v294 = vld [vmem:[%s289 + $0x10] sm:$0xf]
  %v295 = vld [vmem:[%s289 + $0x14] sm:$0xf]
  %v296 = vld [vmem:[%s289 + $0x18] sm:$0xf]
  %v297 = vld [vmem:[%s289 + $0x1c] sm:$0xf]
  %v306 = vunpack.c.l.b16 %v290
  %v307 = vunpack.c.l.b16 %v291
  %v308 = vunpack.c.l.b16 %v292
  %v309 = vunpack.c.l.b16 %v293
  %v310 = vunpack.c.l.b16 %v294
  %v311 = vunpack.c.l.b16 %v295
  %v312 = vunpack.c.l.b16 %v296
  %v313 = vunpack.c.l.b16 %v297
  %v314 = vpack.c.b16 %v307, %v306
  %v315 = vpack.c.b16 %v309, %v308
  %v316 = vpack.c.b16 %v311, %v310
  %v317 = vpack.c.b16 %v313, %v312
  %322 = vmatprep.subr.bf16.mxu0 %v145
  %323 = vmatpush1.bf16.msra.mxu0 %v144
  %324 = vmatprep.subr.bf16.mxu0 %v147
  %325 = vmatpush1.bf16.msra.mxu0 %v146
  %326 = vmatprep.subr.bf16.mxu0 %v149
  %327 = vmatpush1.bf16.msra.mxu0 %v148
  %328 = vmatprep.subr.bf16.mxu0 %v151
  %329 = vmatpush1.bf16.msra.mxu0 %v150
  %330 = vmatprep.subr.bf16.mxu0 %v153
  %331 = vmatpush1.bf16.msra.mxu0 %v152
  %332 = vmatprep.subr.bf16.mxu0 %v155
  %333 = vmatpush1.bf16.msra.mxu0 %v154
  %334 = vmatprep.subr.bf16.mxu0 %v157
  %335 = vmatpush1.bf16.msra.mxu0 %v156
  %336 = vmatprep.subr.bf16.mxu0 %v159
  %337 = vmatpush1.bf16.msra.mxu0 %v158
  %338 = vmatprep.subr.bf16.mxu0 0
  %339 = vmatpush1.bf16.msra.mxu0 0
  %340 = vmatprep.subr.bf16.mxu0 0
  %341 = vmatpush1.bf16.msra.mxu0 0
  %342 = vmatprep.subr.bf16.mxu0 0
  %343 = vmatpush1.bf16.msra.mxu0 0
  %344 = vmatprep.subr.bf16.mxu0 0
  %345 = vmatpush1.bf16.msra.mxu0 0
  %346 = vmatprep.subr.bf16.mxu0 0
  %347 = vmatpush1.bf16.msra.mxu0 0
  %348 = vmatprep.subr.bf16.mxu0 0
  %349 = vmatpush1.bf16.msra.mxu0 0
  %350 = vmatprep.subr.bf16.mxu0 0
  %351 = vmatpush1.bf16.msra.mxu0 0
  %352 = vmatprep.subr.bf16.mxu0 0
  %353 = vmatpush1.bf16.msra.mxu0 0
  %354 = vmatprep.mubr.bf16.mxu0 0
  %355 = vmatmul.mubr.bf16.gmra.mrb[0].mxu0 %v314
  %v356 = vpop.f32.mrb[0].mxu0
  %v357 = vadd.f32 0.0, %v356
  %v358 = vpop.f32.mrb[0].mxu0
  %v359 = vadd.f32 0.0, %v358
  %v360 = vpop.f32.mrb[0].mxu0
  %v361 = vadd.f32 0.0, %v360
  %v362 = vpop.f32.mrb[0].mxu0
  %v363 = vadd.f32 0.0, %v362
  %364 = vmatprep.mubr.bf16.mxu0 0
  %365 = vmatmul.mubr.bf16.gmra.mrb[0].mxu0 %v315
  %v366 = vpop.f32.mrb[0].mxu0
  %v367 = vadd.f32 0.0, %v366
  %v368 = vpop.f32.mrb[0].mxu0
  %v369 = vadd.f32 0.0, %v368
  %v370 = vpop.f32.mrb[0].mxu0
  %v371 = vadd.f32 0.0, %v370
  %v372 = vpop.f32.mrb[0].mxu0
  %v373 = vadd.f32 0.0, %v372
  %374 = vmatprep.mubr.bf16.mxu0 0
  %375 = vmatmul.mubr.bf16.gmra.mrb[0].mxu0 %v316
  %v376 = vpop.f32.mrb[0].mxu0
  %v377 = vadd.f32 0.0, %v376
  %v378 = vpop.f32.mrb[0].mxu0
  %v379 = vadd.f32 0.0, %v378
  %v380 = vpop.f32.mrb[0].mxu0
  %v381 = vadd.f32 0.0, %v380
  %v382 = vpop.f32.mrb[0].mxu0
  %v383 = vadd.f32 0.0, %v382
  %384 = vmatprep.mubr.bf16.mxu0 0
  %385 = vmatmul.mubr.bf16.gmra.mrb[0].mxu0 %v317
  %v386 = vpop.f32.mrb[0].mxu0
  %v387 = vadd.f32 0.0, %v386
  %v388 = vpop.f32.mrb[0].mxu0
  %v389 = vadd.f32 0.0, %v388
  %v390 = vpop.f32.mrb[0].mxu0
  %v391 = vadd.f32 0.0, %v390
  %v392 = vpop.f32.mrb[0].mxu0
  %v393 = vadd.f32 0.0, %v392
  %394 = vdwg.mxu0
  %v395 = vpack.c.bf16 %v361, %v357
  %v396 = vpack.c.bf16 %v363, %v359
  %v397 = vpack.c.bf16 %v371, %v367
  %v398 = vpack.c.bf16 %v373, %v369
  %v399 = vpack.c.bf16 %v381, %v377
  %v400 = vpack.c.bf16 %v383, %v379
  %v401 = vpack.c.bf16 %v391, %v387
  %v402 = vpack.c.bf16 %v393, %v389
  %s403 = scalar_lea.vmem %s6, 256
  %v404 = vld [vmem:[%s403] sm:$0xff]
  %v405 = vld [vmem:[%s403 + $0x8] sm:$0xff]
  %v406 = vld [vmem:[%s403 + $0x10] sm:$0xff]
  %v407 = vld [vmem:[%s403 + $0x18] sm:$0xff]
  %v408 = vld [vmem:[%s403 + $0x20] sm:$0xff]
  %v409 = vld [vmem:[%s403 + $0x28] sm:$0xff]
  %v410 = vld [vmem:[%s403 + $0x30] sm:$0xff]
  %v411 = vld [vmem:[%s403 + $0x38] sm:$0xff]
  %v412 = vld [vmem:[%s403 + $0x40] sm:$0xff]
  %v413 = vld [vmem:[%s403 + $0x48] sm:$0xff]
  %v414 = vld [vmem:[%s403 + $0x50] sm:$0xff]
  %v415 = vld [vmem:[%s403 + $0x58] sm:$0xff]
  %v416 = vld [vmem:[%s403 + $0x60] sm:$0xff]
  %v417 = vld [vmem:[%s403 + $0x68] sm:$0xff]
  %v418 = vld [vmem:[%s403 + $0x70] sm:$0xff]
  %v419 = vld [vmem:[%s403 + $0x78] sm:$0xff]
  %v420 = vld [vmem:[%s403 + $0x80] sm:$0xff]
  %v421 = vld [vmem:[%s403 + $0x88] sm:$0xff]
  %v422 = vld [vmem:[%s403 + $0x90] sm:$0xff]
  %v423 = vld [vmem:[%s403 + $0x98] sm:$0xff]
  %v424 = vld [vmem:[%s403 + $0xa0] sm:$0xff]
  %v425 = vld [vmem:[%s403 + $0xa8] sm:$0xff]
  %v426 = vld [vmem:[%s403 + $0xb0] sm:$0xff]
  %v427 = vld [vmem:[%s403 + $0xb8] sm:$0xff]
  %v428 = vld [vmem:[%s403 + $0xc0] sm:$0xff]
  %v429 = vld [vmem:[%s403 + $0xc8] sm:$0xff]
  %v430 = vld [vmem:[%s403 + $0xd0] sm:$0xff]
  %v431 = vld [vmem:[%s403 + $0xd8] sm:$0xff]
  %v432 = vld [vmem:[%s403 + $0xe0] sm:$0xff]
  %v433 = vld [vmem:[%s403 + $0xe8] sm:$0xff]
  %v434 = vld [vmem:[%s403 + $0xf0] sm:$0xff]
  %v435 = vld [vmem:[%s403 + $0xf8] sm:$0xff]
  %v468 = vunpack.c.l.b16 %v404
  %v469 = vunpack.c.h.b16 %v404
  %v470 = vunpack.c.l.b16 %v405
  %v471 = vunpack.c.h.b16 %v405
  %v472 = vunpack.c.l.b16 %v406
  %v473 = vunpack.c.h.b16 %v406
  %v474 = vunpack.c.l.b16 %v407
  %v475 = vunpack.c.h.b16 %v407
  %v476 = vunpack.c.l.b16 %v408
  %v477 = vunpack.c.h.b16 %v408
  %v478 = vunpack.c.l.b16 %v409
  %v479 = vunpack.c.h.b16 %v409
  %v480 = vunpack.c.l.b16 %v410
  %v481 = vunpack.c.h.b16 %v410
  %v482 = vunpack.c.l.b16 %v411
  %v483 = vunpack.c.h.b16 %v411
  %v484 = vunpack.c.l.b16 %v412
  %v485 = vunpack.c.h.b16 %v412
  %v486 = vunpack.c.l.b16 %v413
  %v487 = vunpack.c.h.b16 %v413
  %v488 = vunpack.c.l.b16 %v414
  %v489 = vunpack.c.h.b16 %v414
  %v490 = vunpack.c.l.b16 %v415
  %v491 = vunpack.c.h.b16 %v415
  %v492 = vunpack.c.l.b16 %v416
  %v493 = vunpack.c.h.b16 %v416
  %v494 = vunpack.c.l.b16 %v417
  %v495 = vunpack.c.h.b16 %v417
  %v496 = vunpack.c.l.b16 %v418
  %v497 = vunpack.c.h.b16 %v418
  %v498 = vunpack.c.l.b16 %v419
  %v499 = vunpack.c.h.b16 %v419
  %v500 = vunpack.c.l.b16 %v420
  %v501 = vunpack.c.h.b16 %v420
  %v502 = vunpack.c.l.b16 %v421
  %v503 = vunpack.c.h.b16 %v421
  %v504 = vunpack.c.l.b16 %v422
  %v505 = vunpack.c.h.b16 %v422
  %v506 = vunpack.c.l.b16 %v423
  %v507 = vunpack.c.h.b16 %v423
  %v508 = vunpack.c.l.b16 %v424
  %v509 = vunpack.c.h.b16 %v424
  %v510 = vunpack.c.l.b16 %v425
  %v511 = vunpack.c.h.b16 %v425
  %v512 = vunpack.c.l.b16 %v426
  %v513 = vunpack.c.h.b16 %v426
  %v514 = vunpack.c.l.b16 %v427
  %v515 = vunpack.c.h.b16 %v427
  %v516 = vunpack.c.l.b16 %v428
  %v517 = vunpack.c.h.b16 %v428
  %v518 = vunpack.c.l.b16 %v429
  %v519 = vunpack.c.h.b16 %v429
  %v520 = vunpack.c.l.b16 %v430
  %v521 = vunpack.c.h.b16 %v430
  %v522 = vunpack.c.l.b16 %v431
  %v523 = vunpack.c.h.b16 %v431
  %v524 = vunpack.c.l.b16 %v432
  %v525 = vunpack.c.h.b16 %v432
  %v526 = vunpack.c.l.b16 %v433
  %v527 = vunpack.c.h.b16 %v433
  %v528 = vunpack.c.l.b16 %v434
  %v529 = vunpack.c.h.b16 %v434
  %v530 = vunpack.c.l.b16 %v435
  %v531 = vunpack.c.h.b16 %v435
  %v532 = vpack.c.b16 %v470, %v468
  %v533 = vpack.c.b16 %v471, %v469
  %v534 = vpack.c.b16 %v474, %v472
  %v535 = vpack.c.b16 %v475, %v473
  %v536 = vpack.c.b16 %v478, %v476
  %v537 = vpack.c.b16 %v479, %v477
  %v538 = vpack.c.b16 %v482, %v480
  %v539 = vpack.c.b16 %v483, %v481
  %v540 = vpack.c.b16 %v486, %v484
  %v541 = vpack.c.b16 %v487, %v485
  %v542 = vpack.c.b16 %v490, %v488
  %v543 = vpack.c.b16 %v491, %v489
  %v544 = vpack.c.b16 %v494, %v492
  %v545 = vpack.c.b16 %v495, %v493
  %v546 = vpack.c.b16 %v498, %v496
  %v547 = vpack.c.b16 %v499, %v497
  %v548 = vpack.c.b16 %v502, %v500
  %v549 = vpack.c.b16 %v503, %v501
  %v550 = vpack.c.b16 %v506, %v504
  %v551 = vpack.c.b16 %v507, %v505
  %v552 = vpack.c.b16 %v510, %v508
  %v553 = vpack.c.b16 %v511, %v509
  %v554 = vpack.c.b16 %v514, %v512
  %v555 = vpack.c.b16 %v515, %v513
  %v556 = vpack.c.b16 %v518, %v516
  %v557 = vpack.c.b16 %v519, %v517
  %v558 = vpack.c.b16 %v522, %v520
  %v559 = vpack.c.b16 %v523, %v521
  %v560 = vpack.c.b16 %v526, %v524
  %v561 = vpack.c.b16 %v527, %v525
  %v562 = vpack.c.b16 %v530, %v528
  %v563 = vpack.c.b16 %v531, %v529
  %596 = vmatprep.subr.bf16.mxu0 %v533
  %597 = vmatpush1.bf16.msra.mxu0 %v532
  %598 = vmatprep.subr.bf16.mxu0 %v535
  %599 = vmatpush1.bf16.msra.mxu0 %v534
  %600 = vmatprep.subr.bf16.mxu0 %v537
  %601 = vmatpush1.bf16.msra.mxu0 %v536
  %602 = vmatprep.subr.bf16.mxu0 %v539
  %603 = vmatpush1.bf16.msra.mxu0 %v538
  %604 = vmatprep.subr.bf16.mxu0 %v541
  %605 = vmatpush1.bf16.msra.mxu0 %v540
  %606 = vmatprep.subr.bf16.mxu0 %v543
  %607 = vmatpush1.bf16.msra.mxu0 %v542
  %608 = vmatprep.subr.bf16.mxu0 %v545
  %609 = vmatpush1.bf16.msra.mxu0 %v544
  %610 = vmatprep.subr.bf16.mxu0 %v547
  %611 = vmatpush1.bf16.msra.mxu0 %v546
  %612 = vmatprep.subr.bf16.mxu0 %v549
  %613 = vmatpush1.bf16.msra.mxu0 %v548
  %614 = vmatprep.subr.bf16.mxu0 %v551
  %615 = vmatpush1.bf16.msra.mxu0 %v550
  %616 = vmatprep.subr.bf16.mxu0 %v553
  %617 = vmatpush1.bf16.msra.mxu0 %v552
  %618 = vmatprep.subr.bf16.mxu0 %v555
  %619 = vmatpush1.bf16.msra.mxu0 %v554
  %620 = vmatprep.subr.bf16.mxu0 %v557
  %621 = vmatpush1.bf16.msra.mxu0 %v556
  %622 = vmatprep.subr.bf16.mxu0 %v559
  %623 = vmatpush1.bf16.msra.mxu0 %v558
  %624 = vmatprep.subr.bf16.mxu0 %v561
  %625 = vmatpush1.bf16.msra.mxu0 %v560
  %626 = vmatprep.subr.bf16.mxu0 %v563
  %627 = vmatpush1.bf16.msra.mxu0 %v562
  %628 = vmatprep.mubr.bf16.mxu0 %v396
  %629 = vmatmul.mubr.bf16.gmra.mrb[0].mxu0 %v395
  %v630 = vpop.f32.mrb[0].mxu0
  %v631 = vadd.f32 0.0, %v630
  %v632 = vpop.f32.mrb[0].mxu0
  %v633 = vadd.f32 0.0, %v632
  %v634 = vpop.f32.mrb[0].mxu0
  %v635 = vadd.f32 0.0, %v634
  %v636 = vpop.f32.mrb[0].mxu0
  %v637 = vadd.f32 0.0, %v636
  %638 = vmatprep.mubr.bf16.mxu0 %v398
  %639 = vmatmul.mubr.bf16.gmra.mrb[0].mxu0 %v397
  %v640 = vpop.f32.mrb[0].mxu0
  %v641 = vadd.f32 0.0, %v640
  %v642 = vpop.f32.mrb[0].mxu0
  %v643 = vadd.f32 0.0, %v642
  %v644 = vpop.f32.mrb[0].mxu0
  %v645 = vadd.f32 0.0, %v644
  %v646 = vpop.f32.mrb[0].mxu0
  %v647 = vadd.f32 0.0, %v646
  %648 = vmatprep.mubr.bf16.mxu0 %v400
  %649 = vmatmul.mubr.bf16.gmra.mrb[0].mxu0 %v399
  %v650 = vpop.f32.mrb[0].mxu0
  %v651 = vadd.f32 0.0, %v650
  %v652 = vpop.f32.mrb[0].mxu0
  %v653 = vadd.f32 0.0, %v652
  %v654 = vpop.f32.mrb[0].mxu0
  %v655 = vadd.f32 0.0, %v654
  %v656 = vpop.f32.mrb[0].mxu0
  %v657 = vadd.f32 0.0, %v656
  %658 = vmatprep.mubr.bf16.mxu0 %v402
  %659 = vmatmul.mubr.bf16.gmra.mrb[0].mxu0 %v401
  %v660 = vpop.f32.mrb[0].mxu0
  %v661 = vadd.f32 0.0, %v660
  %v662 = vpop.f32.mrb[0].mxu0
  %v663 = vadd.f32 0.0, %v662
  %v664 = vpop.f32.mrb[0].mxu0
  %v665 = vadd.f32 0.0, %v664
  %v666 = vpop.f32.mrb[0].mxu0
  %v667 = vadd.f32 0.0, %v666
  %668 = vdwg.mxu0
  %v701 = vunpack.c.l.b16 %v257
  %v702 = vunpack.c.h.b16 %v257
  %v703 = vunpack.c.l.b16 %v258
  %v704 = vunpack.c.h.b16 %v258
  %v705 = vunpack.c.l.b16 %v259
  %v706 = vunpack.c.h.b16 %v259
  %v707 = vunpack.c.l.b16 %v260
  %v708 = vunpack.c.h.b16 %v260
  %v709 = vunpack.c.l.b16 %v261
  %v710 = vunpack.c.h.b16 %v261
  %v711 = vunpack.c.l.b16 %v262
  %v712 = vunpack.c.h.b16 %v262
  %v713 = vunpack.c.l.b16 %v263
  %v714 = vunpack.c.h.b16 %v263
  %v715 = vunpack.c.l.b16 %v264
  %v716 = vunpack.c.h.b16 %v264
  %v717 = vunpack.c.l.b16 %v265
  %v718 = vunpack.c.h.b16 %v265
  %v719 = vunpack.c.l.b16 %v266
  %v720 = vunpack.c.h.b16 %v266
  %v721 = vunpack.c.l.b16 %v267
  %v722 = vunpack.c.h.b16 %v267
  %v723 = vunpack.c.l.b16 %v268
  %v724 = vunpack.c.h.b16 %v268
  %v725 = vunpack.c.l.b16 %v269
  %v726 = vunpack.c.h.b16 %v269
  %v727 = vunpack.c.l.b16 %v270
  %v728 = vunpack.c.h.b16 %v270
  %v729 = vunpack.c.l.b16 %v271
  %v730 = vunpack.c.h.b16 %v271
  %v731 = vunpack.c.l.b16 %v272
  %v732 = vunpack.c.h.b16 %v272
  %v733 = vunpack.c.l.b16 %v273
  %v734 = vunpack.c.h.b16 %v273
  %v735 = vunpack.c.l.b16 %v274
  %v736 = vunpack.c.h.b16 %v274
  %v737 = vunpack.c.l.b16 %v275
  %v738 = vunpack.c.h.b16 %v275
  %v739 = vunpack.c.l.b16 %v276
  %v740 = vunpack.c.h.b16 %v276
  %v741 = vunpack.c.l.b16 %v277
  %v742 = vunpack.c.h.b16 %v277
  %v743 = vunpack.c.l.b16 %v278
  %v744 = vunpack.c.h.b16 %v278
  %v745 = vunpack.c.l.b16 %v279
  %v746 = vunpack.c.h.b16 %v279
  %v747 = vunpack.c.l.b16 %v280
  %v748 = vunpack.c.h.b16 %v280
  %v749 = vunpack.c.l.b16 %v281
  %v750 = vunpack.c.h.b16 %v281
  %v751 = vunpack.c.l.b16 %v282
  %v752 = vunpack.c.h.b16 %v282
  %v753 = vunpack.c.l.b16 %v283
  %v754 = vunpack.c.h.b16 %v283
  %v755 = vunpack.c.l.b16 %v284
  %v756 = vunpack.c.h.b16 %v284
  %v757 = vunpack.c.l.b16 %v285
  %v758 = vunpack.c.h.b16 %v285
  %v759 = vunpack.c.l.b16 %v286
  %v760 = vunpack.c.h.b16 %v286
  %v761 = vunpack.c.l.b16 %v287
  %v762 = vunpack.c.h.b16 %v287
  %v763 = vunpack.c.l.b16 %v288
  %v764 = vunpack.c.h.b16 %v288
  %v765 = vpack.c.b16 %v703, %v701
  %v766 = vpack.c.b16 %v704, %v702
  %v767 = vpack.c.b16 %v707, %v705
  %v768 = vpack.c.b16 %v708, %v706
  %v769 = vpack.c.b16 %v711, %v709
  %v770 = vpack.c.b16 %v712, %v710
  %v771 = vpack.c.b16 %v715, %v713
  %v772 = vpack.c.b16 %v716, %v714
  %v773 = vpack.c.b16 %v719, %v717
  %v774 = vpack.c.b16 %v720, %v718
  %v775 = vpack.c.b16 %v723, %v721
  %v776 = vpack.c.b16 %v724, %v722
  %v777 = vpack.c.b16 %v727, %v725
  %v778 = vpack.c.b16 %v728, %v726
  %v779 = vpack.c.b16 %v731, %v729
  %v780 = vpack.c.b16 %v732, %v730
  %v781 = vpack.c.b16 %v735, %v733
  %v782 = vpack.c.b16 %v736, %v734
  %v783 = vpack.c.b16 %v739, %v737
  %v784 = vpack.c.b16 %v740, %v738
  %v785 = vpack.c.b16 %v743, %v741
  %v786 = vpack.c.b16 %v744, %v742
  %v787 = vpack.c.b16 %v747, %v745
  %v788 = vpack.c.b16 %v748, %v746
  %v789 = vpack.c.b16 %v751, %v749
  %v790 = vpack.c.b16 %v752, %v750
  %v791 = vpack.c.b16 %v755, %v753
  %v792 = vpack.c.b16 %v756, %v754
  %v793 = vpack.c.b16 %v759, %v757
  %v794 = vpack.c.b16 %v760, %v758
  %v795 = vpack.c.b16 %v763, %v761
  %v796 = vpack.c.b16 %v764, %v762
  %829 = vmatprep.subr.bf16.mxu0 %v766
  %830 = vmatpush1.bf16.msra.mxu0 %v765
  %831 = vmatprep.subr.bf16.mxu0 %v768
  %832 = vmatpush1.bf16.msra.mxu0 %v767
  %833 = vmatprep.subr.bf16.mxu0 %v770
  %834 = vmatpush1.bf16.msra.mxu0 %v769
  %835 = vmatprep.subr.bf16.mxu0 %v772
  %836 = vmatpush1.bf16.msra.mxu0 %v771
  %837 = vmatprep.subr.bf16.mxu0 %v774
  %838 = vmatpush1.bf16.msra.mxu0 %v773
  %839 = vmatprep.subr.bf16.mxu0 %v776
  %840 = vmatpush1.bf16.msra.mxu0 %v775
  %841 = vmatprep.subr.bf16.mxu0 %v778
  %842 = vmatpush1.bf16.msra.mxu0 %v777
  %843 = vmatprep.subr.bf16.mxu0 %v780
  %844 = vmatpush1.bf16.msra.mxu0 %v779
  %845 = vmatprep.subr.bf16.mxu0 %v782
  %846 = vmatpush1.bf16.msra.mxu0 %v781
  %847 = vmatprep.subr.bf16.mxu0 %v784
  %848 = vmatpush1.bf16.msra.mxu0 %v783
  %849 = vmatprep.subr.bf16.mxu0 %v786
  %850 = vmatpush1.bf16.msra.mxu0 %v785
  %851 = vmatprep.subr.bf16.mxu0 %v788
  %852 = vmatpush1.bf16.msra.mxu0 %v787
  %853 = vmatprep.subr.bf16.mxu0 %v790
  %854 = vmatpush1.bf16.msra.mxu0 %v789
  %855 = vmatprep.subr.bf16.mxu0 %v792
  %856 = vmatpush1.bf16.msra.mxu0 %v791
  %857 = vmatprep.subr.bf16.mxu0 %v794
  %858 = vmatpush1.bf16.msra.mxu0 %v793
  %859 = vmatprep.subr.bf16.mxu0 %v796
  %860 = vmatpush1.bf16.msra.mxu0 %v795
  %861 = vmatprep.mubr.bf16.mxu0 %v250
  %862 = vmatmul.mubr.bf16.gmra.mrb[0].mxu0 %v249
  %v863 = vpop.f32.mrb[0].mxu0
  %v864 = vadd.f32 %v631, %v863
  %v865 = vpop.f32.mrb[0].mxu0
  %v866 = vadd.f32 %v633, %v865
  %v867 = vpop.f32.mrb[0].mxu0
  %v868 = vadd.f32 %v635, %v867
  %v869 = vpop.f32.mrb[0].mxu0
  %v870 = vadd.f32 %v637, %v869
  %871 = vmatprep.mubr.bf16.mxu0 %v252
  %872 = vmatmul.mubr.bf16.gmra.mrb[0].mxu0 %v251
  %v873 = vpop.f32.mrb[0].mxu0
  %v874 = vadd.f32 %v641, %v873
  %v875 = vpop.f32.mrb[0].mxu0
  %v876 = vadd.f32 %v643, %v875
  %v877 = vpop.f32.mrb[0].mxu0
  %v878 = vadd.f32 %v645, %v877
  %v879 = vpop.f32.mrb[0].mxu0
  %v880 = vadd.f32 %v647, %v879
  %881 = vmatprep.mubr.bf16.mxu0 %v254
  %882 = vmatmul.mubr.bf16.gmra.mrb[0].mxu0 %v253
  %v883 = vpop.f32.mrb[0].mxu0
  %v884 = vadd.f32 %v651, %v883
  %v885 = vpop.f32.mrb[0].mxu0
  %v886 = vadd.f32 %v653, %v885
  %v887 = vpop.f32.mrb[0].mxu0
  %v888 = vadd.f32 %v655, %v887
  %v889 = vpop.f32.mrb[0].mxu0
  %v890 = vadd.f32 %v657, %v889
  %891 = vmatprep.mubr.bf16.mxu0 %v256
  %892 = vmatmul.mubr.bf16.gmra.mrb[0].mxu0 %v255
  %v893 = vpop.f32.mrb[0].mxu0
  %v894 = vadd.f32 %v661, %v893
  %v895 = vpop.f32.mrb[0].mxu0
  %v896 = vadd.f32 %v663, %v895
  %v897 = vpop.f32.mrb[0].mxu0
  %v898 = vadd.f32 %v665, %v897
  %v899 = vpop.f32.mrb[0].mxu0
  %v900 = vadd.f32 %v667, %v899
  %901 = vdwg.mxu0
  %s902 = scalar_lea.vmem %s1, 64
  %v903 = vld [vmem:[%s902] sm:$0xf]
  %v904 = vld [vmem:[%s902 + $0x4] sm:$0xf]
  %v905 = vld [vmem:[%s902 + $0x8] sm:$0xf]
  %v906 = vld [vmem:[%s902 + $0xc] sm:$0xf]
  %v907 = vld [vmem:[%s902 + $0x10] sm:$0xf]
  %v908 = vld [vmem:[%s902 + $0x14] sm:$0xf]
  %v909 = vld [vmem:[%s902 + $0x18] sm:$0xf]
  %v910 = vld [vmem:[%s902 + $0x1c] sm:$0xf]
  %v919 = vunpack.c.l.b16 %v903
  %v920 = vunpack.c.l.b16 %v904
  %v921 = vunpack.c.l.b16 %v905
  %v922 = vunpack.c.l.b16 %v906
  %v923 = vunpack.c.l.b16 %v907
  %v924 = vunpack.c.l.b16 %v908
  %v925 = vunpack.c.l.b16 %v909
  %v926 = vunpack.c.l.b16 %v910
  %v927 = vpack.c.b16 %v920, %v919
  %v928 = vpack.c.b16 %v922, %v921
  %v929 = vpack.c.b16 %v924, %v923
  %v930 = vpack.c.b16 %v926, %v925
  %935 = vmatprep.subr.bf16.mxu0 %v145
  %936 = vmatpush1.bf16.msra.mxu0 %v144
  %937 = vmatprep.subr.bf16.mxu0 %v147
  %938 = vmatpush1.bf16.msra.mxu0 %v146
  %939 = vmatprep.subr.bf16.mxu0 %v149
  %940 = vmatpush1.bf16.msra.mxu0 %v148
  %941 = vmatprep.subr.bf16.mxu0 %v151
  %942 = vmatpush1.bf16.msra.mxu0 %v150
  %943 = vmatprep.subr.bf16.mxu0 %v153
  %944 = vmatpush1.bf16.msra.mxu0 %v152
  %945 = vmatprep.subr.bf16.mxu0 %v155
  %946 = vmatpush1.bf16.msra.mxu0 %v154
  %947 = vmatprep.subr.bf16.mxu0 %v157
  %948 = vmatpush1.bf16.msra.mxu0 %v156
  %949 = vmatprep.subr.bf16.mxu0 %v159
  %950 = vmatpush1.bf16.msra.mxu0 %v158
  %951 = vmatprep.subr.bf16.mxu0 0
  %952 = vmatpush1.bf16.msra.mxu0 0
  %953 = vmatprep.subr.bf16.mxu0 0
  %954 = vmatpush1.bf16.msra.mxu0 0
  %955 = vmatprep.subr.bf16.mxu0 0
  %956 = vmatpush1.bf16.msra.mxu0 0
  %957 = vmatprep.subr.bf16.mxu0 0
  %958 = vmatpush1.bf16.msra.mxu0 0
  %959 = vmatprep.subr.bf16.mxu0 0
  %960 = vmatpush1.bf16.msra.mxu0 0
  %961 = vmatprep.subr.bf16.mxu0 0
  %962 = vmatpush1.bf16.msra.mxu0 0
  %963 = vmatprep.subr.bf16.mxu0 0
  %964 = vmatpush1.bf16.msra.mxu0 0
  %965 = vmatprep.subr.bf16.mxu0 0
  %966 = vmatpush1.bf16.msra.mxu0 0
  %967 = vmatprep.mubr.bf16.mxu0 0
  %968 = vmatmul.mubr.bf16.gmra.mrb[0].mxu0 %v927
  %v969 = vpop.f32.mrb[0].mxu0
  %v970 = vadd.f32 0.0, %v969
  %v971 = vpop.f32.mrb[0].mxu0
  %v972 = vadd.f32 0.0, %v971
  %v973 = vpop.f32.mrb[0].mxu0
  %v974 = vadd.f32 0.0, %v973
  %v975 = vpop.f32.mrb[0].mxu0
  %v976 = vadd.f32 0.0, %v975
  %977 = vmatprep.mubr.bf16.mxu0 0
  %978 = vmatmul.mubr.bf16.gmra.mrb[0].mxu0 %v928
  %v979 = vpop.f32.mrb[0].mxu0
  %v980 = vadd.f32 0.0, %v979
  %v981 = vpop.f32.mrb[0].mxu0
  %v982 = vadd.f32 0.0, %v981
  %v983 = vpop.f32.mrb[0].mxu0
  %v984 = vadd.f32 0.0, %v983
  %v985 = vpop.f32.mrb[0].mxu0
  %v986 = vadd.f32 0.0, %v985
  %987 = vmatprep.mubr.bf16.mxu0 0
  %988 = vmatmul.mubr.bf16.gmra.mrb[0].mxu0 %v929
  %v989 = vpop.f32.mrb[0].mxu0
  %v990 = vadd.f32 0.0, %v989
  %v991 = vpop.f32.mrb[0].mxu0
  %v992 = vadd.f32 0.0, %v991
  %v993 = vpop.f32.mrb[0].mxu0
  %v994 = vadd.f32 0.0, %v993
  %v995 = vpop.f32.mrb[0].mxu0
  %v996 = vadd.f32 0.0, %v995
  %997 = vmatprep.mubr.bf16.mxu0 0
  %998 = vmatmul.mubr.bf16.gmra.mrb[0].mxu0 %v930
  %v999 = vpop.f32.mrb[0].mxu0
  %v1000 = vadd.f32 0.0, %v999
  %v1001 = vpop.f32.mrb[0].mxu0
  %v1002 = vadd.f32 0.0, %v1001
  %v1003 = vpop.f32.mrb[0].mxu0
  %v1004 = vadd.f32 0.0, %v1003
  %v1005 = vpop.f32.mrb[0].mxu0
  %v1006 = vadd.f32 0.0, %v1005
  %1007 = vdwg.mxu0
  %v1008 = vpack.c.bf16 %v974, %v970
  %v1009 = vpack.c.bf16 %v976, %v972
  %v1010 = vpack.c.bf16 %v984, %v980
  %v1011 = vpack.c.bf16 %v986, %v982
  %v1012 = vpack.c.bf16 %v994, %v990
  %v1013 = vpack.c.bf16 %v996, %v992
  %v1014 = vpack.c.bf16 %v1004, %v1000
  %v1015 = vpack.c.bf16 %v1006, %v1002
  %s1016 = scalar_lea.vmem %s6, 512
  %v1017 = vld [vmem:[%s1016] sm:$0xff]
  %v1018 = vld [vmem:[%s1016 + $0x8] sm:$0xff]
  %v1019 = vld [vmem:[%s1016 + $0x10] sm:$0xff]
  %v1020 = vld [vmem:[%s1016 + $0x18] sm:$0xff]
  %v1021 = vld [vmem:[%s1016 + $0x20] sm:$0xff]
  %v1022 = vld [vmem:[%s1016 + $0x28] sm:$0xff]
  %v1023 = vld [vmem:[%s1016 + $0x30] sm:$0xff]
  %v1024 = vld [vmem:[%s1016 + $0x38] sm:$0xff]
  %v1025 = vld [vmem:[%s1016 + $0x40] sm:$0xff]
  %v1026 = vld [vmem:[%s1016 + $0x48] sm:$0xff]
  %v1027 = vld [vmem:[%s1016 + $0x50] sm:$0xff]
  %v1028 = vld [vmem:[%s1016 + $0x58] sm:$0xff]
  %v1029 = vld [vmem:[%s1016 + $0x60] sm:$0xff]
  %v1030 = vld [vmem:[%s1016 + $0x68] sm:$0xff]
  %v1031 = vld [vmem:[%s1016 + $0x70] sm:$0xff]
  %v1032 = vld [vmem:[%s1016 + $0x78] sm:$0xff]
  %v1033 = vld [vmem:[%s1016 + $0x80] sm:$0xff]
  %v1034 = vld [vmem:[%s1016 + $0x88] sm:$0xff]
  %v1035 = vld [vmem:[%s1016 + $0x90] sm:$0xff]
  %v1036 = vld [vmem:[%s1016 + $0x98] sm:$0xff]
  %v1037 = vld [vmem:[%s1016 + $0xa0] sm:$0xff]
  %v1038 = vld [vmem:[%s1016 + $0xa8] sm:$0xff]
  %v1039 = vld [vmem:[%s1016 + $0xb0] sm:$0xff]
  %v1040 = vld [vmem:[%s1016 + $0xb8] sm:$0xff]
  %v1041 = vld [vmem:[%s1016 + $0xc0] sm:$0xff]
  %v1042 = vld [vmem:[%s1016 + $0xc8] sm:$0xff]
  %v1043 = vld [vmem:[%s1016 + $0xd0] sm:$0xff]
  %v1044 = vld [vmem:[%s1016 + $0xd8] sm:$0xff]
  %v1045 = vld [vmem:[%s1016 + $0xe0] sm:$0xff]
  %v1046 = vld [vmem:[%s1016 + $0xe8] sm:$0xff]
  %v1047 = vld [vmem:[%s1016 + $0xf0] sm:$0xff]
  %v1048 = vld [vmem:[%s1016 + $0xf8] sm:$0xff]
  %v1081 = vunpack.c.l.b16 %v1017
  %v1082 = vunpack.c.h.b16 %v1017
  %v1083 = vunpack.c.l.b16 %v1018
  %v1084 = vunpack.c.h.b16 %v1018
  %v1085 = vunpack.c.l.b16 %v1019
  %v1086 = vunpack.c.h.b16 %v1019
  %v1087 = vunpack.c.l.b16 %v1020
  %v1088 = vunpack.c.h.b16 %v1020
  %v1089 = vunpack.c.l.b16 %v1021
  %v1090 = vunpack.c.h.b16 %v1021
  %v1091 = vunpack.c.l.b16 %v1022
  %v1092 = vunpack.c.h.b16 %v1022
  %v1093 = vunpack.c.l.b16 %v1023
  %v1094 = vunpack.c.h.b16 %v1023
  %v1095 = vunpack.c.l.b16 %v1024
  %v1096 = vunpack.c.h.b16 %v1024
  %v1097 = vunpack.c.l.b16 %v1025
  %v1098 = vunpack.c.h.b16 %v1025
  %v1099 = vunpack.c.l.b16 %v1026
  %v1100 = vunpack.c.h.b16 %v1026
  %v1101 = vunpack.c.l.b16 %v1027
  %v1102 = vunpack.c.h.b16 %v1027
  %v1103 = vunpack.c.l.b16 %v1028
  %v1104 = vunpack.c.h.b16 %v1028
  %v1105 = vunpack.c.l.b16 %v1029
  %v1106 = vunpack.c.h.b16 %v1029
  %v1107 = vunpack.c.l.b16 %v1030
  %v1108 = vunpack.c.h.b16 %v1030
  %v1109 = vunpack.c.l.b16 %v1031
  %v1110 = vunpack.c.h.b16 %v1031
  %v1111 = vunpack.c.l.b16 %v1032
  %v1112 = vunpack.c.h.b16 %v1032
  %v1113 = vunpack.c.l.b16 %v1033
  %v1114 = vunpack.c.h.b16 %v1033
  %v1115 = vunpack.c.l.b16 %v1034
  %v1116 = vunpack.c.h.b16 %v1034
  %v1117 = vunpack.c.l.b16 %v1035
  %v1118 = vunpack.c.h.b16 %v1035
  %v1119 = vunpack.c.l.b16 %v1036
  %v1120 = vunpack.c.h.b16 %v1036
  %v1121 = vunpack.c.l.b16 %v1037
  %v1122 = vunpack.c.h.b16 %v1037
  %v1123 = vunpack.c.l.b16 %v1038
  %v1124 = vunpack.c.h.b16 %v1038
  %v1125 = vunpack.c.l.b16 %v1039
  %v1126 = vunpack.c.h.b16 %v1039
  %v1127 = vunpack.c.l.b16 %v1040
  %v1128 = vunpack.c.h.b16 %v1040
  %v1129 = vunpack.c.l.b16 %v1041
  %v1130 = vunpack.c.h.b16 %v1041
  %v1131 = vunpack.c.l.b16 %v1042
  %v1132 = vunpack.c.h.b16 %v1042
  %v1133 = vunpack.c.l.b16 %v1043
  %v1134 = vunpack.c.h.b16 %v1043
  %v1135 = vunpack.c.l.b16 %v1044
  %v1136 = vunpack.c.h.b16 %v1044
  %v1137 = vunpack.c.l.b16 %v1045
  %v1138 = vunpack.c.h.b16 %v1045
  %v1139 = vunpack.c.l.b16 %v1046
  %v1140 = vunpack.c.h.b16 %v1046
  %v1141 = vunpack.c.l.b16 %v1047
  %v1142 = vunpack.c.h.b16 %v1047
  %v1143 = vunpack.c.l.b16 %v1048
  %v1144 = vunpack.c.h.b16 %v1048
  %v1145 = vpack.c.b16 %v1083, %v1081
  %v1146 = vpack.c.b16 %v1084, %v1082
  %v1147 = vpack.c.b16 %v1087, %v1085
  %v1148 = vpack.c.b16 %v1088, %v1086
  %v1149 = vpack.c.b16 %v1091, %v1089
  %v1150 = vpack.c.b16 %v1092, %v1090
  %v1151 = vpack.c.b16 %v1095, %v1093
  %v1152 = vpack.c.b16 %v1096, %v1094
  %v1153 = vpack.c.b16 %v1099, %v1097
  %v1154 = vpack.c.b16 %v1100, %v1098
  %v1155 = vpack.c.b16 %v1103, %v1101
  %v1156 = vpack.c.b16 %v1104, %v1102
  %v1157 = vpack.c.b16 %v1107, %v1105
  %v1158 = vpack.c.b16 %v1108, %v1106
  %v1159 = vpack.c.b16 %v1111, %v1109
  %v1160 = vpack.c.b16 %v1112, %v1110
  %v1161 = vpack.c.b16 %v1115, %v1113
  %v1162 = vpack.c.b16 %v1116, %v1114
  %v1163 = vpack.c.b16 %v1119, %v1117
  %v1164 = vpack.c.b16 %v1120, %v1118
  %v1165 = vpack.c.b16 %v1123, %v1121
  %v1166 = vpack.c.b16 %v1124, %v1122
  %v1167 = vpack.c.b16 %v1127, %v1125
  %v1168 = vpack.c.b16 %v1128, %v1126
  %v1169 = vpack.c.b16 %v1131, %v1129
  %v1170 = vpack.c.b16 %v1132, %v1130
  %v1171 = vpack.c.b16 %v1135, %v1133
  %v1172 = vpack.c.b16 %v1136, %v1134
  %v1173 = vpack.c.b16 %v1139, %v1137
  %v1174 = vpack.c.b16 %v1140, %v1138
  %v1175 = vpack.c.b16 %v1143, %v1141
  %v1176 = vpack.c.b16 %v1144, %v1142
  %1209 = vmatprep.subr.bf16.mxu0 %v1146
  %1210 = vmatpush1.bf16.msra.mxu0 %v1145
  %1211 = vmatprep.subr.bf16.mxu0 %v1148
  %1212 = vmatpush1.bf16.msra.mxu0 %v1147
  %1213 = vmatprep.subr.bf16.mxu0 %v1150
  %1214 = vmatpush1.bf16.msra.mxu0 %v1149
  %1215 = vmatprep.subr.bf16.mxu0 %v1152
  %1216 = vmatpush1.bf16.msra.mxu0 %v1151
  %1217 = vmatprep.subr.bf16.mxu0 %v1154
  %1218 = vmatpush1.bf16.msra.mxu0 %v1153
  %1219 = vmatprep.subr.bf16.mxu0 %v1156
  %1220 = vmatpush1.bf16.msra.mxu0 %v1155
  %1221 = vmatprep.subr.bf16.mxu0 %v1158
  %1222 = vmatpush1.bf16.msra.mxu0 %v1157
  %1223 = vmatprep.subr.bf16.mxu0 %v1160
  %1224 = vmatpush1.bf16.msra.mxu0 %v1159
  %1225 = vmatprep.subr.bf16.mxu0 %v1162
  %1226 = vmatpush1.bf16.msra.mxu0 %v1161
  %1227 = vmatprep.subr.bf16.mxu0 %v1164
  %1228 = vmatpush1.bf16.msra.mxu0 %v1163
  %1229 = vmatprep.subr.bf16.mxu0 %v1166
  %1230 = vmatpush1.bf16.msra.mxu0 %v1165
  %1231 = vmatprep.subr.bf16.mxu0 %v1168
  %1232 = vmatpush1.bf16.msra.mxu0 %v1167
  %1233 = vmatprep.subr.bf16.mxu0 %v1170
  %1234 = vmatpush1.bf16.msra.mxu0 %v1169
  %1235 = vmatprep.subr.bf16.mxu0 %v1172
  %1236 = vmatpush1.bf16.msra.mxu0 %v1171
  %1237 = vmatprep.subr.bf16.mxu0 %v1174
  %1238 = vmatpush1.bf16.msra.mxu0 %v1173
  %1239 = vmatprep.subr.bf16.mxu0 %v1176
  %1240 = vmatpush1.bf16.msra.mxu0 %v1175
  %1241 = vmatprep.mubr.bf16.mxu0 %v1009
  %1242 = vmatmul.mubr.bf16.gmra.mrb[0].mxu0 %v1008
  %v1243 = vpop.f32.mrb[0].mxu0
  %v1244 = vadd.f32 0.0, %v1243
  %v1245 = vpop.f32.mrb[0].mxu0
  %v1246 = vadd.f32 0.0, %v1245
  %v1247 = vpop.f32.mrb[0].mxu0
  %v1248 = vadd.f32 0.0, %v1247
  %v1249 = vpop.f32.mrb[0].mxu0
  %v1250 = vadd.f32 0.0, %v1249
  %1251 = vmatprep.mubr.bf16.mxu0 %v1011
  %1252 = vmatmul.mubr.bf16.gmra.mrb[0].mxu0 %v1010
  %v1253 = vpop.f32.mrb[0].mxu0
  %v1254 = vadd.f32 0.0, %v1253
  %v1255 = vpop.f32.mrb[0].mxu0
  %v1256 = vadd.f32 0.0, %v1255
  %v1257 = vpop.f32.mrb[0].mxu0
  %v1258 = vadd.f32 0.0, %v1257
  %v1259 = vpop.f32.mrb[0].mxu0
  %v1260 = vadd.f32 0.0, %v1259
  %1261 = vmatprep.mubr.bf16.mxu0 %v1013
  %1262 = vmatmul.mubr.bf16.gmra.mrb[0].mxu0 %v1012
  %v1263 = vpop.f32.mrb[0].mxu0
  %v1264 = vadd.f32 0.0, %v1263
  %v1265 = vpop.f32.mrb[0].mxu0
  %v1266 = vadd.f32 0.0, %v1265
  %v1267 = vpop.f32.mrb[0].mxu0
  %v1268 = vadd.f32 0.0, %v1267
  %v1269 = vpop.f32.mrb[0].mxu0
  %v1270 = vadd.f32 0.0, %v1269
  %1271 = vmatprep.mubr.bf16.mxu0 %v1015
  %1272 = vmatmul.mubr.bf16.gmra.mrb[0].mxu0 %v1014
  %v1273 = vpop.f32.mrb[0].mxu0
  %v1274 = vadd.f32 0.0, %v1273
  %v1275 = vpop.f32.mrb[0].mxu0
  %v1276 = vadd.f32 0.0, %v1275
  %v1277 = vpop.f32.mrb[0].mxu0
  %v1278 = vadd.f32 0.0, %v1277
  %v1279 = vpop.f32.mrb[0].mxu0
  %v1280 = vadd.f32 0.0, %v1279
  %1281 = vdwg.mxu0
  %v1282 = vadd.f32 %v864, %v1244
  %v1283 = vadd.f32 %v866, %v1246
  %v1284 = vadd.f32 %v868, %v1248
  %v1285 = vadd.f32 %v870, %v1250
  %v1286 = vadd.f32 %v874, %v1254
  %v1287 = vadd.f32 %v876, %v1256
  %v1288 = vadd.f32 %v878, %v1258
  %v1289 = vadd.f32 %v880, %v1260
  %v1290 = vadd.f32 %v884, %v1264
  %v1291 = vadd.f32 %v886, %v1266
  %v1292 = vadd.f32 %v888, %v1268
  %v1293 = vadd.f32 %v890, %v1270
  %v1294 = vadd.f32 %v894, %v1274
  %v1295 = vadd.f32 %v896, %v1276
  %v1296 = vadd.f32 %v898, %v1278
  %v1297 = vadd.f32 %v900, %v1280
  %s1298 = scalar_lea.vmem %s1, 96
  %v1299 = vld [vmem:[%s1298] sm:$0xf]
  %v1300 = vld [vmem:[%s1298 + $0x4] sm:$0xf]
  %v1301 = vld [vmem:[%s1298 + $0x8] sm:$0xf]
  %v1302 = vld [vmem:[%s1298 + $0xc] sm:$0xf]
  %v1303 = vld [vmem:[%s1298 + $0x10] sm:$0xf]
  %v1304 = vld [vmem:[%s1298 + $0x14] sm:$0xf]
  %v1305 = vld [vmem:[%s1298 + $0x18] sm:$0xf]
  %v1306 = vld [vmem:[%s1298 + $0x1c] sm:$0xf]
  %v1315 = vunpack.c.l.b16 %v1299
  %v1316 = vunpack.c.l.b16 %v1300
  %v1317 = vunpack.c.l.b16 %v1301
  %v1318 = vunpack.c.l.b16 %v1302
  %v1319 = vunpack.c.l.b16 %v1303
  %v1320 = vunpack.c.l.b16 %v1304
  %v1321 = vunpack.c.l.b16 %v1305
  %v1322 = vunpack.c.l.b16 %v1306
  %v1323 = vpack.c.b16 %v1316, %v1315
  %v1324 = vpack.c.b16 %v1318, %v1317
  %v1325 = vpack.c.b16 %v1320, %v1319
  %v1326 = vpack.c.b16 %v1322, %v1321
  %1331 = vmatprep.subr.bf16.mxu0 %v145
  %1332 = vmatpush1.bf16.msra.mxu0 %v144
  %1333 = vmatprep.subr.bf16.mxu0 %v147
  %1334 = vmatpush1.bf16.msra.mxu0 %v146
  %1335 = vmatprep.subr.bf16.mxu0 %v149
  %1336 = vmatpush1.bf16.msra.mxu0 %v148
  %1337 = vmatprep.subr.bf16.mxu0 %v151
  %1338 = vmatpush1.bf16.msra.mxu0 %v150
  %1339 = vmatprep.subr.bf16.mxu0 %v153
  %1340 = vmatpush1.bf16.msra.mxu0 %v152
  %1341 = vmatprep.subr.bf16.mxu0 %v155
  %1342 = vmatpush1.bf16.msra.mxu0 %v154
  %1343 = vmatprep.subr.bf16.mxu0 %v157
  %1344 = vmatpush1.bf16.msra.mxu0 %v156
  %1345 = vmatprep.subr.bf16.mxu0 %v159
  %1346 = vmatpush1.bf16.msra.mxu0 %v158
  %1347 = vmatprep.subr.bf16.mxu0 0
  %1348 = vmatpush1.bf16.msra.mxu0 0
  %1349 = vmatprep.subr.bf16.mxu0 0
  %1350 = vmatpush1.bf16.msra.mxu0 0
  %1351 = vmatprep.subr.bf16.mxu0 0
  %1352 = vmatpush1.bf16.msra.mxu0 0
  %1353 = vmatprep.subr.bf16.mxu0 0
  %1354 = vmatpush1.bf16.msra.mxu0 0
  %1355 = vmatprep.subr.bf16.mxu0 0
  %1356 = vmatpush1.bf16.msra.mxu0 0
  %1357 = vmatprep.subr.bf16.mxu0 0
  %1358 = vmatpush1.bf16.msra.mxu0 0
  %1359 = vmatprep.subr.bf16.mxu0 0
  %1360 = vmatpush1.bf16.msra.mxu0 0
  %1361 = vmatprep.subr.bf16.mxu0 0
  %1362 = vmatpush1.bf16.msra.mxu0 0
  %1363 = vmatprep.mubr.bf16.mxu0 0
  %1364 = vmatmul.mubr.bf16.gmra.mrb[0].mxu0 %v1323
  %v1365 = vpop.f32.mrb[0].mxu0
  %v1366 = vadd.f32 0.0, %v1365
  %v1367 = vpop.f32.mrb[0].mxu0
  %v1368 = vadd.f32 0.0, %v1367
  %v1369 = vpop.f32.mrb[0].mxu0
  %v1370 = vadd.f32 0.0, %v1369
  %v1371 = vpop.f32.mrb[0].mxu0
  %v1372 = vadd.f32 0.0, %v1371
  %1373 = vmatprep.mubr.bf16.mxu0 0
  %1374 = vmatmul.mubr.bf16.gmra.mrb[0].mxu0 %v1324
  %v1375 = vpop.f32.mrb[0].mxu0
  %v1376 = vadd.f32 0.0, %v1375
  %v1377 = vpop.f32.mrb[0].mxu0
  %v1378 = vadd.f32 0.0, %v1377
  %v1379 = vpop.f32.mrb[0].mxu0
  %v1380 = vadd.f32 0.0, %v1379
  %v1381 = vpop.f32.mrb[0].mxu0
  %v1382 = vadd.f32 0.0, %v1381
  %1383 = vmatprep.mubr.bf16.mxu0 0
  %1384 = vmatmul.mubr.bf16.gmra.mrb[0].mxu0 %v1325
  %v1385 = vpop.f32.mrb[0].mxu0
  %v1386 = vadd.f32 0.0, %v1385
  %v1387 = vpop.f32.mrb[0].mxu0
  %v1388 = vadd.f32 0.0, %v1387
  %v1389 = vpop.f32.mrb[0].mxu0
  %v1390 = vadd.f32 0.0, %v1389
  %v1391 = vpop.f32.mrb[0].mxu0
  %v1392 = vadd.f32 0.0, %v1391
  %1393 = vmatprep.mubr.bf16.mxu0 0
  %1394 = vmatmul.mubr.bf16.gmra.mrb[0].mxu0 %v1326
  %v1395 = vpop.f32.mrb[0].mxu0
  %v1396 = vadd.f32 0.0, %v1395
  %v1397 = vpop.f32.mrb[0].mxu0
  %v1398 = vadd.f32 0.0, %v1397
  %v1399 = vpop.f32.mrb[0].mxu0
  %v1400 = vadd.f32 0.0, %v1399
  %v1401 = vpop.f32.mrb[0].mxu0
  %v1402 = vadd.f32 0.0, %v1401
  %1403 = vdwg.mxu0
  %v1404 = vpack.c.bf16 %v1370, %v1366
  %v1405 = vpack.c.bf16 %v1372, %v1368
  %v1406 = vpack.c.bf16 %v1380, %v1376
  %v1407 = vpack.c.bf16 %v1382, %v1378
  %v1408 = vpack.c.bf16 %v1390, %v1386
  %v1409 = vpack.c.bf16 %v1392, %v1388
  %v1410 = vpack.c.bf16 %v1400, %v1396
  %v1411 = vpack.c.bf16 %v1402, %v1398
  %s1412 = scalar_lea.vmem %s6, 768
  %v1413 = vld [vmem:[%s1412] sm:$0xff]
  %v1414 = vld [vmem:[%s1412 + $0x8] sm:$0xff]
  %v1415 = vld [vmem:[%s1412 + $0x10] sm:$0xff]
  %v1416 = vld [vmem:[%s1412 + $0x18] sm:$0xff]
  %v1417 = vld [vmem:[%s1412 + $0x20] sm:$0xff]
  %v1418 = vld [vmem:[%s1412 + $0x28] sm:$0xff]
  %v1419 = vld [vmem:[%s1412 + $0x30] sm:$0xff]
  %v1420 = vld [vmem:[%s1412 + $0x38] sm:$0xff]
  %v1421 = vld [vmem:[%s1412 + $0x40] sm:$0xff]
  %v1422 = vld [vmem:[%s1412 + $0x48] sm:$0xff]
  %v1423 = vld [vmem:[%s1412 + $0x50] sm:$0xff]
  %v1424 = vld [vmem:[%s1412 + $0x58] sm:$0xff]
  %v1425 = vld [vmem:[%s1412 + $0x60] sm:$0xff]
  %v1426 = vld [vmem:[%s1412 + $0x68] sm:$0xff]
  %v1427 = vld [vmem:[%s1412 + $0x70] sm:$0xff]
  %v1428 = vld [vmem:[%s1412 + $0x78] sm:$0xff]
  %v1429 = vld [vmem:[%s1412 + $0x80] sm:$0xff]
  %v1430 = vld [vmem:[%s1412 + $0x88] sm:$0xff]
  %v1431 = vld [vmem:[%s1412 + $0x90] sm:$0xff]
  %v1432 = vld [vmem:[%s1412 + $0x98] sm:$0xff]
  %v1433 = vld [vmem:[%s1412 + $0xa0] sm:$0xff]
  %v1434 = vld [vmem:[%s1412 + $0xa8] sm:$0xff]
  %v1435 = vld [vmem:[%s1412 + $0xb0] sm:$0xff]
  %v1436 = vld [vmem:[%s1412 + $0xb8] sm:$0xff]
  %v1437 = vld [vmem:[%s1412 + $0xc0] sm:$0xff]
  %v1438 = vld [vmem:[%s1412 + $0xc8] sm:$0xff]
  %v1439 = vld [vmem:[%s1412 + $0xd0] sm:$0xff]
  %v1440 = vld [vmem:[%s1412 + $0xd8] sm:$0xff]
  %v1441 = vld [vmem:[%s1412 + $0xe0] sm:$0xff]
  %v1442 = vld [vmem:[%s1412 + $0xe8] sm:$0xff]
  %v1443 = vld [vmem:[%s1412 + $0xf0] sm:$0xff]
  %v1444 = vld [vmem:[%s1412 + $0xf8] sm:$0xff]
  %v1477 = vunpack.c.l.b16 %v1413
  %v1478 = vunpack.c.h.b16 %v1413
  %v1479 = vunpack.c.l.b16 %v1414
  %v1480 = vunpack.c.h.b16 %v1414
  %v1481 = vunpack.c.l.b16 %v1415
  %v1482 = vunpack.c.h.b16 %v1415
  %v1483 = vunpack.c.l.b16 %v1416
  %v1484 = vunpack.c.h.b16 %v1416
  %v1485 = vunpack.c.l.b16 %v1417
  %v1486 = vunpack.c.h.b16 %v1417
  %v1487 = vunpack.c.l.b16 %v1418
  %v1488 = vunpack.c.h.b16 %v1418
  %v1489 = vunpack.c.l.b16 %v1419
  %v1490 = vunpack.c.h.b16 %v1419
  %v1491 = vunpack.c.l.b16 %v1420
  %v1492 = vunpack.c.h.b16 %v1420
  %v1493 = vunpack.c.l.b16 %v1421
  %v1494 = vunpack.c.h.b16 %v1421
  %v1495 = vunpack.c.l.b16 %v1422
  %v1496 = vunpack.c.h.b16 %v1422
  %v1497 = vunpack.c.l.b16 %v1423
  %v1498 = vunpack.c.h.b16 %v1423
  %v1499 = vunpack.c.l.b16 %v1424
  %v1500 = vunpack.c.h.b16 %v1424
  %v1501 = vunpack.c.l.b16 %v1425
  %v1502 = vunpack.c.h.b16 %v1425
  %v1503 = vunpack.c.l.b16 %v1426
  %v1504 = vunpack.c.h.b16 %v1426
  %v1505 = vunpack.c.l.b16 %v1427
  %v1506 = vunpack.c.h.b16 %v1427
  %v1507 = vunpack.c.l.b16 %v1428
  %v1508 = vunpack.c.h.b16 %v1428
  %v1509 = vunpack.c.l.b16 %v1429
  %v1510 = vunpack.c.h.b16 %v1429
  %v1511 = vunpack.c.l.b16 %v1430
  %v1512 = vunpack.c.h.b16 %v1430
  %v1513 = vunpack.c.l.b16 %v1431
  %v1514 = vunpack.c.h.b16 %v1431
  %v1515 = vunpack.c.l.b16 %v1432
  %v1516 = vunpack.c.h.b16 %v1432
  %v1517 = vunpack.c.l.b16 %v1433
  %v1518 = vunpack.c.h.b16 %v1433
  %v1519 = vunpack.c.l.b16 %v1434
  %v1520 = vunpack.c.h.b16 %v1434
  %v1521 = vunpack.c.l.b16 %v1435
  %v1522 = vunpack.c.h.b16 %v1435
  %v1523 = vunpack.c.l.b16 %v1436
  %v1524 = vunpack.c.h.b16 %v1436
  %v1525 = vunpack.c.l.b16 %v1437
  %v1526 = vunpack.c.h.b16 %v1437
  %v1527 = vunpack.c.l.b16 %v1438
  %v1528 = vunpack.c.h.b16 %v1438
  %v1529 = vunpack.c.l.b16 %v1439
  %v1530 = vunpack.c.h.b16 %v1439
  %v1531 = vunpack.c.l.b16 %v1440
  %v1532 = vunpack.c.h.b16 %v1440
  %v1533 = vunpack.c.l.b16 %v1441
  %v1534 = vunpack.c.h.b16 %v1441
  %v1535 = vunpack.c.l.b16 %v1442
  %v1536 = vunpack.c.h.b16 %v1442
  %v1537 = vunpack.c.l.b16 %v1443
  %v1538 = vunpack.c.h.b16 %v1443
  %v1539 = vunpack.c.l.b16 %v1444
  %v1540 = vunpack.c.h.b16 %v1444
  %v1541 = vpack.c.b16 %v1479, %v1477
  %v1542 = vpack.c.b16 %v1480, %v1478
  %v1543 = vpack.c.b16 %v1483, %v1481
  %v1544 = vpack.c.b16 %v1484, %v1482
  %v1545 = vpack.c.b16 %v1487, %v1485
  %v1546 = vpack.c.b16 %v1488, %v1486
  %v1547 = vpack.c.b16 %v1491, %v1489
  %v1548 = vpack.c.b16 %v1492, %v1490
  %v1549 = vpack.c.b16 %v1495, %v1493
  %v1550 = vpack.c.b16 %v1496, %v1494
  %v1551 = vpack.c.b16 %v1499, %v1497
  %v1552 = vpack.c.b16 %v1500, %v1498
  %v1553 = vpack.c.b16 %v1503, %v1501
  %v1554 = vpack.c.b16 %v1504, %v1502
  %v1555 = vpack.c.b16 %v1507, %v1505
  %v1556 = vpack.c.b16 %v1508, %v1506
  %v1557 = vpack.c.b16 %v1511, %v1509
  %v1558 = vpack.c.b16 %v1512, %v1510
  %v1559 = vpack.c.b16 %v1515, %v1513
  %v1560 = vpack.c.b16 %v1516, %v1514
  %v1561 = vpack.c.b16 %v1519, %v1517
  %v1562 = vpack.c.b16 %v1520, %v1518
  %v1563 = vpack.c.b16 %v1523, %v1521
  %v1564 = vpack.c.b16 %v1524, %v1522
  %v1565 = vpack.c.b16 %v1527, %v1525
  %v1566 = vpack.c.b16 %v1528, %v1526
  %v1567 = vpack.c.b16 %v1531, %v1529
  %v1568 = vpack.c.b16 %v1532, %v1530
  %v1569 = vpack.c.b16 %v1535, %v1533
  %v1570 = vpack.c.b16 %v1536, %v1534
  %v1571 = vpack.c.b16 %v1539, %v1537
  %v1572 = vpack.c.b16 %v1540, %v1538
  %1605 = vmatprep.subr.bf16.mxu0 %v1542
  %1606 = vmatpush1.bf16.msra.mxu0 %v1541
  %1607 = vmatprep.subr.bf16.mxu0 %v1544
  %1608 = vmatpush1.bf16.msra.mxu0 %v1543
  %1609 = vmatprep.subr.bf16.mxu0 %v1546
  %1610 = vmatpush1.bf16.msra.mxu0 %v1545
  %1611 = vmatprep.subr.bf16.mxu0 %v1548
  %1612 = vmatpush1.bf16.msra.mxu0 %v1547
  %1613 = vmatprep.subr.bf16.mxu0 %v1550
  %1614 = vmatpush1.bf16.msra.mxu0 %v1549
  %1615 = vmatprep.subr.bf16.mxu0 %v1552
  %1616 = vmatpush1.bf16.msra.mxu0 %v1551
  %1617 = vmatprep.subr.bf16.mxu0 %v1554
  %1618 = vmatpush1.bf16.msra.mxu0 %v1553
  %1619 = vmatprep.subr.bf16.mxu0 %v1556
  %1620 = vmatpush1.bf16.msra.mxu0 %v1555
  %1621 = vmatprep.subr.bf16.mxu0 %v1558
  %1622 = vmatpush1.bf16.msra.mxu0 %v1557
  %1623 = vmatprep.subr.bf16.mxu0 %v1560
  %1624 = vmatpush1.bf16.msra.mxu0 %v1559
  %1625 = vmatprep.subr.bf16.mxu0 %v1562
  %1626 = vmatpush1.bf16.msra.mxu0 %v1561
  %1627 = vmatprep.subr.bf16.mxu0 %v1564
  %1628 = vmatpush1.bf16.msra.mxu0 %v1563
  %1629 = vmatprep.subr.bf16.mxu0 %v1566
  %1630 = vmatpush1.bf16.msra.mxu0 %v1565
  %1631 = vmatprep.subr.bf16.mxu0 %v1568
  %1632 = vmatpush1.bf16.msra.mxu0 %v1567
  %1633 = vmatprep.subr.bf16.mxu0 %v1570
  %1634 = vmatpush1.bf16.msra.mxu0 %v1569
  %1635 = vmatprep.subr.bf16.mxu0 %v1572
  %1636 = vmatpush1.bf16.msra.mxu0 %v1571
  %1637 = vmatprep.mubr.bf16.mxu0 %v1405
  %1638 = vmatmul.mubr.bf16.gmra.mrb[0].mxu0 %v1404
  %v1639 = vpop.f32.mrb[0].mxu0
  %v1640 = vadd.f32 0.0, %v1639
  %v1641 = vpop.f32.mrb[0].mxu0
  %v1642 = vadd.f32 0.0, %v1641
  %v1643 = vpop.f32.mrb[0].mxu0
  %v1644 = vadd.f32 0.0, %v1643
  %v1645 = vpop.f32.mrb[0].mxu0
  %v1646 = vadd.f32 0.0, %v1645
  %1647 = vmatprep.mubr.bf16.mxu0 %v1407
  %1648 = vmatmul.mubr.bf16.gmra.mrb[0].mxu0 %v1406
  %v1649 = vpop.f32.mrb[0].mxu0
  %v1650 = vadd.f32 0.0, %v1649
  %v1651 = vpop.f32.mrb[0].mxu0
  %v1652 = vadd.f32 0.0, %v1651
  %v1653 = vpop.f32.mrb[0].mxu0
  %v1654 = vadd.f32 0.0, %v1653
  %v1655 = vpop.f32.mrb[0].mxu0
  %v1656 = vadd.f32 0.0, %v1655
  %1657 = vmatprep.mubr.bf16.mxu0 %v1409
  %1658 = vmatmul.mubr.bf16.gmra.mrb[0].mxu0 %v1408
  %v1659 = vpop.f32.mrb[0].mxu0
  %v1660 = vadd.f32 0.0, %v1659
  %v1661 = vpop.f32.mrb[0].mxu0
  %v1662 = vadd.f32 0.0, %v1661
  %v1663 = vpop.f32.mrb[0].mxu0
  %v1664 = vadd.f32 0.0, %v1663
  %v1665 = vpop.f32.mrb[0].mxu0
  %v1666 = vadd.f32 0.0, %v1665
  %1667 = vmatprep.mubr.bf16.mxu0 %v1411
  %1668 = vmatmul.mubr.bf16.gmra.mrb[0].mxu0 %v1410
  %v1669 = vpop.f32.mrb[0].mxu0
  %v1670 = vadd.f32 0.0, %v1669
  %v1671 = vpop.f32.mrb[0].mxu0
  %v1672 = vadd.f32 0.0, %v1671
  %v1673 = vpop.f32.mrb[0].mxu0
  %v1674 = vadd.f32 0.0, %v1673
  %v1675 = vpop.f32.mrb[0].mxu0
  %v1676 = vadd.f32 0.0, %v1675
  %1677 = vdwg.mxu0
  %v1678 = vadd.f32 %v1282, %v1640
  %v1679 = vadd.f32 %v1283, %v1642
  %v1680 = vadd.f32 %v1284, %v1644
  %v1681 = vadd.f32 %v1285, %v1646
  %v1682 = vadd.f32 %v1286, %v1650
  %v1683 = vadd.f32 %v1287, %v1652
  %v1684 = vadd.f32 %v1288, %v1654
  %v1685 = vadd.f32 %v1289, %v1656
  %v1686 = vadd.f32 %v1290, %v1660
  %v1687 = vadd.f32 %v1291, %v1662
  %v1688 = vadd.f32 %v1292, %v1664
  %v1689 = vadd.f32 %v1293, %v1666
  %v1690 = vadd.f32 %v1294, %v1670
  %v1691 = vadd.f32 %v1295, %v1672
  %v1692 = vadd.f32 %v1296, %v1674
  %v1693 = vadd.f32 %v1297, %v1676
  %vm1694 = vcmp.ge.f32.partialorder %v1678, 0.0
  %vm1695 = vcmp.ge.f32.partialorder %v1679, 0.0
  %vm1696 = vcmp.ge.f32.partialorder %v1680, 0.0
  %vm1697 = vcmp.ge.f32.partialorder %v1681, 0.0
  %vm1698 = vcmp.ge.f32.partialorder %v1682, 0.0
  %vm1699 = vcmp.ge.f32.partialorder %v1683, 0.0
  %vm1700 = vcmp.ge.f32.partialorder %v1684, 0.0
  %vm1701 = vcmp.ge.f32.partialorder %v1685, 0.0
  %vm1702 = vcmp.ge.f32.partialorder %v1686, 0.0
  %vm1703 = vcmp.ge.f32.partialorder %v1687, 0.0
  %vm1704 = vcmp.ge.f32.partialorder %v1688, 0.0
  %vm1705 = vcmp.ge.f32.partialorder %v1689, 0.0
  %vm1706 = vcmp.ge.f32.partialorder %v1690, 0.0
  %vm1707 = vcmp.ge.f32.partialorder %v1691, 0.0
  %vm1708 = vcmp.ge.f32.partialorder %v1692, 0.0
  %vm1709 = vcmp.ge.f32.partialorder %v1693, 0.0
  %v1710 = vmul.f32 %v1678, 0.2
  %v1711 = vmul.f32 %v1679, 0.2
  %v1712 = vmul.f32 %v1680, 0.2
  %v1713 = vmul.f32 %v1681, 0.2
  %v1714 = vmul.f32 %v1682, 0.2
  %v1715 = vmul.f32 %v1683, 0.2
  %v1716 = vmul.f32 %v1684, 0.2
  %v1717 = vmul.f32 %v1685, 0.2
  %v1718 = vmul.f32 %v1686, 0.2
  %v1719 = vmul.f32 %v1687, 0.2
  %v1720 = vmul.f32 %v1688, 0.2
  %v1721 = vmul.f32 %v1689, 0.2
  %v1722 = vmul.f32 %v1690, 0.2
  %v1723 = vmul.f32 %v1691, 0.2
  %v1724 = vmul.f32 %v1692, 0.2
  %v1725 = vmul.f32 %v1693, 0.2
  %v1726 = vsel %vm1694, %v1678, %v1710
  %v1727 = vsel %vm1695, %v1679, %v1711
  %v1728 = vsel %vm1696, %v1680, %v1712
  %v1729 = vsel %vm1697, %v1681, %v1713
  %v1730 = vsel %vm1698, %v1682, %v1714
  %v1731 = vsel %vm1699, %v1683, %v1715
  %v1732 = vsel %vm1700, %v1684, %v1716
  %v1733 = vsel %vm1701, %v1685, %v1717
  %v1734 = vsel %vm1702, %v1686, %v1718
  %v1735 = vsel %vm1703, %v1687, %v1719
  %v1736 = vsel %vm1704, %v1688, %v1720
  %v1737 = vsel %vm1705, %v1689, %v1721
  %v1738 = vsel %vm1706, %v1690, %v1722
  %v1739 = vsel %vm1707, %v1691, %v1723
  %v1740 = vsel %vm1708, %v1692, %v1724
  %v1741 = vsel %vm1709, %v1693, %v1725
  %v1742 = vpack.c.bf16 %v1728, %v1726
  %v1743 = vpack.c.bf16 %v1729, %v1727
  %v1744 = vpack.c.bf16 %v1732, %v1730
  %v1745 = vpack.c.bf16 %v1733, %v1731
  %v1746 = vpack.c.bf16 %v1736, %v1734
  %v1747 = vpack.c.bf16 %v1737, %v1735
  %v1748 = vpack.c.bf16 %v1740, %v1738
  %v1749 = vpack.c.bf16 %v1741, %v1739
  %v1750 = vld [vmem:[%s2] sm:$0xf]
  %v1751 = vld [vmem:[%s2 + $0x4] sm:$0xf]
  %v1752 = vld [vmem:[%s2 + $0x8] sm:$0xf]
  %v1753 = vld [vmem:[%s2 + $0xc] sm:$0xf]
  %v1758 = vunpack.c.l.b16 %v1750
  %v1759 = vunpack.c.l.b16 %v1751
  %v1760 = vunpack.c.l.b16 %v1752
  %v1761 = vunpack.c.l.b16 %v1753
  %v1762 = vpack.c.b16 %v1759, %v1758
  %v1763 = vpack.c.b16 %v1761, %v1760
  %vm1764 = vcmask 523264
  %v1766 = vsel %vm1764, %v1762, 0
  %v1769 = vsel %vm1764, %v1763, 0
  %1771 = vmatprep.subr.bf16.mxu0 %v1743
  %1772 = vmatpush1.bf16.msra.mxu0 %v1742
  %1773 = vmatprep.subr.bf16.mxu0 %v1745
  %1774 = vmatpush1.bf16.msra.mxu0 %v1744
  %1775 = vmatprep.subr.bf16.mxu0 %v1747
  %1776 = vmatpush1.bf16.msra.mxu0 %v1746
  %1777 = vmatprep.subr.bf16.mxu0 %v1749
  %1778 = vmatpush1.bf16.msra.mxu0 %v1748
  %1779 = vmatprep.subr.bf16.mxu0 0
  %1780 = vmatpush1.bf16.msra.mxu0 0
  %1781 = vmatprep.subr.bf16.mxu0 0
  %1782 = vmatpush1.bf16.msra.mxu0 0
  %1783 = vmatprep.subr.bf16.mxu0 0
  %1784 = vmatpush1.bf16.msra.mxu0 0
  %1785 = vmatprep.subr.bf16.mxu0 0
  %1786 = vmatpush1.bf16.msra.mxu0 0
  %1787 = vmatprep.subr.bf16.mxu0 0
  %1788 = vmatpush1.bf16.msra.mxu0 0
  %1789 = vmatprep.subr.bf16.mxu0 0
  %1790 = vmatpush1.bf16.msra.mxu0 0
  %1791 = vmatprep.subr.bf16.mxu0 0
  %1792 = vmatpush1.bf16.msra.mxu0 0
  %1793 = vmatprep.subr.bf16.mxu0 0
  %1794 = vmatpush1.bf16.msra.mxu0 0
  %1795 = vmatprep.subr.bf16.mxu0 0
  %1796 = vmatpush1.bf16.msra.mxu0 0
  %1797 = vmatprep.subr.bf16.mxu0 0
  %1798 = vmatpush1.bf16.msra.mxu0 0
  %1799 = vmatprep.subr.bf16.mxu0 0
  %1800 = vmatpush1.bf16.msra.mxu0 0
  %1801 = vmatprep.subr.bf16.mxu0 0
  %1802 = vmatpush1.bf16.msra.mxu0 0
  %1803 = vmatprep.mubr.bf16.mxu0 0
  %1804 = vmatmul.mubr.bf16.gmra.mrb[0].mxu0 %v1766
  %v1805 = vpop.f32.mrb[0].mxu0
  %v1806 = vadd.f32 0.0, %v1805
  %v1807 = vpop.f32.mrb[0].mxu0
  %v1808 = vadd.f32 0.0, %v1807
  %v1809 = vpop.f32.mrb[0].mxu0
  %v1810 = vadd.f32 0.0, %v1809
  %v1811 = vpop.f32.mrb[0].mxu0
  %v1812 = vadd.f32 0.0, %v1811
  %1813 = vmatprep.mubr.bf16.mxu0 0
  %1814 = vmatmul.mubr.bf16.gmra.mrb[0].mxu0 %v1769
  %v1815 = vpop.f32.mrb[0].mxu0
  %v1816 = vadd.f32 0.0, %v1815
  %v1817 = vpop.f32.mrb[0].mxu0
  %v1818 = vadd.f32 0.0, %v1817
  %v1819 = vpop.f32.mrb[0].mxu0
  %v1820 = vadd.f32 0.0, %v1819
  %v1821 = vpop.f32.mrb[0].mxu0
  %v1822 = vadd.f32 0.0, %v1821
  %1823 = vdwg.mxu0
  %v1824 = vpack.c.bf16 %v1810, %v1806
  %v1825 = vpack.c.bf16 %v1812, %v1808
  %v1826 = vpack.c.bf16 %v1820, %v1816
  %v1827 = vpack.c.bf16 %v1822, %v1818
  %v1828 = vld [vmem:[%s7] sm:$0xff]
  %v1829 = vld [vmem:[%s7 + $0x8] sm:$0xff]
  %v1830 = vld [vmem:[%s7 + $0x10] sm:$0xff]
  %v1831 = vld [vmem:[%s7 + $0x18] sm:$0xff]
  %v1832 = vld [vmem:[%s7 + $0x20] sm:$0xff]
  %v1833 = vld [vmem:[%s7 + $0x28] sm:$0xff]
  %v1834 = vld [vmem:[%s7 + $0x30] sm:$0xff]
  %v1835 = vld [vmem:[%s7 + $0x38] sm:$0xff]
  %v1836 = vld [vmem:[%s7 + $0x40] sm:$0xff]
  %v1837 = vld [vmem:[%s7 + $0x48] sm:$0xff]
  %v1838 = vld [vmem:[%s7 + $0x50] sm:$0xff]
  %v1839 = vld [vmem:[%s7 + $0x58] sm:$0xff]
  %v1840 = vld [vmem:[%s7 + $0x60] sm:$0xff]
  %v1841 = vld [vmem:[%s7 + $0x68] sm:$0xff]
  %v1842 = vld [vmem:[%s7 + $0x70] sm:$0xff]
  %v1843 = vld [vmem:[%s7 + $0x78] sm:$0xff]
  %v1844 = vld [vmem:[%s7 + $0x80] sm:$0xff]
  %v1845 = vld [vmem:[%s7 + $0x88] sm:$0xff]
  %v1846 = vld [vmem:[%s7 + $0x90] sm:$0xff]
  %v1847 = vld [vmem:[%s7 + $0x98] sm:$0xff]
  %v1848 = vld [vmem:[%s7 + $0xa0] sm:$0xff]
  %v1849 = vld [vmem:[%s7 + $0xa8] sm:$0xff]
  %v1850 = vld [vmem:[%s7 + $0xb0] sm:$0xff]
  %v1851 = vld [vmem:[%s7 + $0xb8] sm:$0xff]
  %v1852 = vld [vmem:[%s7 + $0xc0] sm:$0xff]
  %v1853 = vld [vmem:[%s7 + $0xc8] sm:$0xff]
  %v1854 = vld [vmem:[%s7 + $0xd0] sm:$0xff]
  %v1855 = vld [vmem:[%s7 + $0xd8] sm:$0xff]
  %v1856 = vld [vmem:[%s7 + $0xe0] sm:$0xff]
  %v1857 = vld [vmem:[%s7 + $0xe8] sm:$0xff]
  %v1858 = vld [vmem:[%s7 + $0xf0] sm:$0xff]
  %v1859 = vld [vmem:[%s7 + $0xf8] sm:$0xff]
  %s1860 = scalar_lea.vmem %s2, 16
  %v1861 = vld [vmem:[%s1860] sm:$0xf]
  %v1862 = vld [vmem:[%s1860 + $0x4] sm:$0xf]
  %v1863 = vld [vmem:[%s1860 + $0x8] sm:$0xf]
  %v1864 = vld [vmem:[%s1860 + $0xc] sm:$0xf]
  %v1869 = vunpack.c.l.b16 %v1861
  %v1870 = vunpack.c.l.b16 %v1862
  %v1871 = vunpack.c.l.b16 %v1863
  %v1872 = vunpack.c.l.b16 %v1864
  %v1873 = vpack.c.b16 %v1870, %v1869
  %v1874 = vpack.c.b16 %v1872, %v1871
  %v1876 = vsel %vm1764, %v1873, 0
  %v1879 = vsel %vm1764, %v1874, 0
  %1881 = vmatprep.subr.bf16.mxu0 %v1743
  %1882 = vmatpush1.bf16.msra.mxu0 %v1742
  %1883 = vmatprep.subr.bf16.mxu0 %v1745
  %1884 = vmatpush1.bf16.msra.mxu0 %v1744
  %1885 = vmatprep.subr.bf16.mxu0 %v1747
  %1886 = vmatpush1.bf16.msra.mxu0 %v1746
  %1887 = vmatprep.subr.bf16.mxu0 %v1749
  %1888 = vmatpush1.bf16.msra.mxu0 %v1748
  %1889 = vmatprep.subr.bf16.mxu0 0
  %1890 = vmatpush1.bf16.msra.mxu0 0
  %1891 = vmatprep.subr.bf16.mxu0 0
  %1892 = vmatpush1.bf16.msra.mxu0 0
  %1893 = vmatprep.subr.bf16.mxu0 0
  %1894 = vmatpush1.bf16.msra.mxu0 0
  %1895 = vmatprep.subr.bf16.mxu0 0
  %1896 = vmatpush1.bf16.msra.mxu0 0
  %1897 = vmatprep.subr.bf16.mxu0 0
  %1898 = vmatpush1.bf16.msra.mxu0 0
  %1899 = vmatprep.subr.bf16.mxu0 0
  %1900 = vmatpush1.bf16.msra.mxu0 0
  %1901 = vmatprep.subr.bf16.mxu0 0
  %1902 = vmatpush1.bf16.msra.mxu0 0
  %1903 = vmatprep.subr.bf16.mxu0 0
  %1904 = vmatpush1.bf16.msra.mxu0 0
  %1905 = vmatprep.subr.bf16.mxu0 0
  %1906 = vmatpush1.bf16.msra.mxu0 0
  %1907 = vmatprep.subr.bf16.mxu0 0
  %1908 = vmatpush1.bf16.msra.mxu0 0
  %1909 = vmatprep.subr.bf16.mxu0 0
  %1910 = vmatpush1.bf16.msra.mxu0 0
  %1911 = vmatprep.subr.bf16.mxu0 0
  %1912 = vmatpush1.bf16.msra.mxu0 0
  %1913 = vmatprep.mubr.bf16.mxu0 0
  %1914 = vmatmul.mubr.bf16.gmra.mrb[0].mxu0 %v1876
  %v1915 = vpop.f32.mrb[0].mxu0
  %v1916 = vadd.f32 0.0, %v1915
  %v1917 = vpop.f32.mrb[0].mxu0
  %v1918 = vadd.f32 0.0, %v1917
  %v1919 = vpop.f32.mrb[0].mxu0
  %v1920 = vadd.f32 0.0, %v1919
  %v1921 = vpop.f32.mrb[0].mxu0
  %v1922 = vadd.f32 0.0, %v1921
  %1923 = vmatprep.mubr.bf16.mxu0 0
  %1924 = vmatmul.mubr.bf16.gmra.mrb[0].mxu0 %v1879
  %v1925 = vpop.f32.mrb[0].mxu0
  %v1926 = vadd.f32 0.0, %v1925
  %v1927 = vpop.f32.mrb[0].mxu0
  %v1928 = vadd.f32 0.0, %v1927
  %v1929 = vpop.f32.mrb[0].mxu0
  %v1930 = vadd.f32 0.0, %v1929
  %v1931 = vpop.f32.mrb[0].mxu0
  %v1932 = vadd.f32 0.0, %v1931
  %1933 = vdwg.mxu0
  %v1934 = vpack.c.bf16 %v1920, %v1916
  %v1935 = vpack.c.bf16 %v1922, %v1918
  %v1936 = vpack.c.bf16 %v1930, %v1926
  %v1937 = vpack.c.bf16 %v1932, %v1928
  %s1938 = scalar_lea.vmem %s7, 256
  %v1939 = vld [vmem:[%s1938] sm:$0xff]
  %v1940 = vld [vmem:[%s1938 + $0x8] sm:$0xff]
  %v1941 = vld [vmem:[%s1938 + $0x10] sm:$0xff]
  %v1942 = vld [vmem:[%s1938 + $0x18] sm:$0xff]
  %v1943 = vld [vmem:[%s1938 + $0x20] sm:$0xff]
  %v1944 = vld [vmem:[%s1938 + $0x28] sm:$0xff]
  %v1945 = vld [vmem:[%s1938 + $0x30] sm:$0xff]
  %v1946 = vld [vmem:[%s1938 + $0x38] sm:$0xff]
  %v1947 = vld [vmem:[%s1938 + $0x40] sm:$0xff]
  %v1948 = vld [vmem:[%s1938 + $0x48] sm:$0xff]
  %v1949 = vld [vmem:[%s1938 + $0x50] sm:$0xff]
  %v1950 = vld [vmem:[%s1938 + $0x58] sm:$0xff]
  %v1951 = vld [vmem:[%s1938 + $0x60] sm:$0xff]
  %v1952 = vld [vmem:[%s1938 + $0x68] sm:$0xff]
  %v1953 = vld [vmem:[%s1938 + $0x70] sm:$0xff]
  %v1954 = vld [vmem:[%s1938 + $0x78] sm:$0xff]
  %v1955 = vld [vmem:[%s1938 + $0x80] sm:$0xff]
  %v1956 = vld [vmem:[%s1938 + $0x88] sm:$0xff]
  %v1957 = vld [vmem:[%s1938 + $0x90] sm:$0xff]
  %v1958 = vld [vmem:[%s1938 + $0x98] sm:$0xff]
  %v1959 = vld [vmem:[%s1938 + $0xa0] sm:$0xff]
  %v1960 = vld [vmem:[%s1938 + $0xa8] sm:$0xff]
  %v1961 = vld [vmem:[%s1938 + $0xb0] sm:$0xff]
  %v1962 = vld [vmem:[%s1938 + $0xb8] sm:$0xff]
  %v1963 = vld [vmem:[%s1938 + $0xc0] sm:$0xff]
  %v1964 = vld [vmem:[%s1938 + $0xc8] sm:$0xff]
  %v1965 = vld [vmem:[%s1938 + $0xd0] sm:$0xff]
  %v1966 = vld [vmem:[%s1938 + $0xd8] sm:$0xff]
  %v1967 = vld [vmem:[%s1938 + $0xe0] sm:$0xff]
  %v1968 = vld [vmem:[%s1938 + $0xe8] sm:$0xff]
  %v1969 = vld [vmem:[%s1938 + $0xf0] sm:$0xff]
  %v1970 = vld [vmem:[%s1938 + $0xf8] sm:$0xff]
  %v2003 = vunpack.c.l.b16 %v1939
  %v2004 = vunpack.c.h.b16 %v1939
  %v2005 = vunpack.c.l.b16 %v1940
  %v2006 = vunpack.c.h.b16 %v1940
  %v2007 = vunpack.c.l.b16 %v1941
  %v2008 = vunpack.c.h.b16 %v1941
  %v2009 = vunpack.c.l.b16 %v1942
  %v2010 = vunpack.c.h.b16 %v1942
  %v2011 = vunpack.c.l.b16 %v1943
  %v2012 = vunpack.c.h.b16 %v1943
  %v2013 = vunpack.c.l.b16 %v1944
  %v2014 = vunpack.c.h.b16 %v1944
  %v2015 = vunpack.c.l.b16 %v1945
  %v2016 = vunpack.c.h.b16 %v1945
  %v2017 = vunpack.c.l.b16 %v1946
  %v2018 = vunpack.c.h.b16 %v1946
  %v2019 = vunpack.c.l.b16 %v1947
  %v2020 = vunpack.c.h.b16 %v1947
  %v2021 = vunpack.c.l.b16 %v1948
  %v2022 = vunpack.c.h.b16 %v1948
  %v2023 = vunpack.c.l.b16 %v1949
  %v2024 = vunpack.c.h.b16 %v1949
  %v2025 = vunpack.c.l.b16 %v1950
  %v2026 = vunpack.c.h.b16 %v1950
  %v2027 = vunpack.c.l.b16 %v1951
  %v2028 = vunpack.c.h.b16 %v1951
  %v2029 = vunpack.c.l.b16 %v1952
  %v2030 = vunpack.c.h.b16 %v1952
  %v2031 = vunpack.c.l.b16 %v1953
  %v2032 = vunpack.c.h.b16 %v1953
  %v2033 = vunpack.c.l.b16 %v1954
  %v2034 = vunpack.c.h.b16 %v1954
  %v2035 = vunpack.c.l.b16 %v1955
  %v2036 = vunpack.c.h.b16 %v1955
  %v2037 = vunpack.c.l.b16 %v1956
  %v2038 = vunpack.c.h.b16 %v1956
  %v2039 = vunpack.c.l.b16 %v1957
  %v2040 = vunpack.c.h.b16 %v1957
  %v2041 = vunpack.c.l.b16 %v1958
  %v2042 = vunpack.c.h.b16 %v1958
  %v2043 = vunpack.c.l.b16 %v1959
  %v2044 = vunpack.c.h.b16 %v1959
  %v2045 = vunpack.c.l.b16 %v1960
  %v2046 = vunpack.c.h.b16 %v1960
  %v2047 = vunpack.c.l.b16 %v1961
  %v2048 = vunpack.c.h.b16 %v1961
  %v2049 = vunpack.c.l.b16 %v1962
  %v2050 = vunpack.c.h.b16 %v1962
  %v2051 = vunpack.c.l.b16 %v1963
  %v2052 = vunpack.c.h.b16 %v1963
  %v2053 = vunpack.c.l.b16 %v1964
  %v2054 = vunpack.c.h.b16 %v1964
  %v2055 = vunpack.c.l.b16 %v1965
  %v2056 = vunpack.c.h.b16 %v1965
  %v2057 = vunpack.c.l.b16 %v1966
  %v2058 = vunpack.c.h.b16 %v1966
  %v2059 = vunpack.c.l.b16 %v1967
  %v2060 = vunpack.c.h.b16 %v1967
  %v2061 = vunpack.c.l.b16 %v1968
  %v2062 = vunpack.c.h.b16 %v1968
  %v2063 = vunpack.c.l.b16 %v1969
  %v2064 = vunpack.c.h.b16 %v1969
  %v2065 = vunpack.c.l.b16 %v1970
  %v2066 = vunpack.c.h.b16 %v1970
  %v2067 = vpack.c.b16 %v2005, %v2003
  %v2068 = vpack.c.b16 %v2006, %v2004
  %v2069 = vpack.c.b16 %v2009, %v2007
  %v2070 = vpack.c.b16 %v2010, %v2008
  %v2071 = vpack.c.b16 %v2013, %v2011
  %v2072 = vpack.c.b16 %v2014, %v2012
  %v2073 = vpack.c.b16 %v2017, %v2015
  %v2074 = vpack.c.b16 %v2018, %v2016
  %v2075 = vpack.c.b16 %v2021, %v2019
  %v2076 = vpack.c.b16 %v2022, %v2020
  %v2077 = vpack.c.b16 %v2025, %v2023
  %v2078 = vpack.c.b16 %v2026, %v2024
  %v2079 = vpack.c.b16 %v2029, %v2027
  %v2080 = vpack.c.b16 %v2030, %v2028
  %v2081 = vpack.c.b16 %v2033, %v2031
  %v2082 = vpack.c.b16 %v2034, %v2032
  %v2083 = vpack.c.b16 %v2037, %v2035
  %v2084 = vpack.c.b16 %v2038, %v2036
  %v2085 = vpack.c.b16 %v2041, %v2039
  %v2086 = vpack.c.b16 %v2042, %v2040
  %v2087 = vpack.c.b16 %v2045, %v2043
  %v2088 = vpack.c.b16 %v2046, %v2044
  %v2089 = vpack.c.b16 %v2049, %v2047
  %v2090 = vpack.c.b16 %v2050, %v2048
  %v2091 = vpack.c.b16 %v2053, %v2051
  %v2092 = vpack.c.b16 %v2054, %v2052
  %v2093 = vpack.c.b16 %v2057, %v2055
  %v2094 = vpack.c.b16 %v2058, %v2056
  %v2095 = vpack.c.b16 %v2061, %v2059
  %v2096 = vpack.c.b16 %v2062, %v2060
  %v2097 = vpack.c.b16 %v2065, %v2063
  %v2098 = vpack.c.b16 %v2066, %v2064
  %2131 = vmatprep.subr.bf16.mxu0 %v2068
  %2132 = vmatpush1.bf16.msra.mxu0 %v2067
  %2133 = vmatprep.subr.bf16.mxu0 %v2070
  %2134 = vmatpush1.bf16.msra.mxu0 %v2069
  %2135 = vmatprep.subr.bf16.mxu0 %v2072
  %2136 = vmatpush1.bf16.msra.mxu0 %v2071
  %2137 = vmatprep.subr.bf16.mxu0 %v2074
  %2138 = vmatpush1.bf16.msra.mxu0 %v2073
  %2139 = vmatprep.subr.bf16.mxu0 %v2076
  %2140 = vmatpush1.bf16.msra.mxu0 %v2075
  %2141 = vmatprep.subr.bf16.mxu0 %v2078
  %2142 = vmatpush1.bf16.msra.mxu0 %v2077
  %2143 = vmatprep.subr.bf16.mxu0 %v2080
  %2144 = vmatpush1.bf16.msra.mxu0 %v2079
  %2145 = vmatprep.subr.bf16.mxu0 %v2082
  %2146 = vmatpush1.bf16.msra.mxu0 %v2081
  %2147 = vmatprep.subr.bf16.mxu0 %v2084
  %2148 = vmatpush1.bf16.msra.mxu0 %v2083
  %2149 = vmatprep.subr.bf16.mxu0 %v2086
  %2150 = vmatpush1.bf16.msra.mxu0 %v2085
  %2151 = vmatprep.subr.bf16.mxu0 %v2088
  %2152 = vmatpush1.bf16.msra.mxu0 %v2087
  %2153 = vmatprep.subr.bf16.mxu0 %v2090
  %2154 = vmatpush1.bf16.msra.mxu0 %v2089
  %2155 = vmatprep.subr.bf16.mxu0 %v2092
  %2156 = vmatpush1.bf16.msra.mxu0 %v2091
  %2157 = vmatprep.subr.bf16.mxu0 %v2094
  %2158 = vmatpush1.bf16.msra.mxu0 %v2093
  %2159 = vmatprep.subr.bf16.mxu0 %v2096
  %2160 = vmatpush1.bf16.msra.mxu0 %v2095
  %2161 = vmatprep.subr.bf16.mxu0 %v2098
  %2162 = vmatpush1.bf16.msra.mxu0 %v2097
  %2163 = vmatprep.mubr.bf16.mxu0 %v1935
  %2164 = vmatmul.mubr.bf16.gmra.mrb[0].mxu0 %v1934
  %v2165 = vpop.f32.mrb[0].mxu0
  %v2166 = vadd.f32 0.0, %v2165
  %v2167 = vpop.f32.mrb[0].mxu0
  %v2168 = vadd.f32 0.0, %v2167
  %v2169 = vpop.f32.mrb[0].mxu0
  %v2170 = vadd.f32 0.0, %v2169
  %v2171 = vpop.f32.mrb[0].mxu0
  %v2172 = vadd.f32 0.0, %v2171
  %2173 = vmatprep.mubr.bf16.mxu0 %v1937
  %2174 = vmatmul.mubr.bf16.gmra.mrb[0].mxu0 %v1936
  %v2175 = vpop.f32.mrb[0].mxu0
  %v2176 = vadd.f32 0.0, %v2175
  %v2177 = vpop.f32.mrb[0].mxu0
  %v2178 = vadd.f32 0.0, %v2177
  %v2179 = vpop.f32.mrb[0].mxu0
  %v2180 = vadd.f32 0.0, %v2179
  %v2181 = vpop.f32.mrb[0].mxu0
  %v2182 = vadd.f32 0.0, %v2181
  %2183 = vdwg.mxu0
  %v2216 = vunpack.c.l.b16 %v1828
  %v2217 = vunpack.c.h.b16 %v1828
  %v2218 = vunpack.c.l.b16 %v1829
  %v2219 = vunpack.c.h.b16 %v1829
  %v2220 = vunpack.c.l.b16 %v1830
  %v2221 = vunpack.c.h.b16 %v1830
  %v2222 = vunpack.c.l.b16 %v1831
  %v2223 = vunpack.c.h.b16 %v1831
  %v2224 = vunpack.c.l.b16 %v1832
  %v2225 = vunpack.c.h.b16 %v1832
  %v2226 = vunpack.c.l.b16 %v1833
  %v2227 = vunpack.c.h.b16 %v1833
  %v2228 = vunpack.c.l.b16 %v1834
  %v2229 = vunpack.c.h.b16 %v1834
  %v2230 = vunpack.c.l.b16 %v1835
  %v2231 = vunpack.c.h.b16 %v1835
  %v2232 = vunpack.c.l.b16 %v1836
  %v2233 = vunpack.c.h.b16 %v1836
  %v2234 = vunpack.c.l.b16 %v1837
  %v2235 = vunpack.c.h.b16 %v1837
  %v2236 = vunpack.c.l.b16 %v1838
  %v2237 = vunpack.c.h.b16 %v1838
  %v2238 = vunpack.c.l.b16 %v1839
  %v2239 = vunpack.c.h.b16 %v1839
  %v2240 = vunpack.c.l.b16 %v1840
  %v2241 = vunpack.c.h.b16 %v1840
  %v2242 = vunpack.c.l.b16 %v1841
  %v2243 = vunpack.c.h.b16 %v1841
  %v2244 = vunpack.c.l.b16 %v1842
  %v2245 = vunpack.c.h.b16 %v1842
  %v2246 = vunpack.c.l.b16 %v1843
  %v2247 = vunpack.c.h.b16 %v1843
  %v2248 = vunpack.c.l.b16 %v1844
  %v2249 = vunpack.c.h.b16 %v1844
  %v2250 = vunpack.c.l.b16 %v1845
  %v2251 = vunpack.c.h.b16 %v1845
  %v2252 = vunpack.c.l.b16 %v1846
  %v2253 = vunpack.c.h.b16 %v1846
  %v2254 = vunpack.c.l.b16 %v1847
  %v2255 = vunpack.c.h.b16 %v1847
  %v2256 = vunpack.c.l.b16 %v1848
  %v2257 = vunpack.c.h.b16 %v1848
  %v2258 = vunpack.c.l.b16 %v1849
  %v2259 = vunpack.c.h.b16 %v1849
  %v2260 = vunpack.c.l.b16 %v1850
  %v2261 = vunpack.c.h.b16 %v1850
  %v2262 = vunpack.c.l.b16 %v1851
  %v2263 = vunpack.c.h.b16 %v1851
  %v2264 = vunpack.c.l.b16 %v1852
  %v2265 = vunpack.c.h.b16 %v1852
  %v2266 = vunpack.c.l.b16 %v1853
  %v2267 = vunpack.c.h.b16 %v1853
  %v2268 = vunpack.c.l.b16 %v1854
  %v2269 = vunpack.c.h.b16 %v1854
  %v2270 = vunpack.c.l.b16 %v1855
  %v2271 = vunpack.c.h.b16 %v1855
  %v2272 = vunpack.c.l.b16 %v1856
  %v2273 = vunpack.c.h.b16 %v1856
  %v2274 = vunpack.c.l.b16 %v1857
  %v2275 = vunpack.c.h.b16 %v1857
  %v2276 = vunpack.c.l.b16 %v1858
  %v2277 = vunpack.c.h.b16 %v1858
  %v2278 = vunpack.c.l.b16 %v1859
  %v2279 = vunpack.c.h.b16 %v1859
  %v2280 = vpack.c.b16 %v2218, %v2216
  %v2281 = vpack.c.b16 %v2219, %v2217
  %v2282 = vpack.c.b16 %v2222, %v2220
  %v2283 = vpack.c.b16 %v2223, %v2221
  %v2284 = vpack.c.b16 %v2226, %v2224
  %v2285 = vpack.c.b16 %v2227, %v2225
  %v2286 = vpack.c.b16 %v2230, %v2228
  %v2287 = vpack.c.b16 %v2231, %v2229
  %v2288 = vpack.c.b16 %v2234, %v2232
  %v2289 = vpack.c.b16 %v2235, %v2233
  %v2290 = vpack.c.b16 %v2238, %v2236
  %v2291 = vpack.c.b16 %v2239, %v2237
  %v2292 = vpack.c.b16 %v2242, %v2240
  %v2293 = vpack.c.b16 %v2243, %v2241
  %v2294 = vpack.c.b16 %v2246, %v2244
  %v2295 = vpack.c.b16 %v2247, %v2245
  %v2296 = vpack.c.b16 %v2250, %v2248
  %v2297 = vpack.c.b16 %v2251, %v2249
  %v2298 = vpack.c.b16 %v2254, %v2252
  %v2299 = vpack.c.b16 %v2255, %v2253
  %v2300 = vpack.c.b16 %v2258, %v2256
  %v2301 = vpack.c.b16 %v2259, %v2257
  %v2302 = vpack.c.b16 %v2262, %v2260
  %v2303 = vpack.c.b16 %v2263, %v2261
  %v2304 = vpack.c.b16 %v2266, %v2264
  %v2305 = vpack.c.b16 %v2267, %v2265
  %v2306 = vpack.c.b16 %v2270, %v2268
  %v2307 = vpack.c.b16 %v2271, %v2269
  %v2308 = vpack.c.b16 %v2274, %v2272
  %v2309 = vpack.c.b16 %v2275, %v2273
  %v2310 = vpack.c.b16 %v2278, %v2276
  %v2311 = vpack.c.b16 %v2279, %v2277
  %2344 = vmatprep.subr.bf16.mxu0 %v2281
  %2345 = vmatpush1.bf16.msra.mxu0 %v2280
  %2346 = vmatprep.subr.bf16.mxu0 %v2283
  %2347 = vmatpush1.bf16.msra.mxu0 %v2282
  %2348 = vmatprep.subr.bf16.mxu0 %v2285
  %2349 = vmatpush1.bf16.msra.mxu0 %v2284
  %2350 = vmatprep.subr.bf16.mxu0 %v2287
  %2351 = vmatpush1.bf16.msra.mxu0 %v2286
  %2352 = vmatprep.subr.bf16.mxu0 %v2289
  %2353 = vmatpush1.bf16.msra.mxu0 %v2288
  %2354 = vmatprep.subr.bf16.mxu0 %v2291
  %2355 = vmatpush1.bf16.msra.mxu0 %v2290
  %2356 = vmatprep.subr.bf16.mxu0 %v2293
  %2357 = vmatpush1.bf16.msra.mxu0 %v2292
  %2358 = vmatprep.subr.bf16.mxu0 %v2295
  %2359 = vmatpush1.bf16.msra.mxu0 %v2294
  %2360 = vmatprep.subr.bf16.mxu0 %v2297
  %2361 = vmatpush1.bf16.msra.mxu0 %v2296
  %2362 = vmatprep.subr.bf16.mxu0 %v2299
  %2363 = vmatpush1.bf16.msra.mxu0 %v2298
  %2364 = vmatprep.subr.bf16.mxu0 %v2301
  %2365 = vmatpush1.bf16.msra.mxu0 %v2300
  %2366 = vmatprep.subr.bf16.mxu0 %v2303
  %2367 = vmatpush1.bf16.msra.mxu0 %v2302
  %2368 = vmatprep.subr.bf16.mxu0 %v2305
  %2369 = vmatpush1.bf16.msra.mxu0 %v2304
  %2370 = vmatprep.subr.bf16.mxu0 %v2307
  %2371 = vmatpush1.bf16.msra.mxu0 %v2306
  %2372 = vmatprep.subr.bf16.mxu0 %v2309
  %2373 = vmatpush1.bf16.msra.mxu0 %v2308
  %2374 = vmatprep.subr.bf16.mxu0 %v2311
  %2375 = vmatpush1.bf16.msra.mxu0 %v2310
  %2376 = vmatprep.mubr.bf16.mxu0 %v1825
  %2377 = vmatmul.mubr.bf16.gmra.mrb[0].mxu0 %v1824
  %v2378 = vpop.f32.mrb[0].mxu0
  %v2379 = vadd.f32 %v2166, %v2378
  %v2380 = vpop.f32.mrb[0].mxu0
  %v2381 = vadd.f32 %v2168, %v2380
  %v2382 = vpop.f32.mrb[0].mxu0
  %v2383 = vadd.f32 %v2170, %v2382
  %v2384 = vpop.f32.mrb[0].mxu0
  %v2385 = vadd.f32 %v2172, %v2384
  %2386 = vmatprep.mubr.bf16.mxu0 %v1827
  %2387 = vmatmul.mubr.bf16.gmra.mrb[0].mxu0 %v1826
  %v2388 = vpop.f32.mrb[0].mxu0
  %v2389 = vadd.f32 %v2176, %v2388
  %v2390 = vpop.f32.mrb[0].mxu0
  %v2391 = vadd.f32 %v2178, %v2390
  %v2392 = vpop.f32.mrb[0].mxu0
  %v2393 = vadd.f32 %v2180, %v2392
  %v2394 = vpop.f32.mrb[0].mxu0
  %v2395 = vadd.f32 %v2182, %v2394
  %2396 = vdwg.mxu0
  %s2397 = scalar_lea.vmem %s2, 32
  %v2398 = vld [vmem:[%s2397] sm:$0xf]
  %v2399 = vld [vmem:[%s2397 + $0x4] sm:$0xf]
  %v2400 = vld [vmem:[%s2397 + $0x8] sm:$0xf]
  %v2401 = vld [vmem:[%s2397 + $0xc] sm:$0xf]
  %v2406 = vunpack.c.l.b16 %v2398
  %v2407 = vunpack.c.l.b16 %v2399
  %v2408 = vunpack.c.l.b16 %v2400
  %v2409 = vunpack.c.l.b16 %v2401
  %v2410 = vpack.c.b16 %v2407, %v2406
  %v2411 = vpack.c.b16 %v2409, %v2408
  %v2413 = vsel %vm1764, %v2410, 0
  %v2416 = vsel %vm1764, %v2411, 0
  %2418 = vmatprep.subr.bf16.mxu0 %v1743
  %2419 = vmatpush1.bf16.msra.mxu0 %v1742
  %2420 = vmatprep.subr.bf16.mxu0 %v1745
  %2421 = vmatpush1.bf16.msra.mxu0 %v1744
  %2422 = vmatprep.subr.bf16.mxu0 %v1747
  %2423 = vmatpush1.bf16.msra.mxu0 %v1746
  %2424 = vmatprep.subr.bf16.mxu0 %v1749
  %2425 = vmatpush1.bf16.msra.mxu0 %v1748
  %2426 = vmatprep.subr.bf16.mxu0 0
  %2427 = vmatpush1.bf16.msra.mxu0 0
  %2428 = vmatprep.subr.bf16.mxu0 0
  %2429 = vmatpush1.bf16.msra.mxu0 0
  %2430 = vmatprep.subr.bf16.mxu0 0
  %2431 = vmatpush1.bf16.msra.mxu0 0
  %2432 = vmatprep.subr.bf16.mxu0 0
  %2433 = vmatpush1.bf16.msra.mxu0 0
  %2434 = vmatprep.subr.bf16.mxu0 0
  %2435 = vmatpush1.bf16.msra.mxu0 0
  %2436 = vmatprep.subr.bf16.mxu0 0
  %2437 = vmatpush1.bf16.msra.mxu0 0
  %2438 = vmatprep.subr.bf16.mxu0 0
  %2439 = vmatpush1.bf16.msra.mxu0 0
  %2440 = vmatprep.subr.bf16.mxu0 0
  %2441 = vmatpush1.bf16.msra.mxu0 0
  %2442 = vmatprep.subr.bf16.mxu0 0
  %2443 = vmatpush1.bf16.msra.mxu0 0
  %2444 = vmatprep.subr.bf16.mxu0 0
  %2445 = vmatpush1.bf16.msra.mxu0 0
  %2446 = vmatprep.subr.bf16.mxu0 0
  %2447 = vmatpush1.bf16.msra.mxu0 0
  %2448 = vmatprep.subr.bf16.mxu0 0
  %2449 = vmatpush1.bf16.msra.mxu0 0
  %2450 = vmatprep.mubr.bf16.mxu0 0
  %2451 = vmatmul.mubr.bf16.gmra.mrb[0].mxu0 %v2413
  %v2452 = vpop.f32.mrb[0].mxu0
  %v2453 = vadd.f32 0.0, %v2452
  %v2454 = vpop.f32.mrb[0].mxu0
  %v2455 = vadd.f32 0.0, %v2454
  %v2456 = vpop.f32.mrb[0].mxu0
  %v2457 = vadd.f32 0.0, %v2456
  %v2458 = vpop.f32.mrb[0].mxu0
  %v2459 = vadd.f32 0.0, %v2458
  %2460 = vmatprep.mubr.bf16.mxu0 0
  %2461 = vmatmul.mubr.bf16.gmra.mrb[0].mxu0 %v2416
  %v2462 = vpop.f32.mrb[0].mxu0
  %v2463 = vadd.f32 0.0, %v2462
  %v2464 = vpop.f32.mrb[0].mxu0
  %v2465 = vadd.f32 0.0, %v2464
  %v2466 = vpop.f32.mrb[0].mxu0
  %v2467 = vadd.f32 0.0, %v2466
  %v2468 = vpop.f32.mrb[0].mxu0
  %v2469 = vadd.f32 0.0, %v2468
  %2470 = vdwg.mxu0
  %v2471 = vpack.c.bf16 %v2457, %v2453
  %v2472 = vpack.c.bf16 %v2459, %v2455
  %v2473 = vpack.c.bf16 %v2467, %v2463
  %v2474 = vpack.c.bf16 %v2469, %v2465
  %s2475 = scalar_lea.vmem %s7, 512
  %v2476 = vld [vmem:[%s2475] sm:$0xff]
  %v2477 = vld [vmem:[%s2475 + $0x8] sm:$0xff]
  %v2478 = vld [vmem:[%s2475 + $0x10] sm:$0xff]
  %v2479 = vld [vmem:[%s2475 + $0x18] sm:$0xff]
  %v2480 = vld [vmem:[%s2475 + $0x20] sm:$0xff]
  %v2481 = vld [vmem:[%s2475 + $0x28] sm:$0xff]
  %v2482 = vld [vmem:[%s2475 + $0x30] sm:$0xff]
  %v2483 = vld [vmem:[%s2475 + $0x38] sm:$0xff]
  %v2484 = vld [vmem:[%s2475 + $0x40] sm:$0xff]
  %v2485 = vld [vmem:[%s2475 + $0x48] sm:$0xff]
  %v2486 = vld [vmem:[%s2475 + $0x50] sm:$0xff]
  %v2487 = vld [vmem:[%s2475 + $0x58] sm:$0xff]
  %v2488 = vld [vmem:[%s2475 + $0x60] sm:$0xff]
  %v2489 = vld [vmem:[%s2475 + $0x68] sm:$0xff]
  %v2490 = vld [vmem:[%s2475 + $0x70] sm:$0xff]
  %v2491 = vld [vmem:[%s2475 + $0x78] sm:$0xff]
  %v2492 = vld [vmem:[%s2475 + $0x80] sm:$0xff]
  %v2493 = vld [vmem:[%s2475 + $0x88] sm:$0xff]
  %v2494 = vld [vmem:[%s2475 + $0x90] sm:$0xff]
  %v2495 = vld [vmem:[%s2475 + $0x98] sm:$0xff]
  %v2496 = vld [vmem:[%s2475 + $0xa0] sm:$0xff]
  %v2497 = vld [vmem:[%s2475 + $0xa8] sm:$0xff]
  %v2498 = vld [vmem:[%s2475 + $0xb0] sm:$0xff]
  %v2499 = vld [vmem:[%s2475 + $0xb8] sm:$0xff]
  %v2500 = vld [vmem:[%s2475 + $0xc0] sm:$0xff]
  %v2501 = vld [vmem:[%s2475 + $0xc8] sm:$0xff]
  %v2502 = vld [vmem:[%s2475 + $0xd0] sm:$0xff]
  %v2503 = vld [vmem:[%s2475 + $0xd8] sm:$0xff]
  %v2504 = vld [vmem:[%s2475 + $0xe0] sm:$0xff]
  %v2505 = vld [vmem:[%s2475 + $0xe8] sm:$0xff]
  %v2506 = vld [vmem:[%s2475 + $0xf0] sm:$0xff]
  %v2507 = vld [vmem:[%s2475 + $0xf8] sm:$0xff]
  %v2540 = vunpack.c.l.b16 %v2476
  %v2541 = vunpack.c.h.b16 %v2476
  %v2542 = vunpack.c.l.b16 %v2477
  %v2543 = vunpack.c.h.b16 %v2477
  %v2544 = vunpack.c.l.b16 %v2478
  %v2545 = vunpack.c.h.b16 %v2478
  %v2546 = vunpack.c.l.b16 %v2479
  %v2547 = vunpack.c.h.b16 %v2479
  %v2548 = vunpack.c.l.b16 %v2480
  %v2549 = vunpack.c.h.b16 %v2480
  %v2550 = vunpack.c.l.b16 %v2481
  %v2551 = vunpack.c.h.b16 %v2481
  %v2552 = vunpack.c.l.b16 %v2482
  %v2553 = vunpack.c.h.b16 %v2482
  %v2554 = vunpack.c.l.b16 %v2483
  %v2555 = vunpack.c.h.b16 %v2483
  %v2556 = vunpack.c.l.b16 %v2484
  %v2557 = vunpack.c.h.b16 %v2484
  %v2558 = vunpack.c.l.b16 %v2485
  %v2559 = vunpack.c.h.b16 %v2485
  %v2560 = vunpack.c.l.b16 %v2486
  %v2561 = vunpack.c.h.b16 %v2486
  %v2562 = vunpack.c.l.b16 %v2487
  %v2563 = vunpack.c.h.b16 %v2487
  %v2564 = vunpack.c.l.b16 %v2488
  %v2565 = vunpack.c.h.b16 %v2488
  %v2566 = vunpack.c.l.b16 %v2489
  %v2567 = vunpack.c.h.b16 %v2489
  %v2568 = vunpack.c.l.b16 %v2490
  %v2569 = vunpack.c.h.b16 %v2490
  %v2570 = vunpack.c.l.b16 %v2491
  %v2571 = vunpack.c.h.b16 %v2491
  %v2572 = vunpack.c.l.b16 %v2492
  %v2573 = vunpack.c.h.b16 %v2492
  %v2574 = vunpack.c.l.b16 %v2493
  %v2575 = vunpack.c.h.b16 %v2493
  %v2576 = vunpack.c.l.b16 %v2494
  %v2577 = vunpack.c.h.b16 %v2494
  %v2578 = vunpack.c.l.b16 %v2495
  %v2579 = vunpack.c.h.b16 %v2495
  %v2580 = vunpack.c.l.b16 %v2496
  %v2581 = vunpack.c.h.b16 %v2496
  %v2582 = vunpack.c.l.b16 %v2497
  %v2583 = vunpack.c.h.b16 %v2497
  %v2584 = vunpack.c.l.b16 %v2498
  %v2585 = vunpack.c.h.b16 %v2498
  %v2586 = vunpack.c.l.b16 %v2499
  %v2587 = vunpack.c.h.b16 %v2499
  %v2588 = vunpack.c.l.b16 %v2500
  %v2589 = vunpack.c.h.b16 %v2500
  %v2590 = vunpack.c.l.b16 %v2501
  %v2591 = vunpack.c.h.b16 %v2501
  %v2592 = vunpack.c.l.b16 %v2502
  %v2593 = vunpack.c.h.b16 %v2502
  %v2594 = vunpack.c.l.b16 %v2503
  %v2595 = vunpack.c.h.b16 %v2503
  %v2596 = vunpack.c.l.b16 %v2504
  %v2597 = vunpack.c.h.b16 %v2504
  %v2598 = vunpack.c.l.b16 %v2505
  %v2599 = vunpack.c.h.b16 %v2505
  %v2600 = vunpack.c.l.b16 %v2506
  %v2601 = vunpack.c.h.b16 %v2506
  %v2602 = vunpack.c.l.b16 %v2507
  %v2603 = vunpack.c.h.b16 %v2507
  %v2604 = vpack.c.b16 %v2542, %v2540
  %v2605 = vpack.c.b16 %v2543, %v2541
  %v2606 = vpack.c.b16 %v2546, %v2544
  %v2607 = vpack.c.b16 %v2547, %v2545
  %v2608 = vpack.c.b16 %v2550, %v2548
  %v2609 = vpack.c.b16 %v2551, %v2549
  %v2610 = vpack.c.b16 %v2554, %v2552
  %v2611 = vpack.c.b16 %v2555, %v2553
  %v2612 = vpack.c.b16 %v2558, %v2556
  %v2613 = vpack.c.b16 %v2559, %v2557
  %v2614 = vpack.c.b16 %v2562, %v2560
  %v2615 = vpack.c.b16 %v2563, %v2561
  %v2616 = vpack.c.b16 %v2566, %v2564
  %v2617 = vpack.c.b16 %v2567, %v2565
  %v2618 = vpack.c.b16 %v2570, %v2568
  %v2619 = vpack.c.b16 %v2571, %v2569
  %v2620 = vpack.c.b16 %v2574, %v2572
  %v2621 = vpack.c.b16 %v2575, %v2573
  %v2622 = vpack.c.b16 %v2578, %v2576
  %v2623 = vpack.c.b16 %v2579, %v2577
  %v2624 = vpack.c.b16 %v2582, %v2580
  %v2625 = vpack.c.b16 %v2583, %v2581
  %v2626 = vpack.c.b16 %v2586, %v2584
  %v2627 = vpack.c.b16 %v2587, %v2585
  %v2628 = vpack.c.b16 %v2590, %v2588
  %v2629 = vpack.c.b16 %v2591, %v2589
  %v2630 = vpack.c.b16 %v2594, %v2592
  %v2631 = vpack.c.b16 %v2595, %v2593
  %v2632 = vpack.c.b16 %v2598, %v2596
  %v2633 = vpack.c.b16 %v2599, %v2597
  %v2634 = vpack.c.b16 %v2602, %v2600
  %v2635 = vpack.c.b16 %v2603, %v2601
  %2668 = vmatprep.subr.bf16.mxu0 %v2605
  %2669 = vmatpush1.bf16.msra.mxu0 %v2604
  %2670 = vmatprep.subr.bf16.mxu0 %v2607
  %2671 = vmatpush1.bf16.msra.mxu0 %v2606
  %2672 = vmatprep.subr.bf16.mxu0 %v2609
  %2673 = vmatpush1.bf16.msra.mxu0 %v2608
  %2674 = vmatprep.subr.bf16.mxu0 %v2611
  %2675 = vmatpush1.bf16.msra.mxu0 %v2610
  %2676 = vmatprep.subr.bf16.mxu0 %v2613
  %2677 = vmatpush1.bf16.msra.mxu0 %v2612
  %2678 = vmatprep.subr.bf16.mxu0 %v2615
  %2679 = vmatpush1.bf16.msra.mxu0 %v2614
  %2680 = vmatprep.subr.bf16.mxu0 %v2617
  %2681 = vmatpush1.bf16.msra.mxu0 %v2616
  %2682 = vmatprep.subr.bf16.mxu0 %v2619
  %2683 = vmatpush1.bf16.msra.mxu0 %v2618
  %2684 = vmatprep.subr.bf16.mxu0 %v2621
  %2685 = vmatpush1.bf16.msra.mxu0 %v2620
  %2686 = vmatprep.subr.bf16.mxu0 %v2623
  %2687 = vmatpush1.bf16.msra.mxu0 %v2622
  %2688 = vmatprep.subr.bf16.mxu0 %v2625
  %2689 = vmatpush1.bf16.msra.mxu0 %v2624
  %2690 = vmatprep.subr.bf16.mxu0 %v2627
  %2691 = vmatpush1.bf16.msra.mxu0 %v2626
  %2692 = vmatprep.subr.bf16.mxu0 %v2629
  %2693 = vmatpush1.bf16.msra.mxu0 %v2628
  %2694 = vmatprep.subr.bf16.mxu0 %v2631
  %2695 = vmatpush1.bf16.msra.mxu0 %v2630
  %2696 = vmatprep.subr.bf16.mxu0 %v2633
  %2697 = vmatpush1.bf16.msra.mxu0 %v2632
  %2698 = vmatprep.subr.bf16.mxu0 %v2635
  %2699 = vmatpush1.bf16.msra.mxu0 %v2634
  %2700 = vmatprep.mubr.bf16.mxu0 %v2472
  %2701 = vmatmul.mubr.bf16.gmra.mrb[0].mxu0 %v2471
  %v2702 = vpop.f32.mrb[0].mxu0
  %v2703 = vadd.f32 0.0, %v2702
  %v2704 = vpop.f32.mrb[0].mxu0
  %v2705 = vadd.f32 0.0, %v2704
  %v2706 = vpop.f32.mrb[0].mxu0
  %v2707 = vadd.f32 0.0, %v2706
  %v2708 = vpop.f32.mrb[0].mxu0
  %v2709 = vadd.f32 0.0, %v2708
  %2710 = vmatprep.mubr.bf16.mxu0 %v2474
  %2711 = vmatmul.mubr.bf16.gmra.mrb[0].mxu0 %v2473
  %v2712 = vpop.f32.mrb[0].mxu0
  %v2713 = vadd.f32 0.0, %v2712
  %v2714 = vpop.f32.mrb[0].mxu0
  %v2715 = vadd.f32 0.0, %v2714
  %v2716 = vpop.f32.mrb[0].mxu0
  %v2717 = vadd.f32 0.0, %v2716
  %v2718 = vpop.f32.mrb[0].mxu0
  %v2719 = vadd.f32 0.0, %v2718
  %2720 = vdwg.mxu0
  %v2721 = vadd.f32 %v2379, %v2703
  %v2722 = vadd.f32 %v2381, %v2705
  %v2723 = vadd.f32 %v2383, %v2707
  %v2724 = vadd.f32 %v2385, %v2709
  %v2725 = vadd.f32 %v2389, %v2713
  %v2726 = vadd.f32 %v2391, %v2715
  %v2727 = vadd.f32 %v2393, %v2717
  %v2728 = vadd.f32 %v2395, %v2719
  %s2729 = scalar_lea.vmem %s2, 48
  %v2730 = vld [vmem:[%s2729] sm:$0xf]
  %v2731 = vld [vmem:[%s2729 + $0x4] sm:$0xf]
  %v2732 = vld [vmem:[%s2729 + $0x8] sm:$0xf]
  %v2733 = vld [vmem:[%s2729 + $0xc] sm:$0xf]
  %v2738 = vunpack.c.l.b16 %v2730
  %v2739 = vunpack.c.l.b16 %v2731
  %v2740 = vunpack.c.l.b16 %v2732
  %v2741 = vunpack.c.l.b16 %v2733
  %v2742 = vpack.c.b16 %v2739, %v2738
  %v2743 = vpack.c.b16 %v2741, %v2740
  %v2745 = vsel %vm1764, %v2742, 0
  %v2748 = vsel %vm1764, %v2743, 0
  %2750 = vmatprep.subr.bf16.mxu0 %v1743
  %2751 = vmatpush1.bf16.msra.mxu0 %v1742
  %2752 = vmatprep.subr.bf16.mxu0 %v1745
  %2753 = vmatpush1.bf16.msra.mxu0 %v1744
  %2754 = vmatprep.subr.bf16.mxu0 %v1747
  %2755 = vmatpush1.bf16.msra.mxu0 %v1746
  %2756 = vmatprep.subr.bf16.mxu0 %v1749
  %2757 = vmatpush1.bf16.msra.mxu0 %v1748
  %2758 = vmatprep.subr.bf16.mxu0 0
  %2759 = vmatpush1.bf16.msra.mxu0 0
  %2760 = vmatprep.subr.bf16.mxu0 0
  %2761 = vmatpush1.bf16.msra.mxu0 0
  %2762 = vmatprep.subr.bf16.mxu0 0
  %2763 = vmatpush1.bf16.msra.mxu0 0
  %2764 = vmatprep.subr.bf16.mxu0 0
  %2765 = vmatpush1.bf16.msra.mxu0 0
  %2766 = vmatprep.subr.bf16.mxu0 0
  %2767 = vmatpush1.bf16.msra.mxu0 0
  %2768 = vmatprep.subr.bf16.mxu0 0
  %2769 = vmatpush1.bf16.msra.mxu0 0
  %2770 = vmatprep.subr.bf16.mxu0 0
  %2771 = vmatpush1.bf16.msra.mxu0 0
  %2772 = vmatprep.subr.bf16.mxu0 0
  %2773 = vmatpush1.bf16.msra.mxu0 0
  %2774 = vmatprep.subr.bf16.mxu0 0
  %2775 = vmatpush1.bf16.msra.mxu0 0
  %2776 = vmatprep.subr.bf16.mxu0 0
  %2777 = vmatpush1.bf16.msra.mxu0 0
  %2778 = vmatprep.subr.bf16.mxu0 0
  %2779 = vmatpush1.bf16.msra.mxu0 0
  %2780 = vmatprep.subr.bf16.mxu0 0
  %2781 = vmatpush1.bf16.msra.mxu0 0
  %2782 = vmatprep.mubr.bf16.mxu0 0
  %2783 = vmatmul.mubr.bf16.gmra.mrb[0].mxu0 %v2745
  %v2784 = vpop.f32.mrb[0].mxu0
  %v2785 = vadd.f32 0.0, %v2784
  %v2786 = vpop.f32.mrb[0].mxu0
  %v2787 = vadd.f32 0.0, %v2786
  %v2788 = vpop.f32.mrb[0].mxu0
  %v2789 = vadd.f32 0.0, %v2788
  %v2790 = vpop.f32.mrb[0].mxu0
  %v2791 = vadd.f32 0.0, %v2790
  %2792 = vmatprep.mubr.bf16.mxu0 0
  %2793 = vmatmul.mubr.bf16.gmra.mrb[0].mxu0 %v2748
  %v2794 = vpop.f32.mrb[0].mxu0
  %v2795 = vadd.f32 0.0, %v2794
  %v2796 = vpop.f32.mrb[0].mxu0
  %v2797 = vadd.f32 0.0, %v2796
  %v2798 = vpop.f32.mrb[0].mxu0
  %v2799 = vadd.f32 0.0, %v2798
  %v2800 = vpop.f32.mrb[0].mxu0
  %v2801 = vadd.f32 0.0, %v2800
  %2802 = vdwg.mxu0
  %v2803 = vpack.c.bf16 %v2789, %v2785
  %v2804 = vpack.c.bf16 %v2791, %v2787
  %v2805 = vpack.c.bf16 %v2799, %v2795
  %v2806 = vpack.c.bf16 %v2801, %v2797
  %s2807 = scalar_lea.vmem %s7, 768
  %v2808 = vld [vmem:[%s2807] sm:$0xff]
  %v2809 = vld [vmem:[%s2807 + $0x8] sm:$0xff]
  %v2810 = vld [vmem:[%s2807 + $0x10] sm:$0xff]
  %v2811 = vld [vmem:[%s2807 + $0x18] sm:$0xff]
  %v2812 = vld [vmem:[%s2807 + $0x20] sm:$0xff]
  %v2813 = vld [vmem:[%s2807 + $0x28] sm:$0xff]
  %v2814 = vld [vmem:[%s2807 + $0x30] sm:$0xff]
  %v2815 = vld [vmem:[%s2807 + $0x38] sm:$0xff]
  %v2816 = vld [vmem:[%s2807 + $0x40] sm:$0xff]
  %v2817 = vld [vmem:[%s2807 + $0x48] sm:$0xff]
  %v2818 = vld [vmem:[%s2807 + $0x50] sm:$0xff]
  %v2819 = vld [vmem:[%s2807 + $0x58] sm:$0xff]
  %v2820 = vld [vmem:[%s2807 + $0x60] sm:$0xff]
  %v2821 = vld [vmem:[%s2807 + $0x68] sm:$0xff]
  %v2822 = vld [vmem:[%s2807 + $0x70] sm:$0xff]
  %v2823 = vld [vmem:[%s2807 + $0x78] sm:$0xff]
  %v2824 = vld [vmem:[%s2807 + $0x80] sm:$0xff]
  %v2825 = vld [vmem:[%s2807 + $0x88] sm:$0xff]
  %v2826 = vld [vmem:[%s2807 + $0x90] sm:$0xff]
  %v2827 = vld [vmem:[%s2807 + $0x98] sm:$0xff]
  %v2828 = vld [vmem:[%s2807 + $0xa0] sm:$0xff]
  %v2829 = vld [vmem:[%s2807 + $0xa8] sm:$0xff]
  %v2830 = vld [vmem:[%s2807 + $0xb0] sm:$0xff]
  %v2831 = vld [vmem:[%s2807 + $0xb8] sm:$0xff]
  %v2832 = vld [vmem:[%s2807 + $0xc0] sm:$0xff]
  %v2833 = vld [vmem:[%s2807 + $0xc8] sm:$0xff]
  %v2834 = vld [vmem:[%s2807 + $0xd0] sm:$0xff]
  %v2835 = vld [vmem:[%s2807 + $0xd8] sm:$0xff]
  %v2836 = vld [vmem:[%s2807 + $0xe0] sm:$0xff]
  %v2837 = vld [vmem:[%s2807 + $0xe8] sm:$0xff]
  %v2838 = vld [vmem:[%s2807 + $0xf0] sm:$0xff]
  %v2839 = vld [vmem:[%s2807 + $0xf8] sm:$0xff]
  %v2872 = vunpack.c.l.b16 %v2808
  %v2873 = vunpack.c.h.b16 %v2808
  %v2874 = vunpack.c.l.b16 %v2809
  %v2875 = vunpack.c.h.b16 %v2809
  %v2876 = vunpack.c.l.b16 %v2810
  %v2877 = vunpack.c.h.b16 %v2810
  %v2878 = vunpack.c.l.b16 %v2811
  %v2879 = vunpack.c.h.b16 %v2811
  %v2880 = vunpack.c.l.b16 %v2812
  %v2881 = vunpack.c.h.b16 %v2812
  %v2882 = vunpack.c.l.b16 %v2813
  %v2883 = vunpack.c.h.b16 %v2813
  %v2884 = vunpack.c.l.b16 %v2814
  %v2885 = vunpack.c.h.b16 %v2814
  %v2886 = vunpack.c.l.b16 %v2815
  %v2887 = vunpack.c.h.b16 %v2815
  %v2888 = vunpack.c.l.b16 %v2816
  %v2889 = vunpack.c.h.b16 %v2816
  %v2890 = vunpack.c.l.b16 %v2817
  %v2891 = vunpack.c.h.b16 %v2817
  %v2892 = vunpack.c.l.b16 %v2818
  %v2893 = vunpack.c.h.b16 %v2818
  %v2894 = vunpack.c.l.b16 %v2819
  %v2895 = vunpack.c.h.b16 %v2819
  %v2896 = vunpack.c.l.b16 %v2820
  %v2897 = vunpack.c.h.b16 %v2820
  %v2898 = vunpack.c.l.b16 %v2821
  %v2899 = vunpack.c.h.b16 %v2821
  %v2900 = vunpack.c.l.b16 %v2822
  %v2901 = vunpack.c.h.b16 %v2822
  %v2902 = vunpack.c.l.b16 %v2823
  %v2903 = vunpack.c.h.b16 %v2823
  %v2904 = vunpack.c.l.b16 %v2824
  %v2905 = vunpack.c.h.b16 %v2824
  %v2906 = vunpack.c.l.b16 %v2825
  %v2907 = vunpack.c.h.b16 %v2825
  %v2908 = vunpack.c.l.b16 %v2826
  %v2909 = vunpack.c.h.b16 %v2826
  %v2910 = vunpack.c.l.b16 %v2827
  %v2911 = vunpack.c.h.b16 %v2827
  %v2912 = vunpack.c.l.b16 %v2828
  %v2913 = vunpack.c.h.b16 %v2828
  %v2914 = vunpack.c.l.b16 %v2829
  %v2915 = vunpack.c.h.b16 %v2829
  %v2916 = vunpack.c.l.b16 %v2830
  %v2917 = vunpack.c.h.b16 %v2830
  %v2918 = vunpack.c.l.b16 %v2831
  %v2919 = vunpack.c.h.b16 %v2831
  %v2920 = vunpack.c.l.b16 %v2832
  %v2921 = vunpack.c.h.b16 %v2832
  %v2922 = vunpack.c.l.b16 %v2833
  %v2923 = vunpack.c.h.b16 %v2833
  %v2924 = vunpack.c.l.b16 %v2834
  %v2925 = vunpack.c.h.b16 %v2834
  %v2926 = vunpack.c.l.b16 %v2835
  %v2927 = vunpack.c.h.b16 %v2835
  %v2928 = vunpack.c.l.b16 %v2836
  %v2929 = vunpack.c.h.b16 %v2836
  %v2930 = vunpack.c.l.b16 %v2837
  %v2931 = vunpack.c.h.b16 %v2837
  %v2932 = vunpack.c.l.b16 %v2838
  %v2933 = vunpack.c.h.b16 %v2838
  %v2934 = vunpack.c.l.b16 %v2839
  %v2935 = vunpack.c.h.b16 %v2839
  %v2936 = vpack.c.b16 %v2874, %v2872
  %v2937 = vpack.c.b16 %v2875, %v2873
  %v2938 = vpack.c.b16 %v2878, %v2876
  %v2939 = vpack.c.b16 %v2879, %v2877
  %v2940 = vpack.c.b16 %v2882, %v2880
  %v2941 = vpack.c.b16 %v2883, %v2881
  %v2942 = vpack.c.b16 %v2886, %v2884
  %v2943 = vpack.c.b16 %v2887, %v2885
  %v2944 = vpack.c.b16 %v2890, %v2888
  %v2945 = vpack.c.b16 %v2891, %v2889
  %v2946 = vpack.c.b16 %v2894, %v2892
  %v2947 = vpack.c.b16 %v2895, %v2893
  %v2948 = vpack.c.b16 %v2898, %v2896
  %v2949 = vpack.c.b16 %v2899, %v2897
  %v2950 = vpack.c.b16 %v2902, %v2900
  %v2951 = vpack.c.b16 %v2903, %v2901
  %v2952 = vpack.c.b16 %v2906, %v2904
  %v2953 = vpack.c.b16 %v2907, %v2905
  %v2954 = vpack.c.b16 %v2910, %v2908
  %v2955 = vpack.c.b16 %v2911, %v2909
  %v2956 = vpack.c.b16 %v2914, %v2912
  %v2957 = vpack.c.b16 %v2915, %v2913
  %v2958 = vpack.c.b16 %v2918, %v2916
  %v2959 = vpack.c.b16 %v2919, %v2917
  %v2960 = vpack.c.b16 %v2922, %v2920
  %v2961 = vpack.c.b16 %v2923, %v2921
  %v2962 = vpack.c.b16 %v2926, %v2924
  %v2963 = vpack.c.b16 %v2927, %v2925
  %v2964 = vpack.c.b16 %v2930, %v2928
  %v2965 = vpack.c.b16 %v2931, %v2929
  %v2966 = vpack.c.b16 %v2934, %v2932
  %v2967 = vpack.c.b16 %v2935, %v2933
  %3000 = vmatprep.subr.bf16.mxu0 %v2937
  %3001 = vmatpush1.bf16.msra.mxu0 %v2936
  %3002 = vmatprep.subr.bf16.mxu0 %v2939
  %3003 = vmatpush1.bf16.msra.mxu0 %v2938
  %3004 = vmatprep.subr.bf16.mxu0 %v2941
  %3005 = vmatpush1.bf16.msra.mxu0 %v2940
  %3006 = vmatprep.subr.bf16.mxu0 %v2943
  %3007 = vmatpush1.bf16.msra.mxu0 %v2942
  %3008 = vmatprep.subr.bf16.mxu0 %v2945
  %3009 = vmatpush1.bf16.msra.mxu0 %v2944
  %3010 = vmatprep.subr.bf16.mxu0 %v2947
  %3011 = vmatpush1.bf16.msra.mxu0 %v2946
  %3012 = vmatprep.subr.bf16.mxu0 %v2949
  %3013 = vmatpush1.bf16.msra.mxu0 %v2948
  %3014 = vmatprep.subr.bf16.mxu0 %v2951
  %3015 = vmatpush1.bf16.msra.mxu0 %v2950
  %3016 = vmatprep.subr.bf16.mxu0 %v2953
  %3017 = vmatpush1.bf16.msra.mxu0 %v2952
  %3018 = vmatprep.subr.bf16.mxu0 %v2955
  %3019 = vmatpush1.bf16.msra.mxu0 %v2954
  %3020 = vmatprep.subr.bf16.mxu0 %v2957
  %3021 = vmatpush1.bf16.msra.mxu0 %v2956
  %3022 = vmatprep.subr.bf16.mxu0 %v2959
  %3023 = vmatpush1.bf16.msra.mxu0 %v2958
  %3024 = vmatprep.subr.bf16.mxu0 %v2961
  %3025 = vmatpush1.bf16.msra.mxu0 %v2960
  %3026 = vmatprep.subr.bf16.mxu0 %v2963
  %3027 = vmatpush1.bf16.msra.mxu0 %v2962
  %3028 = vmatprep.subr.bf16.mxu0 %v2965
  %3029 = vmatpush1.bf16.msra.mxu0 %v2964
  %3030 = vmatprep.subr.bf16.mxu0 %v2967
  %3031 = vmatpush1.bf16.msra.mxu0 %v2966
  %3032 = vmatprep.mubr.bf16.mxu0 %v2804
  %3033 = vmatmul.mubr.bf16.gmra.mrb[0].mxu0 %v2803
  %v3034 = vpop.f32.mrb[0].mxu0
  %v3035 = vadd.f32 0.0, %v3034
  %v3036 = vpop.f32.mrb[0].mxu0
  %v3037 = vadd.f32 0.0, %v3036
  %v3038 = vpop.f32.mrb[0].mxu0
  %v3039 = vadd.f32 0.0, %v3038
  %v3040 = vpop.f32.mrb[0].mxu0
  %v3041 = vadd.f32 0.0, %v3040
  %3042 = vmatprep.mubr.bf16.mxu0 %v2806
  %3043 = vmatmul.mubr.bf16.gmra.mrb[0].mxu0 %v2805
  %v3044 = vpop.f32.mrb[0].mxu0
  %v3045 = vadd.f32 0.0, %v3044
  %v3046 = vpop.f32.mrb[0].mxu0
  %v3047 = vadd.f32 0.0, %v3046
  %v3048 = vpop.f32.mrb[0].mxu0
  %v3049 = vadd.f32 0.0, %v3048
  %v3050 = vpop.f32.mrb[0].mxu0
  %v3051 = vadd.f32 0.0, %v3050
  %3052 = vdwg.mxu0
  %v3053 = vadd.f32 %v2721, %v3035
  %v3054 = vadd.f32 %v2722, %v3037
  %v3055 = vadd.f32 %v2723, %v3039
  %v3056 = vadd.f32 %v2724, %v3041
  %v3057 = vadd.f32 %v2725, %v3045
  %v3058 = vadd.f32 %v2726, %v3047
  %v3059 = vadd.f32 %v2727, %v3049
  %v3060 = vadd.f32 %v2728, %v3051
  %v3061 = vadd.f32 %v3053, %v3055
  %v3062 = vadd.f32 %v3061, %v3057
  %v3063 = vadd.f32 %v3062, %v3059
  %v3064 = vrot.slane %v3063, 4
  %v3065 = vadd.f32 %v3063, %v3064
  %v3066 = vrot.slane %v3065, 2
  %v3067 = vadd.f32 %v3065, %v3066
  %v3068 = vrot.slane %v3067, 1
  %v3069 = vadd.f32 %v3067, %v3068
  %v3070 = vadd.f32 %v3054, %v3056
  %v3071 = vadd.f32 %v3070, %v3058
  %v3072 = vadd.f32 %v3071, %v3060
  %v3073 = vrot.slane %v3072, 4
  %v3074 = vadd.f32 %v3072, %v3073
  %v3075 = vrot.slane %v3074, 2
  %v3076 = vadd.f32 %v3074, %v3075
  %v3077 = vrot.slane %v3076, 1
  %v3078 = vadd.f32 %v3076, %v3077
  %v3079 = vld [vmem:[%s11] sm:$0xff]
  %v3080 = vld [vmem:[%s11 + $0x8] sm:$0xff]
  %v3081 = vld [vmem:[%s11 + $0x10] sm:$0xff]
  %v3082 = vld [vmem:[%s11 + $0x18] sm:$0xff]
  %v3083 = vld [vmem:[%s11 + $0x20] sm:$0xff]
  %v3084 = vld [vmem:[%s11 + $0x28] sm:$0xff]
  %v3085 = vld [vmem:[%s11 + $0x30] sm:$0xff]
  %v3086 = vld [vmem:[%s11 + $0x38] sm:$0xff]
  %v3087 = vld [vmem:[%s11 + $0x40] sm:$0xff]
  %v3088 = vld [vmem:[%s11 + $0x48] sm:$0xff]
  %v3089 = vld [vmem:[%s11 + $0x50] sm:$0xff]
  %v3090 = vld [vmem:[%s11 + $0x58] sm:$0xff]
  %v3091 = vld [vmem:[%s11 + $0x60] sm:$0xff]
  %v3092 = vld [vmem:[%s11 + $0x68] sm:$0xff]
  %v3093 = vld [vmem:[%s11 + $0x70] sm:$0xff]
  %v3094 = vld [vmem:[%s11 + $0x78] sm:$0xff]
  %v3095 = vld [vmem:[%s11 + $0x80] sm:$0xff]
  %v3096 = vld [vmem:[%s11 + $0x88] sm:$0xff]
  %v3097 = vld [vmem:[%s11 + $0x90] sm:$0xff]
  %v3098 = vld [vmem:[%s11 + $0x98] sm:$0xff]
  %v3099 = vld [vmem:[%s11 + $0xa0] sm:$0xff]
  %v3100 = vld [vmem:[%s11 + $0xa8] sm:$0xff]
  %v3101 = vld [vmem:[%s11 + $0xb0] sm:$0xff]
  %v3102 = vld [vmem:[%s11 + $0xb8] sm:$0xff]
  %v3103 = vld [vmem:[%s11 + $0xc0] sm:$0xff]
  %v3104 = vld [vmem:[%s11 + $0xc8] sm:$0xff]
  %v3105 = vld [vmem:[%s11 + $0xd0] sm:$0xff]
  %v3106 = vld [vmem:[%s11 + $0xd8] sm:$0xff]
  %v3107 = vld [vmem:[%s11 + $0xe0] sm:$0xff]
  %v3108 = vld [vmem:[%s11 + $0xe8] sm:$0xff]
  %v3109 = vld [vmem:[%s11 + $0xf0] sm:$0xff]
  %v3110 = vld [vmem:[%s11 + $0xf8] sm:$0xff]
  %v3111 = vld [vmem:[%s11 + $0x100] sm:$0xff]
  %v3112 = vld [vmem:[%s11 + $0x108] sm:$0xff]
  %v3113 = vld [vmem:[%s11 + $0x110] sm:$0xff]
  %v3114 = vld [vmem:[%s11 + $0x118] sm:$0xff]
  %v3115 = vld [vmem:[%s11 + $0x120] sm:$0xff]
  %v3116 = vld [vmem:[%s11 + $0x128] sm:$0xff]
  %v3117 = vld [vmem:[%s11 + $0x130] sm:$0xff]
  %v3118 = vld [vmem:[%s11 + $0x138] sm:$0xff]
  %v3119 = vld [vmem:[%s11 + $0x140] sm:$0xff]
  %v3120 = vld [vmem:[%s11 + $0x148] sm:$0xff]
  %v3121 = vld [vmem:[%s11 + $0x150] sm:$0xff]
  %v3122 = vld [vmem:[%s11 + $0x158] sm:$0xff]
  %v3123 = vld [vmem:[%s11 + $0x160] sm:$0xff]
  %v3124 = vld [vmem:[%s11 + $0x168] sm:$0xff]
  %v3125 = vld [vmem:[%s11 + $0x170] sm:$0xff]
  %v3126 = vld [vmem:[%s11 + $0x178] sm:$0xff]
  %v3127 = vld [vmem:[%s11 + $0x180] sm:$0xff]
  %v3128 = vld [vmem:[%s11 + $0x188] sm:$0xff]
  %v3129 = vld [vmem:[%s11 + $0x190] sm:$0xff]
  %v3130 = vld [vmem:[%s11 + $0x198] sm:$0xff]
  %v3131 = vld [vmem:[%s11 + $0x1a0] sm:$0xff]
  %v3132 = vld [vmem:[%s11 + $0x1a8] sm:$0xff]
  %v3133 = vld [vmem:[%s11 + $0x1b0] sm:$0xff]
  %v3134 = vld [vmem:[%s11 + $0x1b8] sm:$0xff]
  %v3135 = vld [vmem:[%s11 + $0x1c0] sm:$0xff]
  %v3136 = vld [vmem:[%s11 + $0x1c8] sm:$0xff]
  %v3137 = vld [vmem:[%s11 + $0x1d0] sm:$0xff]
  %v3138 = vld [vmem:[%s11 + $0x1d8] sm:$0xff]
  %v3139 = vld [vmem:[%s11 + $0x1e0] sm:$0xff]
  %v3140 = vld [vmem:[%s11 + $0x1e8] sm:$0xff]
  %v3141 = vld [vmem:[%s11 + $0x1f0] sm:$0xff]
  %v3142 = vld [vmem:[%s11 + $0x1f8] sm:$0xff]
  %3143 = vmatprep.subr.mxu0 %v3080
  %3144 = vmatpush1.msra.mxu0 %v3079
  %3145 = vmatprep.subr.mxu0 %v3082
  %3146 = vmatpush1.msra.mxu0 %v3081
  %3147 = vmatprep.subr.mxu0 %v3084
  %3148 = vmatpush1.msra.mxu0 %v3083
  %3149 = vmatprep.subr.mxu0 %v3086
  %3150 = vmatpush1.msra.mxu0 %v3085
  %3151 = vmatprep.subr.mxu0 %v3088
  %3152 = vmatpush1.msra.mxu0 %v3087
  %3153 = vmatprep.subr.mxu0 %v3090
  %3154 = vmatpush1.msra.mxu0 %v3089
  %3155 = vmatprep.subr.mxu0 %v3092
  %3156 = vmatpush1.msra.mxu0 %v3091
  %3157 = vmatprep.subr.mxu0 %v3094
  %3158 = vmatpush1.msra.mxu0 %v3093
  %3159 = vmatprep.subr.mxu0 %v3096
  %3160 = vmatpush1.msra.mxu0 %v3095
  %3161 = vmatprep.subr.mxu0 %v3098
  %3162 = vmatpush1.msra.mxu0 %v3097
  %3163 = vmatprep.subr.mxu0 %v3100
  %3164 = vmatpush1.msra.mxu0 %v3099
  %3165 = vmatprep.subr.mxu0 %v3102
  %3166 = vmatpush1.msra.mxu0 %v3101
  %3167 = vmatprep.subr.mxu0 %v3104
  %3168 = vmatpush1.msra.mxu0 %v3103
  %3169 = vmatprep.subr.mxu0 %v3106
  %3170 = vmatpush1.msra.mxu0 %v3105
  %3171 = vmatprep.subr.mxu0 %v3108
  %3172 = vmatpush1.msra.mxu0 %v3107
  %3173 = vmatprep.subr.mxu0 %v3110
  %3174 = vmatpush1.msra.mxu0 %v3109
  %3175 = vmatprep.subr.mxu0 %v3112
  %3176 = vmatpush1.msra.mxu0 %v3111
  %3177 = vmatprep.subr.mxu0 %v3114
  %3178 = vmatpush1.msra.mxu0 %v3113
  %3179 = vmatprep.subr.mxu0 %v3116
  %3180 = vmatpush1.msra.mxu0 %v3115
  %3181 = vmatprep.subr.mxu0 %v3118
  %3182 = vmatpush1.msra.mxu0 %v3117
  %3183 = vmatprep.subr.mxu0 %v3120
  %3184 = vmatpush1.msra.mxu0 %v3119
  %3185 = vmatprep.subr.mxu0 %v3122
  %3186 = vmatpush1.msra.mxu0 %v3121
  %3187 = vmatprep.subr.mxu0 %v3124
  %3188 = vmatpush1.msra.mxu0 %v3123
  %3189 = vmatprep.subr.mxu0 %v3126
  %3190 = vmatpush1.msra.mxu0 %v3125
  %3191 = vmatprep.subr.mxu0 %v3128
  %3192 = vmatpush1.msra.mxu0 %v3127
  %3193 = vmatprep.subr.mxu0 %v3130
  %3194 = vmatpush1.msra.mxu0 %v3129
  %3195 = vmatprep.subr.mxu0 %v3132
  %3196 = vmatpush1.msra.mxu0 %v3131
  %3197 = vmatprep.subr.mxu0 %v3134
  %3198 = vmatpush1.msra.mxu0 %v3133
  %3199 = vmatprep.subr.mxu0 %v3136
  %3200 = vmatpush1.msra.mxu0 %v3135
  %3201 = vmatprep.subr.mxu0 %v3138
  %3202 = vmatpush1.msra.mxu0 %v3137
  %3203 = vmatprep.subr.mxu0 %v3140
  %3204 = vmatpush1.msra.mxu0 %v3139
  %3205 = vmatprep.subr.mxu0 %v3142
  %3206 = vmatpush1.msra.mxu0 %v3141
  %3207 = vmatprep.mubr.f32.mxu0 %v3078
  %3208 = vmatmul.mubr.f32.gmra.mrb[0].mxu0 %v3069
  %v3209 = vpop.f32.mrb[0].mxu0
  %v3210 = vadd.f32 0.0, %v3209
  %v3211 = vpop.f32.mrb[0].mxu0
  %v3212 = vadd.f32 0.0, %v3211
  %3213 = vdwg.mxu0
  %v3214 = vmul.f32 %v3210, 0.001953125
  %v3215 = vmul.f32 %v3212, 0.001953125
  %v3216 = vlaneseq
  %v3217 = vshrl.u32 %v3216, 7
  %v3218 = vsub.s32 0, %v3217
  %v3219 = vrot.slane %v3214, %v3218
  %v3220 = vlaneseq
  %v3221 = vshrl.u32 %v3220, 7
  %v3222 = vsub.s32 0, %v3221
  %v3223 = vrot.slane %v3215, %v3222
  %v3224 = vsub.f32 %v3053, %v3219
  %v3225 = vsub.f32 %v3054, %v3223
  %v3226 = vsub.f32 %v3055, %v3219
  %v3227 = vsub.f32 %v3056, %v3223
  %v3228 = vsub.f32 %v3057, %v3219
  %v3229 = vsub.f32 %v3058, %v3223
  %v3230 = vsub.f32 %v3059, %v3219
  %v3231 = vsub.f32 %v3060, %v3223
  %v3232 = vmul.f32 %v3224, %v3224
  %v3233 = vmul.f32 %v3225, %v3225
  %v3234 = vmul.f32 %v3226, %v3226
  %v3235 = vmul.f32 %v3227, %v3227
  %v3236 = vmul.f32 %v3228, %v3228
  %v3237 = vmul.f32 %v3229, %v3229
  %v3238 = vmul.f32 %v3230, %v3230
  %v3239 = vmul.f32 %v3231, %v3231
  %v3240 = vadd.f32 %v3232, %v3234
  %v3241 = vadd.f32 %v3240, %v3236
  %v3242 = vadd.f32 %v3241, %v3238
  %v3243 = vrot.slane %v3242, 4
  %v3244 = vadd.f32 %v3242, %v3243
  %v3245 = vrot.slane %v3244, 2
  %v3246 = vadd.f32 %v3244, %v3245
  %v3247 = vrot.slane %v3246, 1
  %v3248 = vadd.f32 %v3246, %v3247
  %v3249 = vadd.f32 %v3233, %v3235
  %v3250 = vadd.f32 %v3249, %v3237
  %v3251 = vadd.f32 %v3250, %v3239
  %v3252 = vrot.slane %v3251, 4
  %v3253 = vadd.f32 %v3251, %v3252
  %v3254 = vrot.slane %v3253, 2
  %v3255 = vadd.f32 %v3253, %v3254
  %v3256 = vrot.slane %v3255, 1
  %v3257 = vadd.f32 %v3255, %v3256
  %3258 = vmatprep.subr.mxu0 %v3080
  %3259 = vmatpush1.msra.mxu0 %v3079
  %3260 = vmatprep.subr.mxu0 %v3082
  %3261 = vmatpush1.msra.mxu0 %v3081
  %3262 = vmatprep.subr.mxu0 %v3084
  %3263 = vmatpush1.msra.mxu0 %v3083
  %3264 = vmatprep.subr.mxu0 %v3086
  %3265 = vmatpush1.msra.mxu0 %v3085
  %3266 = vmatprep.subr.mxu0 %v3088
  %3267 = vmatpush1.msra.mxu0 %v3087
  %3268 = vmatprep.subr.mxu0 %v3090
  %3269 = vmatpush1.msra.mxu0 %v3089
  %3270 = vmatprep.subr.mxu0 %v3092
  %3271 = vmatpush1.msra.mxu0 %v3091
  %3272 = vmatprep.subr.mxu0 %v3094
  %3273 = vmatpush1.msra.mxu0 %v3093
  %3274 = vmatprep.subr.mxu0 %v3096
  %3275 = vmatpush1.msra.mxu0 %v3095
  %3276 = vmatprep.subr.mxu0 %v3098
  %3277 = vmatpush1.msra.mxu0 %v3097
  %3278 = vmatprep.subr.mxu0 %v3100
  %3279 = vmatpush1.msra.mxu0 %v3099
  %3280 = vmatprep.subr.mxu0 %v3102
  %3281 = vmatpush1.msra.mxu0 %v3101
  %3282 = vmatprep.subr.mxu0 %v3104
  %3283 = vmatpush1.msra.mxu0 %v3103
  %3284 = vmatprep.subr.mxu0 %v3106
  %3285 = vmatpush1.msra.mxu0 %v3105
  %3286 = vmatprep.subr.mxu0 %v3108
  %3287 = vmatpush1.msra.mxu0 %v3107
  %3288 = vmatprep.subr.mxu0 %v3110
  %3289 = vmatpush1.msra.mxu0 %v3109
  %3290 = vmatprep.subr.mxu0 %v3112
  %3291 = vmatpush1.msra.mxu0 %v3111
  %3292 = vmatprep.subr.mxu0 %v3114
  %3293 = vmatpush1.msra.mxu0 %v3113
  %3294 = vmatprep.subr.mxu0 %v3116
  %3295 = vmatpush1.msra.mxu0 %v3115
  %3296 = vmatprep.subr.mxu0 %v3118
  %3297 = vmatpush1.msra.mxu0 %v3117
  %3298 = vmatprep.subr.mxu0 %v3120
  %3299 = vmatpush1.msra.mxu0 %v3119
  %3300 = vmatprep.subr.mxu0 %v3122
  %3301 = vmatpush1.msra.mxu0 %v3121
  %3302 = vmatprep.subr.mxu0 %v3124
  %3303 = vmatpush1.msra.mxu0 %v3123
  %3304 = vmatprep.subr.mxu0 %v3126
  %3305 = vmatpush1.msra.mxu0 %v3125
  %3306 = vmatprep.subr.mxu0 %v3128
  %3307 = vmatpush1.msra.mxu0 %v3127
  %3308 = vmatprep.subr.mxu0 %v3130
  %3309 = vmatpush1.msra.mxu0 %v3129
  %3310 = vmatprep.subr.mxu0 %v3132
  %3311 = vmatpush1.msra.mxu0 %v3131
  %3312 = vmatprep.subr.mxu0 %v3134
  %3313 = vmatpush1.msra.mxu0 %v3133
  %3314 = vmatprep.subr.mxu0 %v3136
  %3315 = vmatpush1.msra.mxu0 %v3135
  %3316 = vmatprep.subr.mxu0 %v3138
  %3317 = vmatpush1.msra.mxu0 %v3137
  %3318 = vmatprep.subr.mxu0 %v3140
  %3319 = vmatpush1.msra.mxu0 %v3139
  %3320 = vmatprep.subr.mxu0 %v3142
  %3321 = vmatpush1.msra.mxu0 %v3141
  %3322 = vmatprep.mubr.f32.mxu0 %v3257
  %3323 = vmatmul.mubr.f32.gmra.mrb[0].mxu0 %v3248
  %v3324 = vpop.f32.mrb[0].mxu0
  %v3325 = vadd.f32 0.0, %v3324
  %v3326 = vpop.f32.mrb[0].mxu0
  %v3327 = vadd.f32 0.0, %v3326
  %3328 = vdwg.mxu0
  %v3329 = vmul.f32 %v3325, 0.001953125
  %v3330 = vmul.f32 %v3327, 0.001953125
  %v3331 = vadd.f32 %v3329, 1e-05
  %v3332 = vadd.f32 %v3330, 1e-05
  %v3333 = vrsqrt.pop %v3331
  %v3334 = vrsqrt.pop %v3332
  %v3335 = vld [vmem:[%s12] sm:$0x3]
  %v3338 = vcombine.low %v3333, %v3334
  %v3340 = vunpack.c.l.s4 1966171168
  %v3341 = vunpack.c.0.s8 %v3340
  %v3342 = vlaneseq
  %v3343 = vshrl.u32 %v3342, 7
  %v3344 = vsub.s32 %v3341, %v3343
  %v3345 = vrot.slane %v3338, %v3344
  %v3347 = vunpack.c.l.s4 1966171168
  %v3348 = vunpack.c.0.s8 %v3347
  %v3349 = vlaneseq
  %v3350 = vshrl.u32 %v3349, 7
  %v3351 = vsub.s32 %v3348, %v3350
  %v3352 = vrot.slane %v3345, %v3351
  %v3354 = vmul.f32 %v3335, %v3352
  %v3356 = vlaneseq
  %v3357 = vshrl.u32 %v3356, 7
  %v3358 = vsub.s32 0, %v3357
  %v3359 = vrot.slane %v3354, %v3358
  %v3360 = vlaneseq
  %v3361 = vshrl.u32 %v3360, 7
  %v3362 = vsub.s32 1, %v3361
  %v3363 = vrot.slane %v3354, %v3362
  %v3366 = vmul.f32 %v3224, %v3359
  %v3367 = vmul.f32 %v3225, %v3363
  %v3368 = vmul.f32 %v3226, %v3359
  %v3369 = vmul.f32 %v3227, %v3363
  %v3370 = vmul.f32 %v3228, %v3359
  %v3371 = vmul.f32 %v3229, %v3363
  %v3372 = vmul.f32 %v3230, %v3359
  %v3373 = vmul.f32 %v3231, %v3363
  %v3374 = vld [vmem:[%s13] sm:$0x3]
  %v3376 = vlaneseq
  %v3377 = vshrl.u32 %v3376, 7
  %v3378 = vsub.s32 0, %v3377
  %v3379 = vrot.slane %v3374, %v3378
  %v3380 = vlaneseq
  %v3381 = vshrl.u32 %v3380, 7
  %v3382 = vsub.s32 1, %v3381
  %v3383 = vrot.slane %v3374, %v3382
  %v3386 = vadd.f32 %v3366, %v3379
  %v3387 = vadd.f32 %v3367, %v3383
  %v3388 = vadd.f32 %v3368, %v3379
  %v3389 = vadd.f32 %v3369, %v3383
  %v3390 = vadd.f32 %v3370, %v3379
  %v3391 = vadd.f32 %v3371, %v3383
  %v3392 = vadd.f32 %v3372, %v3379
  %v3393 = vadd.f32 %v3373, %v3383
  %vm3394 = vcmp.ge.f32.partialorder %v3386, 0.0
  %vm3395 = vcmp.ge.f32.partialorder %v3387, 0.0
  %vm3396 = vcmp.ge.f32.partialorder %v3388, 0.0
  %vm3397 = vcmp.ge.f32.partialorder %v3389, 0.0
  %vm3398 = vcmp.ge.f32.partialorder %v3390, 0.0
  %vm3399 = vcmp.ge.f32.partialorder %v3391, 0.0
  %vm3400 = vcmp.ge.f32.partialorder %v3392, 0.0
  %vm3401 = vcmp.ge.f32.partialorder %v3393, 0.0
  %v3402 = vmul.f32 %v3386, 0.2
  %v3403 = vmul.f32 %v3387, 0.2
  %v3404 = vmul.f32 %v3388, 0.2
  %v3405 = vmul.f32 %v3389, 0.2
  %v3406 = vmul.f32 %v3390, 0.2
  %v3407 = vmul.f32 %v3391, 0.2
  %v3408 = vmul.f32 %v3392, 0.2
  %v3409 = vmul.f32 %v3393, 0.2
  %v3410 = vsel %vm3394, %v3386, %v3402
  %v3411 = vsel %vm3395, %v3387, %v3403
  %v3412 = vsel %vm3396, %v3388, %v3404
  %v3413 = vsel %vm3397, %v3389, %v3405
  %v3414 = vsel %vm3398, %v3390, %v3406
  %v3415 = vsel %vm3399, %v3391, %v3407
  %v3416 = vsel %vm3400, %v3392, %v3408
  %v3417 = vsel %vm3401, %v3393, %v3409
  %v3418 = vpack.c.bf16 %v3412, %v3410
  %v3419 = vpack.c.bf16 %v3413, %v3411
  %v3420 = vpack.c.bf16 %v3416, %v3414
  %v3421 = vpack.c.bf16 %v3417, %v3415
  %v3422 = vld [vmem:[%s3] sm:$0xf]
  %v3423 = vld [vmem:[%s3 + $0x4] sm:$0xf]
  %v3426 = vunpack.c.l.b16 %v3422
  %v3427 = vunpack.c.l.b16 %v3423
  %v3428 = vpack.c.b16 %v3427, %v3426
  %vm3429 = vcmask 261120
  %v3431 = vsel %vm3429, %v3428, 0
  %3433 = vmatprep.subr.bf16.mxu0 %v3419
  %3434 = vmatpush1.bf16.msra.mxu0 %v3418
  %3435 = vmatprep.subr.bf16.mxu0 %v3421
  %3436 = vmatpush1.bf16.msra.mxu0 %v3420
  %3437 = vmatprep.subr.bf16.mxu0 0
  %3438 = vmatpush1.bf16.msra.mxu0 0
  %3439 = vmatprep.subr.bf16.mxu0 0
  %3440 = vmatpush1.bf16.msra.mxu0 0
  %3441 = vmatprep.subr.bf16.mxu0 0
  %3442 = vmatpush1.bf16.msra.mxu0 0
  %3443 = vmatprep.subr.bf16.mxu0 0
  %3444 = vmatpush1.bf16.msra.mxu0 0
  %3445 = vmatprep.subr.bf16.mxu0 0
  %3446 = vmatpush1.bf16.msra.mxu0 0
  %3447 = vmatprep.subr.bf16.mxu0 0
  %3448 = vmatpush1.bf16.msra.mxu0 0
  %3449 = vmatprep.subr.bf16.mxu0 0
  %3450 = vmatpush1.bf16.msra.mxu0 0
  %3451 = vmatprep.subr.bf16.mxu0 0
  %3452 = vmatpush1.bf16.msra.mxu0 0
  %3453 = vmatprep.subr.bf16.mxu0 0
  %3454 = vmatpush1.bf16.msra.mxu0 0
  %3455 = vmatprep.subr.bf16.mxu0 0
  %3456 = vmatpush1.bf16.msra.mxu0 0
  %3457 = vmatprep.subr.bf16.mxu0 0
  %3458 = vmatpush1.bf16.msra.mxu0 0
  %3459 = vmatprep.subr.bf16.mxu0 0
  %3460 = vmatpush1.bf16.msra.mxu0 0
  %3461 = vmatprep.subr.bf16.mxu0 0
  %3462 = vmatpush1.bf16.msra.mxu0 0
  %3463 = vmatprep.subr.bf16.mxu0 0
  %3464 = vmatpush1.bf16.msra.mxu0 0
  %3465 = vmatprep.mubr.bf16.mxu0 0
  %3466 = vmatmul.mubr.bf16.gmra.mrb[0].mxu0 %v3431
  %v3467 = vpop.f32.mrb[0].mxu0
  %v3468 = vadd.f32 0.0, %v3467
  %v3469 = vpop.f32.mrb[0].mxu0
  %v3470 = vadd.f32 0.0, %v3469
  %v3471 = vpop.f32.mrb[0].mxu0
  %v3472 = vadd.f32 0.0, %v3471
  %v3473 = vpop.f32.mrb[0].mxu0
  %v3474 = vadd.f32 0.0, %v3473
  %3475 = vdwg.mxu0
  %v3476 = vpack.c.bf16 %v3472, %v3468
  %v3477 = vpack.c.bf16 %v3474, %v3470
  %v3478 = vld [vmem:[%s8] sm:$0xff]
  %v3479 = vld [vmem:[%s8 + $0x8] sm:$0xff]
  %v3480 = vld [vmem:[%s8 + $0x10] sm:$0xff]
  %v3481 = vld [vmem:[%s8 + $0x18] sm:$0xff]
  %v3482 = vld [vmem:[%s8 + $0x20] sm:$0xff]
  %v3483 = vld [vmem:[%s8 + $0x28] sm:$0xff]
  %v3484 = vld [vmem:[%s8 + $0x30] sm:$0xff]
  %v3485 = vld [vmem:[%s8 + $0x38] sm:$0xff]
  %v3486 = vld [vmem:[%s8 + $0x40] sm:$0xff]
  %v3487 = vld [vmem:[%s8 + $0x48] sm:$0xff]
  %v3488 = vld [vmem:[%s8 + $0x50] sm:$0xff]
  %v3489 = vld [vmem:[%s8 + $0x58] sm:$0xff]
  %v3490 = vld [vmem:[%s8 + $0x60] sm:$0xff]
  %v3491 = vld [vmem:[%s8 + $0x68] sm:$0xff]
  %v3492 = vld [vmem:[%s8 + $0x70] sm:$0xff]
  %v3493 = vld [vmem:[%s8 + $0x78] sm:$0xff]
  %v3494 = vld [vmem:[%s8 + $0x80] sm:$0xff]
  %v3495 = vld [vmem:[%s8 + $0x88] sm:$0xff]
  %v3496 = vld [vmem:[%s8 + $0x90] sm:$0xff]
  %v3497 = vld [vmem:[%s8 + $0x98] sm:$0xff]
  %v3498 = vld [vmem:[%s8 + $0xa0] sm:$0xff]
  %v3499 = vld [vmem:[%s8 + $0xa8] sm:$0xff]
  %v3500 = vld [vmem:[%s8 + $0xb0] sm:$0xff]
  %v3501 = vld [vmem:[%s8 + $0xb8] sm:$0xff]
  %v3502 = vld [vmem:[%s8 + $0xc0] sm:$0xff]
  %v3503 = vld [vmem:[%s8 + $0xc8] sm:$0xff]
  %v3504 = vld [vmem:[%s8 + $0xd0] sm:$0xff]
  %v3505 = vld [vmem:[%s8 + $0xd8] sm:$0xff]
  %v3506 = vld [vmem:[%s8 + $0xe0] sm:$0xff]
  %v3507 = vld [vmem:[%s8 + $0xe8] sm:$0xff]
  %v3508 = vld [vmem:[%s8 + $0xf0] sm:$0xff]
  %v3509 = vld [vmem:[%s8 + $0xf8] sm:$0xff]
  %s3510 = scalar_lea.vmem %s3, 8
  %v3511 = vld [vmem:[%s3510] sm:$0xf]
  %v3512 = vld [vmem:[%s3510 + $0x4] sm:$0xf]
  %v3515 = vunpack.c.l.b16 %v3511
  %v3516 = vunpack.c.l.b16 %v3512
  %v3517 = vpack.c.b16 %v3516, %v3515
  %v3519 = vsel %vm3429, %v3517, 0
  %3521 = vmatprep.subr.bf16.mxu0 %v3419
  %3522 = vmatpush1.bf16.msra.mxu0 %v3418
  %3523 = vmatprep.subr.bf16.mxu0 %v3421
  %3524 = vmatpush1.bf16.msra.mxu0 %v3420
  %3525 = vmatprep.subr.bf16.mxu0 0
  %3526 = vmatpush1.bf16.msra.mxu0 0
  %3527 = vmatprep.subr.bf16.mxu0 0
  %3528 = vmatpush1.bf16.msra.mxu0 0
  %3529 = vmatprep.subr.bf16.mxu0 0
  %3530 = vmatpush1.bf16.msra.mxu0 0
  %3531 = vmatprep.subr.bf16.mxu0 0
  %3532 = vmatpush1.bf16.msra.mxu0 0
  %3533 = vmatprep.subr.bf16.mxu0 0
  %3534 = vmatpush1.bf16.msra.mxu0 0
  %3535 = vmatprep.subr.bf16.mxu0 0
  %3536 = vmatpush1.bf16.msra.mxu0 0
  %3537 = vmatprep.subr.bf16.mxu0 0
  %3538 = vmatpush1.bf16.msra.mxu0 0
  %3539 = vmatprep.subr.bf16.mxu0 0
  %3540 = vmatpush1.bf16.msra.mxu0 0
  %3541 = vmatprep.subr.bf16.mxu0 0
  %3542 = vmatpush1.bf16.msra.mxu0 0
  %3543 = vmatprep.subr.bf16.mxu0 0
  %3544 = vmatpush1.bf16.msra.mxu0 0
  %3545 = vmatprep.subr.bf16.mxu0 0
  %3546 = vmatpush1.bf16.msra.mxu0 0
  %3547 = vmatprep.subr.bf16.mxu0 0
  %3548 = vmatpush1.bf16.msra.mxu0 0
  %3549 = vmatprep.subr.bf16.mxu0 0
  %3550 = vmatpush1.bf16.msra.mxu0 0
  %3551 = vmatprep.subr.bf16.mxu0 0
  %3552 = vmatpush1.bf16.msra.mxu0 0
  %3553 = vmatprep.mubr.bf16.mxu0 0
  %3554 = vmatmul.mubr.bf16.gmra.mrb[0].mxu0 %v3519
  %v3555 = vpop.f32.mrb[0].mxu0
  %v3556 = vadd.f32 0.0, %v3555
  %v3557 = vpop.f32.mrb[0].mxu0
  %v3558 = vadd.f32 0.0, %v3557
  %v3559 = vpop.f32.mrb[0].mxu0
  %v3560 = vadd.f32 0.0, %v3559
  %v3561 = vpop.f32.mrb[0].mxu0
  %v3562 = vadd.f32 0.0, %v3561
  %3563 = vdwg.mxu0
  %v3564 = vpack.c.bf16 %v3560, %v3556
  %v3565 = vpack.c.bf16 %v3562, %v3558
  %s3566 = scalar_lea.vmem %s8, 256
  %v3567 = vld [vmem:[%s3566] sm:$0xff]
  %v3568 = vld [vmem:[%s3566 + $0x8] sm:$0xff]
  %v3569 = vld [vmem:[%s3566 + $0x10] sm:$0xff]
  %v3570 = vld [vmem:[%s3566 + $0x18] sm:$0xff]
  %v3571 = vld [vmem:[%s3566 + $0x20] sm:$0xff]
  %v3572 = vld [vmem:[%s3566 + $0x28] sm:$0xff]
  %v3573 = vld [vmem:[%s3566 + $0x30] sm:$0xff]
  %v3574 = vld [vmem:[%s3566 + $0x38] sm:$0xff]
  %v3575 = vld [vmem:[%s3566 + $0x40] sm:$0xff]
  %v3576 = vld [vmem:[%s3566 + $0x48] sm:$0xff]
  %v3577 = vld [vmem:[%s3566 + $0x50] sm:$0xff]
  %v3578 = vld [vmem:[%s3566 + $0x58] sm:$0xff]
  %v3579 = vld [vmem:[%s3566 + $0x60] sm:$0xff]
  %v3580 = vld [vmem:[%s3566 + $0x68] sm:$0xff]
  %v3581 = vld [vmem:[%s3566 + $0x70] sm:$0xff]
  %v3582 = vld [vmem:[%s3566 + $0x78] sm:$0xff]
  %v3583 = vld [vmem:[%s3566 + $0x80] sm:$0xff]
  %v3584 = vld [vmem:[%s3566 + $0x88] sm:$0xff]
  %v3585 = vld [vmem:[%s3566 + $0x90] sm:$0xff]
  %v3586 = vld [vmem:[%s3566 + $0x98] sm:$0xff]
  %v3587 = vld [vmem:[%s3566 + $0xa0] sm:$0xff]
  %v3588 = vld [vmem:[%s3566 + $0xa8] sm:$0xff]
  %v3589 = vld [vmem:[%s3566 + $0xb0] sm:$0xff]
  %v3590 = vld [vmem:[%s3566 + $0xb8] sm:$0xff]
  %v3591 = vld [vmem:[%s3566 + $0xc0] sm:$0xff]
  %v3592 = vld [vmem:[%s3566 + $0xc8] sm:$0xff]
  %v3593 = vld [vmem:[%s3566 + $0xd0] sm:$0xff]
  %v3594 = vld [vmem:[%s3566 + $0xd8] sm:$0xff]
  %v3595 = vld [vmem:[%s3566 + $0xe0] sm:$0xff]
  %v3596 = vld [vmem:[%s3566 + $0xe8] sm:$0xff]
  %v3597 = vld [vmem:[%s3566 + $0xf0] sm:$0xff]
  %v3598 = vld [vmem:[%s3566 + $0xf8] sm:$0xff]
  %v3631 = vunpack.c.l.b16 %v3567
  %v3632 = vunpack.c.h.b16 %v3567
  %v3633 = vunpack.c.l.b16 %v3568
  %v3634 = vunpack.c.h.b16 %v3568
  %v3635 = vunpack.c.l.b16 %v3569
  %v3636 = vunpack.c.h.b16 %v3569
  %v3637 = vunpack.c.l.b16 %v3570
  %v3638 = vunpack.c.h.b16 %v3570
  %v3639 = vunpack.c.l.b16 %v3571
  %v3640 = vunpack.c.h.b16 %v3571
  %v3641 = vunpack.c.l.b16 %v3572
  %v3642 = vunpack.c.h.b16 %v3572
  %v3643 = vunpack.c.l.b16 %v3573
  %v3644 = vunpack.c.h.b16 %v3573
  %v3645 = vunpack.c.l.b16 %v3574
  %v3646 = vunpack.c.h.b16 %v3574
  %v3647 = vunpack.c.l.b16 %v3575
  %v3648 = vunpack.c.h.b16 %v3575
  %v3649 = vunpack.c.l.b16 %v3576
  %v3650 = vunpack.c.h.b16 %v3576
  %v3651 = vunpack.c.l.b16 %v3577
  %v3652 = vunpack.c.h.b16 %v3577
  %v3653 = vunpack.c.l.b16 %v3578
  %v3654 = vunpack.c.h.b16 %v3578
  %v3655 = vunpack.c.l.b16 %v3579
  %v3656 = vunpack.c.h.b16 %v3579
  %v3657 = vunpack.c.l.b16 %v3580
  %v3658 = vunpack.c.h.b16 %v3580
  %v3659 = vunpack.c.l.b16 %v3581
  %v3660 = vunpack.c.h.b16 %v3581
  %v3661 = vunpack.c.l.b16 %v3582
  %v3662 = vunpack.c.h.b16 %v3582
  %v3663 = vunpack.c.l.b16 %v3583
  %v3664 = vunpack.c.h.b16 %v3583
  %v3665 = vunpack.c.l.b16 %v3584
  %v3666 = vunpack.c.h.b16 %v3584
  %v3667 = vunpack.c.l.b16 %v3585
  %v3668 = vunpack.c.h.b16 %v3585
  %v3669 = vunpack.c.l.b16 %v3586
  %v3670 = vunpack.c.h.b16 %v3586
  %v3671 = vunpack.c.l.b16 %v3587
  %v3672 = vunpack.c.h.b16 %v3587
  %v3673 = vunpack.c.l.b16 %v3588
  %v3674 = vunpack.c.h.b16 %v3588
  %v3675 = vunpack.c.l.b16 %v3589
  %v3676 = vunpack.c.h.b16 %v3589
  %v3677 = vunpack.c.l.b16 %v3590
  %v3678 = vunpack.c.h.b16 %v3590
  %v3679 = vunpack.c.l.b16 %v3591
  %v3680 = vunpack.c.h.b16 %v3591
  %v3681 = vunpack.c.l.b16 %v3592
  %v3682 = vunpack.c.h.b16 %v3592
  %v3683 = vunpack.c.l.b16 %v3593
  %v3684 = vunpack.c.h.b16 %v3593
  %v3685 = vunpack.c.l.b16 %v3594
  %v3686 = vunpack.c.h.b16 %v3594
  %v3687 = vunpack.c.l.b16 %v3595
  %v3688 = vunpack.c.h.b16 %v3595
  %v3689 = vunpack.c.l.b16 %v3596
  %v3690 = vunpack.c.h.b16 %v3596
  %v3691 = vunpack.c.l.b16 %v3597
  %v3692 = vunpack.c.h.b16 %v3597
  %v3693 = vunpack.c.l.b16 %v3598
  %v3694 = vunpack.c.h.b16 %v3598
  %v3695 = vpack.c.b16 %v3633, %v3631
  %v3696 = vpack.c.b16 %v3634, %v3632
  %v3697 = vpack.c.b16 %v3637, %v3635
  %v3698 = vpack.c.b16 %v3638, %v3636
  %v3699 = vpack.c.b16 %v3641, %v3639
  %v3700 = vpack.c.b16 %v3642, %v3640
  %v3701 = vpack.c.b16 %v3645, %v3643
  %v3702 = vpack.c.b16 %v3646, %v3644
  %v3703 = vpack.c.b16 %v3649, %v3647
  %v3704 = vpack.c.b16 %v3650, %v3648
  %v3705 = vpack.c.b16 %v3653, %v3651
  %v3706 = vpack.c.b16 %v3654, %v3652
  %v3707 = vpack.c.b16 %v3657, %v3655
  %v3708 = vpack.c.b16 %v3658, %v3656
  %v3709 = vpack.c.b16 %v3661, %v3659
  %v3710 = vpack.c.b16 %v3662, %v3660
  %v3711 = vpack.c.b16 %v3665, %v3663
  %v3712 = vpack.c.b16 %v3666, %v3664
  %v3713 = vpack.c.b16 %v3669, %v3667
  %v3714 = vpack.c.b16 %v3670, %v3668
  %v3715 = vpack.c.b16 %v3673, %v3671
  %v3716 = vpack.c.b16 %v3674, %v3672
  %v3717 = vpack.c.b16 %v3677, %v3675
  %v3718 = vpack.c.b16 %v3678, %v3676
  %v3719 = vpack.c.b16 %v3681, %v3679
  %v3720 = vpack.c.b16 %v3682, %v3680
  %v3721 = vpack.c.b16 %v3685, %v3683
  %v3722 = vpack.c.b16 %v3686, %v3684
  %v3723 = vpack.c.b16 %v3689, %v3687
  %v3724 = vpack.c.b16 %v3690, %v3688
  %v3725 = vpack.c.b16 %v3693, %v3691
  %v3726 = vpack.c.b16 %v3694, %v3692
  %3759 = vmatprep.subr.bf16.mxu0 %v3696
  %3760 = vmatpush1.bf16.msra.mxu0 %v3695
  %3761 = vmatprep.subr.bf16.mxu0 %v3698
  %3762 = vmatpush1.bf16.msra.mxu0 %v3697
  %3763 = vmatprep.subr.bf16.mxu0 %v3700
  %3764 = vmatpush1.bf16.msra.mxu0 %v3699
  %3765 = vmatprep.subr.bf16.mxu0 %v3702
  %3766 = vmatpush1.bf16.msra.mxu0 %v3701
  %3767 = vmatprep.subr.bf16.mxu0 %v3704
  %3768 = vmatpush1.bf16.msra.mxu0 %v3703
  %3769 = vmatprep.subr.bf16.mxu0 %v3706
  %3770 = vmatpush1.bf16.msra.mxu0 %v3705
  %3771 = vmatprep.subr.bf16.mxu0 %v3708
  %3772 = vmatpush1.bf16.msra.mxu0 %v3707
  %3773 = vmatprep.subr.bf16.mxu0 %v3710
  %3774 = vmatpush1.bf16.msra.mxu0 %v3709
  %3775 = vmatprep.subr.bf16.mxu0 %v3712
  %3776 = vmatpush1.bf16.msra.mxu0 %v3711
  %3777 = vmatprep.subr.bf16.mxu0 %v3714
  %3778 = vmatpush1.bf16.msra.mxu0 %v3713
  %3779 = vmatprep.subr.bf16.mxu0 %v3716
  %3780 = vmatpush1.bf16.msra.mxu0 %v3715
  %3781 = vmatprep.subr.bf16.mxu0 %v3718
  %3782 = vmatpush1.bf16.msra.mxu0 %v3717
  %3783 = vmatprep.subr.bf16.mxu0 %v3720
  %3784 = vmatpush1.bf16.msra.mxu0 %v3719
  %3785 = vmatprep.subr.bf16.mxu0 %v3722
  %3786 = vmatpush1.bf16.msra.mxu0 %v3721
  %3787 = vmatprep.subr.bf16.mxu0 %v3724
  %3788 = vmatpush1.bf16.msra.mxu0 %v3723
  %3789 = vmatprep.subr.bf16.mxu0 %v3726
  %3790 = vmatpush1.bf16.msra.mxu0 %v3725
  %3791 = vmatprep.mubr.bf16.mxu0 %v3565
  %3792 = vmatmul.mubr.bf16.gmra.mrb[0].mxu0 %v3564
  %v3793 = vpop.f32.mrb[0].mxu0
  %v3794 = vadd.f32 0.0, %v3793
  %v3795 = vpop.f32.mrb[0].mxu0
  %v3796 = vadd.f32 0.0, %v3795
  %v3797 = vpop.f32.mrb[0].mxu0
  %v3798 = vadd.f32 0.0, %v3797
  %v3799 = vpop.f32.mrb[0].mxu0
  %v3800 = vadd.f32 0.0, %v3799
  %3801 = vdwg.mxu0
  %v3834 = vunpack.c.l.b16 %v3478
  %v3835 = vunpack.c.h.b16 %v3478
  %v3836 = vunpack.c.l.b16 %v3479
  %v3837 = vunpack.c.h.b16 %v3479
  %v3838 = vunpack.c.l.b16 %v3480
  %v3839 = vunpack.c.h.b16 %v3480
  %v3840 = vunpack.c.l.b16 %v3481
  %v3841 = vunpack.c.h.b16 %v3481
  %v3842 = vunpack.c.l.b16 %v3482
  %v3843 = vunpack.c.h.b16 %v3482
  %v3844 = vunpack.c.l.b16 %v3483
  %v3845 = vunpack.c.h.b16 %v3483
  %v3846 = vunpack.c.l.b16 %v3484
  %v3847 = vunpack.c.h.b16 %v3484
  %v3848 = vunpack.c.l.b16 %v3485
  %v3849 = vunpack.c.h.b16 %v3485
  %v3850 = vunpack.c.l.b16 %v3486
  %v3851 = vunpack.c.h.b16 %v3486
  %v3852 = vunpack.c.l.b16 %v3487
  %v3853 = vunpack.c.h.b16 %v3487
  %v3854 = vunpack.c.l.b16 %v3488
  %v3855 = vunpack.c.h.b16 %v3488
  %v3856 = vunpack.c.l.b16 %v3489
  %v3857 = vunpack.c.h.b16 %v3489
  %v3858 = vunpack.c.l.b16 %v3490
  %v3859 = vunpack.c.h.b16 %v3490
  %v3860 = vunpack.c.l.b16 %v3491
  %v3861 = vunpack.c.h.b16 %v3491
  %v3862 = vunpack.c.l.b16 %v3492
  %v3863 = vunpack.c.h.b16 %v3492
  %v3864 = vunpack.c.l.b16 %v3493
  %v3865 = vunpack.c.h.b16 %v3493
  %v3866 = vunpack.c.l.b16 %v3494
  %v3867 = vunpack.c.h.b16 %v3494
  %v3868 = vunpack.c.l.b16 %v3495
  %v3869 = vunpack.c.h.b16 %v3495
  %v3870 = vunpack.c.l.b16 %v3496
  %v3871 = vunpack.c.h.b16 %v3496
  %v3872 = vunpack.c.l.b16 %v3497
  %v3873 = vunpack.c.h.b16 %v3497
  %v3874 = vunpack.c.l.b16 %v3498
  %v3875 = vunpack.c.h.b16 %v3498
  %v3876 = vunpack.c.l.b16 %v3499
  %v3877 = vunpack.c.h.b16 %v3499
  %v3878 = vunpack.c.l.b16 %v3500
  %v3879 = vunpack.c.h.b16 %v3500
  %v3880 = vunpack.c.l.b16 %v3501
  %v3881 = vunpack.c.h.b16 %v3501
  %v3882 = vunpack.c.l.b16 %v3502
  %v3883 = vunpack.c.h.b16 %v3502
  %v3884 = vunpack.c.l.b16 %v3503
  %v3885 = vunpack.c.h.b16 %v3503
  %v3886 = vunpack.c.l.b16 %v3504
  %v3887 = vunpack.c.h.b16 %v3504
  %v3888 = vunpack.c.l.b16 %v3505
  %v3889 = vunpack.c.h.b16 %v3505
  %v3890 = vunpack.c.l.b16 %v3506
  %v3891 = vunpack.c.h.b16 %v3506
  %v3892 = vunpack.c.l.b16 %v3507
  %v3893 = vunpack.c.h.b16 %v3507
  %v3894 = vunpack.c.l.b16 %v3508
  %v3895 = vunpack.c.h.b16 %v3508
  %v3896 = vunpack.c.l.b16 %v3509
  %v3897 = vunpack.c.h.b16 %v3509
  %v3898 = vpack.c.b16 %v3836, %v3834
  %v3899 = vpack.c.b16 %v3837, %v3835
  %v3900 = vpack.c.b16 %v3840, %v3838
  %v3901 = vpack.c.b16 %v3841, %v3839
  %v3902 = vpack.c.b16 %v3844, %v3842
  %v3903 = vpack.c.b16 %v3845, %v3843
  %v3904 = vpack.c.b16 %v3848, %v3846
  %v3905 = vpack.c.b16 %v3849, %v3847
  %v3906 = vpack.c.b16 %v3852, %v3850
  %v3907 = vpack.c.b16 %v3853, %v3851
  %v3908 = vpack.c.b16 %v3856, %v3854
  %v3909 = vpack.c.b16 %v3857, %v3855
  %v3910 = vpack.c.b16 %v3860, %v3858
  %v3911 = vpack.c.b16 %v3861, %v3859
  %v3912 = vpack.c.b16 %v3864, %v3862
  %v3913 = vpack.c.b16 %v3865, %v3863
  %v3914 = vpack.c.b16 %v3868, %v3866
  %v3915 = vpack.c.b16 %v3869, %v3867
  %v3916 = vpack.c.b16 %v3872, %v3870
  %v3917 = vpack.c.b16 %v3873, %v3871
  %v3918 = vpack.c.b16 %v3876, %v3874
  %v3919 = vpack.c.b16 %v3877, %v3875
  %v3920 = vpack.c.b16 %v3880, %v3878
  %v3921 = vpack.c.b16 %v3881, %v3879
  %v3922 = vpack.c.b16 %v3884, %v3882
  %v3923 = vpack.c.b16 %v3885, %v3883
  %v3924 = vpack.c.b16 %v3888, %v3886
  %v3925 = vpack.c.b16 %v3889, %v3887
  %v3926 = vpack.c.b16 %v3892, %v3890
  %v3927 = vpack.c.b16 %v3893, %v3891
  %v3928 = vpack.c.b16 %v3896, %v3894
  %v3929 = vpack.c.b16 %v3897, %v3895
  %3962 = vmatprep.subr.bf16.mxu0 %v3899
  %3963 = vmatpush1.bf16.msra.mxu0 %v3898
  %3964 = vmatprep.subr.bf16.mxu0 %v3901
  %3965 = vmatpush1.bf16.msra.mxu0 %v3900
  %3966 = vmatprep.subr.bf16.mxu0 %v3903
  %3967 = vmatpush1.bf16.msra.mxu0 %v3902
  %3968 = vmatprep.subr.bf16.mxu0 %v3905
  %3969 = vmatpush1.bf16.msra.mxu0 %v3904
  %3970 = vmatprep.subr.bf16.mxu0 %v3907
  %3971 = vmatpush1.bf16.msra.mxu0 %v3906
  %3972 = vmatprep.subr.bf16.mxu0 %v3909
  %3973 = vmatpush1.bf16.msra.mxu0 %v3908
  %3974 = vmatprep.subr.bf16.mxu0 %v3911
  %3975 = vmatpush1.bf16.msra.mxu0 %v3910
  %3976 = vmatprep.subr.bf16.mxu0 %v3913
  %3977 = vmatpush1.bf16.msra.mxu0 %v3912
  %3978 = vmatprep.subr.bf16.mxu0 %v3915
  %3979 = vmatpush1.bf16.msra.mxu0 %v3914
  %3980 = vmatprep.subr.bf16.mxu0 %v3917
  %3981 = vmatpush1.bf16.msra.mxu0 %v3916
  %3982 = vmatprep.subr.bf16.mxu0 %v3919
  %3983 = vmatpush1.bf16.msra.mxu0 %v3918
  %3984 = vmatprep.subr.bf16.mxu0 %v3921
  %3985 = vmatpush1.bf16.msra.mxu0 %v3920
  %3986 = vmatprep.subr.bf16.mxu0 %v3923
  %3987 = vmatpush1.bf16.msra.mxu0 %v3922
  %3988 = vmatprep.subr.bf16.mxu0 %v3925
  %3989 = vmatpush1.bf16.msra.mxu0 %v3924
  %3990 = vmatprep.subr.bf16.mxu0 %v3927
  %3991 = vmatpush1.bf16.msra.mxu0 %v3926
  %3992 = vmatprep.subr.bf16.mxu0 %v3929
  %3993 = vmatpush1.bf16.msra.mxu0 %v3928
  %3994 = vmatprep.mubr.bf16.mxu0 %v3477
  %3995 = vmatmul.mubr.bf16.gmra.mrb[0].mxu0 %v3476
  %v3996 = vpop.f32.mrb[0].mxu0
  %v3997 = vadd.f32 %v3794, %v3996
  %v3998 = vpop.f32.mrb[0].mxu0
  %v3999 = vadd.f32 %v3796, %v3998
  %v4000 = vpop.f32.mrb[0].mxu0
  %v4001 = vadd.f32 %v3798, %v4000
  %v4002 = vpop.f32.mrb[0].mxu0
  %v4003 = vadd.f32 %v3800, %v4002
  %4004 = vdwg.mxu0
  %s4005 = scalar_lea.vmem %s3, 16
  %v4006 = vld [vmem:[%s4005] sm:$0xf]
  %v4007 = vld [vmem:[%s4005 + $0x4] sm:$0xf]
  %v4010 = vunpack.c.l.b16 %v4006
  %v4011 = vunpack.c.l.b16 %v4007
  %v4012 = vpack.c.b16 %v4011, %v4010
  %v4014 = vsel %vm3429, %v4012, 0
  %4016 = vmatprep.subr.bf16.mxu0 %v3419
  %4017 = vmatpush1.bf16.msra.mxu0 %v3418
  %4018 = vmatprep.subr.bf16.mxu0 %v3421
  %4019 = vmatpush1.bf16.msra.mxu0 %v3420
  %4020 = vmatprep.subr.bf16.mxu0 0
  %4021 = vmatpush1.bf16.msra.mxu0 0
  %4022 = vmatprep.subr.bf16.mxu0 0
  %4023 = vmatpush1.bf16.msra.mxu0 0
  %4024 = vmatprep.subr.bf16.mxu0 0
  %4025 = vmatpush1.bf16.msra.mxu0 0
  %4026 = vmatprep.subr.bf16.mxu0 0
  %4027 = vmatpush1.bf16.msra.mxu0 0
  %4028 = vmatprep.subr.bf16.mxu0 0
  %4029 = vmatpush1.bf16.msra.mxu0 0
  %4030 = vmatprep.subr.bf16.mxu0 0
  %4031 = vmatpush1.bf16.msra.mxu0 0
  %4032 = vmatprep.subr.bf16.mxu0 0
  %4033 = vmatpush1.bf16.msra.mxu0 0
  %4034 = vmatprep.subr.bf16.mxu0 0
  %4035 = vmatpush1.bf16.msra.mxu0 0
  %4036 = vmatprep.subr.bf16.mxu0 0
  %4037 = vmatpush1.bf16.msra.mxu0 0
  %4038 = vmatprep.subr.bf16.mxu0 0
  %4039 = vmatpush1.bf16.msra.mxu0 0
  %4040 = vmatprep.subr.bf16.mxu0 0
  %4041 = vmatpush1.bf16.msra.mxu0 0
  %4042 = vmatprep.subr.bf16.mxu0 0
  %4043 = vmatpush1.bf16.msra.mxu0 0
  %4044 = vmatprep.subr.bf16.mxu0 0
  %4045 = vmatpush1.bf16.msra.mxu0 0
  %4046 = vmatprep.subr.bf16.mxu0 0
  %4047 = vmatpush1.bf16.msra.mxu0 0
  %4048 = vmatprep.mubr.bf16.mxu0 0
  %4049 = vmatmul.mubr.bf16.gmra.mrb[0].mxu0 %v4014
  %v4050 = vpop.f32.mrb[0].mxu0
  %v4051 = vadd.f32 0.0, %v4050
  %v4052 = vpop.f32.mrb[0].mxu0
  %v4053 = vadd.f32 0.0, %v4052
  %v4054 = vpop.f32.mrb[0].mxu0
  %v4055 = vadd.f32 0.0, %v4054
  %v4056 = vpop.f32.mrb[0].mxu0
  %v4057 = vadd.f32 0.0, %v4056
  %4058 = vdwg.mxu0
  %v4059 = vpack.c.bf16 %v4055, %v4051
  %v4060 = vpack.c.bf16 %v4057, %v4053
  %s4061 = scalar_lea.vmem %s8, 512
  %v4062 = vld [vmem:[%s4061] sm:$0xff]
  %v4063 = vld [vmem:[%s4061 + $0x8] sm:$0xff]
  %v4064 = vld [vmem:[%s4061 + $0x10] sm:$0xff]
  %v4065 = vld [vmem:[%s4061 + $0x18] sm:$0xff]
  %v4066 = vld [vmem:[%s4061 + $0x20] sm:$0xff]
  %v4067 = vld [vmem:[%s4061 + $0x28] sm:$0xff]
  %v4068 = vld [vmem:[%s4061 + $0x30] sm:$0xff]
  %v4069 = vld [vmem:[%s4061 + $0x38] sm:$0xff]
  %v4070 = vld [vmem:[%s4061 + $0x40] sm:$0xff]
  %v4071 = vld [vmem:[%s4061 + $0x48] sm:$0xff]
  %v4072 = vld [vmem:[%s4061 + $0x50] sm:$0xff]
  %v4073 = vld [vmem:[%s4061 + $0x58] sm:$0xff]
  %v4074 = vld [vmem:[%s4061 + $0x60] sm:$0xff]
  %v4075 = vld [vmem:[%s4061 + $0x68] sm:$0xff]
  %v4076 = vld [vmem:[%s4061 + $0x70] sm:$0xff]
  %v4077 = vld [vmem:[%s4061 + $0x78] sm:$0xff]
  %v4078 = vld [vmem:[%s4061 + $0x80] sm:$0xff]
  %v4079 = vld [vmem:[%s4061 + $0x88] sm:$0xff]
  %v4080 = vld [vmem:[%s4061 + $0x90] sm:$0xff]
  %v4081 = vld [vmem:[%s4061 + $0x98] sm:$0xff]
  %v4082 = vld [vmem:[%s4061 + $0xa0] sm:$0xff]
  %v4083 = vld [vmem:[%s4061 + $0xa8] sm:$0xff]
  %v4084 = vld [vmem:[%s4061 + $0xb0] sm:$0xff]
  %v4085 = vld [vmem:[%s4061 + $0xb8] sm:$0xff]
  %v4086 = vld [vmem:[%s4061 + $0xc0] sm:$0xff]
  %v4087 = vld [vmem:[%s4061 + $0xc8] sm:$0xff]
  %v4088 = vld [vmem:[%s4061 + $0xd0] sm:$0xff]
  %v4089 = vld [vmem:[%s4061 + $0xd8] sm:$0xff]
  %v4090 = vld [vmem:[%s4061 + $0xe0] sm:$0xff]
  %v4091 = vld [vmem:[%s4061 + $0xe8] sm:$0xff]
  %v4092 = vld [vmem:[%s4061 + $0xf0] sm:$0xff]
  %v4093 = vld [vmem:[%s4061 + $0xf8] sm:$0xff]
  %v4126 = vunpack.c.l.b16 %v4062
  %v4127 = vunpack.c.h.b16 %v4062
  %v4128 = vunpack.c.l.b16 %v4063
  %v4129 = vunpack.c.h.b16 %v4063
  %v4130 = vunpack.c.l.b16 %v4064
  %v4131 = vunpack.c.h.b16 %v4064
  %v4132 = vunpack.c.l.b16 %v4065
  %v4133 = vunpack.c.h.b16 %v4065
  %v4134 = vunpack.c.l.b16 %v4066
  %v4135 = vunpack.c.h.b16 %v4066
  %v4136 = vunpack.c.l.b16 %v4067
  %v4137 = vunpack.c.h.b16 %v4067
  %v4138 = vunpack.c.l.b16 %v4068
  %v4139 = vunpack.c.h.b16 %v4068
  %v4140 = vunpack.c.l.b16 %v4069
  %v4141 = vunpack.c.h.b16 %v4069
  %v4142 = vunpack.c.l.b16 %v4070
  %v4143 = vunpack.c.h.b16 %v4070
  %v4144 = vunpack.c.l.b16 %v4071
  %v4145 = vunpack.c.h.b16 %v4071
  %v4146 = vunpack.c.l.b16 %v4072
  %v4147 = vunpack.c.h.b16 %v4072
  %v4148 = vunpack.c.l.b16 %v4073
  %v4149 = vunpack.c.h.b16 %v4073
  %v4150 = vunpack.c.l.b16 %v4074
  %v4151 = vunpack.c.h.b16 %v4074
  %v4152 = vunpack.c.l.b16 %v4075
  %v4153 = vunpack.c.h.b16 %v4075
  %v4154 = vunpack.c.l.b16 %v4076
  %v4155 = vunpack.c.h.b16 %v4076
  %v4156 = vunpack.c.l.b16 %v4077
  %v4157 = vunpack.c.h.b16 %v4077
  %v4158 = vunpack.c.l.b16 %v4078
  %v4159 = vunpack.c.h.b16 %v4078
  %v4160 = vunpack.c.l.b16 %v4079
  %v4161 = vunpack.c.h.b16 %v4079
  %v4162 = vunpack.c.l.b16 %v4080
  %v4163 = vunpack.c.h.b16 %v4080
  %v4164 = vunpack.c.l.b16 %v4081
  %v4165 = vunpack.c.h.b16 %v4081
  %v4166 = vunpack.c.l.b16 %v4082
  %v4167 = vunpack.c.h.b16 %v4082
  %v4168 = vunpack.c.l.b16 %v4083
  %v4169 = vunpack.c.h.b16 %v4083
  %v4170 = vunpack.c.l.b16 %v4084
  %v4171 = vunpack.c.h.b16 %v4084
  %v4172 = vunpack.c.l.b16 %v4085
  %v4173 = vunpack.c.h.b16 %v4085
  %v4174 = vunpack.c.l.b16 %v4086
  %v4175 = vunpack.c.h.b16 %v4086
  %v4176 = vunpack.c.l.b16 %v4087
  %v4177 = vunpack.c.h.b16 %v4087
  %v4178 = vunpack.c.l.b16 %v4088
  %v4179 = vunpack.c.h.b16 %v4088
  %v4180 = vunpack.c.l.b16 %v4089
  %v4181 = vunpack.c.h.b16 %v4089
  %v4182 = vunpack.c.l.b16 %v4090
  %v4183 = vunpack.c.h.b16 %v4090
  %v4184 = vunpack.c.l.b16 %v4091
  %v4185 = vunpack.c.h.b16 %v4091
  %v4186 = vunpack.c.l.b16 %v4092
  %v4187 = vunpack.c.h.b16 %v4092
  %v4188 = vunpack.c.l.b16 %v4093
  %v4189 = vunpack.c.h.b16 %v4093
  %v4190 = vpack.c.b16 %v4128, %v4126
  %v4191 = vpack.c.b16 %v4129, %v4127
  %v4192 = vpack.c.b16 %v4132, %v4130
  %v4193 = vpack.c.b16 %v4133, %v4131
  %v4194 = vpack.c.b16 %v4136, %v4134
  %v4195 = vpack.c.b16 %v4137, %v4135
  %v4196 = vpack.c.b16 %v4140, %v4138
  %v4197 = vpack.c.b16 %v4141, %v4139
  %v4198 = vpack.c.b16 %v4144, %v4142
  %v4199 = vpack.c.b16 %v4145, %v4143
  %v4200 = vpack.c.b16 %v4148, %v4146
  %v4201 = vpack.c.b16 %v4149, %v4147
  %v4202 = vpack.c.b16 %v4152, %v4150
  %v4203 = vpack.c.b16 %v4153, %v4151
  %v4204 = vpack.c.b16 %v4156, %v4154
  %v4205 = vpack.c.b16 %v4157, %v4155
  %v4206 = vpack.c.b16 %v4160, %v4158
  %v4207 = vpack.c.b16 %v4161, %v4159
  %v4208 = vpack.c.b16 %v4164, %v4162
  %v4209 = vpack.c.b16 %v4165, %v4163
  %v4210 = vpack.c.b16 %v4168, %v4166
  %v4211 = vpack.c.b16 %v4169, %v4167
  %v4212 = vpack.c.b16 %v4172, %v4170
  %v4213 = vpack.c.b16 %v4173, %v4171
  %v4214 = vpack.c.b16 %v4176, %v4174
  %v4215 = vpack.c.b16 %v4177, %v4175
  %v4216 = vpack.c.b16 %v4180, %v4178
  %v4217 = vpack.c.b16 %v4181, %v4179
  %v4218 = vpack.c.b16 %v4184, %v4182
  %v4219 = vpack.c.b16 %v4185, %v4183
  %v4220 = vpack.c.b16 %v4188, %v4186
  %v4221 = vpack.c.b16 %v4189, %v4187
  %4254 = vmatprep.subr.bf16.mxu0 %v4191
  %4255 = vmatpush1.bf16.msra.mxu0 %v4190
  %4256 = vmatprep.subr.bf16.mxu0 %v4193
  %4257 = vmatpush1.bf16.msra.mxu0 %v4192
  %4258 = vmatprep.subr.bf16.mxu0 %v4195
  %4259 = vmatpush1.bf16.msra.mxu0 %v4194
  %4260 = vmatprep.subr.bf16.mxu0 %v4197
  %4261 = vmatpush1.bf16.msra.mxu0 %v4196
  %4262 = vmatprep.subr.bf16.mxu0 %v4199
  %4263 = vmatpush1.bf16.msra.mxu0 %v4198
  %4264 = vmatprep.subr.bf16.mxu0 %v4201
  %4265 = vmatpush1.bf16.msra.mxu0 %v4200
  %4266 = vmatprep.subr.bf16.mxu0 %v4203
  %4267 = vmatpush1.bf16.msra.mxu0 %v4202
  %4268 = vmatprep.subr.bf16.mxu0 %v4205
  %4269 = vmatpush1.bf16.msra.mxu0 %v4204
  %4270 = vmatprep.subr.bf16.mxu0 %v4207
  %4271 = vmatpush1.bf16.msra.mxu0 %v4206
  %4272 = vmatprep.subr.bf16.mxu0 %v4209
  %4273 = vmatpush1.bf16.msra.mxu0 %v4208
  %4274 = vmatprep.subr.bf16.mxu0 %v4211
  %4275 = vmatpush1.bf16.msra.mxu0 %v4210
  %4276 = vmatprep.subr.bf16.mxu0 %v4213
  %4277 = vmatpush1.bf16.msra.mxu0 %v4212
  %4278 = vmatprep.subr.bf16.mxu0 %v4215
  %4279 = vmatpush1.bf16.msra.mxu0 %v4214
  %4280 = vmatprep.subr.bf16.mxu0 %v4217
  %4281 = vmatpush1.bf16.msra.mxu0 %v4216
  %4282 = vmatprep.subr.bf16.mxu0 %v4219
  %4283 = vmatpush1.bf16.msra.mxu0 %v4218
  %4284 = vmatprep.subr.bf16.mxu0 %v4221
  %4285 = vmatpush1.bf16.msra.mxu0 %v4220
  %4286 = vmatprep.mubr.bf16.mxu0 %v4060
  %4287 = vmatmul.mubr.bf16.gmra.mrb[0].mxu0 %v4059
  %v4288 = vpop.f32.mrb[0].mxu0
  %v4289 = vadd.f32 0.0, %v4288
  %v4290 = vpop.f32.mrb[0].mxu0
  %v4291 = vadd.f32 0.0, %v4290
  %v4292 = vpop.f32.mrb[0].mxu0
  %v4293 = vadd.f32 0.0, %v4292
  %v4294 = vpop.f32.mrb[0].mxu0
  %v4295 = vadd.f32 0.0, %v4294
  %4296 = vdwg.mxu0
  %v4297 = vadd.f32 %v3997, %v4289
  %v4298 = vadd.f32 %v3999, %v4291
  %v4299 = vadd.f32 %v4001, %v4293
  %v4300 = vadd.f32 %v4003, %v4295
  %s4301 = scalar_lea.vmem %s3, 24
  %v4302 = vld [vmem:[%s4301] sm:$0xf]
  %v4303 = vld [vmem:[%s4301 + $0x4] sm:$0xf]
  %v4306 = vunpack.c.l.b16 %v4302
  %v4307 = vunpack.c.l.b16 %v4303
  %v4308 = vpack.c.b16 %v4307, %v4306
  %v4310 = vsel %vm3429, %v4308, 0
  %4312 = vmatprep.subr.bf16.mxu0 %v3419
  %4313 = vmatpush1.bf16.msra.mxu0 %v3418
  %4314 = vmatprep.subr.bf16.mxu0 %v3421
  %4315 = vmatpush1.bf16.msra.mxu0 %v3420
  %4316 = vmatprep.subr.bf16.mxu0 0
  %4317 = vmatpush1.bf16.msra.mxu0 0
  %4318 = vmatprep.subr.bf16.mxu0 0
  %4319 = vmatpush1.bf16.msra.mxu0 0
  %4320 = vmatprep.subr.bf16.mxu0 0
  %4321 = vmatpush1.bf16.msra.mxu0 0
  %4322 = vmatprep.subr.bf16.mxu0 0
  %4323 = vmatpush1.bf16.msra.mxu0 0
  %4324 = vmatprep.subr.bf16.mxu0 0
  %4325 = vmatpush1.bf16.msra.mxu0 0
  %4326 = vmatprep.subr.bf16.mxu0 0
  %4327 = vmatpush1.bf16.msra.mxu0 0
  %4328 = vmatprep.subr.bf16.mxu0 0
  %4329 = vmatpush1.bf16.msra.mxu0 0
  %4330 = vmatprep.subr.bf16.mxu0 0
  %4331 = vmatpush1.bf16.msra.mxu0 0
  %4332 = vmatprep.subr.bf16.mxu0 0
  %4333 = vmatpush1.bf16.msra.mxu0 0
  %4334 = vmatprep.subr.bf16.mxu0 0
  %4335 = vmatpush1.bf16.msra.mxu0 0
  %4336 = vmatprep.subr.bf16.mxu0 0
  %4337 = vmatpush1.bf16.msra.mxu0 0
  %4338 = vmatprep.subr.bf16.mxu0 0
  %4339 = vmatpush1.bf16.msra.mxu0 0
  %4340 = vmatprep.subr.bf16.mxu0 0
  %4341 = vmatpush1.bf16.msra.mxu0 0
  %4342 = vmatprep.subr.bf16.mxu0 0
  %4343 = vmatpush1.bf16.msra.mxu0 0
  %4344 = vmatprep.mubr.bf16.mxu0 0
  %4345 = vmatmul.mubr.bf16.gmra.mrb[0].mxu0 %v4310
  %v4346 = vpop.f32.mrb[0].mxu0
  %v4347 = vadd.f32 0.0, %v4346
  %v4348 = vpop.f32.mrb[0].mxu0
  %v4349 = vadd.f32 0.0, %v4348
  %v4350 = vpop.f32.mrb[0].mxu0
  %v4351 = vadd.f32 0.0, %v4350
  %v4352 = vpop.f32.mrb[0].mxu0
  %v4353 = vadd.f32 0.0, %v4352
  %4354 = vdwg.mxu0
  %v4355 = vpack.c.bf16 %v4351, %v4347
  %v4356 = vpack.c.bf16 %v4353, %v4349
  %s4357 = scalar_lea.vmem %s8, 768
  %v4358 = vld [vmem:[%s4357] sm:$0xff]
  %v4359 = vld [vmem:[%s4357 + $0x8] sm:$0xff]
  %v4360 = vld [vmem:[%s4357 + $0x10] sm:$0xff]
  %v4361 = vld [vmem:[%s4357 + $0x18] sm:$0xff]
  %v4362 = vld [vmem:[%s4357 + $0x20] sm:$0xff]
  %v4363 = vld [vmem:[%s4357 + $0x28] sm:$0xff]
  %v4364 = vld [vmem:[%s4357 + $0x30] sm:$0xff]
  %v4365 = vld [vmem:[%s4357 + $0x38] sm:$0xff]
  %v4366 = vld [vmem:[%s4357 + $0x40] sm:$0xff]
  %v4367 = vld [vmem:[%s4357 + $0x48] sm:$0xff]
  %v4368 = vld [vmem:[%s4357 + $0x50] sm:$0xff]
  %v4369 = vld [vmem:[%s4357 + $0x58] sm:$0xff]
  %v4370 = vld [vmem:[%s4357 + $0x60] sm:$0xff]
  %v4371 = vld [vmem:[%s4357 + $0x68] sm:$0xff]
  %v4372 = vld [vmem:[%s4357 + $0x70] sm:$0xff]
  %v4373 = vld [vmem:[%s4357 + $0x78] sm:$0xff]
  %v4374 = vld [vmem:[%s4357 + $0x80] sm:$0xff]
  %v4375 = vld [vmem:[%s4357 + $0x88] sm:$0xff]
  %v4376 = vld [vmem:[%s4357 + $0x90] sm:$0xff]
  %v4377 = vld [vmem:[%s4357 + $0x98] sm:$0xff]
  %v4378 = vld [vmem:[%s4357 + $0xa0] sm:$0xff]
  %v4379 = vld [vmem:[%s4357 + $0xa8] sm:$0xff]
  %v4380 = vld [vmem:[%s4357 + $0xb0] sm:$0xff]
  %v4381 = vld [vmem:[%s4357 + $0xb8] sm:$0xff]
  %v4382 = vld [vmem:[%s4357 + $0xc0] sm:$0xff]
  %v4383 = vld [vmem:[%s4357 + $0xc8] sm:$0xff]
  %v4384 = vld [vmem:[%s4357 + $0xd0] sm:$0xff]
  %v4385 = vld [vmem:[%s4357 + $0xd8] sm:$0xff]
  %v4386 = vld [vmem:[%s4357 + $0xe0] sm:$0xff]
  %v4387 = vld [vmem:[%s4357 + $0xe8] sm:$0xff]
  %v4388 = vld [vmem:[%s4357 + $0xf0] sm:$0xff]
  %v4389 = vld [vmem:[%s4357 + $0xf8] sm:$0xff]
  %v4422 = vunpack.c.l.b16 %v4358
  %v4423 = vunpack.c.h.b16 %v4358
  %v4424 = vunpack.c.l.b16 %v4359
  %v4425 = vunpack.c.h.b16 %v4359
  %v4426 = vunpack.c.l.b16 %v4360
  %v4427 = vunpack.c.h.b16 %v4360
  %v4428 = vunpack.c.l.b16 %v4361
  %v4429 = vunpack.c.h.b16 %v4361
  %v4430 = vunpack.c.l.b16 %v4362
  %v4431 = vunpack.c.h.b16 %v4362
  %v4432 = vunpack.c.l.b16 %v4363
  %v4433 = vunpack.c.h.b16 %v4363
  %v4434 = vunpack.c.l.b16 %v4364
  %v4435 = vunpack.c.h.b16 %v4364
  %v4436 = vunpack.c.l.b16 %v4365
  %v4437 = vunpack.c.h.b16 %v4365
  %v4438 = vunpack.c.l.b16 %v4366
  %v4439 = vunpack.c.h.b16 %v4366
  %v4440 = vunpack.c.l.b16 %v4367
  %v4441 = vunpack.c.h.b16 %v4367
  %v4442 = vunpack.c.l.b16 %v4368
  %v4443 = vunpack.c.h.b16 %v4368
  %v4444 = vunpack.c.l.b16 %v4369
  %v4445 = vunpack.c.h.b16 %v4369
  %v4446 = vunpack.c.l.b16 %v4370
  %v4447 = vunpack.c.h.b16 %v4370
  %v4448 = vunpack.c.l.b16 %v4371
  %v4449 = vunpack.c.h.b16 %v4371
  %v4450 = vunpack.c.l.b16 %v4372
  %v4451 = vunpack.c.h.b16 %v4372
  %v4452 = vunpack.c.l.b16 %v4373
  %v4453 = vunpack.c.h.b16 %v4373
  %v4454 = vunpack.c.l.b16 %v4374
  %v4455 = vunpack.c.h.b16 %v4374
  %v4456 = vunpack.c.l.b16 %v4375
  %v4457 = vunpack.c.h.b16 %v4375
  %v4458 = vunpack.c.l.b16 %v4376
  %v4459 = vunpack.c.h.b16 %v4376
  %v4460 = vunpack.c.l.b16 %v4377
  %v4461 = vunpack.c.h.b16 %v4377
  %v4462 = vunpack.c.l.b16 %v4378
  %v4463 = vunpack.c.h.b16 %v4378
  %v4464 = vunpack.c.l.b16 %v4379
  %v4465 = vunpack.c.h.b16 %v4379
  %v4466 = vunpack.c.l.b16 %v4380
  %v4467 = vunpack.c.h.b16 %v4380
  %v4468 = vunpack.c.l.b16 %v4381
  %v4469 = vunpack.c.h.b16 %v4381
  %v4470 = vunpack.c.l.b16 %v4382
  %v4471 = vunpack.c.h.b16 %v4382
  %v4472 = vunpack.c.l.b16 %v4383
  %v4473 = vunpack.c.h.b16 %v4383
  %v4474 = vunpack.c.l.b16 %v4384
  %v4475 = vunpack.c.h.b16 %v4384
  %v4476 = vunpack.c.l.b16 %v4385
  %v4477 = vunpack.c.h.b16 %v4385
  %v4478 = vunpack.c.l.b16 %v4386
  %v4479 = vunpack.c.h.b16 %v4386
  %v4480 = vunpack.c.l.b16 %v4387
  %v4481 = vunpack.c.h.b16 %v4387
  %v4482 = vunpack.c.l.b16 %v4388
  %v4483 = vunpack.c.h.b16 %v4388
  %v4484 = vunpack.c.l.b16 %v4389
  %v4485 = vunpack.c.h.b16 %v4389
  %v4486 = vpack.c.b16 %v4424, %v4422
  %v4487 = vpack.c.b16 %v4425, %v4423
  %v4488 = vpack.c.b16 %v4428, %v4426
  %v4489 = vpack.c.b16 %v4429, %v4427
  %v4490 = vpack.c.b16 %v4432, %v4430
  %v4491 = vpack.c.b16 %v4433, %v4431
  %v4492 = vpack.c.b16 %v4436, %v4434
  %v4493 = vpack.c.b16 %v4437, %v4435
  %v4494 = vpack.c.b16 %v4440, %v4438
  %v4495 = vpack.c.b16 %v4441, %v4439
  %v4496 = vpack.c.b16 %v4444, %v4442
  %v4497 = vpack.c.b16 %v4445, %v4443
  %v4498 = vpack.c.b16 %v4448, %v4446
  %v4499 = vpack.c.b16 %v4449, %v4447
  %v4500 = vpack.c.b16 %v4452, %v4450
  %v4501 = vpack.c.b16 %v4453, %v4451
  %v4502 = vpack.c.b16 %v4456, %v4454
  %v4503 = vpack.c.b16 %v4457, %v4455
  %v4504 = vpack.c.b16 %v4460, %v4458
  %v4505 = vpack.c.b16 %v4461, %v4459
  %v4506 = vpack.c.b16 %v4464, %v4462
  %v4507 = vpack.c.b16 %v4465, %v4463
  %v4508 = vpack.c.b16 %v4468, %v4466
  %v4509 = vpack.c.b16 %v4469, %v4467
  %v4510 = vpack.c.b16 %v4472, %v4470
  %v4511 = vpack.c.b16 %v4473, %v4471
  %v4512 = vpack.c.b16 %v4476, %v4474
  %v4513 = vpack.c.b16 %v4477, %v4475
  %v4514 = vpack.c.b16 %v4480, %v4478
  %v4515 = vpack.c.b16 %v4481, %v4479
  %v4516 = vpack.c.b16 %v4484, %v4482
  %v4517 = vpack.c.b16 %v4485, %v4483
  %4550 = vmatprep.subr.bf16.mxu0 %v4487
  %4551 = vmatpush1.bf16.msra.mxu0 %v4486
  %4552 = vmatprep.subr.bf16.mxu0 %v4489
  %4553 = vmatpush1.bf16.msra.mxu0 %v4488
  %4554 = vmatprep.subr.bf16.mxu0 %v4491
  %4555 = vmatpush1.bf16.msra.mxu0 %v4490
  %4556 = vmatprep.subr.bf16.mxu0 %v4493
  %4557 = vmatpush1.bf16.msra.mxu0 %v4492
  %4558 = vmatprep.subr.bf16.mxu0 %v4495
  %4559 = vmatpush1.bf16.msra.mxu0 %v4494
  %4560 = vmatprep.subr.bf16.mxu0 %v4497
  %4561 = vmatpush1.bf16.msra.mxu0 %v4496
  %4562 = vmatprep.subr.bf16.mxu0 %v4499
  %4563 = vmatpush1.bf16.msra.mxu0 %v4498
  %4564 = vmatprep.subr.bf16.mxu0 %v4501
  %4565 = vmatpush1.bf16.msra.mxu0 %v4500
  %4566 = vmatprep.subr.bf16.mxu0 %v4503
  %4567 = vmatpush1.bf16.msra.mxu0 %v4502
  %4568 = vmatprep.subr.bf16.mxu0 %v4505
  %4569 = vmatpush1.bf16.msra.mxu0 %v4504
  %4570 = vmatprep.subr.bf16.mxu0 %v4507
  %4571 = vmatpush1.bf16.msra.mxu0 %v4506
  %4572 = vmatprep.subr.bf16.mxu0 %v4509
  %4573 = vmatpush1.bf16.msra.mxu0 %v4508
  %4574 = vmatprep.subr.bf16.mxu0 %v4511
  %4575 = vmatpush1.bf16.msra.mxu0 %v4510
  %4576 = vmatprep.subr.bf16.mxu0 %v4513
  %4577 = vmatpush1.bf16.msra.mxu0 %v4512
  %4578 = vmatprep.subr.bf16.mxu0 %v4515
  %4579 = vmatpush1.bf16.msra.mxu0 %v4514
  %4580 = vmatprep.subr.bf16.mxu0 %v4517
  %4581 = vmatpush1.bf16.msra.mxu0 %v4516
  %4582 = vmatprep.mubr.bf16.mxu0 %v4356
  %4583 = vmatmul.mubr.bf16.gmra.mrb[0].mxu0 %v4355
  %v4584 = vpop.f32.mrb[0].mxu0
  %v4585 = vadd.f32 0.0, %v4584
  %v4586 = vpop.f32.mrb[0].mxu0
  %v4587 = vadd.f32 0.0, %v4586
  %v4588 = vpop.f32.mrb[0].mxu0
  %v4589 = vadd.f32 0.0, %v4588
  %v4590 = vpop.f32.mrb[0].mxu0
  %v4591 = vadd.f32 0.0, %v4590
  %4592 = vdwg.mxu0
  %v4593 = vadd.f32 %v4297, %v4585
  %v4594 = vadd.f32 %v4298, %v4587
  %v4595 = vadd.f32 %v4299, %v4589
  %v4596 = vadd.f32 %v4300, %v4591
  %v4597 = vadd.f32 %v4593, %v4595
  %v4598 = vrot.slane %v4597, 4
  %v4599 = vadd.f32 %v4597, %v4598
  %v4600 = vrot.slane %v4599, 2
  %v4601 = vadd.f32 %v4599, %v4600
  %v4602 = vrot.slane %v4601, 1
  %v4603 = vadd.f32 %v4601, %v4602
  %v4604 = vadd.f32 %v4594, %v4596
  %v4605 = vrot.slane %v4604, 4
  %v4606 = vadd.f32 %v4604, %v4605
  %v4607 = vrot.slane %v4606, 2
  %v4608 = vadd.f32 %v4606, %v4607
  %v4609 = vrot.slane %v4608, 1
  %v4610 = vadd.f32 %v4608, %v4609
  %s4611 = scalar_lea.vmem %s11, 512
  %v4612 = vld [vmem:[%s4611] sm:$0xff]
  %v4613 = vld [vmem:[%s4611 + $0x8] sm:$0xff]
  %v4614 = vld [vmem:[%s4611 + $0x10] sm:$0xff]
  %v4615 = vld [vmem:[%s4611 + $0x18] sm:$0xff]
  %v4616 = vld [vmem:[%s4611 + $0x20] sm:$0xff]
  %v4617 = vld [vmem:[%s4611 + $0x28] sm:$0xff]
  %v4618 = vld [vmem:[%s4611 + $0x30] sm:$0xff]
  %v4619 = vld [vmem:[%s4611 + $0x38] sm:$0xff]
  %v4620 = vld [vmem:[%s4611 + $0x40] sm:$0xff]
  %v4621 = vld [vmem:[%s4611 + $0x48] sm:$0xff]
  %v4622 = vld [vmem:[%s4611 + $0x50] sm:$0xff]
  %v4623 = vld [vmem:[%s4611 + $0x58] sm:$0xff]
  %v4624 = vld [vmem:[%s4611 + $0x60] sm:$0xff]
  %v4625 = vld [vmem:[%s4611 + $0x68] sm:$0xff]
  %v4626 = vld [vmem:[%s4611 + $0x70] sm:$0xff]
  %v4627 = vld [vmem:[%s4611 + $0x78] sm:$0xff]
  %v4628 = vld [vmem:[%s4611 + $0x80] sm:$0xff]
  %v4629 = vld [vmem:[%s4611 + $0x88] sm:$0xff]
  %v4630 = vld [vmem:[%s4611 + $0x90] sm:$0xff]
  %v4631 = vld [vmem:[%s4611 + $0x98] sm:$0xff]
  %v4632 = vld [vmem:[%s4611 + $0xa0] sm:$0xff]
  %v4633 = vld [vmem:[%s4611 + $0xa8] sm:$0xff]
  %v4634 = vld [vmem:[%s4611 + $0xb0] sm:$0xff]
  %v4635 = vld [vmem:[%s4611 + $0xb8] sm:$0xff]
  %v4636 = vld [vmem:[%s4611 + $0xc0] sm:$0xff]
  %v4637 = vld [vmem:[%s4611 + $0xc8] sm:$0xff]
  %v4638 = vld [vmem:[%s4611 + $0xd0] sm:$0xff]
  %v4639 = vld [vmem:[%s4611 + $0xd8] sm:$0xff]
  %v4640 = vld [vmem:[%s4611 + $0xe0] sm:$0xff]
  %v4641 = vld [vmem:[%s4611 + $0xe8] sm:$0xff]
  %v4642 = vld [vmem:[%s4611 + $0xf0] sm:$0xff]
  %v4643 = vld [vmem:[%s4611 + $0xf8] sm:$0xff]
  %v4644 = vld [vmem:[%s4611 + $0x100] sm:$0xff]
  %v4645 = vld [vmem:[%s4611 + $0x108] sm:$0xff]
  %v4646 = vld [vmem:[%s4611 + $0x110] sm:$0xff]
  %v4647 = vld [vmem:[%s4611 + $0x118] sm:$0xff]
  %v4648 = vld [vmem:[%s4611 + $0x120] sm:$0xff]
  %v4649 = vld [vmem:[%s4611 + $0x128] sm:$0xff]
  %v4650 = vld [vmem:[%s4611 + $0x130] sm:$0xff]
  %v4651 = vld [vmem:[%s4611 + $0x138] sm:$0xff]
  %v4652 = vld [vmem:[%s4611 + $0x140] sm:$0xff]
  %v4653 = vld [vmem:[%s4611 + $0x148] sm:$0xff]
  %v4654 = vld [vmem:[%s4611 + $0x150] sm:$0xff]
  %v4655 = vld [vmem:[%s4611 + $0x158] sm:$0xff]
  %v4656 = vld [vmem:[%s4611 + $0x160] sm:$0xff]
  %v4657 = vld [vmem:[%s4611 + $0x168] sm:$0xff]
  %v4658 = vld [vmem:[%s4611 + $0x170] sm:$0xff]
  %v4659 = vld [vmem:[%s4611 + $0x178] sm:$0xff]
  %v4660 = vld [vmem:[%s4611 + $0x180] sm:$0xff]
  %v4661 = vld [vmem:[%s4611 + $0x188] sm:$0xff]
  %v4662 = vld [vmem:[%s4611 + $0x190] sm:$0xff]
  %v4663 = vld [vmem:[%s4611 + $0x198] sm:$0xff]
  %v4664 = vld [vmem:[%s4611 + $0x1a0] sm:$0xff]
  %v4665 = vld [vmem:[%s4611 + $0x1a8] sm:$0xff]
  %v4666 = vld [vmem:[%s4611 + $0x1b0] sm:$0xff]
  %v4667 = vld [vmem:[%s4611 + $0x1b8] sm:$0xff]
  %v4668 = vld [vmem:[%s4611 + $0x1c0] sm:$0xff]
  %v4669 = vld [vmem:[%s4611 + $0x1c8] sm:$0xff]
  %v4670 = vld [vmem:[%s4611 + $0x1d0] sm:$0xff]
  %v4671 = vld [vmem:[%s4611 + $0x1d8] sm:$0xff]
  %v4672 = vld [vmem:[%s4611 + $0x1e0] sm:$0xff]
  %v4673 = vld [vmem:[%s4611 + $0x1e8] sm:$0xff]
  %v4674 = vld [vmem:[%s4611 + $0x1f0] sm:$0xff]
  %v4675 = vld [vmem:[%s4611 + $0x1f8] sm:$0xff]
  %4676 = vmatprep.subr.mxu0 %v4613
  %4677 = vmatpush1.msra.mxu0 %v4612
  %4678 = vmatprep.subr.mxu0 %v4615
  %4679 = vmatpush1.msra.mxu0 %v4614
  %4680 = vmatprep.subr.mxu0 %v4617
  %4681 = vmatpush1.msra.mxu0 %v4616
  %4682 = vmatprep.subr.mxu0 %v4619
  %4683 = vmatpush1.msra.mxu0 %v4618
  %4684 = vmatprep.subr.mxu0 %v4621
  %4685 = vmatpush1.msra.mxu0 %v4620
  %4686 = vmatprep.subr.mxu0 %v4623
  %4687 = vmatpush1.msra.mxu0 %v4622
  %4688 = vmatprep.subr.mxu0 %v4625
  %4689 = vmatpush1.msra.mxu0 %v4624
  %4690 = vmatprep.subr.mxu0 %v4627
  %4691 = vmatpush1.msra.mxu0 %v4626
  %4692 = vmatprep.subr.mxu0 %v4629
  %4693 = vmatpush1.msra.mxu0 %v4628
  %4694 = vmatprep.subr.mxu0 %v4631
  %4695 = vmatpush1.msra.mxu0 %v4630
  %4696 = vmatprep.subr.mxu0 %v4633
  %4697 = vmatpush1.msra.mxu0 %v4632
  %4698 = vmatprep.subr.mxu0 %v4635
  %4699 = vmatpush1.msra.mxu0 %v4634
  %4700 = vmatprep.subr.mxu0 %v4637
  %4701 = vmatpush1.msra.mxu0 %v4636
  %4702 = vmatprep.subr.mxu0 %v4639
  %4703 = vmatpush1.msra.mxu0 %v4638
  %4704 = vmatprep.subr.mxu0 %v4641
  %4705 = vmatpush1.msra.mxu0 %v4640
  %4706 = vmatprep.subr.mxu0 %v4643
  %4707 = vmatpush1.msra.mxu0 %v4642
  %4708 = vmatprep.subr.mxu0 %v4645
  %4709 = vmatpush1.msra.mxu0 %v4644
  %4710 = vmatprep.subr.mxu0 %v4647
  %4711 = vmatpush1.msra.mxu0 %v4646
  %4712 = vmatprep.subr.mxu0 %v4649
  %4713 = vmatpush1.msra.mxu0 %v4648
  %4714 = vmatprep.subr.mxu0 %v4651
  %4715 = vmatpush1.msra.mxu0 %v4650
  %4716 = vmatprep.subr.mxu0 %v4653
  %4717 = vmatpush1.msra.mxu0 %v4652
  %4718 = vmatprep.subr.mxu0 %v4655
  %4719 = vmatpush1.msra.mxu0 %v4654
  %4720 = vmatprep.subr.mxu0 %v4657
  %4721 = vmatpush1.msra.mxu0 %v4656
  %4722 = vmatprep.subr.mxu0 %v4659
  %4723 = vmatpush1.msra.mxu0 %v4658
  %4724 = vmatprep.subr.mxu0 %v4661
  %4725 = vmatpush1.msra.mxu0 %v4660
  %4726 = vmatprep.subr.mxu0 %v4663
  %4727 = vmatpush1.msra.mxu0 %v4662
  %4728 = vmatprep.subr.mxu0 %v4665
  %4729 = vmatpush1.msra.mxu0 %v4664
  %4730 = vmatprep.subr.mxu0 %v4667
  %4731 = vmatpush1.msra.mxu0 %v4666
  %4732 = vmatprep.subr.mxu0 %v4669
  %4733 = vmatpush1.msra.mxu0 %v4668
  %4734 = vmatprep.subr.mxu0 %v4671
  %4735 = vmatpush1.msra.mxu0 %v4670
  %4736 = vmatprep.subr.mxu0 %v4673
  %4737 = vmatpush1.msra.mxu0 %v4672
  %4738 = vmatprep.subr.mxu0 %v4675
  %4739 = vmatpush1.msra.mxu0 %v4674
  %4740 = vmatprep.mubr.f32.mxu0 %v4610
  %4741 = vmatmul.mubr.f32.gmra.mrb[0].mxu0 %v4603
  %v4742 = vpop.f32.mrb[0].mxu0
  %v4743 = vadd.f32 0.0, %v4742
  %v4744 = vpop.f32.mrb[0].mxu0
  %v4745 = vadd.f32 0.0, %v4744
  %4746 = vdwg.mxu0
  %v4747 = vmul.f32 %v4743, 0.0078125
  %v4748 = vmul.f32 %v4745, 0.0078125
  %v4749 = vlaneseq
  %v4750 = vshrl.u32 %v4749, 7
  %v4751 = vsub.s32 0, %v4750
  %v4752 = vrot.slane %v4747, %v4751
  %v4753 = vlaneseq
  %v4754 = vshrl.u32 %v4753, 7
  %v4755 = vsub.s32 0, %v4754
  %v4756 = vrot.slane %v4748, %v4755
  %v4757 = vsub.f32 %v4593, %v4752
  %v4758 = vsub.f32 %v4594, %v4756
  %v4759 = vsub.f32 %v4595, %v4752
  %v4760 = vsub.f32 %v4596, %v4756
  %v4761 = vmul.f32 %v4757, %v4757
  %v4762 = vmul.f32 %v4758, %v4758
  %v4763 = vmul.f32 %v4759, %v4759
  %v4764 = vmul.f32 %v4760, %v4760
  %v4765 = vadd.f32 %v4761, %v4763
  %v4766 = vrot.slane %v4765, 4
  %v4767 = vadd.f32 %v4765, %v4766
  %v4768 = vrot.slane %v4767, 2
  %v4769 = vadd.f32 %v4767, %v4768
  %v4770 = vrot.slane %v4769, 1
  %v4771 = vadd.f32 %v4769, %v4770
  %v4772 = vadd.f32 %v4762, %v4764
  %v4773 = vrot.slane %v4772, 4
  %v4774 = vadd.f32 %v4772, %v4773
  %v4775 = vrot.slane %v4774, 2
  %v4776 = vadd.f32 %v4774, %v4775
  %v4777 = vrot.slane %v4776, 1
  %v4778 = vadd.f32 %v4776, %v4777
  %4779 = vmatprep.subr.mxu0 %v4613
  %4780 = vmatpush1.msra.mxu0 %v4612
  %4781 = vmatprep.subr.mxu0 %v4615
  %4782 = vmatpush1.msra.mxu0 %v4614
  %4783 = vmatprep.subr.mxu0 %v4617
  %4784 = vmatpush1.msra.mxu0 %v4616
  %4785 = vmatprep.subr.mxu0 %v4619
  %4786 = vmatpush1.msra.mxu0 %v4618
  %4787 = vmatprep.subr.mxu0 %v4621
  %4788 = vmatpush1.msra.mxu0 %v4620
  %4789 = vmatprep.subr.mxu0 %v4623
  %4790 = vmatpush1.msra.mxu0 %v4622
  %4791 = vmatprep.subr.mxu0 %v4625
  %4792 = vmatpush1.msra.mxu0 %v4624
  %4793 = vmatprep.subr.mxu0 %v4627
  %4794 = vmatpush1.msra.mxu0 %v4626
  %4795 = vmatprep.subr.mxu0 %v4629
  %4796 = vmatpush1.msra.mxu0 %v4628
  %4797 = vmatprep.subr.mxu0 %v4631
  %4798 = vmatpush1.msra.mxu0 %v4630
  %4799 = vmatprep.subr.mxu0 %v4633
  %4800 = vmatpush1.msra.mxu0 %v4632
  %4801 = vmatprep.subr.mxu0 %v4635
  %4802 = vmatpush1.msra.mxu0 %v4634
  %4803 = vmatprep.subr.mxu0 %v4637
  %4804 = vmatpush1.msra.mxu0 %v4636
  %4805 = vmatprep.subr.mxu0 %v4639
  %4806 = vmatpush1.msra.mxu0 %v4638
  %4807 = vmatprep.subr.mxu0 %v4641
  %4808 = vmatpush1.msra.mxu0 %v4640
  %4809 = vmatprep.subr.mxu0 %v4643
  %4810 = vmatpush1.msra.mxu0 %v4642
  %4811 = vmatprep.subr.mxu0 %v4645
  %4812 = vmatpush1.msra.mxu0 %v4644
  %4813 = vmatprep.subr.mxu0 %v4647
  %4814 = vmatpush1.msra.mxu0 %v4646
  %4815 = vmatprep.subr.mxu0 %v4649
  %4816 = vmatpush1.msra.mxu0 %v4648
  %4817 = vmatprep.subr.mxu0 %v4651
  %4818 = vmatpush1.msra.mxu0 %v4650
  %4819 = vmatprep.subr.mxu0 %v4653
  %4820 = vmatpush1.msra.mxu0 %v4652
  %4821 = vmatprep.subr.mxu0 %v4655
  %4822 = vmatpush1.msra.mxu0 %v4654
  %4823 = vmatprep.subr.mxu0 %v4657
  %4824 = vmatpush1.msra.mxu0 %v4656
  %4825 = vmatprep.subr.mxu0 %v4659
  %4826 = vmatpush1.msra.mxu0 %v4658
  %4827 = vmatprep.subr.mxu0 %v4661
  %4828 = vmatpush1.msra.mxu0 %v4660
  %4829 = vmatprep.subr.mxu0 %v4663
  %4830 = vmatpush1.msra.mxu0 %v4662
  %4831 = vmatprep.subr.mxu0 %v4665
  %4832 = vmatpush1.msra.mxu0 %v4664
  %4833 = vmatprep.subr.mxu0 %v4667
  %4834 = vmatpush1.msra.mxu0 %v4666
  %4835 = vmatprep.subr.mxu0 %v4669
  %4836 = vmatpush1.msra.mxu0 %v4668
  %4837 = vmatprep.subr.mxu0 %v4671
  %4838 = vmatpush1.msra.mxu0 %v4670
  %4839 = vmatprep.subr.mxu0 %v4673
  %4840 = vmatpush1.msra.mxu0 %v4672
  %4841 = vmatprep.subr.mxu0 %v4675
  %4842 = vmatpush1.msra.mxu0 %v4674
  %4843 = vmatprep.mubr.f32.mxu0 %v4778
  %4844 = vmatmul.mubr.f32.gmra.mrb[0].mxu0 %v4771
  %v4845 = vpop.f32.mrb[0].mxu0
  %v4846 = vadd.f32 0.0, %v4845
  %v4847 = vpop.f32.mrb[0].mxu0
  %v4848 = vadd.f32 0.0, %v4847
  %4849 = vdwg.mxu0
  %v4850 = vmul.f32 %v4846, 0.0078125
  %v4851 = vmul.f32 %v4848, 0.0078125
  %v4852 = vadd.f32 %v4850, 1e-05
  %v4853 = vadd.f32 %v4851, 1e-05
  %v4854 = vrsqrt.pop %v4852
  %v4855 = vrsqrt.pop %v4853
  %s4856 = scalar_lea.vmem %s12, 2
  %v4857 = vld [vmem:[%s4856] sm:$0x3]
  %v4860 = vcombine.low %v4854, %v4855
  %v4862 = vunpack.c.l.s4 1966171168
  %v4863 = vunpack.c.0.s8 %v4862
  %v4864 = vlaneseq
  %v4865 = vshrl.u32 %v4864, 7
  %v4866 = vsub.s32 %v4863, %v4865
  %v4867 = vrot.slane %v4860, %v4866
  %v4869 = vunpack.c.l.s4 1966171168
  %v4870 = vunpack.c.0.s8 %v4869
  %v4871 = vlaneseq
  %v4872 = vshrl.u32 %v4871, 7
  %v4873 = vsub.s32 %v4870, %v4872
  %v4874 = vrot.slane %v4867, %v4873
  %v4876 = vmul.f32 %v4857, %v4874
  %v4878 = vlaneseq
  %v4879 = vshrl.u32 %v4878, 7
  %v4880 = vsub.s32 0, %v4879
  %v4881 = vrot.slane %v4876, %v4880
  %v4882 = vlaneseq
  %v4883 = vshrl.u32 %v4882, 7
  %v4884 = vsub.s32 1, %v4883
  %v4885 = vrot.slane %v4876, %v4884
  %v4888 = vmul.f32 %v4757, %v4881
  %v4889 = vmul.f32 %v4758, %v4885
  %v4890 = vmul.f32 %v4759, %v4881
  %v4891 = vmul.f32 %v4760, %v4885
  %s4892 = scalar_lea.vmem %s13, 2
  %v4893 = vld [vmem:[%s4892] sm:$0x3]
  %v4895 = vlaneseq
  %v4896 = vshrl.u32 %v4895, 7
  %v4897 = vsub.s32 0, %v4896
  %v4898 = vrot.slane %v4893, %v4897
  %v4899 = vlaneseq
  %v4900 = vshrl.u32 %v4899, 7
  %v4901 = vsub.s32 1, %v4900
  %v4902 = vrot.slane %v4893, %v4901
  %v4905 = vadd.f32 %v4888, %v4898
  %v4906 = vadd.f32 %v4889, %v4902
  %v4907 = vadd.f32 %v4890, %v4898
  %v4908 = vadd.f32 %v4891, %v4902
  %vm4909 = vcmp.ge.f32.partialorder %v4905, 0.0
  %vm4910 = vcmp.ge.f32.partialorder %v4906, 0.0
  %vm4911 = vcmp.ge.f32.partialorder %v4907, 0.0
  %vm4912 = vcmp.ge.f32.partialorder %v4908, 0.0
  %v4913 = vmul.f32 %v4905, 0.2
  %v4914 = vmul.f32 %v4906, 0.2
  %v4915 = vmul.f32 %v4907, 0.2
  %v4916 = vmul.f32 %v4908, 0.2
  %v4917 = vsel %vm4909, %v4905, %v4913
  %v4918 = vsel %vm4910, %v4906, %v4914
  %v4919 = vsel %vm4911, %v4907, %v4915
  %v4920 = vsel %vm4912, %v4908, %v4916
  %v4921 = vpack.c.bf16 %v4919, %v4917
  %v4922 = vpack.c.bf16 %v4920, %v4918
  %v4923 = vld [vmem:[%s4] sm:$0xf]
  %vm4924 = vcmask 130048
  %v4926 = vsel %vm4924, %v4923, 0
  %4928 = vmatprep.subr.bf16.mxu0 %v4922
  %4929 = vmatpush1.bf16.msra.mxu0 %v4921
  %4930 = vmatprep.subr.bf16.mxu0 0
  %4931 = vmatpush1.bf16.msra.mxu0 0
  %4932 = vmatprep.subr.bf16.mxu0 0
  %4933 = vmatpush1.bf16.msra.mxu0 0
  %4934 = vmatprep.subr.bf16.mxu0 0
  %4935 = vmatpush1.bf16.msra.mxu0 0
  %4936 = vmatprep.subr.bf16.mxu0 0
  %4937 = vmatpush1.bf16.msra.mxu0 0
  %4938 = vmatprep.subr.bf16.mxu0 0
  %4939 = vmatpush1.bf16.msra.mxu0 0
  %4940 = vmatprep.subr.bf16.mxu0 0
  %4941 = vmatpush1.bf16.msra.mxu0 0
  %4942 = vmatprep.subr.bf16.mxu0 0
  %4943 = vmatpush1.bf16.msra.mxu0 0
  %4944 = vmatprep.subr.bf16.mxu0 0
  %4945 = vmatpush1.bf16.msra.mxu0 0
  %4946 = vmatprep.subr.bf16.mxu0 0
  %4947 = vmatpush1.bf16.msra.mxu0 0
  %4948 = vmatprep.subr.bf16.mxu0 0
  %4949 = vmatpush1.bf16.msra.mxu0 0
  %4950 = vmatprep.subr.bf16.mxu0 0
  %4951 = vmatpush1.bf16.msra.mxu0 0
  %4952 = vmatprep.subr.bf16.mxu0 0
  %4953 = vmatpush1.bf16.msra.mxu0 0
  %4954 = vmatprep.subr.bf16.mxu0 0
  %4955 = vmatpush1.bf16.msra.mxu0 0
  %4956 = vmatprep.subr.bf16.mxu0 0
  %4957 = vmatpush1.bf16.msra.mxu0 0
  %4958 = vmatprep.subr.bf16.mxu0 0
  %4959 = vmatpush1.bf16.msra.mxu0 0
  %4960 = vmatprep.mubr.bf16.mxu0 0
  %4961 = vmatmul.mubr.bf16.gmra.mrb[0].mxu0 %v4926
  %v4962 = vpop.f32.mrb[0].mxu0
  %v4963 = vadd.f32 0.0, %v4962
  %v4964 = vpop.f32.mrb[0].mxu0
  %v4965 = vadd.f32 0.0, %v4964
  %v4966 = vpop.f32.mrb[0].mxu0
  %v4967 = vpop.f32.mrb[0].mxu0
  %4968 = vdwg.mxu0
  %v4969 = vpack.c.bf16 %v4963, %v4963
  %v4970 = vpack.c.bf16 %v4965, %v4965
  %v4971 = vld [vmem:[%s9] sm:$0xff]
  %v4972 = vld [vmem:[%s9 + $0x8] sm:$0xff]
  %v4973 = vld [vmem:[%s9 + $0x10] sm:$0xff]
  %v4974 = vld [vmem:[%s9 + $0x18] sm:$0xff]
  %v4975 = vld [vmem:[%s9 + $0x20] sm:$0xff]
  %v4976 = vld [vmem:[%s9 + $0x28] sm:$0xff]
  %v4977 = vld [vmem:[%s9 + $0x30] sm:$0xff]
  %v4978 = vld [vmem:[%s9 + $0x38] sm:$0xff]
  %v4979 = vld [vmem:[%s9 + $0x40] sm:$0xff]
  %v4980 = vld [vmem:[%s9 + $0x48] sm:$0xff]
  %v4981 = vld [vmem:[%s9 + $0x50] sm:$0xff]
  %v4982 = vld [vmem:[%s9 + $0x58] sm:$0xff]
  %v4983 = vld [vmem:[%s9 + $0x60] sm:$0xff]
  %v4984 = vld [vmem:[%s9 + $0x68] sm:$0xff]
  %v4985 = vld [vmem:[%s9 + $0x70] sm:$0xff]
  %v4986 = vld [vmem:[%s9 + $0x78] sm:$0xff]
  %v4987 = vld [vmem:[%s9 + $0x80] sm:$0xff]
  %v4988 = vld [vmem:[%s9 + $0x88] sm:$0xff]
  %v4989 = vld [vmem:[%s9 + $0x90] sm:$0xff]
  %v4990 = vld [vmem:[%s9 + $0x98] sm:$0xff]
  %v4991 = vld [vmem:[%s9 + $0xa0] sm:$0xff]
  %v4992 = vld [vmem:[%s9 + $0xa8] sm:$0xff]
  %v4993 = vld [vmem:[%s9 + $0xb0] sm:$0xff]
  %v4994 = vld [vmem:[%s9 + $0xb8] sm:$0xff]
  %v4995 = vld [vmem:[%s9 + $0xc0] sm:$0xff]
  %v4996 = vld [vmem:[%s9 + $0xc8] sm:$0xff]
  %v4997 = vld [vmem:[%s9 + $0xd0] sm:$0xff]
  %v4998 = vld [vmem:[%s9 + $0xd8] sm:$0xff]
  %v4999 = vld [vmem:[%s9 + $0xe0] sm:$0xff]
  %v5000 = vld [vmem:[%s9 + $0xe8] sm:$0xff]
  %v5001 = vld [vmem:[%s9 + $0xf0] sm:$0xff]
  %v5002 = vld [vmem:[%s9 + $0xf8] sm:$0xff]
  %s5003 = scalar_lea.vmem %s4, 4
  %v5004 = vld [vmem:[%s5003] sm:$0xf]
  %v5006 = vsel %vm4924, %v5004, 0
  %5008 = vmatprep.subr.bf16.mxu0 %v4922
  %5009 = vmatpush1.bf16.msra.mxu0 %v4921
  %5010 = vmatprep.subr.bf16.mxu0 0
  %5011 = vmatpush1.bf16.msra.mxu0 0
  %5012 = vmatprep.subr.bf16.mxu0 0
  %5013 = vmatpush1.bf16.msra.mxu0 0
  %5014 = vmatprep.subr.bf16.mxu0 0
  %5015 = vmatpush1.bf16.msra.mxu0 0
  %5016 = vmatprep.subr.bf16.mxu0 0
  %5017 = vmatpush1.bf16.msra.mxu0 0
  %5018 = vmatprep.subr.bf16.mxu0 0
  %5019 = vmatpush1.bf16.msra.mxu0 0
  %5020 = vmatprep.subr.bf16.mxu0 0
  %5021 = vmatpush1.bf16.msra.mxu0 0
  %5022 = vmatprep.subr.bf16.mxu0 0
  %5023 = vmatpush1.bf16.msra.mxu0 0
  %5024 = vmatprep.subr.bf16.mxu0 0
  %5025 = vmatpush1.bf16.msra.mxu0 0
  %5026 = vmatprep.subr.bf16.mxu0 0
  %5027 = vmatpush1.bf16.msra.mxu0 0
  %5028 = vmatprep.subr.bf16.mxu0 0
  %5029 = vmatpush1.bf16.msra.mxu0 0
  %5030 = vmatprep.subr.bf16.mxu0 0
  %5031 = vmatpush1.bf16.msra.mxu0 0
  %5032 = vmatprep.subr.bf16.mxu0 0
  %5033 = vmatpush1.bf16.msra.mxu0 0
  %5034 = vmatprep.subr.bf16.mxu0 0
  %5035 = vmatpush1.bf16.msra.mxu0 0
  %5036 = vmatprep.subr.bf16.mxu0 0
  %5037 = vmatpush1.bf16.msra.mxu0 0
  %5038 = vmatprep.subr.bf16.mxu0 0
  %5039 = vmatpush1.bf16.msra.mxu0 0
  %5040 = vmatprep.mubr.bf16.mxu0 0
  %5041 = vmatmul.mubr.bf16.gmra.mrb[0].mxu0 %v5006
  %v5042 = vpop.f32.mrb[0].mxu0
  %v5043 = vadd.f32 0.0, %v5042
  %v5044 = vpop.f32.mrb[0].mxu0
  %v5045 = vadd.f32 0.0, %v5044
  %v5046 = vpop.f32.mrb[0].mxu0
  %v5047 = vpop.f32.mrb[0].mxu0
  %5048 = vdwg.mxu0
  %v5049 = vpack.c.bf16 %v5043, %v5043
  %v5050 = vpack.c.bf16 %v5045, %v5045
  %s5051 = scalar_lea.vmem %s9, 256
  %v5052 = vld [vmem:[%s5051] sm:$0xff]
  %v5053 = vld [vmem:[%s5051 + $0x8] sm:$0xff]
  %v5054 = vld [vmem:[%s5051 + $0x10] sm:$0xff]
  %v5055 = vld [vmem:[%s5051 + $0x18] sm:$0xff]
  %v5056 = vld [vmem:[%s5051 + $0x20] sm:$0xff]
  %v5057 = vld [vmem:[%s5051 + $0x28] sm:$0xff]
  %v5058 = vld [vmem:[%s5051 + $0x30] sm:$0xff]
  %v5059 = vld [vmem:[%s5051 + $0x38] sm:$0xff]
  %v5060 = vld [vmem:[%s5051 + $0x40] sm:$0xff]
  %v5061 = vld [vmem:[%s5051 + $0x48] sm:$0xff]
  %v5062 = vld [vmem:[%s5051 + $0x50] sm:$0xff]
  %v5063 = vld [vmem:[%s5051 + $0x58] sm:$0xff]
  %v5064 = vld [vmem:[%s5051 + $0x60] sm:$0xff]
  %v5065 = vld [vmem:[%s5051 + $0x68] sm:$0xff]
  %v5066 = vld [vmem:[%s5051 + $0x70] sm:$0xff]
  %v5067 = vld [vmem:[%s5051 + $0x78] sm:$0xff]
  %v5068 = vld [vmem:[%s5051 + $0x80] sm:$0xff]
  %v5069 = vld [vmem:[%s5051 + $0x88] sm:$0xff]
  %v5070 = vld [vmem:[%s5051 + $0x90] sm:$0xff]
  %v5071 = vld [vmem:[%s5051 + $0x98] sm:$0xff]
  %v5072 = vld [vmem:[%s5051 + $0xa0] sm:$0xff]
  %v5073 = vld [vmem:[%s5051 + $0xa8] sm:$0xff]
  %v5074 = vld [vmem:[%s5051 + $0xb0] sm:$0xff]
  %v5075 = vld [vmem:[%s5051 + $0xb8] sm:$0xff]
  %v5076 = vld [vmem:[%s5051 + $0xc0] sm:$0xff]
  %v5077 = vld [vmem:[%s5051 + $0xc8] sm:$0xff]
  %v5078 = vld [vmem:[%s5051 + $0xd0] sm:$0xff]
  %v5079 = vld [vmem:[%s5051 + $0xd8] sm:$0xff]
  %v5080 = vld [vmem:[%s5051 + $0xe0] sm:$0xff]
  %v5081 = vld [vmem:[%s5051 + $0xe8] sm:$0xff]
  %v5082 = vld [vmem:[%s5051 + $0xf0] sm:$0xff]
  %v5083 = vld [vmem:[%s5051 + $0xf8] sm:$0xff]
  %v5116 = vunpack.c.l.b16 %v5052
  %v5117 = vunpack.c.h.b16 %v5052
  %v5118 = vunpack.c.l.b16 %v5053
  %v5119 = vunpack.c.h.b16 %v5053
  %v5120 = vunpack.c.l.b16 %v5054
  %v5121 = vunpack.c.h.b16 %v5054
  %v5122 = vunpack.c.l.b16 %v5055
  %v5123 = vunpack.c.h.b16 %v5055
  %v5124 = vunpack.c.l.b16 %v5056
  %v5125 = vunpack.c.h.b16 %v5056
  %v5126 = vunpack.c.l.b16 %v5057
  %v5127 = vunpack.c.h.b16 %v5057
  %v5128 = vunpack.c.l.b16 %v5058
  %v5129 = vunpack.c.h.b16 %v5058
  %v5130 = vunpack.c.l.b16 %v5059
  %v5131 = vunpack.c.h.b16 %v5059
  %v5132 = vunpack.c.l.b16 %v5060
  %v5133 = vunpack.c.h.b16 %v5060
  %v5134 = vunpack.c.l.b16 %v5061
  %v5135 = vunpack.c.h.b16 %v5061
  %v5136 = vunpack.c.l.b16 %v5062
  %v5137 = vunpack.c.h.b16 %v5062
  %v5138 = vunpack.c.l.b16 %v5063
  %v5139 = vunpack.c.h.b16 %v5063
  %v5140 = vunpack.c.l.b16 %v5064
  %v5141 = vunpack.c.h.b16 %v5064
  %v5142 = vunpack.c.l.b16 %v5065
  %v5143 = vunpack.c.h.b16 %v5065
  %v5144 = vunpack.c.l.b16 %v5066
  %v5145 = vunpack.c.h.b16 %v5066
  %v5146 = vunpack.c.l.b16 %v5067
  %v5147 = vunpack.c.h.b16 %v5067
  %v5148 = vunpack.c.l.b16 %v5068
  %v5149 = vunpack.c.h.b16 %v5068
  %v5150 = vunpack.c.l.b16 %v5069
  %v5151 = vunpack.c.h.b16 %v5069
  %v5152 = vunpack.c.l.b16 %v5070
  %v5153 = vunpack.c.h.b16 %v5070
  %v5154 = vunpack.c.l.b16 %v5071
  %v5155 = vunpack.c.h.b16 %v5071
  %v5156 = vunpack.c.l.b16 %v5072
  %v5157 = vunpack.c.h.b16 %v5072
  %v5158 = vunpack.c.l.b16 %v5073
  %v5159 = vunpack.c.h.b16 %v5073
  %v5160 = vunpack.c.l.b16 %v5074
  %v5161 = vunpack.c.h.b16 %v5074
  %v5162 = vunpack.c.l.b16 %v5075
  %v5163 = vunpack.c.h.b16 %v5075
  %v5164 = vunpack.c.l.b16 %v5076
  %v5165 = vunpack.c.h.b16 %v5076
  %v5166 = vunpack.c.l.b16 %v5077
  %v5167 = vunpack.c.h.b16 %v5077
  %v5168 = vunpack.c.l.b16 %v5078
  %v5169 = vunpack.c.h.b16 %v5078
  %v5170 = vunpack.c.l.b16 %v5079
  %v5171 = vunpack.c.h.b16 %v5079
  %v5172 = vunpack.c.l.b16 %v5080
  %v5173 = vunpack.c.h.b16 %v5080
  %v5174 = vunpack.c.l.b16 %v5081
  %v5175 = vunpack.c.h.b16 %v5081
  %v5176 = vunpack.c.l.b16 %v5082
  %v5177 = vunpack.c.h.b16 %v5082
  %v5178 = vunpack.c.l.b16 %v5083
  %v5179 = vunpack.c.h.b16 %v5083
  %v5180 = vpack.c.b16 %v5118, %v5116
  %v5181 = vpack.c.b16 %v5119, %v5117
  %v5182 = vpack.c.b16 %v5122, %v5120
  %v5183 = vpack.c.b16 %v5123, %v5121
  %v5184 = vpack.c.b16 %v5126, %v5124
  %v5185 = vpack.c.b16 %v5127, %v5125
  %v5186 = vpack.c.b16 %v5130, %v5128
  %v5187 = vpack.c.b16 %v5131, %v5129
  %v5188 = vpack.c.b16 %v5134, %v5132
  %v5189 = vpack.c.b16 %v5135, %v5133
  %v5190 = vpack.c.b16 %v5138, %v5136
  %v5191 = vpack.c.b16 %v5139, %v5137
  %v5192 = vpack.c.b16 %v5142, %v5140
  %v5193 = vpack.c.b16 %v5143, %v5141
  %v5194 = vpack.c.b16 %v5146, %v5144
  %v5195 = vpack.c.b16 %v5147, %v5145
  %v5196 = vpack.c.b16 %v5150, %v5148
  %v5197 = vpack.c.b16 %v5151, %v5149
  %v5198 = vpack.c.b16 %v5154, %v5152
  %v5199 = vpack.c.b16 %v5155, %v5153
  %v5200 = vpack.c.b16 %v5158, %v5156
  %v5201 = vpack.c.b16 %v5159, %v5157
  %v5202 = vpack.c.b16 %v5162, %v5160
  %v5203 = vpack.c.b16 %v5163, %v5161
  %v5204 = vpack.c.b16 %v5166, %v5164
  %v5205 = vpack.c.b16 %v5167, %v5165
  %v5206 = vpack.c.b16 %v5170, %v5168
  %v5207 = vpack.c.b16 %v5171, %v5169
  %v5208 = vpack.c.b16 %v5174, %v5172
  %v5209 = vpack.c.b16 %v5175, %v5173
  %v5210 = vpack.c.b16 %v5178, %v5176
  %v5211 = vpack.c.b16 %v5179, %v5177
  %5244 = vmatprep.subr.bf16.mxu0 %v5181
  %5245 = vmatpush1.bf16.msra.mxu0 %v5180
  %5246 = vmatprep.subr.bf16.mxu0 %v5183
  %5247 = vmatpush1.bf16.msra.mxu0 %v5182
  %5248 = vmatprep.subr.bf16.mxu0 %v5185
  %5249 = vmatpush1.bf16.msra.mxu0 %v5184
  %5250 = vmatprep.subr.bf16.mxu0 %v5187
  %5251 = vmatpush1.bf16.msra.mxu0 %v5186
  %5252 = vmatprep.subr.bf16.mxu0 %v5189
  %5253 = vmatpush1.bf16.msra.mxu0 %v5188
  %5254 = vmatprep.subr.bf16.mxu0 %v5191
  %5255 = vmatpush1.bf16.msra.mxu0 %v5190
  %5256 = vmatprep.subr.bf16.mxu0 %v5193
  %5257 = vmatpush1.bf16.msra.mxu0 %v5192
  %5258 = vmatprep.subr.bf16.mxu0 %v5195
  %5259 = vmatpush1.bf16.msra.mxu0 %v5194
  %5260 = vmatprep.subr.bf16.mxu0 %v5197
  %5261 = vmatpush1.bf16.msra.mxu0 %v5196
  %5262 = vmatprep.subr.bf16.mxu0 %v5199
  %5263 = vmatpush1.bf16.msra.mxu0 %v5198
  %5264 = vmatprep.subr.bf16.mxu0 %v5201
  %5265 = vmatpush1.bf16.msra.mxu0 %v5200
  %5266 = vmatprep.subr.bf16.mxu0 %v5203
  %5267 = vmatpush1.bf16.msra.mxu0 %v5202
  %5268 = vmatprep.subr.bf16.mxu0 %v5205
  %5269 = vmatpush1.bf16.msra.mxu0 %v5204
  %5270 = vmatprep.subr.bf16.mxu0 %v5207
  %5271 = vmatpush1.bf16.msra.mxu0 %v5206
  %5272 = vmatprep.subr.bf16.mxu0 %v5209
  %5273 = vmatpush1.bf16.msra.mxu0 %v5208
  %5274 = vmatprep.subr.bf16.mxu0 %v5211
  %5275 = vmatpush1.bf16.msra.mxu0 %v5210
  %5276 = vmatprep.mubr.bf16.mxu0 %v5050
  %5277 = vmatmul.mubr.bf16.gmra.mrb[0].mxu0 %v5049
  %v5278 = vpop.f32.mrb[0].mxu0
  %v5279 = vadd.f32 0.0, %v5278
  %v5280 = vpop.f32.mrb[0].mxu0
  %v5281 = vadd.f32 0.0, %v5280
  %v5282 = vpop.f32.mrb[0].mxu0
  %v5283 = vpop.f32.mrb[0].mxu0
  %5284 = vdwg.mxu0
  %v5317 = vunpack.c.l.b16 %v4971
  %v5318 = vunpack.c.h.b16 %v4971
  %v5319 = vunpack.c.l.b16 %v4972
  %v5320 = vunpack.c.h.b16 %v4972
  %v5321 = vunpack.c.l.b16 %v4973
  %v5322 = vunpack.c.h.b16 %v4973
  %v5323 = vunpack.c.l.b16 %v4974
  %v5324 = vunpack.c.h.b16 %v4974
  %v5325 = vunpack.c.l.b16 %v4975
  %v5326 = vunpack.c.h.b16 %v4975
  %v5327 = vunpack.c.l.b16 %v4976
  %v5328 = vunpack.c.h.b16 %v4976
  %v5329 = vunpack.c.l.b16 %v4977
  %v5330 = vunpack.c.h.b16 %v4977
  %v5331 = vunpack.c.l.b16 %v4978
  %v5332 = vunpack.c.h.b16 %v4978
  %v5333 = vunpack.c.l.b16 %v4979
  %v5334 = vunpack.c.h.b16 %v4979
  %v5335 = vunpack.c.l.b16 %v4980
  %v5336 = vunpack.c.h.b16 %v4980
  %v5337 = vunpack.c.l.b16 %v4981
  %v5338 = vunpack.c.h.b16 %v4981
  %v5339 = vunpack.c.l.b16 %v4982
  %v5340 = vunpack.c.h.b16 %v4982
  %v5341 = vunpack.c.l.b16 %v4983
  %v5342 = vunpack.c.h.b16 %v4983
  %v5343 = vunpack.c.l.b16 %v4984
  %v5344 = vunpack.c.h.b16 %v4984
  %v5345 = vunpack.c.l.b16 %v4985
  %v5346 = vunpack.c.h.b16 %v4985
  %v5347 = vunpack.c.l.b16 %v4986
  %v5348 = vunpack.c.h.b16 %v4986
  %v5349 = vunpack.c.l.b16 %v4987
  %v5350 = vunpack.c.h.b16 %v4987
  %v5351 = vunpack.c.l.b16 %v4988
  %v5352 = vunpack.c.h.b16 %v4988
  %v5353 = vunpack.c.l.b16 %v4989
  %v5354 = vunpack.c.h.b16 %v4989
  %v5355 = vunpack.c.l.b16 %v4990
  %v5356 = vunpack.c.h.b16 %v4990
  %v5357 = vunpack.c.l.b16 %v4991
  %v5358 = vunpack.c.h.b16 %v4991
  %v5359 = vunpack.c.l.b16 %v4992
  %v5360 = vunpack.c.h.b16 %v4992
  %v5361 = vunpack.c.l.b16 %v4993
  %v5362 = vunpack.c.h.b16 %v4993
  %v5363 = vunpack.c.l.b16 %v4994
  %v5364 = vunpack.c.h.b16 %v4994
  %v5365 = vunpack.c.l.b16 %v4995
  %v5366 = vunpack.c.h.b16 %v4995
  %v5367 = vunpack.c.l.b16 %v4996
  %v5368 = vunpack.c.h.b16 %v4996
  %v5369 = vunpack.c.l.b16 %v4997
  %v5370 = vunpack.c.h.b16 %v4997
  %v5371 = vunpack.c.l.b16 %v4998
  %v5372 = vunpack.c.h.b16 %v4998
  %v5373 = vunpack.c.l.b16 %v4999
  %v5374 = vunpack.c.h.b16 %v4999
  %v5375 = vunpack.c.l.b16 %v5000
  %v5376 = vunpack.c.h.b16 %v5000
  %v5377 = vunpack.c.l.b16 %v5001
  %v5378 = vunpack.c.h.b16 %v5001
  %v5379 = vunpack.c.l.b16 %v5002
  %v5380 = vunpack.c.h.b16 %v5002
  %v5381 = vpack.c.b16 %v5319, %v5317
  %v5382 = vpack.c.b16 %v5320, %v5318
  %v5383 = vpack.c.b16 %v5323, %v5321
  %v5384 = vpack.c.b16 %v5324, %v5322
  %v5385 = vpack.c.b16 %v5327, %v5325
  %v5386 = vpack.c.b16 %v5328, %v5326
  %v5387 = vpack.c.b16 %v5331, %v5329
  %v5388 = vpack.c.b16 %v5332, %v5330
  %v5389 = vpack.c.b16 %v5335, %v5333
  %v5390 = vpack.c.b16 %v5336, %v5334
  %v5391 = vpack.c.b16 %v5339, %v5337
  %v5392 = vpack.c.b16 %v5340, %v5338
  %v5393 = vpack.c.b16 %v5343, %v5341
  %v5394 = vpack.c.b16 %v5344, %v5342
  %v5395 = vpack.c.b16 %v5347, %v5345
  %v5396 = vpack.c.b16 %v5348, %v5346
  %v5397 = vpack.c.b16 %v5351, %v5349
  %v5398 = vpack.c.b16 %v5352, %v5350
  %v5399 = vpack.c.b16 %v5355, %v5353
  %v5400 = vpack.c.b16 %v5356, %v5354
  %v5401 = vpack.c.b16 %v5359, %v5357
  %v5402 = vpack.c.b16 %v5360, %v5358
  %v5403 = vpack.c.b16 %v5363, %v5361
  %v5404 = vpack.c.b16 %v5364, %v5362
  %v5405 = vpack.c.b16 %v5367, %v5365
  %v5406 = vpack.c.b16 %v5368, %v5366
  %v5407 = vpack.c.b16 %v5371, %v5369
  %v5408 = vpack.c.b16 %v5372, %v5370
  %v5409 = vpack.c.b16 %v5375, %v5373
  %v5410 = vpack.c.b16 %v5376, %v5374
  %v5411 = vpack.c.b16 %v5379, %v5377
  %v5412 = vpack.c.b16 %v5380, %v5378
  %5445 = vmatprep.subr.bf16.mxu0 %v5382
  %5446 = vmatpush1.bf16.msra.mxu0 %v5381
  %5447 = vmatprep.subr.bf16.mxu0 %v5384
  %5448 = vmatpush1.bf16.msra.mxu0 %v5383
  %5449 = vmatprep.subr.bf16.mxu0 %v5386
  %5450 = vmatpush1.bf16.msra.mxu0 %v5385
  %5451 = vmatprep.subr.bf16.mxu0 %v5388
  %5452 = vmatpush1.bf16.msra.mxu0 %v5387
  %5453 = vmatprep.subr.bf16.mxu0 %v5390
  %5454 = vmatpush1.bf16.msra.mxu0 %v5389
  %5455 = vmatprep.subr.bf16.mxu0 %v5392
  %5456 = vmatpush1.bf16.msra.mxu0 %v5391
  %5457 = vmatprep.subr.bf16.mxu0 %v5394
  %5458 = vmatpush1.bf16.msra.mxu0 %v5393
  %5459 = vmatprep.subr.bf16.mxu0 %v5396
  %5460 = vmatpush1.bf16.msra.mxu0 %v5395
  %5461 = vmatprep.subr.bf16.mxu0 %v5398
  %5462 = vmatpush1.bf16.msra.mxu0 %v5397
  %5463 = vmatprep.subr.bf16.mxu0 %v5400
  %5464 = vmatpush1.bf16.msra.mxu0 %v5399
  %5465 = vmatprep.subr.bf16.mxu0 %v5402
  %5466 = vmatpush1.bf16.msra.mxu0 %v5401
  %5467 = vmatprep.subr.bf16.mxu0 %v5404
  %5468 = vmatpush1.bf16.msra.mxu0 %v5403
  %5469 = vmatprep.subr.bf16.mxu0 %v5406
  %5470 = vmatpush1.bf16.msra.mxu0 %v5405
  %5471 = vmatprep.subr.bf16.mxu0 %v5408
  %5472 = vmatpush1.bf16.msra.mxu0 %v5407
  %5473 = vmatprep.subr.bf16.mxu0 %v5410
  %5474 = vmatpush1.bf16.msra.mxu0 %v5409
  %5475 = vmatprep.subr.bf16.mxu0 %v5412
  %5476 = vmatpush1.bf16.msra.mxu0 %v5411
  %5477 = vmatprep.mubr.bf16.mxu0 %v4970
  %5478 = vmatmul.mubr.bf16.gmra.mrb[0].mxu0 %v4969
  %v5479 = vpop.f32.mrb[0].mxu0
  %v5480 = vadd.f32 %v5279, %v5479
  %v5481 = vpop.f32.mrb[0].mxu0
  %v5482 = vadd.f32 %v5281, %v5481
  %v5483 = vpop.f32.mrb[0].mxu0
  %v5484 = vpop.f32.mrb[0].mxu0
  %5485 = vdwg.mxu0
  %s5486 = scalar_lea.vmem %s4, 8
  %v5487 = vld [vmem:[%s5486] sm:$0xf]
  %v5489 = vsel %vm4924, %v5487, 0
  %5491 = vmatprep.subr.bf16.mxu0 %v4922
  %5492 = vmatpush1.bf16.msra.mxu0 %v4921
  %5493 = vmatprep.subr.bf16.mxu0 0
  %5494 = vmatpush1.bf16.msra.mxu0 0
  %5495 = vmatprep.subr.bf16.mxu0 0
  %5496 = vmatpush1.bf16.msra.mxu0 0
  %5497 = vmatprep.subr.bf16.mxu0 0
  %5498 = vmatpush1.bf16.msra.mxu0 0
  %5499 = vmatprep.subr.bf16.mxu0 0
  %5500 = vmatpush1.bf16.msra.mxu0 0
  %5501 = vmatprep.subr.bf16.mxu0 0
  %5502 = vmatpush1.bf16.msra.mxu0 0
  %5503 = vmatprep.subr.bf16.mxu0 0
  %5504 = vmatpush1.bf16.msra.mxu0 0
  %5505 = vmatprep.subr.bf16.mxu0 0
  %5506 = vmatpush1.bf16.msra.mxu0 0
  %5507 = vmatprep.subr.bf16.mxu0 0
  %5508 = vmatpush1.bf16.msra.mxu0 0
  %5509 = vmatprep.subr.bf16.mxu0 0
  %5510 = vmatpush1.bf16.msra.mxu0 0
  %5511 = vmatprep.subr.bf16.mxu0 0
  %5512 = vmatpush1.bf16.msra.mxu0 0
  %5513 = vmatprep.subr.bf16.mxu0 0
  %5514 = vmatpush1.bf16.msra.mxu0 0
  %5515 = vmatprep.subr.bf16.mxu0 0
  %5516 = vmatpush1.bf16.msra.mxu0 0
  %5517 = vmatprep.subr.bf16.mxu0 0
  %5518 = vmatpush1.bf16.msra.mxu0 0
  %5519 = vmatprep.subr.bf16.mxu0 0
  %5520 = vmatpush1.bf16.msra.mxu0 0
  %5521 = vmatprep.subr.bf16.mxu0 0
  %5522 = vmatpush1.bf16.msra.mxu0 0
  %5523 = vmatprep.mubr.bf16.mxu0 0
  %5524 = vmatmul.mubr.bf16.gmra.mrb[0].mxu0 %v5489
  %v5525 = vpop.f32.mrb[0].mxu0
  %v5526 = vadd.f32 0.0, %v5525
  %v5527 = vpop.f32.mrb[0].mxu0
  %v5528 = vadd.f32 0.0, %v5527
  %v5529 = vpop.f32.mrb[0].mxu0
  %v5530 = vpop.f32.mrb[0].mxu0
  %5531 = vdwg.mxu0
  %v5532 = vpack.c.bf16 %v5526, %v5526
  %v5533 = vpack.c.bf16 %v5528, %v5528
  %s5534 = scalar_lea.vmem %s9, 512
  %v5535 = vld [vmem:[%s5534] sm:$0xff]
  %v5536 = vld [vmem:[%s5534 + $0x8] sm:$0xff]
  %v5537 = vld [vmem:[%s5534 + $0x10] sm:$0xff]
  %v5538 = vld [vmem:[%s5534 + $0x18] sm:$0xff]
  %v5539 = vld [vmem:[%s5534 + $0x20] sm:$0xff]
  %v5540 = vld [vmem:[%s5534 + $0x28] sm:$0xff]
  %v5541 = vld [vmem:[%s5534 + $0x30] sm:$0xff]
  %v5542 = vld [vmem:[%s5534 + $0x38] sm:$0xff]
  %v5543 = vld [vmem:[%s5534 + $0x40] sm:$0xff]
  %v5544 = vld [vmem:[%s5534 + $0x48] sm:$0xff]
  %v5545 = vld [vmem:[%s5534 + $0x50] sm:$0xff]
  %v5546 = vld [vmem:[%s5534 + $0x58] sm:$0xff]
  %v5547 = vld [vmem:[%s5534 + $0x60] sm:$0xff]
  %v5548 = vld [vmem:[%s5534 + $0x68] sm:$0xff]
  %v5549 = vld [vmem:[%s5534 + $0x70] sm:$0xff]
  %v5550 = vld [vmem:[%s5534 + $0x78] sm:$0xff]
  %v5551 = vld [vmem:[%s5534 + $0x80] sm:$0xff]
  %v5552 = vld [vmem:[%s5534 + $0x88] sm:$0xff]
  %v5553 = vld [vmem:[%s5534 + $0x90] sm:$0xff]
  %v5554 = vld [vmem:[%s5534 + $0x98] sm:$0xff]
  %v5555 = vld [vmem:[%s5534 + $0xa0] sm:$0xff]
  %v5556 = vld [vmem:[%s5534 + $0xa8] sm:$0xff]
  %v5557 = vld [vmem:[%s5534 + $0xb0] sm:$0xff]
  %v5558 = vld [vmem:[%s5534 + $0xb8] sm:$0xff]
  %v5559 = vld [vmem:[%s5534 + $0xc0] sm:$0xff]
  %v5560 = vld [vmem:[%s5534 + $0xc8] sm:$0xff]
  %v5561 = vld [vmem:[%s5534 + $0xd0] sm:$0xff]
  %v5562 = vld [vmem:[%s5534 + $0xd8] sm:$0xff]
  %v5563 = vld [vmem:[%s5534 + $0xe0] sm:$0xff]
  %v5564 = vld [vmem:[%s5534 + $0xe8] sm:$0xff]
  %v5565 = vld [vmem:[%s5534 + $0xf0] sm:$0xff]
  %v5566 = vld [vmem:[%s5534 + $0xf8] sm:$0xff]
  %v5599 = vunpack.c.l.b16 %v5535
  %v5600 = vunpack.c.h.b16 %v5535
  %v5601 = vunpack.c.l.b16 %v5536
  %v5602 = vunpack.c.h.b16 %v5536
  %v5603 = vunpack.c.l.b16 %v5537
  %v5604 = vunpack.c.h.b16 %v5537
  %v5605 = vunpack.c.l.b16 %v5538
  %v5606 = vunpack.c.h.b16 %v5538
  %v5607 = vunpack.c.l.b16 %v5539
  %v5608 = vunpack.c.h.b16 %v5539
  %v5609 = vunpack.c.l.b16 %v5540
  %v5610 = vunpack.c.h.b16 %v5540
  %v5611 = vunpack.c.l.b16 %v5541
  %v5612 = vunpack.c.h.b16 %v5541
  %v5613 = vunpack.c.l.b16 %v5542
  %v5614 = vunpack.c.h.b16 %v5542
  %v5615 = vunpack.c.l.b16 %v5543
  %v5616 = vunpack.c.h.b16 %v5543
  %v5617 = vunpack.c.l.b16 %v5544
  %v5618 = vunpack.c.h.b16 %v5544
  %v5619 = vunpack.c.l.b16 %v5545
  %v5620 = vunpack.c.h.b16 %v5545
  %v5621 = vunpack.c.l.b16 %v5546
  %v5622 = vunpack.c.h.b16 %v5546
  %v5623 = vunpack.c.l.b16 %v5547
  %v5624 = vunpack.c.h.b16 %v5547
  %v5625 = vunpack.c.l.b16 %v5548
  %v5626 = vunpack.c.h.b16 %v5548
  %v5627 = vunpack.c.l.b16 %v5549
  %v5628 = vunpack.c.h.b16 %v5549
  %v5629 = vunpack.c.l.b16 %v5550
  %v5630 = vunpack.c.h.b16 %v5550
  %v5631 = vunpack.c.l.b16 %v5551
  %v5632 = vunpack.c.h.b16 %v5551
  %v5633 = vunpack.c.l.b16 %v5552
  %v5634 = vunpack.c.h.b16 %v5552
  %v5635 = vunpack.c.l.b16 %v5553
  %v5636 = vunpack.c.h.b16 %v5553
  %v5637 = vunpack.c.l.b16 %v5554
  %v5638 = vunpack.c.h.b16 %v5554
  %v5639 = vunpack.c.l.b16 %v5555
  %v5640 = vunpack.c.h.b16 %v5555
  %v5641 = vunpack.c.l.b16 %v5556
  %v5642 = vunpack.c.h.b16 %v5556
  %v5643 = vunpack.c.l.b16 %v5557
  %v5644 = vunpack.c.h.b16 %v5557
  %v5645 = vunpack.c.l.b16 %v5558
  %v5646 = vunpack.c.h.b16 %v5558
  %v5647 = vunpack.c.l.b16 %v5559
  %v5648 = vunpack.c.h.b16 %v5559
  %v5649 = vunpack.c.l.b16 %v5560
  %v5650 = vunpack.c.h.b16 %v5560
  %v5651 = vunpack.c.l.b16 %v5561
  %v5652 = vunpack.c.h.b16 %v5561
  %v5653 = vunpack.c.l.b16 %v5562
  %v5654 = vunpack.c.h.b16 %v5562
  %v5655 = vunpack.c.l.b16 %v5563
  %v5656 = vunpack.c.h.b16 %v5563
  %v5657 = vunpack.c.l.b16 %v5564
  %v5658 = vunpack.c.h.b16 %v5564
  %v5659 = vunpack.c.l.b16 %v5565
  %v5660 = vunpack.c.h.b16 %v5565
  %v5661 = vunpack.c.l.b16 %v5566
  %v5662 = vunpack.c.h.b16 %v5566
  %v5663 = vpack.c.b16 %v5601, %v5599
  %v5664 = vpack.c.b16 %v5602, %v5600
  %v5665 = vpack.c.b16 %v5605, %v5603
  %v5666 = vpack.c.b16 %v5606, %v5604
  %v5667 = vpack.c.b16 %v5609, %v5607
  %v5668 = vpack.c.b16 %v5610, %v5608
  %v5669 = vpack.c.b16 %v5613, %v5611
  %v5670 = vpack.c.b16 %v5614, %v5612
  %v5671 = vpack.c.b16 %v5617, %v5615
  %v5672 = vpack.c.b16 %v5618, %v5616
  %v5673 = vpack.c.b16 %v5621, %v5619
  %v5674 = vpack.c.b16 %v5622, %v5620
  %v5675 = vpack.c.b16 %v5625, %v5623
  %v5676 = vpack.c.b16 %v5626, %v5624
  %v5677 = vpack.c.b16 %v5629, %v5627
  %v5678 = vpack.c.b16 %v5630, %v5628
  %v5679 = vpack.c.b16 %v5633, %v5631
  %v5680 = vpack.c.b16 %v5634, %v5632
  %v5681 = vpack.c.b16 %v5637, %v5635
  %v5682 = vpack.c.b16 %v5638, %v5636
  %v5683 = vpack.c.b16 %v5641, %v5639
  %v5684 = vpack.c.b16 %v5642, %v5640
  %v5685 = vpack.c.b16 %v5645, %v5643
  %v5686 = vpack.c.b16 %v5646, %v5644
  %v5687 = vpack.c.b16 %v5649, %v5647
  %v5688 = vpack.c.b16 %v5650, %v5648
  %v5689 = vpack.c.b16 %v5653, %v5651
  %v5690 = vpack.c.b16 %v5654, %v5652
  %v5691 = vpack.c.b16 %v5657, %v5655
  %v5692 = vpack.c.b16 %v5658, %v5656
  %v5693 = vpack.c.b16 %v5661, %v5659
  %v5694 = vpack.c.b16 %v5662, %v5660
  %5727 = vmatprep.subr.bf16.mxu0 %v5664
  %5728 = vmatpush1.bf16.msra.mxu0 %v5663
  %5729 = vmatprep.subr.bf16.mxu0 %v5666
  %5730 = vmatpush1.bf16.msra.mxu0 %v5665
  %5731 = vmatprep.subr.bf16.mxu0 %v5668
  %5732 = vmatpush1.bf16.msra.mxu0 %v5667
  %5733 = vmatprep.subr.bf16.mxu0 %v5670
  %5734 = vmatpush1.bf16.msra.mxu0 %v5669
  %5735 = vmatprep.subr.bf16.mxu0 %v5672
  %5736 = vmatpush1.bf16.msra.mxu0 %v5671
  %5737 = vmatprep.subr.bf16.mxu0 %v5674
  %5738 = vmatpush1.bf16.msra.mxu0 %v5673
  %5739 = vmatprep.subr.bf16.mxu0 %v5676
  %5740 = vmatpush1.bf16.msra.mxu0 %v5675
  %5741 = vmatprep.subr.bf16.mxu0 %v5678
  %5742 = vmatpush1.bf16.msra.mxu0 %v5677
  %5743 = vmatprep.subr.bf16.mxu0 %v5680
  %5744 = vmatpush1.bf16.msra.mxu0 %v5679
  %5745 = vmatprep.subr.bf16.mxu0 %v5682
  %5746 = vmatpush1.bf16.msra.mxu0 %v5681
  %5747 = vmatprep.subr.bf16.mxu0 %v5684
  %5748 = vmatpush1.bf16.msra.mxu0 %v5683
  %5749 = vmatprep.subr.bf16.mxu0 %v5686
  %5750 = vmatpush1.bf16.msra.mxu0 %v5685
  %5751 = vmatprep.subr.bf16.mxu0 %v5688
  %5752 = vmatpush1.bf16.msra.mxu0 %v5687
  %5753 = vmatprep.subr.bf16.mxu0 %v5690
  %5754 = vmatpush1.bf16.msra.mxu0 %v5689
  %5755 = vmatprep.subr.bf16.mxu0 %v5692
  %5756 = vmatpush1.bf16.msra.mxu0 %v5691
  %5757 = vmatprep.subr.bf16.mxu0 %v5694
  %5758 = vmatpush1.bf16.msra.mxu0 %v5693
  %5759 = vmatprep.mubr.bf16.mxu0 %v5533
  %5760 = vmatmul.mubr.bf16.gmra.mrb[0].mxu0 %v5532
  %v5761 = vpop.f32.mrb[0].mxu0
  %v5762 = vadd.f32 0.0, %v5761
  %v5763 = vpop.f32.mrb[0].mxu0
  %v5764 = vadd.f32 0.0, %v5763
  %v5765 = vpop.f32.mrb[0].mxu0
  %v5766 = vpop.f32.mrb[0].mxu0
  %5767 = vdwg.mxu0
  %v5768 = vadd.f32 %v5480, %v5762
  %v5769 = vadd.f32 %v5482, %v5764
  %s5770 = scalar_lea.vmem %s4, 12
  %v5771 = vld [vmem:[%s5770] sm:$0xf]
  %v5773 = vsel %vm4924, %v5771, 0
  %5775 = vmatprep.subr.bf16.mxu0 %v4922
  %5776 = vmatpush1.bf16.msra.mxu0 %v4921
  %5777 = vmatprep.subr.bf16.mxu0 0
  %5778 = vmatpush1.bf16.msra.mxu0 0
  %5779 = vmatprep.subr.bf16.mxu0 0
  %5780 = vmatpush1.bf16.msra.mxu0 0
  %5781 = vmatprep.subr.bf16.mxu0 0
  %5782 = vmatpush1.bf16.msra.mxu0 0
  %5783 = vmatprep.subr.bf16.mxu0 0
  %5784 = vmatpush1.bf16.msra.mxu0 0
  %5785 = vmatprep.subr.bf16.mxu0 0
  %5786 = vmatpush1.bf16.msra.mxu0 0
  %5787 = vmatprep.subr.bf16.mxu0 0
  %5788 = vmatpush1.bf16.msra.mxu0 0
  %5789 = vmatprep.subr.bf16.mxu0 0
  %5790 = vmatpush1.bf16.msra.mxu0 0
  %5791 = vmatprep.subr.bf16.mxu0 0
  %5792 = vmatpush1.bf16.msra.mxu0 0
  %5793 = vmatprep.subr.bf16.mxu0 0
  %5794 = vmatpush1.bf16.msra.mxu0 0
  %5795 = vmatprep.subr.bf16.mxu0 0
  %5796 = vmatpush1.bf16.msra.mxu0 0
  %5797 = vmatprep.subr.bf16.mxu0 0
  %5798 = vmatpush1.bf16.msra.mxu0 0
  %5799 = vmatprep.subr.bf16.mxu0 0
  %5800 = vmatpush1.bf16.msra.mxu0 0
  %5801 = vmatprep.subr.bf16.mxu0 0
  %5802 = vmatpush1.bf16.msra.mxu0 0
  %5803 = vmatprep.subr.bf16.mxu0 0
  %5804 = vmatpush1.bf16.msra.mxu0 0
  %5805 = vmatprep.subr.bf16.mxu0 0
  %5806 = vmatpush1.bf16.msra.mxu0 0
  %5807 = vmatprep.mubr.bf16.mxu0 0
  %5808 = vmatmul.mubr.bf16.gmra.mrb[0].mxu0 %v5773
  %v5809 = vpop.f32.mrb[0].mxu0
  %v5810 = vadd.f32 0.0, %v5809
  %v5811 = vpop.f32.mrb[0].mxu0
  %v5812 = vadd.f32 0.0, %v5811
  %v5813 = vpop.f32.mrb[0].mxu0
  %v5814 = vpop.f32.mrb[0].mxu0
  %5815 = vdwg.mxu0
  %v5816 = vpack.c.bf16 %v5810, %v5810
  %v5817 = vpack.c.bf16 %v5812, %v5812
  %s5818 = scalar_lea.vmem %s9, 768
  %v5819 = vld [vmem:[%s5818] sm:$0xff]
  %v5820 = vld [vmem:[%s5818 + $0x8] sm:$0xff]
  %v5821 = vld [vmem:[%s5818 + $0x10] sm:$0xff]
  %v5822 = vld [vmem:[%s5818 + $0x18] sm:$0xff]
  %v5823 = vld [vmem:[%s5818 + $0x20] sm:$0xff]
  %v5824 = vld [vmem:[%s5818 + $0x28] sm:$0xff]
  %v5825 = vld [vmem:[%s5818 + $0x30] sm:$0xff]
  %v5826 = vld [vmem:[%s5818 + $0x38] sm:$0xff]
  %v5827 = vld [vmem:[%s5818 + $0x40] sm:$0xff]
  %v5828 = vld [vmem:[%s5818 + $0x48] sm:$0xff]
  %v5829 = vld [vmem:[%s5818 + $0x50] sm:$0xff]
  %v5830 = vld [vmem:[%s5818 + $0x58] sm:$0xff]
  %v5831 = vld [vmem:[%s5818 + $0x60] sm:$0xff]
  %v5832 = vld [vmem:[%s5818 + $0x68] sm:$0xff]
  %v5833 = vld [vmem:[%s5818 + $0x70] sm:$0xff]
  %v5834 = vld [vmem:[%s5818 + $0x78] sm:$0xff]
  %v5835 = vld [vmem:[%s5818 + $0x80] sm:$0xff]
  %v5836 = vld [vmem:[%s5818 + $0x88] sm:$0xff]
  %v5837 = vld [vmem:[%s5818 + $0x90] sm:$0xff]
  %v5838 = vld [vmem:[%s5818 + $0x98] sm:$0xff]
  %v5839 = vld [vmem:[%s5818 + $0xa0] sm:$0xff]
  %v5840 = vld [vmem:[%s5818 + $0xa8] sm:$0xff]
  %v5841 = vld [vmem:[%s5818 + $0xb0] sm:$0xff]
  %v5842 = vld [vmem:[%s5818 + $0xb8] sm:$0xff]
  %v5843 = vld [vmem:[%s5818 + $0xc0] sm:$0xff]
  %v5844 = vld [vmem:[%s5818 + $0xc8] sm:$0xff]
  %v5845 = vld [vmem:[%s5818 + $0xd0] sm:$0xff]
  %v5846 = vld [vmem:[%s5818 + $0xd8] sm:$0xff]
  %v5847 = vld [vmem:[%s5818 + $0xe0] sm:$0xff]
  %v5848 = vld [vmem:[%s5818 + $0xe8] sm:$0xff]
  %v5849 = vld [vmem:[%s5818 + $0xf0] sm:$0xff]
  %v5850 = vld [vmem:[%s5818 + $0xf8] sm:$0xff]
  %v5883 = vunpack.c.l.b16 %v5819
  %v5884 = vunpack.c.h.b16 %v5819
  %v5885 = vunpack.c.l.b16 %v5820
  %v5886 = vunpack.c.h.b16 %v5820
  %v5887 = vunpack.c.l.b16 %v5821
  %v5888 = vunpack.c.h.b16 %v5821
  %v5889 = vunpack.c.l.b16 %v5822
  %v5890 = vunpack.c.h.b16 %v5822
  %v5891 = vunpack.c.l.b16 %v5823
  %v5892 = vunpack.c.h.b16 %v5823
  %v5893 = vunpack.c.l.b16 %v5824
  %v5894 = vunpack.c.h.b16 %v5824
  %v5895 = vunpack.c.l.b16 %v5825
  %v5896 = vunpack.c.h.b16 %v5825
  %v5897 = vunpack.c.l.b16 %v5826
  %v5898 = vunpack.c.h.b16 %v5826
  %v5899 = vunpack.c.l.b16 %v5827
  %v5900 = vunpack.c.h.b16 %v5827
  %v5901 = vunpack.c.l.b16 %v5828
  %v5902 = vunpack.c.h.b16 %v5828
  %v5903 = vunpack.c.l.b16 %v5829
  %v5904 = vunpack.c.h.b16 %v5829
  %v5905 = vunpack.c.l.b16 %v5830
  %v5906 = vunpack.c.h.b16 %v5830
  %v5907 = vunpack.c.l.b16 %v5831
  %v5908 = vunpack.c.h.b16 %v5831
  %v5909 = vunpack.c.l.b16 %v5832
  %v5910 = vunpack.c.h.b16 %v5832
  %v5911 = vunpack.c.l.b16 %v5833
  %v5912 = vunpack.c.h.b16 %v5833
  %v5913 = vunpack.c.l.b16 %v5834
  %v5914 = vunpack.c.h.b16 %v5834
  %v5915 = vunpack.c.l.b16 %v5835
  %v5916 = vunpack.c.h.b16 %v5835
  %v5917 = vunpack.c.l.b16 %v5836
  %v5918 = vunpack.c.h.b16 %v5836
  %v5919 = vunpack.c.l.b16 %v5837
  %v5920 = vunpack.c.h.b16 %v5837
  %v5921 = vunpack.c.l.b16 %v5838
  %v5922 = vunpack.c.h.b16 %v5838
  %v5923 = vunpack.c.l.b16 %v5839
  %v5924 = vunpack.c.h.b16 %v5839
  %v5925 = vunpack.c.l.b16 %v5840
  %v5926 = vunpack.c.h.b16 %v5840
  %v5927 = vunpack.c.l.b16 %v5841
  %v5928 = vunpack.c.h.b16 %v5841
  %v5929 = vunpack.c.l.b16 %v5842
  %v5930 = vunpack.c.h.b16 %v5842
  %v5931 = vunpack.c.l.b16 %v5843
  %v5932 = vunpack.c.h.b16 %v5843
  %v5933 = vunpack.c.l.b16 %v5844
  %v5934 = vunpack.c.h.b16 %v5844
  %v5935 = vunpack.c.l.b16 %v5845
  %v5936 = vunpack.c.h.b16 %v5845
  %v5937 = vunpack.c.l.b16 %v5846
  %v5938 = vunpack.c.h.b16 %v5846
  %v5939 = vunpack.c.l.b16 %v5847
  %v5940 = vunpack.c.h.b16 %v5847
  %v5941 = vunpack.c.l.b16 %v5848
  %v5942 = vunpack.c.h.b16 %v5848
  %v5943 = vunpack.c.l.b16 %v5849
  %v5944 = vunpack.c.h.b16 %v5849
  %v5945 = vunpack.c.l.b16 %v5850
  %v5946 = vunpack.c.h.b16 %v5850
  %v5947 = vpack.c.b16 %v5885, %v5883
  %v5948 = vpack.c.b16 %v5886, %v5884
  %v5949 = vpack.c.b16 %v5889, %v5887
  %v5950 = vpack.c.b16 %v5890, %v5888
  %v5951 = vpack.c.b16 %v5893, %v5891
  %v5952 = vpack.c.b16 %v5894, %v5892
  %v5953 = vpack.c.b16 %v5897, %v5895
  %v5954 = vpack.c.b16 %v5898, %v5896
  %v5955 = vpack.c.b16 %v5901, %v5899
  %v5956 = vpack.c.b16 %v5902, %v5900
  %v5957 = vpack.c.b16 %v5905, %v5903
  %v5958 = vpack.c.b16 %v5906, %v5904
  %v5959 = vpack.c.b16 %v5909, %v5907
  %v5960 = vpack.c.b16 %v5910, %v5908
  %v5961 = vpack.c.b16 %v5913, %v5911
  %v5962 = vpack.c.b16 %v5914, %v5912
  %v5963 = vpack.c.b16 %v5917, %v5915
  %v5964 = vpack.c.b16 %v5918, %v5916
  %v5965 = vpack.c.b16 %v5921, %v5919
  %v5966 = vpack.c.b16 %v5922, %v5920
  %v5967 = vpack.c.b16 %v5925, %v5923
  %v5968 = vpack.c.b16 %v5926, %v5924
  %v5969 = vpack.c.b16 %v5929, %v5927
  %v5970 = vpack.c.b16 %v5930, %v5928
  %v5971 = vpack.c.b16 %v5933, %v5931
  %v5972 = vpack.c.b16 %v5934, %v5932
  %v5973 = vpack.c.b16 %v5937, %v5935
  %v5974 = vpack.c.b16 %v5938, %v5936
  %v5975 = vpack.c.b16 %v5941, %v5939
  %v5976 = vpack.c.b16 %v5942, %v5940
  %v5977 = vpack.c.b16 %v5945, %v5943
  %v5978 = vpack.c.b16 %v5946, %v5944
  %6011 = vmatprep.subr.bf16.mxu0 %v5948
  %6012 = vmatpush1.bf16.msra.mxu0 %v5947
  %6013 = vmatprep.subr.bf16.mxu0 %v5950
  %6014 = vmatpush1.bf16.msra.mxu0 %v5949
  %6015 = vmatprep.subr.bf16.mxu0 %v5952
  %6016 = vmatpush1.bf16.msra.mxu0 %v5951
  %6017 = vmatprep.subr.bf16.mxu0 %v5954
  %6018 = vmatpush1.bf16.msra.mxu0 %v5953
  %6019 = vmatprep.subr.bf16.mxu0 %v5956
  %6020 = vmatpush1.bf16.msra.mxu0 %v5955
  %6021 = vmatprep.subr.bf16.mxu0 %v5958
  %6022 = vmatpush1.bf16.msra.mxu0 %v5957
  %6023 = vmatprep.subr.bf16.mxu0 %v5960
  %6024 = vmatpush1.bf16.msra.mxu0 %v5959
  %6025 = vmatprep.subr.bf16.mxu0 %v5962
  %6026 = vmatpush1.bf16.msra.mxu0 %v5961
  %6027 = vmatprep.subr.bf16.mxu0 %v5964
  %6028 = vmatpush1.bf16.msra.mxu0 %v5963
  %6029 = vmatprep.subr.bf16.mxu0 %v5966
  %6030 = vmatpush1.bf16.msra.mxu0 %v5965
  %6031 = vmatprep.subr.bf16.mxu0 %v5968
  %6032 = vmatpush1.bf16.msra.mxu0 %v5967
  %6033 = vmatprep.subr.bf16.mxu0 %v5970
  %6034 = vmatpush1.bf16.msra.mxu0 %v5969
  %6035 = vmatprep.subr.bf16.mxu0 %v5972
  %6036 = vmatpush1.bf16.msra.mxu0 %v5971
  %6037 = vmatprep.subr.bf16.mxu0 %v5974
  %6038 = vmatpush1.bf16.msra.mxu0 %v5973
  %6039 = vmatprep.subr.bf16.mxu0 %v5976
  %6040 = vmatpush1.bf16.msra.mxu0 %v5975
  %6041 = vmatprep.subr.bf16.mxu0 %v5978
  %6042 = vmatpush1.bf16.msra.mxu0 %v5977
  %6043 = vmatprep.mubr.bf16.mxu0 %v5817
  %6044 = vmatmul.mubr.bf16.gmra.mrb[0].mxu0 %v5816
  %v6045 = vpop.f32.mrb[0].mxu0
  %v6046 = vadd.f32 0.0, %v6045
  %v6047 = vpop.f32.mrb[0].mxu0
  %v6048 = vadd.f32 0.0, %v6047
  %v6049 = vpop.f32.mrb[0].mxu0
  %v6050 = vpop.f32.mrb[0].mxu0
  %6051 = vdwg.mxu0
  %v6052 = vadd.f32 %v5768, %v6046
  %v6053 = vadd.f32 %v5769, %v6048
  %v6054 = vrot.slane %v6052, 4
  %v6055 = vadd.f32 %v6052, %v6054
  %v6056 = vrot.slane %v6055, 2
  %v6057 = vadd.f32 %v6055, %v6056
  %v6058 = vrot.slane %v6057, 1
  %v6059 = vadd.f32 %v6057, %v6058
  %v6060 = vrot.slane %v6053, 4
  %v6061 = vadd.f32 %v6053, %v6060
  %v6062 = vrot.slane %v6061, 2
  %v6063 = vadd.f32 %v6061, %v6062
  %v6064 = vrot.slane %v6063, 1
  %v6065 = vadd.f32 %v6063, %v6064
  %s6066 = scalar_lea.vmem %s11, 1024
  %v6067 = vld [vmem:[%s6066] sm:$0xff]
  %v6068 = vld [vmem:[%s6066 + $0x8] sm:$0xff]
  %v6069 = vld [vmem:[%s6066 + $0x10] sm:$0xff]
  %v6070 = vld [vmem:[%s6066 + $0x18] sm:$0xff]
  %v6071 = vld [vmem:[%s6066 + $0x20] sm:$0xff]
  %v6072 = vld [vmem:[%s6066 + $0x28] sm:$0xff]
  %v6073 = vld [vmem:[%s6066 + $0x30] sm:$0xff]
  %v6074 = vld [vmem:[%s6066 + $0x38] sm:$0xff]
  %v6075 = vld [vmem:[%s6066 + $0x40] sm:$0xff]
  %v6076 = vld [vmem:[%s6066 + $0x48] sm:$0xff]
  %v6077 = vld [vmem:[%s6066 + $0x50] sm:$0xff]
  %v6078 = vld [vmem:[%s6066 + $0x58] sm:$0xff]
  %v6079 = vld [vmem:[%s6066 + $0x60] sm:$0xff]
  %v6080 = vld [vmem:[%s6066 + $0x68] sm:$0xff]
  %v6081 = vld [vmem:[%s6066 + $0x70] sm:$0xff]
  %v6082 = vld [vmem:[%s6066 + $0x78] sm:$0xff]
  %v6083 = vld [vmem:[%s6066 + $0x80] sm:$0xff]
  %v6084 = vld [vmem:[%s6066 + $0x88] sm:$0xff]
  %v6085 = vld [vmem:[%s6066 + $0x90] sm:$0xff]
  %v6086 = vld [vmem:[%s6066 + $0x98] sm:$0xff]
  %v6087 = vld [vmem:[%s6066 + $0xa0] sm:$0xff]
  %v6088 = vld [vmem:[%s6066 + $0xa8] sm:$0xff]
  %v6089 = vld [vmem:[%s6066 + $0xb0] sm:$0xff]
  %v6090 = vld [vmem:[%s6066 + $0xb8] sm:$0xff]
  %v6091 = vld [vmem:[%s6066 + $0xc0] sm:$0xff]
  %v6092 = vld [vmem:[%s6066 + $0xc8] sm:$0xff]
  %v6093 = vld [vmem:[%s6066 + $0xd0] sm:$0xff]
  %v6094 = vld [vmem:[%s6066 + $0xd8] sm:$0xff]
  %v6095 = vld [vmem:[%s6066 + $0xe0] sm:$0xff]
  %v6096 = vld [vmem:[%s6066 + $0xe8] sm:$0xff]
  %v6097 = vld [vmem:[%s6066 + $0xf0] sm:$0xff]
  %v6098 = vld [vmem:[%s6066 + $0xf8] sm:$0xff]
  %v6099 = vld [vmem:[%s6066 + $0x100] sm:$0xff]
  %v6100 = vld [vmem:[%s6066 + $0x108] sm:$0xff]
  %v6101 = vld [vmem:[%s6066 + $0x110] sm:$0xff]
  %v6102 = vld [vmem:[%s6066 + $0x118] sm:$0xff]
  %v6103 = vld [vmem:[%s6066 + $0x120] sm:$0xff]
  %v6104 = vld [vmem:[%s6066 + $0x128] sm:$0xff]
  %v6105 = vld [vmem:[%s6066 + $0x130] sm:$0xff]
  %v6106 = vld [vmem:[%s6066 + $0x138] sm:$0xff]
  %v6107 = vld [vmem:[%s6066 + $0x140] sm:$0xff]
  %v6108 = vld [vmem:[%s6066 + $0x148] sm:$0xff]
  %v6109 = vld [vmem:[%s6066 + $0x150] sm:$0xff]
  %v6110 = vld [vmem:[%s6066 + $0x158] sm:$0xff]
  %v6111 = vld [vmem:[%s6066 + $0x160] sm:$0xff]
  %v6112 = vld [vmem:[%s6066 + $0x168] sm:$0xff]
  %v6113 = vld [vmem:[%s6066 + $0x170] sm:$0xff]
  %v6114 = vld [vmem:[%s6066 + $0x178] sm:$0xff]
  %v6115 = vld [vmem:[%s6066 + $0x180] sm:$0xff]
  %v6116 = vld [vmem:[%s6066 + $0x188] sm:$0xff]
  %v6117 = vld [vmem:[%s6066 + $0x190] sm:$0xff]
  %v6118 = vld [vmem:[%s6066 + $0x198] sm:$0xff]
  %v6119 = vld [vmem:[%s6066 + $0x1a0] sm:$0xff]
  %v6120 = vld [vmem:[%s6066 + $0x1a8] sm:$0xff]
  %v6121 = vld [vmem:[%s6066 + $0x1b0] sm:$0xff]
  %v6122 = vld [vmem:[%s6066 + $0x1b8] sm:$0xff]
  %v6123 = vld [vmem:[%s6066 + $0x1c0] sm:$0xff]
  %v6124 = vld [vmem:[%s6066 + $0x1c8] sm:$0xff]
  %v6125 = vld [vmem:[%s6066 + $0x1d0] sm:$0xff]
  %v6126 = vld [vmem:[%s6066 + $0x1d8] sm:$0xff]
  %v6127 = vld [vmem:[%s6066 + $0x1e0] sm:$0xff]
  %v6128 = vld [vmem:[%s6066 + $0x1e8] sm:$0xff]
  %v6129 = vld [vmem:[%s6066 + $0x1f0] sm:$0xff]
  %v6130 = vld [vmem:[%s6066 + $0x1f8] sm:$0xff]
  %6131 = vmatprep.subr.mxu0 %v6068
  %6132 = vmatpush1.msra.mxu0 %v6067
  %6133 = vmatprep.subr.mxu0 %v6070
  %6134 = vmatpush1.msra.mxu0 %v6069
  %6135 = vmatprep.subr.mxu0 %v6072
  %6136 = vmatpush1.msra.mxu0 %v6071
  %6137 = vmatprep.subr.mxu0 %v6074
  %6138 = vmatpush1.msra.mxu0 %v6073
  %6139 = vmatprep.subr.mxu0 %v6076
  %6140 = vmatpush1.msra.mxu0 %v6075
  %6141 = vmatprep.subr.mxu0 %v6078
  %6142 = vmatpush1.msra.mxu0 %v6077
  %6143 = vmatprep.subr.mxu0 %v6080
  %6144 = vmatpush1.msra.mxu0 %v6079
  %6145 = vmatprep.subr.mxu0 %v6082
  %6146 = vmatpush1.msra.mxu0 %v6081
  %6147 = vmatprep.subr.mxu0 %v6084
  %6148 = vmatpush1.msra.mxu0 %v6083
  %6149 = vmatprep.subr.mxu0 %v6086
  %6150 = vmatpush1.msra.mxu0 %v6085
  %6151 = vmatprep.subr.mxu0 %v6088
  %6152 = vmatpush1.msra.mxu0 %v6087
  %6153 = vmatprep.subr.mxu0 %v6090
  %6154 = vmatpush1.msra.mxu0 %v6089
  %6155 = vmatprep.subr.mxu0 %v6092
  %6156 = vmatpush1.msra.mxu0 %v6091
  %6157 = vmatprep.subr.mxu0 %v6094
  %6158 = vmatpush1.msra.mxu0 %v6093
  %6159 = vmatprep.subr.mxu0 %v6096
  %6160 = vmatpush1.msra.mxu0 %v6095
  %6161 = vmatprep.subr.mxu0 %v6098
  %6162 = vmatpush1.msra.mxu0 %v6097
  %6163 = vmatprep.subr.mxu0 %v6100
  %6164 = vmatpush1.msra.mxu0 %v6099
  %6165 = vmatprep.subr.mxu0 %v6102
  %6166 = vmatpush1.msra.mxu0 %v6101
  %6167 = vmatprep.subr.mxu0 %v6104
  %6168 = vmatpush1.msra.mxu0 %v6103
  %6169 = vmatprep.subr.mxu0 %v6106
  %6170 = vmatpush1.msra.mxu0 %v6105
  %6171 = vmatprep.subr.mxu0 %v6108
  %6172 = vmatpush1.msra.mxu0 %v6107
  %6173 = vmatprep.subr.mxu0 %v6110
  %6174 = vmatpush1.msra.mxu0 %v6109
  %6175 = vmatprep.subr.mxu0 %v6112
  %6176 = vmatpush1.msra.mxu0 %v6111
  %6177 = vmatprep.subr.mxu0 %v6114
  %6178 = vmatpush1.msra.mxu0 %v6113
  %6179 = vmatprep.subr.mxu0 %v6116
  %6180 = vmatpush1.msra.mxu0 %v6115
  %6181 = vmatprep.subr.mxu0 %v6118
  %6182 = vmatpush1.msra.mxu0 %v6117
  %6183 = vmatprep.subr.mxu0 %v6120
  %6184 = vmatpush1.msra.mxu0 %v6119
  %6185 = vmatprep.subr.mxu0 %v6122
  %6186 = vmatpush1.msra.mxu0 %v6121
  %6187 = vmatprep.subr.mxu0 %v6124
  %6188 = vmatpush1.msra.mxu0 %v6123
  %6189 = vmatprep.subr.mxu0 %v6126
  %6190 = vmatpush1.msra.mxu0 %v6125
  %6191 = vmatprep.subr.mxu0 %v6128
  %6192 = vmatpush1.msra.mxu0 %v6127
  %6193 = vmatprep.subr.mxu0 %v6130
  %6194 = vmatpush1.msra.mxu0 %v6129
  %6195 = vmatprep.mubr.f32.mxu0 %v6065
  %6196 = vmatmul.mubr.f32.gmra.mrb[0].mxu0 %v6059
  %v6197 = vpop.f32.mrb[0].mxu0
  %v6198 = vadd.f32 0.0, %v6197
  %v6199 = vpop.f32.mrb[0].mxu0
  %v6200 = vadd.f32 0.0, %v6199
  %6201 = vdwg.mxu0
  %v6202 = vmul.f32 %v6198, 0.03125
  %v6203 = vmul.f32 %v6200, 0.03125
  %v6204 = vlaneseq
  %v6205 = vshrl.u32 %v6204, 7
  %v6206 = vsub.s32 0, %v6205
  %v6207 = vrot.slane %v6202, %v6206
  %v6208 = vlaneseq
  %v6209 = vshrl.u32 %v6208, 7
  %v6210 = vsub.s32 0, %v6209
  %v6211 = vrot.slane %v6203, %v6210
  %v6212 = vsub.f32 %v6052, %v6207
  %v6213 = vsub.f32 %v6053, %v6211
  %v6214 = vmul.f32 %v6212, %v6212
  %v6215 = vmul.f32 %v6213, %v6213
  %v6216 = vrot.slane %v6214, 4
  %v6217 = vadd.f32 %v6214, %v6216
  %v6218 = vrot.slane %v6217, 2
  %v6219 = vadd.f32 %v6217, %v6218
  %v6220 = vrot.slane %v6219, 1
  %v6221 = vadd.f32 %v6219, %v6220
  %v6222 = vrot.slane %v6215, 4
  %v6223 = vadd.f32 %v6215, %v6222
  %v6224 = vrot.slane %v6223, 2
  %v6225 = vadd.f32 %v6223, %v6224
  %v6226 = vrot.slane %v6225, 1
  %v6227 = vadd.f32 %v6225, %v6226
  %6228 = vmatprep.subr.mxu0 %v6068
  %6229 = vmatpush1.msra.mxu0 %v6067
  %6230 = vmatprep.subr.mxu0 %v6070
  %6231 = vmatpush1.msra.mxu0 %v6069
  %6232 = vmatprep.subr.mxu0 %v6072
  %6233 = vmatpush1.msra.mxu0 %v6071
  %6234 = vmatprep.subr.mxu0 %v6074
  %6235 = vmatpush1.msra.mxu0 %v6073
  %6236 = vmatprep.subr.mxu0 %v6076
  %6237 = vmatpush1.msra.mxu0 %v6075
  %6238 = vmatprep.subr.mxu0 %v6078
  %6239 = vmatpush1.msra.mxu0 %v6077
  %6240 = vmatprep.subr.mxu0 %v6080
  %6241 = vmatpush1.msra.mxu0 %v6079
  %6242 = vmatprep.subr.mxu0 %v6082
  %6243 = vmatpush1.msra.mxu0 %v6081
  %6244 = vmatprep.subr.mxu0 %v6084
  %6245 = vmatpush1.msra.mxu0 %v6083
  %6246 = vmatprep.subr.mxu0 %v6086
  %6247 = vmatpush1.msra.mxu0 %v6085
  %6248 = vmatprep.subr.mxu0 %v6088
  %6249 = vmatpush1.msra.mxu0 %v6087
  %6250 = vmatprep.subr.mxu0 %v6090
  %6251 = vmatpush1.msra.mxu0 %v6089
  %6252 = vmatprep.subr.mxu0 %v6092
  %6253 = vmatpush1.msra.mxu0 %v6091
  %6254 = vmatprep.subr.mxu0 %v6094
  %6255 = vmatpush1.msra.mxu0 %v6093
  %6256 = vmatprep.subr.mxu0 %v6096
  %6257 = vmatpush1.msra.mxu0 %v6095
  %6258 = vmatprep.subr.mxu0 %v6098
  %6259 = vmatpush1.msra.mxu0 %v6097
  %6260 = vmatprep.subr.mxu0 %v6100
  %6261 = vmatpush1.msra.mxu0 %v6099
  %6262 = vmatprep.subr.mxu0 %v6102
  %6263 = vmatpush1.msra.mxu0 %v6101
  %6264 = vmatprep.subr.mxu0 %v6104
  %6265 = vmatpush1.msra.mxu0 %v6103
  %6266 = vmatprep.subr.mxu0 %v6106
  %6267 = vmatpush1.msra.mxu0 %v6105
  %6268 = vmatprep.subr.mxu0 %v6108
  %6269 = vmatpush1.msra.mxu0 %v6107
  %6270 = vmatprep.subr.mxu0 %v6110
  %6271 = vmatpush1.msra.mxu0 %v6109
  %6272 = vmatprep.subr.mxu0 %v6112
  %6273 = vmatpush1.msra.mxu0 %v6111
  %6274 = vmatprep.subr.mxu0 %v6114
  %6275 = vmatpush1.msra.mxu0 %v6113
  %6276 = vmatprep.subr.mxu0 %v6116
  %6277 = vmatpush1.msra.mxu0 %v6115
  %6278 = vmatprep.subr.mxu0 %v6118
  %6279 = vmatpush1.msra.mxu0 %v6117
  %6280 = vmatprep.subr.mxu0 %v6120
  %6281 = vmatpush1.msra.mxu0 %v6119
  %6282 = vmatprep.subr.mxu0 %v6122
  %6283 = vmatpush1.msra.mxu0 %v6121
  %6284 = vmatprep.subr.mxu0 %v6124
  %6285 = vmatpush1.msra.mxu0 %v6123
  %6286 = vmatprep.subr.mxu0 %v6126
  %6287 = vmatpush1.msra.mxu0 %v6125
  %6288 = vmatprep.subr.mxu0 %v6128
  %6289 = vmatpush1.msra.mxu0 %v6127
  %6290 = vmatprep.subr.mxu0 %v6130
  %6291 = vmatpush1.msra.mxu0 %v6129
  %6292 = vmatprep.mubr.f32.mxu0 %v6227
  %6293 = vmatmul.mubr.f32.gmra.mrb[0].mxu0 %v6221
  %v6294 = vpop.f32.mrb[0].mxu0
  %v6295 = vadd.f32 0.0, %v6294
  %v6296 = vpop.f32.mrb[0].mxu0
  %v6297 = vadd.f32 0.0, %v6296
  %6298 = vdwg.mxu0
  %v6299 = vmul.f32 %v6295, 0.03125
  %v6300 = vmul.f32 %v6297, 0.03125
  %v6301 = vadd.f32 %v6299, 1e-05
  %v6302 = vadd.f32 %v6300, 1e-05
  %v6303 = vrsqrt.pop %v6301
  %v6304 = vrsqrt.pop %v6302
  %s6305 = scalar_lea.vmem %s12, 4
  %v6306 = vld [vmem:[%s6305] sm:$0x3]
  %v6309 = vcombine.low %v6303, %v6304
  %v6311 = vunpack.c.l.s4 1966171168
  %v6312 = vunpack.c.0.s8 %v6311
  %v6313 = vlaneseq
  %v6314 = vshrl.u32 %v6313, 7
  %v6315 = vsub.s32 %v6312, %v6314
  %v6316 = vrot.slane %v6309, %v6315
  %v6318 = vunpack.c.l.s4 1966171168
  %v6319 = vunpack.c.0.s8 %v6318
  %v6320 = vlaneseq
  %v6321 = vshrl.u32 %v6320, 7
  %v6322 = vsub.s32 %v6319, %v6321
  %v6323 = vrot.slane %v6316, %v6322
  %v6325 = vmul.f32 %v6306, %v6323
  %v6327 = vlaneseq
  %v6328 = vshrl.u32 %v6327, 7
  %v6329 = vsub.s32 0, %v6328
  %v6330 = vrot.slane %v6325, %v6329
  %v6331 = vlaneseq
  %v6332 = vshrl.u32 %v6331, 7
  %v6333 = vsub.s32 1, %v6332
  %v6334 = vrot.slane %v6325, %v6333
  %v6337 = vmul.f32 %v6212, %v6330
  %v6338 = vmul.f32 %v6213, %v6334
  %s6339 = scalar_lea.vmem %s13, 4
  %v6340 = vld [vmem:[%s6339] sm:$0x3]
  %v6342 = vlaneseq
  %v6343 = vshrl.u32 %v6342, 7
  %v6344 = vsub.s32 0, %v6343
  %v6345 = vrot.slane %v6340, %v6344
  %v6346 = vlaneseq
  %v6347 = vshrl.u32 %v6346, 7
  %v6348 = vsub.s32 1, %v6347
  %v6349 = vrot.slane %v6340, %v6348
  %v6352 = vadd.f32 %v6337, %v6345
  %v6353 = vadd.f32 %v6338, %v6349
  %vm6354 = vcmp.ge.f32.partialorder %v6352, 0.0
  %vm6355 = vcmp.ge.f32.partialorder %v6353, 0.0
  %v6356 = vmul.f32 %v6352, 0.2
  %v6357 = vmul.f32 %v6353, 0.2
  %v6358 = vsel %vm6354, %v6352, %v6356
  %v6359 = vsel %vm6355, %v6353, %v6357
  %v6360 = vpack.c.bf16 %v6358, %v6358
  %v6361 = vpack.c.bf16 %v6359, %v6359
  %v6362 = vld [vmem:[%s5] sm:$0x1]
  %vm6363 = vcmask 64512
  %v6365 = vsel %vm6363, %v6362, 0
  %vm6367 = vcmask 1043456
  %v6369 = vsel %vm6367, %v6360, 0
  %v6372 = vsel %vm6367, %v6361, 0
  %6374 = vmatprep.subr.bf16.mxu0 %v6372
  %6375 = vmatpush1.bf16.msra.mxu0 %v6369
  %6376 = vmatprep.subr.bf16.mxu0 0
  %6377 = vmatpush1.bf16.msra.mxu0 0
  %6378 = vmatprep.subr.bf16.mxu0 0
  %6379 = vmatpush1.bf16.msra.mxu0 0
  %6380 = vmatprep.subr.bf16.mxu0 0
  %6381 = vmatpush1.bf16.msra.mxu0 0
  %6382 = vmatprep.subr.bf16.mxu0 0
  %6383 = vmatpush1.bf16.msra.mxu0 0
  %6384 = vmatprep.subr.bf16.mxu0 0
  %6385 = vmatpush1.bf16.msra.mxu0 0
  %6386 = vmatprep.subr.bf16.mxu0 0
  %6387 = vmatpush1.bf16.msra.mxu0 0
  %6388 = vmatprep.subr.bf16.mxu0 0
  %6389 = vmatpush1.bf16.msra.mxu0 0
  %6390 = vmatprep.subr.bf16.mxu0 0
  %6391 = vmatpush1.bf16.msra.mxu0 0
  %6392 = vmatprep.subr.bf16.mxu0 0
  %6393 = vmatpush1.bf16.msra.mxu0 0
  %6394 = vmatprep.subr.bf16.mxu0 0
  %6395 = vmatpush1.bf16.msra.mxu0 0
  %6396 = vmatprep.subr.bf16.mxu0 0
  %6397 = vmatpush1.bf16.msra.mxu0 0
  %6398 = vmatprep.subr.bf16.mxu0 0
  %6399 = vmatpush1.bf16.msra.mxu0 0
  %6400 = vmatprep.subr.bf16.mxu0 0
  %6401 = vmatpush1.bf16.msra.mxu0 0
  %6402 = vmatprep.subr.bf16.mxu0 0
  %6403 = vmatpush1.bf16.msra.mxu0 0
  %6404 = vmatprep.subr.bf16.mxu0 0
  %6405 = vmatpush1.bf16.msra.mxu0 0
  %6406 = vmatprep.mubr.bf16.mxu0 0
  %6407 = vmatmul.mubr.bf16.gmra.mrb[0].mxu0 %v6365
  %v6408 = vpop.f32.mrb[0].mxu0
  %v6409 = vadd.f32 0.0, %v6408
  %v6410 = vpop.f32.mrb[0].mxu0
  %v6411 = vadd.f32 0.0, %v6410
  %v6412 = vpop.f32.mrb[0].mxu0
  %v6413 = vpop.f32.mrb[0].mxu0
  %6414 = vdwg.mxu0
  %v6415 = vpack.c.bf16 %v6409, %v6409
  %v6416 = vpack.c.bf16 %v6411, %v6411
  %v6417 = vld [vmem:[%s10] sm:$0xf]
  %v6418 = vld [vmem:[%s10 + $0x4] sm:$0xf]
  %v6419 = vld [vmem:[%s10 + $0x8] sm:$0xf]
  %v6420 = vld [vmem:[%s10 + $0xc] sm:$0xf]
  %v6421 = vld [vmem:[%s10 + $0x10] sm:$0xf]
  %v6422 = vld [vmem:[%s10 + $0x14] sm:$0xf]
  %v6423 = vld [vmem:[%s10 + $0x18] sm:$0xf]
  %v6424 = vld [vmem:[%s10 + $0x1c] sm:$0xf]
  %v6425 = vld [vmem:[%s10 + $0x20] sm:$0xf]
  %v6426 = vld [vmem:[%s10 + $0x24] sm:$0xf]
  %v6427 = vld [vmem:[%s10 + $0x28] sm:$0xf]
  %v6428 = vld [vmem:[%s10 + $0x2c] sm:$0xf]
  %v6429 = vld [vmem:[%s10 + $0x30] sm:$0xf]
  %v6430 = vld [vmem:[%s10 + $0x34] sm:$0xf]
  %v6431 = vld [vmem:[%s10 + $0x38] sm:$0xf]
  %v6432 = vld [vmem:[%s10 + $0x3c] sm:$0xf]
  %v6433 = vld [vmem:[%s10 + $0x40] sm:$0xf]
  %v6434 = vld [vmem:[%s10 + $0x44] sm:$0xf]
  %v6435 = vld [vmem:[%s10 + $0x48] sm:$0xf]
  %v6436 = vld [vmem:[%s10 + $0x4c] sm:$0xf]
  %v6437 = vld [vmem:[%s10 + $0x50] sm:$0xf]
  %v6438 = vld [vmem:[%s10 + $0x54] sm:$0xf]
  %v6439 = vld [vmem:[%s10 + $0x58] sm:$0xf]
  %v6440 = vld [vmem:[%s10 + $0x5c] sm:$0xf]
  %v6441 = vld [vmem:[%s10 + $0x60] sm:$0xf]
  %v6442 = vld [vmem:[%s10 + $0x64] sm:$0xf]
  %v6443 = vld [vmem:[%s10 + $0x68] sm:$0xf]
  %v6444 = vld [vmem:[%s10 + $0x6c] sm:$0xf]
  %v6445 = vld [vmem:[%s10 + $0x70] sm:$0xf]
  %v6446 = vld [vmem:[%s10 + $0x74] sm:$0xf]
  %v6447 = vld [vmem:[%s10 + $0x78] sm:$0xf]
  %v6448 = vld [vmem:[%s10 + $0x7c] sm:$0xf]
  %s6449 = scalar_lea.vmem %s5, 1
  %v6450 = vld [vmem:[%s6449] sm:$0x1]
  %v6452 = vsel %vm6363, %v6450, 0
  %6454 = vmatprep.subr.bf16.mxu0 %v6372
  %6455 = vmatpush1.bf16.msra.mxu0 %v6369
  %6456 = vmatprep.subr.bf16.mxu0 0
  %6457 = vmatpush1.bf16.msra.mxu0 0
  %6458 = vmatprep.subr.bf16.mxu0 0
  %6459 = vmatpush1.bf16.msra.mxu0 0
  %6460 = vmatprep.subr.bf16.mxu0 0
  %6461 = vmatpush1.bf16.msra.mxu0 0
  %6462 = vmatprep.subr.bf16.mxu0 0
  %6463 = vmatpush1.bf16.msra.mxu0 0
  %6464 = vmatprep.subr.bf16.mxu0 0
  %6465 = vmatpush1.bf16.msra.mxu0 0
  %6466 = vmatprep.subr.bf16.mxu0 0
  %6467 = vmatpush1.bf16.msra.mxu0 0
  %6468 = vmatprep.subr.bf16.mxu0 0
  %6469 = vmatpush1.bf16.msra.mxu0 0
  %6470 = vmatprep.subr.bf16.mxu0 0
  %6471 = vmatpush1.bf16.msra.mxu0 0
  %6472 = vmatprep.subr.bf16.mxu0 0
  %6473 = vmatpush1.bf16.msra.mxu0 0
  %6474 = vmatprep.subr.bf16.mxu0 0
  %6475 = vmatpush1.bf16.msra.mxu0 0
  %6476 = vmatprep.subr.bf16.mxu0 0
  %6477 = vmatpush1.bf16.msra.mxu0 0
  %6478 = vmatprep.subr.bf16.mxu0 0
  %6479 = vmatpush1.bf16.msra.mxu0 0
  %6480 = vmatprep.subr.bf16.mxu0 0
  %6481 = vmatpush1.bf16.msra.mxu0 0
  %6482 = vmatprep.subr.bf16.mxu0 0
  %6483 = vmatpush1.bf16.msra.mxu0 0
  %6484 = vmatprep.subr.bf16.mxu0 0
  %6485 = vmatpush1.bf16.msra.mxu0 0
  %6486 = vmatprep.mubr.bf16.mxu0 0
  %6487 = vmatmul.mubr.bf16.gmra.mrb[0].mxu0 %v6452
  %v6488 = vpop.f32.mrb[0].mxu0
  %v6489 = vadd.f32 0.0, %v6488
  %v6490 = vpop.f32.mrb[0].mxu0
  %v6491 = vadd.f32 0.0, %v6490
  %v6492 = vpop.f32.mrb[0].mxu0
  %v6493 = vpop.f32.mrb[0].mxu0
  %6494 = vdwg.mxu0
  %v6495 = vpack.c.bf16 %v6489, %v6489
  %v6496 = vpack.c.bf16 %v6491, %v6491
  %s6497 = scalar_lea.vmem %s10, 128
  %v6498 = vld [vmem:[%s6497] sm:$0xf]
  %v6499 = vld [vmem:[%s6497 + $0x4] sm:$0xf]
  %v6500 = vld [vmem:[%s6497 + $0x8] sm:$0xf]
  %v6501 = vld [vmem:[%s6497 + $0xc] sm:$0xf]
  %v6502 = vld [vmem:[%s6497 + $0x10] sm:$0xf]
  %v6503 = vld [vmem:[%s6497 + $0x14] sm:$0xf]
  %v6504 = vld [vmem:[%s6497 + $0x18] sm:$0xf]
  %v6505 = vld [vmem:[%s6497 + $0x1c] sm:$0xf]
  %v6506 = vld [vmem:[%s6497 + $0x20] sm:$0xf]
  %v6507 = vld [vmem:[%s6497 + $0x24] sm:$0xf]
  %v6508 = vld [vmem:[%s6497 + $0x28] sm:$0xf]
  %v6509 = vld [vmem:[%s6497 + $0x2c] sm:$0xf]
  %v6510 = vld [vmem:[%s6497 + $0x30] sm:$0xf]
  %v6511 = vld [vmem:[%s6497 + $0x34] sm:$0xf]
  %v6512 = vld [vmem:[%s6497 + $0x38] sm:$0xf]
  %v6513 = vld [vmem:[%s6497 + $0x3c] sm:$0xf]
  %v6514 = vld [vmem:[%s6497 + $0x40] sm:$0xf]
  %v6515 = vld [vmem:[%s6497 + $0x44] sm:$0xf]
  %v6516 = vld [vmem:[%s6497 + $0x48] sm:$0xf]
  %v6517 = vld [vmem:[%s6497 + $0x4c] sm:$0xf]
  %v6518 = vld [vmem:[%s6497 + $0x50] sm:$0xf]
  %v6519 = vld [vmem:[%s6497 + $0x54] sm:$0xf]
  %v6520 = vld [vmem:[%s6497 + $0x58] sm:$0xf]
  %v6521 = vld [vmem:[%s6497 + $0x5c] sm:$0xf]
  %v6522 = vld [vmem:[%s6497 + $0x60] sm:$0xf]
  %v6523 = vld [vmem:[%s6497 + $0x64] sm:$0xf]
  %v6524 = vld [vmem:[%s6497 + $0x68] sm:$0xf]
  %v6525 = vld [vmem:[%s6497 + $0x6c] sm:$0xf]
  %v6526 = vld [vmem:[%s6497 + $0x70] sm:$0xf]
  %v6527 = vld [vmem:[%s6497 + $0x74] sm:$0xf]
  %v6528 = vld [vmem:[%s6497 + $0x78] sm:$0xf]
  %v6529 = vld [vmem:[%s6497 + $0x7c] sm:$0xf]
  %v6562 = vunpack.c.l.b16 %v6498
  %v6563 = vunpack.c.l.b16 %v6499
  %v6564 = vunpack.c.l.b16 %v6500
  %v6565 = vunpack.c.l.b16 %v6501
  %v6566 = vunpack.c.l.b16 %v6502
  %v6567 = vunpack.c.l.b16 %v6503
  %v6568 = vunpack.c.l.b16 %v6504
  %v6569 = vunpack.c.l.b16 %v6505
  %v6570 = vunpack.c.l.b16 %v6506
  %v6571 = vunpack.c.l.b16 %v6507
  %v6572 = vunpack.c.l.b16 %v6508
  %v6573 = vunpack.c.l.b16 %v6509
  %v6574 = vunpack.c.l.b16 %v6510
  %v6575 = vunpack.c.l.b16 %v6511
  %v6576 = vunpack.c.l.b16 %v6512
  %v6577 = vunpack.c.l.b16 %v6513
  %v6578 = vunpack.c.l.b16 %v6514
  %v6579 = vunpack.c.l.b16 %v6515
  %v6580 = vunpack.c.l.b16 %v6516
  %v6581 = vunpack.c.l.b16 %v6517
  %v6582 = vunpack.c.l.b16 %v6518
  %v6583 = vunpack.c.l.b16 %v6519
  %v6584 = vunpack.c.l.b16 %v6520
  %v6585 = vunpack.c.l.b16 %v6521
  %v6586 = vunpack.c.l.b16 %v6522
  %v6587 = vunpack.c.l.b16 %v6523
  %v6588 = vunpack.c.l.b16 %v6524
  %v6589 = vunpack.c.l.b16 %v6525
  %v6590 = vunpack.c.l.b16 %v6526
  %v6591 = vunpack.c.l.b16 %v6527
  %v6592 = vunpack.c.l.b16 %v6528
  %v6593 = vunpack.c.l.b16 %v6529
  %v6594 = vpack.c.b16 %v6563, %v6562
  %v6595 = vpack.c.b16 %v6565, %v6564
  %v6596 = vpack.c.b16 %v6567, %v6566
  %v6597 = vpack.c.b16 %v6569, %v6568
  %v6598 = vpack.c.b16 %v6571, %v6570
  %v6599 = vpack.c.b16 %v6573, %v6572
  %v6600 = vpack.c.b16 %v6575, %v6574
  %v6601 = vpack.c.b16 %v6577, %v6576
  %v6602 = vpack.c.b16 %v6579, %v6578
  %v6603 = vpack.c.b16 %v6581, %v6580
  %v6604 = vpack.c.b16 %v6583, %v6582
  %v6605 = vpack.c.b16 %v6585, %v6584
  %v6606 = vpack.c.b16 %v6587, %v6586
  %v6607 = vpack.c.b16 %v6589, %v6588
  %v6608 = vpack.c.b16 %v6591, %v6590
  %v6609 = vpack.c.b16 %v6593, %v6592
  %6626 = vmatprep.subr.bf16.mxu0 0
  %6627 = vmatpush1.bf16.msra.mxu0 %v6594
  %6628 = vmatprep.subr.bf16.mxu0 0
  %6629 = vmatpush1.bf16.msra.mxu0 %v6595
  %6630 = vmatprep.subr.bf16.mxu0 0
  %6631 = vmatpush1.bf16.msra.mxu0 %v6596
  %6632 = vmatprep.subr.bf16.mxu0 0
  %6633 = vmatpush1.bf16.msra.mxu0 %v6597
  %6634 = vmatprep.subr.bf16.mxu0 0
  %6635 = vmatpush1.bf16.msra.mxu0 %v6598
  %6636 = vmatprep.subr.bf16.mxu0 0
  %6637 = vmatpush1.bf16.msra.mxu0 %v6599
  %6638 = vmatprep.subr.bf16.mxu0 0
  %6639 = vmatpush1.bf16.msra.mxu0 %v6600
  %6640 = vmatprep.subr.bf16.mxu0 0
  %6641 = vmatpush1.bf16.msra.mxu0 %v6601
  %6642 = vmatprep.subr.bf16.mxu0 0
  %6643 = vmatpush1.bf16.msra.mxu0 %v6602
  %6644 = vmatprep.subr.bf16.mxu0 0
  %6645 = vmatpush1.bf16.msra.mxu0 %v6603
  %6646 = vmatprep.subr.bf16.mxu0 0
  %6647 = vmatpush1.bf16.msra.mxu0 %v6604
  %6648 = vmatprep.subr.bf16.mxu0 0
  %6649 = vmatpush1.bf16.msra.mxu0 %v6605
  %6650 = vmatprep.subr.bf16.mxu0 0
  %6651 = vmatpush1.bf16.msra.mxu0 %v6606
  %6652 = vmatprep.subr.bf16.mxu0 0
  %6653 = vmatpush1.bf16.msra.mxu0 %v6607
  %6654 = vmatprep.subr.bf16.mxu0 0
  %6655 = vmatpush1.bf16.msra.mxu0 %v6608
  %6656 = vmatprep.subr.bf16.mxu0 0
  %6657 = vmatpush1.bf16.msra.mxu0 %v6609
  %6658 = vmatprep.mubr.bf16.mxu0 %v6496
  %6659 = vmatmul.mubr.bf16.gmra.mrb[0].mxu0 %v6495
  %v6660 = vpop.f32.mrb[0].mxu0
  %v6661 = vadd.f32 0.0, %v6660
  %v6662 = vpop.f32.mrb[0].mxu0
  %v6663 = vpop.f32.mrb[0].mxu0
  %v6664 = vpop.f32.mrb[0].mxu0
  %6665 = vdwg.mxu0
  %v6698 = vunpack.c.l.b16 %v6417
  %v6699 = vunpack.c.l.b16 %v6418
  %v6700 = vunpack.c.l.b16 %v6419
  %v6701 = vunpack.c.l.b16 %v6420
  %v6702 = vunpack.c.l.b16 %v6421
  %v6703 = vunpack.c.l.b16 %v6422
  %v6704 = vunpack.c.l.b16 %v6423
  %v6705 = vunpack.c.l.b16 %v6424
  %v6706 = vunpack.c.l.b16 %v6425
  %v6707 = vunpack.c.l.b16 %v6426
  %v6708 = vunpack.c.l.b16 %v6427
  %v6709 = vunpack.c.l.b16 %v6428
  %v6710 = vunpack.c.l.b16 %v6429
  %v6711 = vunpack.c.l.b16 %v6430
  %v6712 = vunpack.c.l.b16 %v6431
  %v6713 = vunpack.c.l.b16 %v6432
  %v6714 = vunpack.c.l.b16 %v6433
  %v6715 = vunpack.c.l.b16 %v6434
  %v6716 = vunpack.c.l.b16 %v6435
  %v6717 = vunpack.c.l.b16 %v6436
  %v6718 = vunpack.c.l.b16 %v6437
  %v6719 = vunpack.c.l.b16 %v6438
  %v6720 = vunpack.c.l.b16 %v6439
  %v6721 = vunpack.c.l.b16 %v6440
  %v6722 = vunpack.c.l.b16 %v6441
  %v6723 = vunpack.c.l.b16 %v6442
  %v6724 = vunpack.c.l.b16 %v6443
  %v6725 = vunpack.c.l.b16 %v6444
  %v6726 = vunpack.c.l.b16 %v6445
  %v6727 = vunpack.c.l.b16 %v6446
  %v6728 = vunpack.c.l.b16 %v6447
  %v6729 = vunpack.c.l.b16 %v6448
  %v6730 = vpack.c.b16 %v6699, %v6698
  %v6731 = vpack.c.b16 %v6701, %v6700
  %v6732 = vpack.c.b16 %v6703, %v6702
  %v6733 = vpack.c.b16 %v6705, %v6704
  %v6734 = vpack.c.b16 %v6707, %v6706
  %v6735 = vpack.c.b16 %v6709, %v6708
  %v6736 = vpack.c.b16 %v6711, %v6710
  %v6737 = vpack.c.b16 %v6713, %v6712
  %v6738 = vpack.c.b16 %v6715, %v6714
  %v6739 = vpack.c.b16 %v6717, %v6716
  %v6740 = vpack.c.b16 %v6719, %v6718
  %v6741 = vpack.c.b16 %v6721, %v6720
  %v6742 = vpack.c.b16 %v6723, %v6722
  %v6743 = vpack.c.b16 %v6725, %v6724
  %v6744 = vpack.c.b16 %v6727, %v6726
  %v6745 = vpack.c.b16 %v6729, %v6728
  %6762 = vmatprep.subr.bf16.mxu0 0
  %6763 = vmatpush1.bf16.msra.mxu0 %v6730
  %6764 = vmatprep.subr.bf16.mxu0 0
  %6765 = vmatpush1.bf16.msra.mxu0 %v6731
  %6766 = vmatprep.subr.bf16.mxu0 0
  %6767 = vmatpush1.bf16.msra.mxu0 %v6732
  %6768 = vmatprep.subr.bf16.mxu0 0
  %6769 = vmatpush1.bf16.msra.mxu0 %v6733
  %6770 = vmatprep.subr.bf16.mxu0 0
  %6771 = vmatpush1.bf16.msra.mxu0 %v6734
  %6772 = vmatprep.subr.bf16.mxu0 0
  %6773 = vmatpush1.bf16.msra.mxu0 %v6735
  %6774 = vmatprep.subr.bf16.mxu0 0
  %6775 = vmatpush1.bf16.msra.mxu0 %v6736
  %6776 = vmatprep.subr.bf16.mxu0 0
  %6777 = vmatpush1.bf16.msra.mxu0 %v6737
  %6778 = vmatprep.subr.bf16.mxu0 0
  %6779 = vmatpush1.bf16.msra.mxu0 %v6738
  %6780 = vmatprep.subr.bf16.mxu0 0
  %6781 = vmatpush1.bf16.msra.mxu0 %v6739
  %6782 = vmatprep.subr.bf16.mxu0 0
  %6783 = vmatpush1.bf16.msra.mxu0 %v6740
  %6784 = vmatprep.subr.bf16.mxu0 0
  %6785 = vmatpush1.bf16.msra.mxu0 %v6741
  %6786 = vmatprep.subr.bf16.mxu0 0
  %6787 = vmatpush1.bf16.msra.mxu0 %v6742
  %6788 = vmatprep.subr.bf16.mxu0 0
  %6789 = vmatpush1.bf16.msra.mxu0 %v6743
  %6790 = vmatprep.subr.bf16.mxu0 0
  %6791 = vmatpush1.bf16.msra.mxu0 %v6744
  %6792 = vmatprep.subr.bf16.mxu0 0
  %6793 = vmatpush1.bf16.msra.mxu0 %v6745
  %6794 = vmatprep.mubr.bf16.mxu0 %v6416
  %6795 = vmatmul.mubr.bf16.gmra.mrb[0].mxu0 %v6415
  %v6796 = vpop.f32.mrb[0].mxu0
  %v6797 = vadd.f32 %v6661, %v6796
  %v6798 = vpop.f32.mrb[0].mxu0
  %v6799 = vpop.f32.mrb[0].mxu0
  %v6800 = vpop.f32.mrb[0].mxu0
  %6801 = vdwg.mxu0
  %s6802 = scalar_lea.vmem %s5, 2
  %v6803 = vld [vmem:[%s6802] sm:$0x1]
  %v6805 = vsel %vm6363, %v6803, 0
  %6807 = vmatprep.subr.bf16.mxu0 %v6372
  %6808 = vmatpush1.bf16.msra.mxu0 %v6369
  %6809 = vmatprep.subr.bf16.mxu0 0
  %6810 = vmatpush1.bf16.msra.mxu0 0
  %6811 = vmatprep.subr.bf16.mxu0 0
  %6812 = vmatpush1.bf16.msra.mxu0 0
  %6813 = vmatprep.subr.bf16.mxu0 0
  %6814 = vmatpush1.bf16.msra.mxu0 0
  %6815 = vmatprep.subr.bf16.mxu0 0
  %6816 = vmatpush1.bf16.msra.mxu0 0
  %6817 = vmatprep.subr.bf16.mxu0 0
  %6818 = vmatpush1.bf16.msra.mxu0 0
  %6819 = vmatprep.subr.bf16.mxu0 0
  %6820 = vmatpush1.bf16.msra.mxu0 0
  %6821 = vmatprep.subr.bf16.mxu0 0
  %6822 = vmatpush1.bf16.msra.mxu0 0
  %6823 = vmatprep.subr.bf16.mxu0 0
  %6824 = vmatpush1.bf16.msra.mxu0 0
  %6825 = vmatprep.subr.bf16.mxu0 0
  %6826 = vmatpush1.bf16.msra.mxu0 0
  %6827 = vmatprep.subr.bf16.mxu0 0
  %6828 = vmatpush1.bf16.msra.mxu0 0
  %6829 = vmatprep.subr.bf16.mxu0 0
  %6830 = vmatpush1.bf16.msra.mxu0 0
  %6831 = vmatprep.subr.bf16.mxu0 0
  %6832 = vmatpush1.bf16.msra.mxu0 0
  %6833 = vmatprep.subr.bf16.mxu0 0
  %6834 = vmatpush1.bf16.msra.mxu0 0
  %6835 = vmatprep.subr.bf16.mxu0 0
  %6836 = vmatpush1.bf16.msra.mxu0 0
  %6837 = vmatprep.subr.bf16.mxu0 0
  %6838 = vmatpush1.bf16.msra.mxu0 0
  %6839 = vmatprep.mubr.bf16.mxu0 0
  %6840 = vmatmul.mubr.bf16.gmra.mrb[0].mxu0 %v6805
  %v6841 = vpop.f32.mrb[0].mxu0
  %v6842 = vadd.f32 0.0, %v6841
  %v6843 = vpop.f32.mrb[0].mxu0
  %v6844 = vadd.f32 0.0, %v6843
  %v6845 = vpop.f32.mrb[0].mxu0
  %v6846 = vpop.f32.mrb[0].mxu0
  %6847 = vdwg.mxu0
  %v6848 = vpack.c.bf16 %v6842, %v6842
  %v6849 = vpack.c.bf16 %v6844, %v6844
  %s6850 = scalar_lea.vmem %s10, 256
  %v6851 = vld [vmem:[%s6850] sm:$0xf]
  %v6852 = vld [vmem:[%s6850 + $0x4] sm:$0xf]
  %v6853 = vld [vmem:[%s6850 + $0x8] sm:$0xf]
  %v6854 = vld [vmem:[%s6850 + $0xc] sm:$0xf]
  %v6855 = vld [vmem:[%s6850 + $0x10] sm:$0xf]
  %v6856 = vld [vmem:[%s6850 + $0x14] sm:$0xf]
  %v6857 = vld [vmem:[%s6850 + $0x18] sm:$0xf]
  %v6858 = vld [vmem:[%s6850 + $0x1c] sm:$0xf]
  %v6859 = vld [vmem:[%s6850 + $0x20] sm:$0xf]
  %v6860 = vld [vmem:[%s6850 + $0x24] sm:$0xf]
  %v6861 = vld [vmem:[%s6850 + $0x28] sm:$0xf]
  %v6862 = vld [vmem:[%s6850 + $0x2c] sm:$0xf]
  %v6863 = vld [vmem:[%s6850 + $0x30] sm:$0xf]
  %v6864 = vld [vmem:[%s6850 + $0x34] sm:$0xf]
  %v6865 = vld [vmem:[%s6850 + $0x38] sm:$0xf]
  %v6866 = vld [vmem:[%s6850 + $0x3c] sm:$0xf]
  %v6867 = vld [vmem:[%s6850 + $0x40] sm:$0xf]
  %v6868 = vld [vmem:[%s6850 + $0x44] sm:$0xf]
  %v6869 = vld [vmem:[%s6850 + $0x48] sm:$0xf]
  %v6870 = vld [vmem:[%s6850 + $0x4c] sm:$0xf]
  %v6871 = vld [vmem:[%s6850 + $0x50] sm:$0xf]
  %v6872 = vld [vmem:[%s6850 + $0x54] sm:$0xf]
  %v6873 = vld [vmem:[%s6850 + $0x58] sm:$0xf]
  %v6874 = vld [vmem:[%s6850 + $0x5c] sm:$0xf]
  %v6875 = vld [vmem:[%s6850 + $0x60] sm:$0xf]
  %v6876 = vld [vmem:[%s6850 + $0x64] sm:$0xf]
  %v6877 = vld [vmem:[%s6850 + $0x68] sm:$0xf]
  %v6878 = vld [vmem:[%s6850 + $0x6c] sm:$0xf]
  %v6879 = vld [vmem:[%s6850 + $0x70] sm:$0xf]
  %v6880 = vld [vmem:[%s6850 + $0x74] sm:$0xf]
  %v6881 = vld [vmem:[%s6850 + $0x78] sm:$0xf]
  %v6882 = vld [vmem:[%s6850 + $0x7c] sm:$0xf]
  %v6915 = vunpack.c.l.b16 %v6851
  %v6916 = vunpack.c.l.b16 %v6852
  %v6917 = vunpack.c.l.b16 %v6853
  %v6918 = vunpack.c.l.b16 %v6854
  %v6919 = vunpack.c.l.b16 %v6855
  %v6920 = vunpack.c.l.b16 %v6856
  %v6921 = vunpack.c.l.b16 %v6857
  %v6922 = vunpack.c.l.b16 %v6858
  %v6923 = vunpack.c.l.b16 %v6859
  %v6924 = vunpack.c.l.b16 %v6860
  %v6925 = vunpack.c.l.b16 %v6861
  %v6926 = vunpack.c.l.b16 %v6862
  %v6927 = vunpack.c.l.b16 %v6863
  %v6928 = vunpack.c.l.b16 %v6864
  %v6929 = vunpack.c.l.b16 %v6865
  %v6930 = vunpack.c.l.b16 %v6866
  %v6931 = vunpack.c.l.b16 %v6867
  %v6932 = vunpack.c.l.b16 %v6868
  %v6933 = vunpack.c.l.b16 %v6869
  %v6934 = vunpack.c.l.b16 %v6870
  %v6935 = vunpack.c.l.b16 %v6871
  %v6936 = vunpack.c.l.b16 %v6872
  %v6937 = vunpack.c.l.b16 %v6873
  %v6938 = vunpack.c.l.b16 %v6874
  %v6939 = vunpack.c.l.b16 %v6875
  %v6940 = vunpack.c.l.b16 %v6876
  %v6941 = vunpack.c.l.b16 %v6877
  %v6942 = vunpack.c.l.b16 %v6878
  %v6943 = vunpack.c.l.b16 %v6879
  %v6944 = vunpack.c.l.b16 %v6880
  %v6945 = vunpack.c.l.b16 %v6881
  %v6946 = vunpack.c.l.b16 %v6882
  %v6947 = vpack.c.b16 %v6916, %v6915
  %v6948 = vpack.c.b16 %v6918, %v6917
  %v6949 = vpack.c.b16 %v6920, %v6919
  %v6950 = vpack.c.b16 %v6922, %v6921
  %v6951 = vpack.c.b16 %v6924, %v6923
  %v6952 = vpack.c.b16 %v6926, %v6925
  %v6953 = vpack.c.b16 %v6928, %v6927
  %v6954 = vpack.c.b16 %v6930, %v6929
  %v6955 = vpack.c.b16 %v6932, %v6931
  %v6956 = vpack.c.b16 %v6934, %v6933
  %v6957 = vpack.c.b16 %v6936, %v6935
  %v6958 = vpack.c.b16 %v6938, %v6937
  %v6959 = vpack.c.b16 %v6940, %v6939
  %v6960 = vpack.c.b16 %v6942, %v6941
  %v6961 = vpack.c.b16 %v6944, %v6943
  %v6962 = vpack.c.b16 %v6946, %v6945
  %6979 = vmatprep.subr.bf16.mxu0 0
  %6980 = vmatpush1.bf16.msra.mxu0 %v6947
  %6981 = vmatprep.subr.bf16.mxu0 0
  %6982 = vmatpush1.bf16.msra.mxu0 %v6948
  %6983 = vmatprep.subr.bf16.mxu0 0
  %6984 = vmatpush1.bf16.msra.mxu0 %v6949
  %6985 = vmatprep.subr.bf16.mxu0 0
  %6986 = vmatpush1.bf16.msra.mxu0 %v6950
  %6987 = vmatprep.subr.bf16.mxu0 0
  %6988 = vmatpush1.bf16.msra.mxu0 %v6951
  %6989 = vmatprep.subr.bf16.mxu0 0
  %6990 = vmatpush1.bf16.msra.mxu0 %v6952
  %6991 = vmatprep.subr.bf16.mxu0 0
  %6992 = vmatpush1.bf16.msra.mxu0 %v6953
  %6993 = vmatprep.subr.bf16.mxu0 0
  %6994 = vmatpush1.bf16.msra.mxu0 %v6954
  %6995 = vmatprep.subr.bf16.mxu0 0
  %6996 = vmatpush1.bf16.msra.mxu0 %v6955
  %6997 = vmatprep.subr.bf16.mxu0 0
  %6998 = vmatpush1.bf16.msra.mxu0 %v6956
  %6999 = vmatprep.subr.bf16.mxu0 0
  %7000 = vmatpush1.bf16.msra.mxu0 %v6957
  %7001 = vmatprep.subr.bf16.mxu0 0
  %7002 = vmatpush1.bf16.msra.mxu0 %v6958
  %7003 = vmatprep.subr.bf16.mxu0 0
  %7004 = vmatpush1.bf16.msra.mxu0 %v6959
  %7005 = vmatprep.subr.bf16.mxu0 0
  %7006 = vmatpush1.bf16.msra.mxu0 %v6960
  %7007 = vmatprep.subr.bf16.mxu0 0
  %7008 = vmatpush1.bf16.msra.mxu0 %v6961
  %7009 = vmatprep.subr.bf16.mxu0 0
  %7010 = vmatpush1.bf16.msra.mxu0 %v6962
  %7011 = vmatprep.mubr.bf16.mxu0 %v6849
  %7012 = vmatmul.mubr.bf16.gmra.mrb[0].mxu0 %v6848
  %v7013 = vpop.f32.mrb[0].mxu0
  %v7014 = vadd.f32 0.0, %v7013
  %v7015 = vpop.f32.mrb[0].mxu0
  %v7016 = vpop.f32.mrb[0].mxu0
  %v7017 = vpop.f32.mrb[0].mxu0
  %7018 = vdwg.mxu0
  %v7019 = vadd.f32 %v6797, %v7014
  %s7020 = scalar_lea.vmem %s5, 3
  %v7021 = vld [vmem:[%s7020] sm:$0x1]
  %v7023 = vsel %vm6363, %v7021, 0
  %7025 = vmatprep.subr.bf16.mxu0 %v6372
  %7026 = vmatpush1.bf16.msra.mxu0 %v6369
  %7027 = vmatprep.subr.bf16.mxu0 0
  %7028 = vmatpush1.bf16.msra.mxu0 0
  %7029 = vmatprep.subr.bf16.mxu0 0
  %7030 = vmatpush1.bf16.msra.mxu0 0
  %7031 = vmatprep.subr.bf16.mxu0 0
  %7032 = vmatpush1.bf16.msra.mxu0 0
  %7033 = vmatprep.subr.bf16.mxu0 0
  %7034 = vmatpush1.bf16.msra.mxu0 0
  %7035 = vmatprep.subr.bf16.mxu0 0
  %7036 = vmatpush1.bf16.msra.mxu0 0
  %7037 = vmatprep.subr.bf16.mxu0 0
  %7038 = vmatpush1.bf16.msra.mxu0 0
  %7039 = vmatprep.subr.bf16.mxu0 0
  %7040 = vmatpush1.bf16.msra.mxu0 0
  %7041 = vmatprep.subr.bf16.mxu0 0
  %7042 = vmatpush1.bf16.msra.mxu0 0
  %7043 = vmatprep.subr.bf16.mxu0 0
  %7044 = vmatpush1.bf16.msra.mxu0 0
  %7045 = vmatprep.subr.bf16.mxu0 0
  %7046 = vmatpush1.bf16.msra.mxu0 0
  %7047 = vmatprep.subr.bf16.mxu0 0
  %7048 = vmatpush1.bf16.msra.mxu0 0
  %7049 = vmatprep.subr.bf16.mxu0 0
  %7050 = vmatpush1.bf16.msra.mxu0 0
  %7051 = vmatprep.subr.bf16.mxu0 0
  %7052 = vmatpush1.bf16.msra.mxu0 0
  %7053 = vmatprep.subr.bf16.mxu0 0
  %7054 = vmatpush1.bf16.msra.mxu0 0
  %7055 = vmatprep.subr.bf16.mxu0 0
  %7056 = vmatpush1.bf16.msra.mxu0 0
  %7057 = vmatprep.mubr.bf16.mxu0 0
  %7058 = vmatmul.mubr.bf16.gmra.mrb[0].mxu0 %v7023
  %v7059 = vpop.f32.mrb[0].mxu0
  %v7060 = vadd.f32 0.0, %v7059
  %v7061 = vpop.f32.mrb[0].mxu0
  %v7062 = vadd.f32 0.0, %v7061
  %v7063 = vpop.f32.mrb[0].mxu0
  %v7064 = vpop.f32.mrb[0].mxu0
  %7065 = vdwg.mxu0
  %v7066 = vpack.c.bf16 %v7060, %v7060
  %v7067 = vpack.c.bf16 %v7062, %v7062
  %s7068 = scalar_lea.vmem %s10, 384
  %v7069 = vld [vmem:[%s7068] sm:$0xf]
  %v7070 = vld [vmem:[%s7068 + $0x4] sm:$0xf]
  %v7071 = vld [vmem:[%s7068 + $0x8] sm:$0xf]
  %v7072 = vld [vmem:[%s7068 + $0xc] sm:$0xf]
  %v7073 = vld [vmem:[%s7068 + $0x10] sm:$0xf]
  %v7074 = vld [vmem:[%s7068 + $0x14] sm:$0xf]
  %v7075 = vld [vmem:[%s7068 + $0x18] sm:$0xf]
  %v7076 = vld [vmem:[%s7068 + $0x1c] sm:$0xf]
  %v7077 = vld [vmem:[%s7068 + $0x20] sm:$0xf]
  %v7078 = vld [vmem:[%s7068 + $0x24] sm:$0xf]
  %v7079 = vld [vmem:[%s7068 + $0x28] sm:$0xf]
  %v7080 = vld [vmem:[%s7068 + $0x2c] sm:$0xf]
  %v7081 = vld [vmem:[%s7068 + $0x30] sm:$0xf]
  %v7082 = vld [vmem:[%s7068 + $0x34] sm:$0xf]
  %v7083 = vld [vmem:[%s7068 + $0x38] sm:$0xf]
  %v7084 = vld [vmem:[%s7068 + $0x3c] sm:$0xf]
  %v7085 = vld [vmem:[%s7068 + $0x40] sm:$0xf]
  %v7086 = vld [vmem:[%s7068 + $0x44] sm:$0xf]
  %v7087 = vld [vmem:[%s7068 + $0x48] sm:$0xf]
  %v7088 = vld [vmem:[%s7068 + $0x4c] sm:$0xf]
  %v7089 = vld [vmem:[%s7068 + $0x50] sm:$0xf]
  %v7090 = vld [vmem:[%s7068 + $0x54] sm:$0xf]
  %v7091 = vld [vmem:[%s7068 + $0x58] sm:$0xf]
  %v7092 = vld [vmem:[%s7068 + $0x5c] sm:$0xf]
  %v7093 = vld [vmem:[%s7068 + $0x60] sm:$0xf]
  %v7094 = vld [vmem:[%s7068 + $0x64] sm:$0xf]
  %v7095 = vld [vmem:[%s7068 + $0x68] sm:$0xf]
  %v7096 = vld [vmem:[%s7068 + $0x6c] sm:$0xf]
  %v7097 = vld [vmem:[%s7068 + $0x70] sm:$0xf]
  %v7098 = vld [vmem:[%s7068 + $0x74] sm:$0xf]
  %v7099 = vld [vmem:[%s7068 + $0x78] sm:$0xf]
  %v7100 = vld [vmem:[%s7068 + $0x7c] sm:$0xf]
  %v7133 = vunpack.c.l.b16 %v7069
  %v7134 = vunpack.c.l.b16 %v7070
  %v7135 = vunpack.c.l.b16 %v7071
  %v7136 = vunpack.c.l.b16 %v7072
  %v7137 = vunpack.c.l.b16 %v7073
  %v7138 = vunpack.c.l.b16 %v7074
  %v7139 = vunpack.c.l.b16 %v7075
  %v7140 = vunpack.c.l.b16 %v7076
  %v7141 = vunpack.c.l.b16 %v7077
  %v7142 = vunpack.c.l.b16 %v7078
  %v7143 = vunpack.c.l.b16 %v7079
  %v7144 = vunpack.c.l.b16 %v7080
  %v7145 = vunpack.c.l.b16 %v7081
  %v7146 = vunpack.c.l.b16 %v7082
  %v7147 = vunpack.c.l.b16 %v7083
  %v7148 = vunpack.c.l.b16 %v7084
  %v7149 = vunpack.c.l.b16 %v7085
  %v7150 = vunpack.c.l.b16 %v7086
  %v7151 = vunpack.c.l.b16 %v7087
  %v7152 = vunpack.c.l.b16 %v7088
  %v7153 = vunpack.c.l.b16 %v7089
  %v7154 = vunpack.c.l.b16 %v7090
  %v7155 = vunpack.c.l.b16 %v7091
  %v7156 = vunpack.c.l.b16 %v7092
  %v7157 = vunpack.c.l.b16 %v7093
  %v7158 = vunpack.c.l.b16 %v7094
  %v7159 = vunpack.c.l.b16 %v7095
  %v7160 = vunpack.c.l.b16 %v7096
  %v7161 = vunpack.c.l.b16 %v7097
  %v7162 = vunpack.c.l.b16 %v7098
  %v7163 = vunpack.c.l.b16 %v7099
  %v7164 = vunpack.c.l.b16 %v7100
  %v7165 = vpack.c.b16 %v7134, %v7133
  %v7166 = vpack.c.b16 %v7136, %v7135
  %v7167 = vpack.c.b16 %v7138, %v7137
  %v7168 = vpack.c.b16 %v7140, %v7139
  %v7169 = vpack.c.b16 %v7142, %v7141
  %v7170 = vpack.c.b16 %v7144, %v7143
  %v7171 = vpack.c.b16 %v7146, %v7145
  %v7172 = vpack.c.b16 %v7148, %v7147
  %v7173 = vpack.c.b16 %v7150, %v7149
  %v7174 = vpack.c.b16 %v7152, %v7151
  %v7175 = vpack.c.b16 %v7154, %v7153
  %v7176 = vpack.c.b16 %v7156, %v7155
  %v7177 = vpack.c.b16 %v7158, %v7157
  %v7178 = vpack.c.b16 %v7160, %v7159
  %v7179 = vpack.c.b16 %v7162, %v7161
  %v7180 = vpack.c.b16 %v7164, %v7163
  %7197 = vmatprep.subr.bf16.mxu0 0
  %7198 = vmatpush1.bf16.msra.mxu0 %v7165
  %7199 = vmatprep.subr.bf16.mxu0 0
  %7200 = vmatpush1.bf16.msra.mxu0 %v7166
  %7201 = vmatprep.subr.bf16.mxu0 0
  %7202 = vmatpush1.bf16.msra.mxu0 %v7167
  %7203 = vmatprep.subr.bf16.mxu0 0
  %7204 = vmatpush1.bf16.msra.mxu0 %v7168
  %7205 = vmatprep.subr.bf16.mxu0 0
  %7206 = vmatpush1.bf16.msra.mxu0 %v7169
  %7207 = vmatprep.subr.bf16.mxu0 0
  %7208 = vmatpush1.bf16.msra.mxu0 %v7170
  %7209 = vmatprep.subr.bf16.mxu0 0
  %7210 = vmatpush1.bf16.msra.mxu0 %v7171
  %7211 = vmatprep.subr.bf16.mxu0 0
  %7212 = vmatpush1.bf16.msra.mxu0 %v7172
  %7213 = vmatprep.subr.bf16.mxu0 0
  %7214 = vmatpush1.bf16.msra.mxu0 %v7173
  %7215 = vmatprep.subr.bf16.mxu0 0
  %7216 = vmatpush1.bf16.msra.mxu0 %v7174
  %7217 = vmatprep.subr.bf16.mxu0 0
  %7218 = vmatpush1.bf16.msra.mxu0 %v7175
  %7219 = vmatprep.subr.bf16.mxu0 0
  %7220 = vmatpush1.bf16.msra.mxu0 %v7176
  %7221 = vmatprep.subr.bf16.mxu0 0
  %7222 = vmatpush1.bf16.msra.mxu0 %v7177
  %7223 = vmatprep.subr.bf16.mxu0 0
  %7224 = vmatpush1.bf16.msra.mxu0 %v7178
  %7225 = vmatprep.subr.bf16.mxu0 0
  %7226 = vmatpush1.bf16.msra.mxu0 %v7179
  %7227 = vmatprep.subr.bf16.mxu0 0
  %7228 = vmatpush1.bf16.msra.mxu0 %v7180
  %7229 = vmatprep.mubr.bf16.mxu0 %v7067
  %7230 = vmatmul.mubr.bf16.gmra.mrb[0].mxu0 %v7066
  %v7231 = vpop.f32.mrb[0].mxu0
  %v7232 = vadd.f32 0.0, %v7231
  %v7233 = vpop.f32.mrb[0].mxu0
  %v7234 = vpop.f32.mrb[0].mxu0
  %v7235 = vpop.f32.mrb[0].mxu0
  %7236 = vdwg.mxu0
  %v7237 = vadd.f32 %v7019, %v7232
  %v7238 = vsub.f32 0.0, %v7237
  %v7239 = vmul.f32 %v7238, 1.442695
  %v7240 = vpow.pop %v7239
  %v7241 = vadd.f32 %v7240, 1.0
  %v7242 = vrcp.pop %v7241
  %v7243 = vmul.f32 1.0, %v7242
  %7244 = vst [vmem:[%s14] sm:$0x3] %v7243
  // Predicated region
  $region58: #{forward.1} parent=0 // pred_check
    _
  $region59: #{forward.1} parent=0 // pred_check_branch
    %7246 = sbr.rel (0) target = $region61
  $region60: #{forward.1} parent=0 // pred_region
    _
  $region61: #{forward.1} parent=0 // pred_fallthru
    _
  // Predicated region
  $region62: #{forward.1} parent=0 // pred_check
    _
  $region63: #{forward.1} parent=0 // pred_check_branch
    %7248 = sbr.rel (0) target = $region65
  $region64: #{forward.1} parent=0 // pred_region
    _
  $region65: #{forward.1} parent=0 // pred_fallthru
    _

</llo_original>
